<compile_context>
chip_gen: v5e
topology: v5e:2x2
jax: 0.10.0
libtpu: 0.0.40
codegen_flags: <defaults>
</compile_context>

<pallas_src>
import functools

import jax
import jax.numpy as jnp
from jax.experimental import pallas as pl
from jax.experimental.pallas import tpu as pltpu


# ----------------------------------------------------------------------------------
# Kernel A: fused LayerNorm(m) -> [W_v | W_g] projection -> sigmoid on the gate half.
#   in : m (TM, c_m), gamma/beta (1, c_m), W_vg (c_m, 2*H*c)
#   out: v (TM, H*c), g = sigmoid(logits) (TM, H*c)
# ----------------------------------------------------------------------------------
def _msa_proj_kernel(m_ref, gam_ref, bet_ref, w_ref, v_ref, g_ref, *, hc):
    x = m_ref[...]                                            # (TM, c_m) f32
    mu = jnp.mean(x, axis=-1, keepdims=True)
    var = jnp.mean((x - mu) ** 2, axis=-1, keepdims=True)
    xn = (x - mu) * jax.lax.rsqrt(var + 1e-5)
    xn = xn * gam_ref[...] + bet_ref[...]
    y = jnp.dot(xn, w_ref[...], preferred_element_type=jnp.float32)   # (TM, 2*hc) f32
    v_ref[...] = y[:, :hc]
    g_ref[...] = jax.nn.sigmoid(y[:, hc:])


# ----------------------------------------------------------------------------------
# Kernel Z: fused LayerNorm(z) -> bias projection -> softmax over the i axis.
#   in : z (1, N_i, TJ, c_z), gamma/beta (1, c_z), W_b (c_z, H)
#   out: w (1, N_i, TJ, H)   with  w[i, j, h] = softmax_i( b[i, j, h] )
# ----------------------------------------------------------------------------------
def _pair_weights_kernel(z_ref, gam_ref, bet_ref, w_ref, o_ref, *, n_head):
    zb = z_ref[0]                                             # (N_i, TJ, c_z)
    n_i, tj, c_z = zb.shape
    x = zb.reshape(n_i * tj, c_z)                             # trivial collapse (TJ % 8 == 0)
    mu = jnp.mean(x, axis=-1, keepdims=True)
    var = jnp.mean((x - mu) ** 2, axis=-1, keepdims=True)
    xn = (x - mu) * jax.lax.rsqrt(var + 1e-5)
    xn = xn * gam_ref[...] + bet_ref[...]
    b = jnp.dot(xn, w_ref[...], preferred_element_type=jnp.float32)   # (N_i*TJ, H)
    b = b.reshape(n_i, tj, n_head)
    # softmax over the i axis (axis 0) == F.softmax(bh_ij, dim=-2) in the reference.
    b = b - jnp.max(b, axis=0, keepdims=True)
    e = jnp.exp(b)
    inv = pl.reciprocal(jnp.sum(e, axis=0, keepdims=True), approx=True)
    o_ref[0] = e * inv


# ----------------------------------------------------------------------------------
# Kernel B: fused pair-weighted average + gate + output projection, per (b, s).
#   in : w (1, H, N, N)  [reused across the s grid axis], v/g (1, 1, N, H*c),
#        W_o (H*c, c_m)
#   out: (1, 1, N, c_m)
# ----------------------------------------------------------------------------------
def _pwa_out_kernel(w_ref, v_ref, g_ref, wo_ref, o_ref, *, n_head, c):
    v = v_ref[0, 0]                                           # (N_j, H*c) f32
    o_parts = []
    for h in range(n_head):                                   # static unroll, 2-D MXU dots
        wh = w_ref[0, h]                                      # (N_i, N_j) f32
        vh = v[:, h * c:(h + 1) * c]                          # (N_j, c)   f32
        o_parts.append(jnp.dot(wh, vh, preferred_element_type=jnp.float32))
    o = jnp.concatenate(o_parts, axis=-1)                     # (N_i, H*c)
    og = g_ref[0, 0] * o                                      # sigmoid gate (f32)
    o_ref[0, 0] = jnp.dot(og, wo_ref[...], preferred_element_type=jnp.float32)


# ----------------------------------------------------------------------------------
# Wrappers
# ----------------------------------------------------------------------------------
def _row_tile(total, target):
    """Largest tile <= target that divides `total` and is a multiple of 8 (or == total)."""
    t = min(total, target)
    for cand in range(t, 0, -1):
        if total % cand == 0 and (cand % 8 == 0 or cand == total):
            return cand
    return total


@functools.partial(jax.jit, static_argnames=("c", "n_head"))
def msa_pair_weighted_averaging(params, m_si, z_ij, *, c, n_head):
    B, S, N, c_m = m_si.shape
    c_z = z_ij.shape[-1]
    H = n_head
    hc = H * c
    R = B * S * N

    # ---------------- kernel A: LN(m) -> [v | sigmoid(g)] -------------------------
    tm = _row_tile(R, 256)
    w_vg = jnp.concatenate([params["w_v"], params["w_g"]], axis=1)      # (c_m, 2*hc)
    v2, g2 = pl.pallas_call(
        functools.partial(_msa_proj_kernel, hc=hc),
        grid=(R // tm,),
        in_specs=[
            pl.BlockSpec((tm, c_m), lambda i: (i, 0)),
            pl.BlockSpec((1, c_m), lambda i: (0, 0)),
            pl.BlockSpec((1, c_m), lambda i: (0, 0)),
            pl.BlockSpec((c_m, 2 * hc), lambda i: (0, 0)),
        ],
        out_specs=(
            pl.BlockSpec((tm, hc), lambda i: (i, 0)),
            pl.BlockSpec((tm, hc), lambda i: (i, 0)),
        ),
        out_shape=(
            jax.ShapeDtypeStruct((R, hc), jnp.float32),
            jax.ShapeDtypeStruct((R, hc), jnp.float32),
        ),
        compiler_params=pltpu.CompilerParams(dimension_semantics=("parallel",)),
    )(m_si.reshape(R, c_m),
      params["ln_m_g"].reshape(1, c_m),
      params["ln_m_b"].reshape(1, c_m),
      w_vg)
    v = v2.reshape(B, S, N, hc)
    g = g2.reshape(B, S, N, hc)

    # ---------------- kernel Z: LN(z) -> bias -> softmax over i -------------------
    tj = _row_tile(N, 16)
    w_z = pl.pallas_call(
        functools.partial(_pair_weights_kernel, n_head=H),
        grid=(B, N // tj),
        in_specs=[
            pl.BlockSpec((1, N, tj, c_z), lambda b, j: (b, 0, j, 0)),
            pl.BlockSpec((1, c_z), lambda b, j: (0, 0)),
            pl.BlockSpec((1, c_z), lambda b, j: (0, 0)),
            pl.BlockSpec((c_z, H), lambda b, j: (0, 0)),
        ],
        out_specs=pl.BlockSpec((1, N, tj, H), lambda b, j: (b, 0, j, 0)),
        out_shape=jax.ShapeDtypeStruct((B, N, N, H), jnp.float32),
        compiler_params=pltpu.CompilerParams(
            dimension_semantics=("parallel", "parallel")),
    )(z_ij,
      params["ln_z_g"].reshape(1, c_z),
      params["ln_z_b"].reshape(1, c_z),
      params["w_b"])
    # Small relayout (B,N,N,H) -> (B,H,N,N) so kernel B slices clean per-head tiles.
    w_bhij = jnp.transpose(w_z, (0, 3, 1, 2))

    # ---------------- kernel B: weighted average + gate + out projection ----------
    out = pl.pallas_call(
        functools.partial(_pwa_out_kernel, n_head=H, c=c),
        grid=(B, S),
        in_specs=[
            pl.BlockSpec((1, H, N, N), lambda b, s: (b, 0, 0, 0)),   # reused across s
            pl.BlockSpec((1, 1, N, hc), lambda b, s: (b, s, 0, 0)),
            pl.BlockSpec((1, 1, N, hc), lambda b, s: (b, s, 0, 0)),
            pl.BlockSpec((hc, c_m), lambda b, s: (0, 0)),
        ],
        out_specs=pl.BlockSpec((1, 1, N, c_m), lambda b, s: (b, s, 0, 0)),
        out_shape=jax.ShapeDtypeStruct((B, S, N, c_m), jnp.float32),
        compiler_params=pltpu.CompilerParams(
            dimension_semantics=("parallel", "parallel")),
    )(w_bhij, v, g, params["w_o"])
    return out


# ----------------------------------------------------------------------------------
# Parameters & pure-JAX reference (for a correctness check)
# ----------------------------------------------------------------------------------
def init_msa_pwa_params(key, c_m, c_z, c, n_head):
    hc = c * n_head
    k = jax.random.split(key, 4)
    s = 0.1
    return {
        "ln_m_g": jnp.ones((c_m,), jnp.float32),
        "ln_m_b": jnp.zeros((c_m,), jnp.float32),
        "w_v": s * jax.random.normal(k[0], (c_m, hc), jnp.float32),
        "w_g": s * jax.random.normal(k[1], (c_m, hc), jnp.float32),
        "ln_z_g": jnp.ones((c_z,), jnp.float32),
        "ln_z_b": jnp.zeros((c_z,), jnp.float32),
        "w_b": s * jax.random.normal(k[2], (c_z, n_head), jnp.float32),
        "w_o": s * jax.random.normal(k[3], (hc, c_m), jnp.float32),
    }


def reference_forward(params, m_si, z_ij, *, c, n_head):
    """Pure-jnp transcription of the PyTorch module (f32 everywhere)."""
    B, S, N, c_m = m_si.shape
    H = n_head

    def ln(x, gamma, beta):
        mu = jnp.mean(x, -1, keepdims=True)
        var = jnp.mean((x - mu) ** 2, -1, keepdims=True)
        return (x - mu) * jax.lax.rsqrt(var + 1e-5) * gamma + beta

    mn = ln(m_si, params["ln_m_g"], params["ln_m_b"])
    v = (mn @ params["w_v"]).reshape(B, S, N, H, c).transpose(0, 1, 3, 2, 4)   # (B,S,H,N,c)
    g = jax.nn.sigmoid(mn @ params["w_g"]).reshape(B, S, N, H, c).transpose(0, 1, 3, 2, 4)
    zn = ln(z_ij, params["ln_z_g"], params["ln_z_b"])
    b = (zn @ params["w_b"]).reshape(B, N, N, H).transpose(0, 3, 1, 2)          # (B,H,N,N)
    w = jax.nn.softmax(b, axis=-2)                                              # dim=-2 (i axis)
    o = g * jnp.einsum("bhij,bshjc->bshic", w, v)
    o = o.transpose(0, 1, 3, 2, 4).reshape(B, S, N, H * c)
    return o @ params["w_o"]


# ----------------------------------------------------------------------------------
# main
# ----------------------------------------------------------------------------------
if __name__ == "__main__":
    B, N_msa, N_token = 2, 8, 32
    c_m, c_z, c, N_head = 64, 32, 32, 8

    key = jax.random.PRNGKey(0)
    kp, km, kz = jax.random.split(key, 3)
    params = init_msa_pwa_params(kp, c_m, c_z, c, N_head)
    m_si = jax.random.normal(km, (B, N_msa, N_token, c_m), jnp.float32)
    z_ij = jax.random.normal(kz, (B, N_token, N_token, c_z), jnp.float32)

    out = msa_pair_weighted_averaging(params, m_si, z_ij, c=c, n_head=N_head)
    out = jax.block_until_ready(out)
    assert out.shape == (B, N_msa, N_token, c_m), out.shape
    assert bool(jnp.all(jnp.isfinite(out)))

    ref = reference_forward(params, m_si, z_ij, c=c, n_head=N_head)
    max_err = float(jnp.max(jnp.abs(out - ref)))
    # Tolerance sized for TPU matmul precision (default XLA f32 matmul may use reduced-
    # precision MXU passes); the f32 Pallas kernels land well inside this.
    assert bool(jnp.allclose(out, ref, rtol=2e-2, atol=1e-2)), f"max |err| = {max_err}"

    print("KERNEL_OK")
</pallas_src>

<mosaic_0001>
module attributes {stable_mosaic.version = 11 : i64} {
  func.func @_msa_proj_kernel(%arg0: i32, %arg1: memref<256x64xf32, #tpu.memory_space<vmem>>, %arg2: memref<1x64xf32, #tpu.memory_space<vmem>>, %arg3: memref<1x64xf32, #tpu.memory_space<vmem>>, %arg4: memref<64x512xf32, #tpu.memory_space<vmem>>, %arg5: memref<256x256xf32, #tpu.memory_space<vmem>>, %arg6: memref<256x256xf32, #tpu.memory_space<vmem>>) attributes {dimension_semantics = [#tpu.dimension_semantics<parallel>], iteration_bounds = array<i64: 2>, scalar_prefetch = 0 : i64, scratch_operands = 0 : i64, tpu.core_type = #tpu.core_type<tc>, window_params = [{transform_indices = @transform_0, window_bounds = array<i64: 256, 64>}, {pipeline_mode = #tpu.pipeline_mode<synchronous>, transform_indices = @transform_1, window_bounds = array<i64: 1, 64>}, {pipeline_mode = #tpu.pipeline_mode<synchronous>, transform_indices = @transform_2, window_bounds = array<i64: 1, 64>}, {pipeline_mode = #tpu.pipeline_mode<synchronous>, transform_indices = @transform_3, window_bounds = array<i64: 64, 512>}, {transform_indices = @transform_4, window_bounds = array<i64: 256, 256>}, {transform_indices = @transform_5, window_bounds = array<i64: 256, 256>}]} {
    %c0 = arith.constant 0 : index
    %c0_0 = arith.constant 0 : index
    %0 = vector.load %arg1[%c0, %c0_0] : memref<256x64xf32, #tpu.memory_space<vmem>>, vector<256x64xf32>
    %cst = arith.constant dense<0.000000e+00> : vector<256xf32>
    %1 = vector.multi_reduction <add>, %0, %cst [1] : vector<256x64xf32> to vector<256xf32>
    %2 = vector.shape_cast %1 : vector<256xf32> to vector<256x1xf32>
    %cst_1 = arith.constant 6.400000e+01 : f32
    %3 = vector.broadcast %cst_1 : f32 to vector<256x1xf32>
    %4 = arith.divf %2, %3 : vector<256x1xf32>
    %5 = vector.broadcast %4 : vector<256x1xf32> to vector<256x64xf32>
    %6 = arith.subf %0, %5 : vector<256x64xf32>
    %7 = arith.mulf %6, %6 : vector<256x64xf32>
    %cst_2 = arith.constant dense<0.000000e+00> : vector<256xf32>
    %8 = vector.multi_reduction <add>, %7, %cst_2 [1] : vector<256x64xf32> to vector<256xf32>
    %9 = vector.shape_cast %8 : vector<256xf32> to vector<256x1xf32>
    %cst_3 = arith.constant 6.400000e+01 : f32
    %10 = vector.broadcast %cst_3 : f32 to vector<256x1xf32>
    %11 = arith.divf %9, %10 : vector<256x1xf32>
    %12 = vector.broadcast %4 : vector<256x1xf32> to vector<256x64xf32>
    %13 = arith.subf %0, %12 : vector<256x64xf32>
    %cst_4 = arith.constant 9.99999974E-6 : f32
    %14 = vector.broadcast %cst_4 : f32 to vector<256x1xf32>
    %15 = arith.addf %11, %14 : vector<256x1xf32>
    %16 = math.rsqrt %15 : vector<256x1xf32>
    %17 = vector.broadcast %16 : vector<256x1xf32> to vector<256x64xf32>
    %18 = arith.mulf %13, %17 : vector<256x64xf32>
    %c0_5 = arith.constant 0 : index
    %c0_6 = arith.constant 0 : index
    %19 = vector.load %arg2[%c0_5, %c0_6] : memref<1x64xf32, #tpu.memory_space<vmem>>, vector<1x64xf32>
    %20 = vector.broadcast %19 : vector<1x64xf32> to vector<256x64xf32>
    %21 = arith.mulf %18, %20 : vector<256x64xf32>
    %c0_7 = arith.constant 0 : index
    %c0_8 = arith.constant 0 : index
    %22 = vector.load %arg3[%c0_7, %c0_8] : memref<1x64xf32, #tpu.memory_space<vmem>>, vector<1x64xf32>
    %23 = vector.broadcast %22 : vector<1x64xf32> to vector<256x64xf32>
    %24 = arith.addf %21, %23 : vector<256x64xf32>
    %c0_9 = arith.constant 0 : index
    %c0_10 = arith.constant 0 : index
    %25 = vector.load %arg4[%c0_9, %c0_10] : memref<64x512xf32, #tpu.memory_space<vmem>>, vector<64x512xf32>
    %cst_11 = arith.constant dense<0.000000e+00> : vector<256x512xf32>
    %26 = tpu.matmul %24, %25, %cst_11 {dimension_numbers = #tpu.dot_dimension_numbers<[1], [0], [0], [1], [0, 0, 1, 1], [], []>} : vector<256x64xf32>, vector<64x512xf32>, vector<256x512xf32> -> vector<256x512xf32>
    %27 = vector.extract_strided_slice %26 {offsets = [0, 0], sizes = [256, 256], strides = [1, 1]} : vector<256x512xf32> to vector<256x256xf32>
    %c0_12 = arith.constant 0 : index
    %c0_13 = arith.constant 0 : index
    %28 = vector.load %arg5[%c0_12, %c0_13] : memref<256x256xf32, #tpu.memory_space<vmem>>, vector<256x256xf32>
    tpu.vector_store %arg5[%c0_12, %c0_13], %27 {strides = array<i32>} : memref<256x256xf32, #tpu.memory_space<vmem>>, vector<256x256xf32>,
    %29 = vector.extract_strided_slice %26 {offsets = [0, 256], sizes = [256, 256], strides = [1, 1]} : vector<256x512xf32> to vector<256x256xf32>
    %30 = arith.negf %29 : vector<256x256xf32>
    %31 = math.exp %30 : vector<256x256xf32>
    %cst_14 = arith.constant 1.000000e+00 : f32
    %32 = vector.broadcast %cst_14 : f32 to vector<256x256xf32>
    %33 = arith.addf %32, %31 : vector<256x256xf32>
    %34 = arith.divf %32, %33 : vector<256x256xf32>
    %c0_15 = arith.constant 0 : index
    %c0_16 = arith.constant 0 : index
    %35 = vector.load %arg6[%c0_15, %c0_16] : memref<256x256xf32, #tpu.memory_space<vmem>>, vector<256x256xf32>
    tpu.vector_store %arg6[%c0_15, %c0_16], %34 {strides = array<i32>} : memref<256x256xf32, #tpu.memory_space<vmem>>, vector<256x256xf32>,
    return
  }
  func.func @transform_0(%arg0: i32) -> (i32, i32) {
    %c0_i32 = arith.constant 0 : i32
    %c0_i32_0 = arith.constant 0 : i32
    return %arg0, %c0_i32 : i32, i32
  }
  func.func @transform_1(%arg0: i32) -> (i32, i32) {
    %c0_i32 = arith.constant 0 : i32
    %c0_i32_0 = arith.constant 0 : i32
    %c0_i32_1 = arith.constant 0 : i32
    return %c0_i32, %c0_i32_0 : i32, i32
  }
  func.func @transform_2(%arg0: i32) -> (i32, i32) {
    %c0_i32 = arith.constant 0 : i32
    %c0_i32_0 = arith.constant 0 : i32
    %c0_i32_1 = arith.constant 0 : i32
    return %c0_i32, %c0_i32_0 : i32, i32
  }
  func.func @transform_3(%arg0: i32) -> (i32, i32) {
    %c0_i32 = arith.constant 0 : i32
    %c0_i32_0 = arith.constant 0 : i32
    %c0_i32_1 = arith.constant 0 : i32
    return %c0_i32, %c0_i32_0 : i32, i32
  }
  func.func @transform_4(%arg0: i32) -> (i32, i32) {
    %c0_i32 = arith.constant 0 : i32
    %c0_i32_0 = arith.constant 0 : i32
    return %arg0, %c0_i32 : i32, i32
  }
  func.func @transform_5(%arg0: i32) -> (i32, i32) {
    %c0_i32 = arith.constant 0 : i32
    %c0_i32_0 = arith.constant 0 : i32
    return %arg0, %c0_i32 : i32, i32
  }
}

module attributes {stable_mosaic.version = 11 : i64} {
  func.func @_pair_weights_kernel(%arg0: i32, %arg1: i32, %arg2: memref<1x32x16x32xf32, #tpu.memory_space<vmem>>, %arg3: memref<1x32xf32, #tpu.memory_space<vmem>>, %arg4: memref<1x32xf32, #tpu.memory_space<vmem>>, %arg5: memref<32x8xf32, #tpu.memory_space<vmem>>, %arg6: memref<1x32x16x8xf32, #tpu.memory_space<vmem>>) attributes {dimension_semantics = [#tpu.dimension_semantics<parallel>, #tpu.dimension_semantics<parallel>], iteration_bounds = array<i64: 2, 2>, scalar_prefetch = 0 : i64, scratch_operands = 0 : i64, tpu.core_type = #tpu.core_type<tc>, window_params = [{transform_indices = @transform_0, window_bounds = array<i64: 1, 32, 16, 32>}, {pipeline_mode = #tpu.pipeline_mode<synchronous>, transform_indices = @transform_1, window_bounds = array<i64: 1, 32>}, {pipeline_mode = #tpu.pipeline_mode<synchronous>, transform_indices = @transform_2, window_bounds = array<i64: 1, 32>}, {pipeline_mode = #tpu.pipeline_mode<synchronous>, transform_indices = @transform_3, window_bounds = array<i64: 32, 8>}, {transform_indices = @transform_4, window_bounds = array<i64: 1, 32, 16, 8>}]} {
    %c0 = arith.constant 0 : index
    %c0_0 = arith.constant 0 : index
    %c0_1 = arith.constant 0 : index
    %c0_2 = arith.constant 0 : index
    %0 = vector.load %arg2[%c0, %c0_0, %c0_1, %c0_2] : memref<1x32x16x32xf32, #tpu.memory_space<vmem>>, vector<1x32x16x32xf32>
    %1 = vector.shape_cast %0 : vector<1x32x16x32xf32> to vector<32x16x32xf32>
    %2 = vector.shape_cast %1 : vector<32x16x32xf32> to vector<512x32xf32>
    %cst = arith.constant dense<0.000000e+00> : vector<512xf32>
    %3 = vector.multi_reduction <add>, %2, %cst [1] : vector<512x32xf32> to vector<512xf32>
    %4 = vector.shape_cast %3 : vector<512xf32> to vector<512x1xf32>
    %cst_3 = arith.constant 3.200000e+01 : f32
    %5 = vector.broadcast %cst_3 : f32 to vector<512x1xf32>
    %6 = arith.divf %4, %5 : vector<512x1xf32>
    %7 = vector.broadcast %6 : vector<512x1xf32> to vector<512x32xf32>
    %8 = arith.subf %2, %7 : vector<512x32xf32>
    %9 = arith.mulf %8, %8 : vector<512x32xf32>
    %cst_4 = arith.constant dense<0.000000e+00> : vector<512xf32>
    %10 = vector.multi_reduction <add>, %9, %cst_4 [1] : vector<512x32xf32> to vector<512xf32>
    %11 = vector.shape_cast %10 : vector<512xf32> to vector<512x1xf32>
    %cst_5 = arith.constant 3.200000e+01 : f32
    %12 = vector.broadcast %cst_5 : f32 to vector<512x1xf32>
    %13 = arith.divf %11, %12 : vector<512x1xf32>
    %14 = vector.broadcast %6 : vector<512x1xf32> to vector<512x32xf32>
    %15 = arith.subf %2, %14 : vector<512x32xf32>
    %cst_6 = arith.constant 9.99999974E-6 : f32
    %16 = vector.broadcast %cst_6 : f32 to vector<512x1xf32>
    %17 = arith.addf %13, %16 : vector<512x1xf32>
    %18 = math.rsqrt %17 : vector<512x1xf32>
    %19 = vector.broadcast %18 : vector<512x1xf32> to vector<512x32xf32>
    %20 = arith.mulf %15, %19 : vector<512x32xf32>
    %c0_7 = arith.constant 0 : index
    %c0_8 = arith.constant 0 : index
    %21 = vector.load %arg3[%c0_7, %c0_8] : memref<1x32xf32, #tpu.memory_space<vmem>>, vector<1x32xf32>
    %22 = vector.broadcast %21 : vector<1x32xf32> to vector<512x32xf32>
    %23 = arith.mulf %20, %22 : vector<512x32xf32>
    %c0_9 = arith.constant 0 : index
    %c0_10 = arith.constant 0 : index
    %24 = vector.load %arg4[%c0_9, %c0_10] : memref<1x32xf32, #tpu.memory_space<vmem>>, vector<1x32xf32>
    %25 = vector.broadcast %24 : vector<1x32xf32> to vector<512x32xf32>
    %26 = arith.addf %23, %25 : vector<512x32xf32>
    %c0_11 = arith.constant 0 : index
    %c0_12 = arith.constant 0 : index
    %27 = vector.load %arg5[%c0_11, %c0_12] : memref<32x8xf32, #tpu.memory_space<vmem>>, vector<32x8xf32>
    %cst_13 = arith.constant dense<0.000000e+00> : vector<512x8xf32>
    %28 = tpu.matmul %26, %27, %cst_13 {dimension_numbers = #tpu.dot_dimension_numbers<[1], [0], [0], [1], [0, 0, 1, 1], [], []>} : vector<512x32xf32>, vector<32x8xf32>, vector<512x8xf32> -> vector<512x8xf32>
    %29 = vector.shape_cast %28 : vector<512x8xf32> to vector<32x16x8xf32>
    %cst_14 = arith.constant dense<0xFF800000> : vector<16x8xf32>
    %30 = vector.multi_reduction <maximumf>, %29, %cst_14 [0] : vector<32x16x8xf32> to vector<16x8xf32>
    %31 = vector.shape_cast %30 : vector<16x8xf32> to vector<1x16x8xf32>
    %32 = vector.broadcast %31 : vector<1x16x8xf32> to vector<32x16x8xf32>
    %33 = arith.subf %29, %32 : vector<32x16x8xf32>
    %34 = math.exp %33 : vector<32x16x8xf32>
    %cst_15 = arith.constant dense<0.000000e+00> : vector<16x8xf32>
    %35 = vector.multi_reduction <add>, %34, %cst_15 [0] : vector<32x16x8xf32> to vector<16x8xf32>
    %36 = vector.shape_cast %35 : vector<16x8xf32> to vector<1x16x8xf32>
    %37 = tpu.reciprocal %36 {approx = true} : vector<1x16x8xf32> -> vector<1x16x8xf32>
    %38 = vector.broadcast %37 : vector<1x16x8xf32> to vector<32x16x8xf32>
    %39 = arith.mulf %34, %38 : vector<32x16x8xf32>
    %c0_16 = arith.constant 0 : index
    %c0_17 = arith.constant 0 : index
    %c0_18 = arith.constant 0 : index
    %c0_19 = arith.constant 0 : index
    %40 = vector.load %arg6[%c0_16, %c0_17, %c0_18, %c0_19] : memref<1x32x16x8xf32, #tpu.memory_space<vmem>>, vector<1x32x16x8xf32>
    %41 = vector.shape_cast %40 : vector<1x32x16x8xf32> to vector<32x16x8xf32>
    %42 = vector.shape_cast %39 : vector<32x16x8xf32> to vector<1x32x16x8xf32>
    tpu.vector_store %arg6[%c0_16, %c0_17, %c0_18, %c0_19], %42 {strides = array<i32>} : memref<1x32x16x8xf32, #tpu.memory_space<vmem>>, vector<1x32x16x8xf32>,
    return
  }
  func.func @transform_0(%arg0: i32, %arg1: i32) -> (i32, i32, i32, i32) {
    %c0_i32 = arith.constant 0 : i32
    %c0_i32_0 = arith.constant 0 : i32
    %c0_i32_1 = arith.constant 0 : i32
    return %arg0, %c0_i32, %arg1, %c0_i32_0 : i32, i32, i32, i32
  }
  func.func @transform_1(%arg0: i32, %arg1: i32) -> (i32, i32) {
    %c0_i32 = arith.constant 0 : i32
    %c0_i32_0 = arith.constant 0 : i32
    %c0_i32_1 = arith.constant 0 : i32
    return %c0_i32, %c0_i32_0 : i32, i32
  }
  func.func @transform_2(%arg0: i32, %arg1: i32) -> (i32, i32) {
    %c0_i32 = arith.constant 0 : i32
    %c0_i32_0 = arith.constant 0 : i32
    %c0_i32_1 = arith.constant 0 : i32
    return %c0_i32, %c0_i32_0 : i32, i32
  }
  func.func @transform_3(%arg0: i32, %arg1: i32) -> (i32, i32) {
    %c0_i32 = arith.constant 0 : i32
    %c0_i32_0 = arith.constant 0 : i32
    %c0_i32_1 = arith.constant 0 : i32
    return %c0_i32, %c0_i32_0 : i32, i32
  }
  func.func @transform_4(%arg0: i32, %arg1: i32) -> (i32, i32, i32, i32) {
    %c0_i32 = arith.constant 0 : i32
    %c0_i32_0 = arith.constant 0 : i32
    %c0_i32_1 = arith.constant 0 : i32
    return %arg0, %c0_i32, %arg1, %c0_i32_0 : i32, i32, i32, i32
  }
}

module attributes {stable_mosaic.version = 11 : i64} {
  func.func @_pwa_out_kernel(%arg0: i32, %arg1: i32, %arg2: memref<1x8x32x32xf32, #tpu.memory_space<vmem>>, %arg3: memref<1x1x32x256xf32, #tpu.memory_space<vmem>>, %arg4: memref<1x1x32x256xf32, #tpu.memory_space<vmem>>, %arg5: memref<256x64xf32, #tpu.memory_space<vmem>>, %arg6: memref<1x1x32x64xf32, #tpu.memory_space<vmem>>) attributes {dimension_semantics = [#tpu.dimension_semantics<parallel>, #tpu.dimension_semantics<parallel>], iteration_bounds = array<i64: 2, 8>, scalar_prefetch = 0 : i64, scratch_operands = 0 : i64, tpu.core_type = #tpu.core_type<tc>, window_params = [{transform_indices = @transform_0, window_bounds = array<i64: 1, 8, 32, 32>}, {transform_indices = @transform_1, window_bounds = array<i64: 1, 1, 32, 256>}, {transform_indices = @transform_2, window_bounds = array<i64: 1, 1, 32, 256>}, {pipeline_mode = #tpu.pipeline_mode<synchronous>, transform_indices = @transform_3, window_bounds = array<i64: 256, 64>}, {transform_indices = @transform_4, window_bounds = array<i64: 1, 1, 32, 64>}]} {
    %c0 = arith.constant 0 : index
    %c0_0 = arith.constant 0 : index
    %c0_1 = arith.constant 0 : index
    %c0_2 = arith.constant 0 : index
    %0 = vector.load %arg3[%c0, %c0_0, %c0_1, %c0_2] : memref<1x1x32x256xf32, #tpu.memory_space<vmem>>, vector<1x1x32x256xf32>
    %1 = vector.shape_cast %0 : vector<1x1x32x256xf32> to vector<32x256xf32>
    %c0_3 = arith.constant 0 : index
    %c0_4 = arith.constant 0 : index
    %c0_5 = arith.constant 0 : index
    %c0_6 = arith.constant 0 : index
    %2 = vector.load %arg2[%c0_3, %c0_4, %c0_5, %c0_6] : memref<1x8x32x32xf32, #tpu.memory_space<vmem>>, vector<1x1x32x32xf32>
    %3 = vector.shape_cast %2 : vector<1x1x32x32xf32> to vector<32x32xf32>
    %4 = vector.extract_strided_slice %1 {offsets = [0, 0], sizes = [32, 32], strides = [1, 1]} : vector<32x256xf32> to vector<32x32xf32>
    %cst = arith.constant dense<0.000000e+00> : vector<32x32xf32>
    %5 = tpu.matmul %3, %4, %cst {dimension_numbers = #tpu.dot_dimension_numbers<[1], [0], [0], [1], [0, 0, 1, 1], [], []>} : vector<32x32xf32>, vector<32x32xf32>, vector<32x32xf32> -> vector<32x32xf32>
    %c0_7 = arith.constant 0 : index
    %c1 = arith.constant 1 : index
    %c0_8 = arith.constant 0 : index
    %c0_9 = arith.constant 0 : index
    %6 = vector.load %arg2[%c0_7, %c1, %c0_8, %c0_9] : memref<1x8x32x32xf32, #tpu.memory_space<vmem>>, vector<1x1x32x32xf32>
    %7 = vector.shape_cast %6 : vector<1x1x32x32xf32> to vector<32x32xf32>
    %8 = vector.extract_strided_slice %1 {offsets = [0, 32], sizes = [32, 32], strides = [1, 1]} : vector<32x256xf32> to vector<32x32xf32>
    %cst_10 = arith.constant dense<0.000000e+00> : vector<32x32xf32>
    %9 = tpu.matmul %7, %8, %cst_10 {dimension_numbers = #tpu.dot_dimension_numbers<[1], [0], [0], [1], [0, 0, 1, 1], [], []>} : vector<32x32xf32>, vector<32x32xf32>, vector<32x32xf32> -> vector<32x32xf32>
    %c0_11 = arith.constant 0 : index
    %c2 = arith.constant 2 : index
    %c0_12 = arith.constant 0 : index
    %c0_13 = arith.constant 0 : index
    %10 = vector.load %arg2[%c0_11, %c2, %c0_12, %c0_13] : memref<1x8x32x32xf32, #tpu.memory_space<vmem>>, vector<1x1x32x32xf32>
    %11 = vector.shape_cast %10 : vector<1x1x32x32xf32> to vector<32x32xf32>
    %12 = vector.extract_strided_slice %1 {offsets = [0, 64], sizes = [32, 32], strides = [1, 1]} : vector<32x256xf32> to vector<32x32xf32>
    %cst_14 = arith.constant dense<0.000000e+00> : vector<32x32xf32>
    %13 = tpu.matmul %11, %12, %cst_14 {dimension_numbers = #tpu.dot_dimension_numbers<[1], [0], [0], [1], [0, 0, 1, 1], [], []>} : vector<32x32xf32>, vector<32x32xf32>, vector<32x32xf32> -> vector<32x32xf32>
    %c0_15 = arith.constant 0 : index
    %c3 = arith.constant 3 : index
    %c0_16 = arith.constant 0 : index
    %c0_17 = arith.constant 0 : index
    %14 = vector.load %arg2[%c0_15, %c3, %c0_16, %c0_17] : memref<1x8x32x32xf32, #tpu.memory_space<vmem>>, vector<1x1x32x32xf32>
    %15 = vector.shape_cast %14 : vector<1x1x32x32xf32> to vector<32x32xf32>
    %16 = vector.extract_strided_slice %1 {offsets = [0, 96], sizes = [32, 32], strides = [1, 1]} : vector<32x256xf32> to vector<32x32xf32>
    %cst_18 = arith.constant dense<0.000000e+00> : vector<32x32xf32>
    %17 = tpu.matmul %15, %16, %cst_18 {dimension_numbers = #tpu.dot_dimension_numbers<[1], [0], [0], [1], [0, 0, 1, 1], [], []>} : vector<32x32xf32>, vector<32x32xf32>, vector<32x32xf32> -> vector<32x32xf32>
    %c0_19 = arith.constant 0 : index
    %c4 = arith.constant 4 : index
    %c0_20 = arith.constant 0 : index
    %c0_21 = arith.constant 0 : index
    %18 = vector.load %arg2[%c0_19, %c4, %c0_20, %c0_21] : memref<1x8x32x32xf32, #tpu.memory_space<vmem>>, vector<1x1x32x32xf32>
    %19 = vector.shape_cast %18 : vector<1x1x32x32xf32> to vector<32x32xf32>
    %20 = vector.extract_strided_slice %1 {offsets = [0, 128], sizes = [32, 32], strides = [1, 1]} : vector<32x256xf32> to vector<32x32xf32>
    %cst_22 = arith.constant dense<0.000000e+00> : vector<32x32xf32>
    %21 = tpu.matmul %19, %20, %cst_22 {dimension_numbers = #tpu.dot_dimension_numbers<[1], [0], [0], [1], [0, 0, 1, 1], [], []>} : vector<32x32xf32>, vector<32x32xf32>, vector<32x32xf32> -> vector<32x32xf32>
    %c0_23 = arith.constant 0 : index
    %c5 = arith.constant 5 : index
    %c0_24 = arith.constant 0 : index
    %c0_25 = arith.constant 0 : index
    %22 = vector.load %arg2[%c0_23, %c5, %c0_24, %c0_25] : memref<1x8x32x32xf32, #tpu.memory_space<vmem>>, vector<1x1x32x32xf32>
    %23 = vector.shape_cast %22 : vector<1x1x32x32xf32> to vector<32x32xf32>
    %24 = vector.extract_strided_slice %1 {offsets = [0, 160], sizes = [32, 32], strides = [1, 1]} : vector<32x256xf32> to vector<32x32xf32>
    %cst_26 = arith.constant dense<0.000000e+00> : vector<32x32xf32>
    %25 = tpu.matmul %23, %24, %cst_26 {dimension_numbers = #tpu.dot_dimension_numbers<[1], [0], [0], [1], [0, 0, 1, 1], [], []>} : vector<32x32xf32>, vector<32x32xf32>, vector<32x32xf32> -> vector<32x32xf32>
    %c0_27 = arith.constant 0 : index
    %c6 = arith.constant 6 : index
    %c0_28 = arith.constant 0 : index
    %c0_29 = arith.constant 0 : index
    %26 = vector.load %arg2[%c0_27, %c6, %c0_28, %c0_29] : memref<1x8x32x32xf32, #tpu.memory_space<vmem>>, vector<1x1x32x32xf32>
    %27 = vector.shape_cast %26 : vector<1x1x32x32xf32> to vector<32x32xf32>
    %28 = vector.extract_strided_slice %1 {offsets = [0, 192], sizes = [32, 32], strides = [1, 1]} : vector<32x256xf32> to vector<32x32xf32>
    %cst_30 = arith.constant dense<0.000000e+00> : vector<32x32xf32>
    %29 = tpu.matmul %27, %28, %cst_30 {dimension_numbers = #tpu.dot_dimension_numbers<[1], [0], [0], [1], [0, 0, 1, 1], [], []>} : vector<32x32xf32>, vector<32x32xf32>, vector<32x32xf32> -> vector<32x32xf32>
    %c0_31 = arith.constant 0 : index
    %c7 = arith.constant 7 : index
    %c0_32 = arith.constant 0 : index
    %c0_33 = arith.constant 0 : index
    %30 = vector.load %arg2[%c0_31, %c7, %c0_32, %c0_33] : memref<1x8x32x32xf32, #tpu.memory_space<vmem>>, vector<1x1x32x32xf32>
    %31 = vector.shape_cast %30 : vector<1x1x32x32xf32> to vector<32x32xf32>
    %32 = vector.extract_strided_slice %1 {offsets = [0, 224], sizes = [32, 32], strides = [1, 1]} : vector<32x256xf32> to vector<32x32xf32>
    %cst_34 = arith.constant dense<0.000000e+00> : vector<32x32xf32>
    %33 = tpu.matmul %31, %32, %cst_34 {dimension_numbers = #tpu.dot_dimension_numbers<[1], [0], [0], [1], [0, 0, 1, 1], [], []>} : vector<32x32xf32>, vector<32x32xf32>, vector<32x32xf32> -> vector<32x32xf32>
    %34 = tpu.concatenate %5, %9, %13, %17, %21, %25, %29, %33 in 1 : vector<32x32xf32>, vector<32x32xf32>, vector<32x32xf32>, vector<32x32xf32>, vector<32x32xf32>, vector<32x32xf32>, vector<32x32xf32>, vector<32x32xf32> -> vector<32x256xf32>
    %c0_35 = arith.constant 0 : index
    %c0_36 = arith.constant 0 : index
    %c0_37 = arith.constant 0 : index
    %c0_38 = arith.constant 0 : index
    %35 = vector.load %arg4[%c0_35, %c0_36, %c0_37, %c0_38] : memref<1x1x32x256xf32, #tpu.memory_space<vmem>>, vector<1x1x32x256xf32>
    %36 = vector.shape_cast %35 : vector<1x1x32x256xf32> to vector<32x256xf32>
    %37 = arith.mulf %36, %34 : vector<32x256xf32>
    %c0_39 = arith.constant 0 : index
    %c0_40 = arith.constant 0 : index
    %38 = vector.load %arg5[%c0_39, %c0_40] : memref<256x64xf32, #tpu.memory_space<vmem>>, vector<256x64xf32>
    %cst_41 = arith.constant dense<0.000000e+00> : vector<32x64xf32>
    %39 = tpu.matmul %37, %38, %cst_41 {dimension_numbers = #tpu.dot_dimension_numbers<[1], [0], [0], [1], [0, 0, 1, 1], [], []>} : vector<32x256xf32>, vector<256x64xf32>, vector<32x64xf32> -> vector<32x64xf32>
    %c0_42 = arith.constant 0 : index
    %c0_43 = arith.constant 0 : index
    %c0_44 = arith.constant 0 : index
    %c0_45 = arith.constant 0 : index
    %40 = vector.load %arg6[%c0_42, %c0_43, %c0_44, %c0_45] : memref<1x1x32x64xf32, #tpu.memory_space<vmem>>, vector<1x1x32x64xf32>
    %41 = vector.shape_cast %40 : vector<1x1x32x64xf32> to vector<32x64xf32>
    %42 = vector.shape_cast %39 : vector<32x64xf32> to vector<1x1x32x64xf32>
    tpu.vector_store %arg6[%c0_42, %c0_43, %c0_44, %c0_45], %42 {strides = array<i32>} : memref<1x1x32x64xf32, #tpu.memory_space<vmem>>, vector<1x1x32x64xf32>,
    return
  }
  func.func @transform_0(%arg0: i32, %arg1: i32) -> (i32, i32, i32, i32) {
    %c0_i32 = arith.constant 0 : i32
    %c0_i32_0 = arith.constant 0 : i32
    %c0_i32_1 = arith.constant 0 : i32
    %c0_i32_2 = arith.constant 0 : i32
    return %arg0, %c0_i32, %c0_i32_0, %c0_i32_1 : i32, i32, i32, i32
  }
  func.func @transform_1(%arg0: i32, %arg1: i32) -> (i32, i32, i32, i32) {
    %c0_i32 = arith.constant 0 : i32
    %c0_i32_0 = arith.constant 0 : i32
    %c0_i32_1 = arith.constant 0 : i32
    return %arg0, %arg1, %c0_i32, %c0_i32_0 : i32, i32, i32, i32
  }
  func.func @transform_2(%arg0: i32, %arg1: i32) -> (i32, i32, i32, i32) {
    %c0_i32 = arith.constant 0 : i32
    %c0_i32_0 = arith.constant 0 : i32
    %c0_i32_1 = arith.constant 0 : i32
    return %arg0, %arg1, %c0_i32, %c0_i32_0 : i32, i32, i32, i32
  }
  func.func @transform_3(%arg0: i32, %arg1: i32) -> (i32, i32) {
    %c0_i32 = arith.constant 0 : i32
    %c0_i32_0 = arith.constant 0 : i32
    %c0_i32_1 = arith.constant 0 : i32
    return %c0_i32, %c0_i32_0 : i32, i32
  }
  func.func @transform_4(%arg0: i32, %arg1: i32) -> (i32, i32, i32, i32) {
    %c0_i32 = arith.constant 0 : i32
    %c0_i32_0 = arith.constant 0 : i32
    %c0_i32_1 = arith.constant 0 : i32
    return %arg0, %arg1, %c0_i32, %c0_i32_0 : i32, i32, i32, i32
  }
}

</mosaic_0001>

<llo_original>
// kernel: msa_pair_weighted_averaging.5
$region0: #{msa_pair_weighted_averaging.5}
  #allocation0 [shape = 'u32[]', space=smem, size = 0x4, offset = 0x4, fixed_abs, tag = 'smem constant byte address 0x4 - core index']
  #allocation1 [shape = 'u32[72,128]{1,0:T(1,128)}', space=vmem, size = 0x9000, scoped, tag = 'internal scratch']
  %s0 = inlined_call_operand.vmem [shape: f32[2,8,32,32], index: 0, kind: input, shape index: {}]
  %s1 = inlined_call_operand.vmem [shape: f32[2,8,32,256], index: 1, kind: input, shape index: {}]
  %s2 = inlined_call_operand.vmem [shape: f32[2,8,32,256], index: 2, kind: input, shape index: {}]
  %s3 = inlined_call_operand.vmem [shape: f32[256,64], index: 3, kind: input, shape index: {}]
  %s4 = inlined_call_operand.hbm [shape: f32[2,8,32,64], index: 4, kind: output, shape index: {}]
  %s5 = sld [smem:[#allocation0]]
  $region49: #{msa_pair_weighted_averaging.5} parent=0
    _
  %s7 = ssub.s32 1, %s5
  %s8 = scalar_select 0, %s7, %s5
  $region1: #{msa_pair_weighted_averaging.5} parent=0
    #allocation2 [shape = 'u8[32768]{0}', space=vmem, size = 0x8000, scoped, tag = 'output window, operand 0']
    #allocation3 [shape = 's32[2]{0}', space=sflag, size = 0x8, scoped, tag = 'scoped memory for msa_pair_weighted_averaging.5']
    %9 = vsyncpa [#allocation3], 0
    %s10 = scalar_lea.sflag [#allocation3], 1
    %11 = vsyncpa %s10, 0
    loop: start=0, step=1, limit=18
    $region2: #{msa_pair_weighted_averaging.5} parent=1 // loop_pre_header
      _
    $region3: #{msa_pair_weighted_averaging.5} parent=1 // loop_header
      %s13 = sphi 0, %s17
      %p14 = scmp.ge.s32.totalorder %s13, 18
      %s20 = sphi 0, %s32
      %s21 = sphi 0, %s28
      %s22 = sphi 0, %s20
      %s23 = sphi 0, %s21
      %s24 = sphi 0, %s22
      %s25 = sphi 0, %s23
      %s35 = sphi 0, %s37
      %s38 = sphi 0, %s35
      %s39 = sphi 0, %s38
      %s55 = sphi 0, %s39
      %s63 = sphi 0, %s65
      %s66 = sphi 0, %s63
      %s67 = sphi 0, %s66
      %s83 = sphi 0, %s67
      %s91 = sphi 0, %s93
      %s94 = sphi 0, %s91
      %s95 = sphi 0, %s94
      %s111 = sphi 0, %s95
      %s115 = sphi 0, %s115
      %s117 = sphi 0, %s115
      %s118 = sphi 0, %s117
      %s132 = sphi 0, %s118
      %s140 = sphi 0, %s142
      %s143 = sphi 0, %s140
      %s144 = sphi 0, %s143
      %s160 = sphi 0, %s144
    $region4: #{msa_pair_weighted_averaging.5} parent=1 // loop_header_branch
      %16 = sbr.rel (%p14) target = $region8
    $region5: #{msa_pair_weighted_averaging.5} parent=1 // loop_body
      %s18 = ssub.s32 %s13, 1
      %s19 = ssub.s32 %s13, 2
      %s26 = sadd.s32 1, %s21
      %p27 = scmp.ge.s32.totalorder %s26, 8
      %s28 = scalar_select %p27, 0, %s26
      %s29 = sadd.s32 1, %s20
      %s30 = scalar_select %p27, %s29, %s20
      %p31 = scmp.ge.s32.totalorder %s30, 2
      %s32 = scalar_select %p31, 0, %s30
      %s33 = ssub.s32 %s20, %s32
      %p34 = scmp.eq.s32.totalorder %s33, 0
      %s36 = sadd.s32 %s35, 1
      %s37 = scalar_select %p34, %s35, %s36
      %p40 = pneg %p34
      %p41 = scmp.eq.s32.totalorder %s13, 15
      %p42 = por %p40, %p41
      %p43 = scmp.ne.s32.totalorder %s35, %s38
      %p44 = scmp.eq.s32.totalorder %s13, 0
      %p45 = por %p43, %p44
      %p46 = scmp.ne.s32.totalorder %s35, %s38
      %p47 = scmp.eq.s32.totalorder %s18, 15
      %p48 = por %p46, %p47
      %p49 = scmp.ne.s32.totalorder %s38, %s39
      %p50 = scmp.eq.s32.totalorder %s18, 0
      %p51 = por %p49, %p50
      %p52 = scmp.ne.s32.totalorder %s38, %s39
      %p53 = scmp.eq.s32.totalorder %s19, 15
      %p54 = por %p52, %p53
      %p56 = scmp.ne.s32.totalorder %s39, %s55
      %p57 = scmp.eq.s32.totalorder %s19, 0
      %p58 = por %p56, %p57
      %s59 = ssub.s32 %s20, %s32
      %s60 = ssub.s32 %s21, %s28
      %s61 = sor.u32 %s59, %s60
      %p62 = scmp.eq.s32.totalorder %s61, 0
      %s64 = sadd.s32 %s63, 1
      %s65 = scalar_select %p62, %s63, %s64
      %p68 = pneg %p62
      %p69 = scmp.eq.s32.totalorder %s13, 15
      %p70 = por %p68, %p69
      %p71 = scmp.ne.s32.totalorder %s63, %s66
      %p72 = scmp.eq.s32.totalorder %s13, 0
      %p73 = por %p71, %p72
      %p74 = scmp.ne.s32.totalorder %s63, %s66
      %p75 = scmp.eq.s32.totalorder %s18, 15
      %p76 = por %p74, %p75
      %p77 = scmp.ne.s32.totalorder %s66, %s67
      %p78 = scmp.eq.s32.totalorder %s18, 0
      %p79 = por %p77, %p78
      %p80 = scmp.ne.s32.totalorder %s66, %s67
      %p81 = scmp.eq.s32.totalorder %s19, 15
      %p82 = por %p80, %p81
      %p84 = scmp.ne.s32.totalorder %s67, %s83
      %p85 = scmp.eq.s32.totalorder %s19, 0
      %p86 = por %p84, %p85
      %s87 = ssub.s32 %s20, %s32
      %s88 = ssub.s32 %s21, %s28
      %s89 = sor.u32 %s87, %s88
      %p90 = scmp.eq.s32.totalorder %s89, 0
      %s92 = sadd.s32 %s91, 1
      %s93 = scalar_select %p90, %s91, %s92
      %p96 = pneg %p90
      %p97 = scmp.eq.s32.totalorder %s13, 15
      %p98 = por %p96, %p97
      %p99 = scmp.ne.s32.totalorder %s91, %s94
      %p100 = scmp.eq.s32.totalorder %s13, 0
      %p101 = por %p99, %p100
      %p102 = scmp.ne.s32.totalorder %s91, %s94
      %p103 = scmp.eq.s32.totalorder %s18, 15
      %p104 = por %p102, %p103
      %p105 = scmp.ne.s32.totalorder %s94, %s95
      %p106 = scmp.eq.s32.totalorder %s18, 0
      %p107 = por %p105, %p106
      %p108 = scmp.ne.s32.totalorder %s94, %s95
      %p109 = scmp.eq.s32.totalorder %s19, 15
      %p110 = por %p108, %p109
      %p112 = scmp.ne.s32.totalorder %s95, %s111
      %p113 = scmp.eq.s32.totalorder %s19, 0
      %p114 = por %p112, %p113
      %s116 = sadd.s32 %s115, 1
      %p119 = scmp.eq.s32.totalorder %s13, 15
      %p120 = scmp.ne.s32.totalorder %s115, %s117
      %p121 = scmp.eq.s32.totalorder %s13, 0
      %p122 = por %p120, %p121
      %p123 = scmp.ne.s32.totalorder %s115, %s117
      %p124 = scmp.eq.s32.totalorder %s18, 15
      %p125 = por %p123, %p124
      %p126 = scmp.ne.s32.totalorder %s117, %s118
      %p127 = scmp.eq.s32.totalorder %s18, 0
      %p128 = por %p126, %p127
      %p129 = scmp.ne.s32.totalorder %s117, %s118
      %p130 = scmp.eq.s32.totalorder %s19, 15
      %p131 = por %p129, %p130
      %p133 = scmp.ne.s32.totalorder %s118, %s132
      %p134 = scmp.eq.s32.totalorder %s19, 0
      %p135 = por %p133, %p134
      %s136 = ssub.s32 %s20, %s32
      %s137 = ssub.s32 %s21, %s28
      %s138 = sor.u32 %s136, %s137
      %p139 = scmp.eq.s32.totalorder %s138, 0
      %s141 = sadd.s32 %s140, 1
      %s142 = scalar_select %p139, %s140, %s141
      %p145 = pneg %p139
      %p146 = scmp.eq.s32.totalorder %s13, 15
      %p147 = por %p145, %p146
      %p148 = scmp.ne.s32.totalorder %s140, %s143
      %p149 = scmp.eq.s32.totalorder %s13, 0
      %p150 = por %p148, %p149
      %p151 = scmp.ne.s32.totalorder %s140, %s143
      %p152 = scmp.eq.s32.totalorder %s18, 15
      %p153 = por %p151, %p152
      %p154 = scmp.ne.s32.totalorder %s143, %s144
      %p155 = scmp.eq.s32.totalorder %s18, 0
      %p156 = por %p154, %p155
      %p157 = scmp.ne.s32.totalorder %s143, %s144
      %p158 = scmp.eq.s32.totalorder %s19, 15
      %p159 = por %p157, %p158
      %p161 = scmp.ne.s32.totalorder %s144, %s160
      %p162 = scmp.eq.s32.totalorder %s19, 0
      %p163 = por %p161, %p162
      %p164 = scmp.le.s32.totalorder 1, %s13
      %p165 = scmp.lt.s32.totalorder %s13, 17
      %p166 = pnand %p164, %p165
      %p167 = pneg %p166
      // Predicated region
      $region9: #{msa_pair_weighted_averaging.5} parent=5 // pred_check
        _
      $region10: #{msa_pair_weighted_averaging.5} parent=5 // pred_check_branch
        %169 = sbr.rel (%p166) target = $region12
      $region11: #{msa_pair_weighted_averaging.5} parent=5 // pred_region
        %s170 = ssub.s32 %s13, 1
        // Predicated region
        $region13: #{msa_pair_weighted_averaging.5} parent=11 // pred_check
          %p171 = pneg %p128
        $region14: #{msa_pair_weighted_averaging.5} parent=11 // pred_check_branch
          %173 = sbr.rel (%p171) target = $region16
        $region15: #{msa_pair_weighted_averaging.5} parent=11 // pred_region
          _
        $region16: #{msa_pair_weighted_averaging.5} parent=11 // pred_fallthru
          _
      $region12: #{msa_pair_weighted_averaging.5} parent=5 // pred_fallthru
        _
      %p174 = scmp.lt.s32.totalorder %s13, 16
      // Predicated region
      $region17: #{msa_pair_weighted_averaging.5} parent=5 // pred_check
        %p175 = pneg %p174
      $region18: #{msa_pair_weighted_averaging.5} parent=5 // pred_check_branch
        %177 = sbr.rel (%p175) target = $region20
      $region19: #{msa_pair_weighted_averaging.5} parent=5 // pred_region
        // Predicated region
        $region21: #{msa_pair_weighted_averaging.5} parent=19 // pred_check
          %p178 = pneg %p45
        $region22: #{msa_pair_weighted_averaging.5} parent=19 // pred_check_branch
          %180 = sbr.rel (%p178) target = $region24
        $region23: #{msa_pair_weighted_averaging.5} parent=19 // pred_region
          %p181 = scmp.lt.s32.totalorder %s20, 1
          %s182 = scalar_select %p181, %s20, 1
          %s183 = smul.addr %s182, 32
          %s184 = smul.addr %s183, 8
          %s185 = scalar_lea.vmem %s0, %s184
        $region24: #{msa_pair_weighted_averaging.5} parent=19 // pred_fallthru
          _
        // Predicated region
        $region25: #{msa_pair_weighted_averaging.5} parent=19 // pred_check
          %p186 = pneg %p73
        $region26: #{msa_pair_weighted_averaging.5} parent=19 // pred_check_branch
          %188 = sbr.rel (%p186) target = $region28
        $region27: #{msa_pair_weighted_averaging.5} parent=19 // pred_region
          %p189 = scmp.lt.s32.totalorder %s20, 1
          %s190 = scalar_select %p189, %s20, 1
          %p191 = scmp.lt.s32.totalorder %s21, 7
          %s192 = scalar_select %p191, %s21, 7
          %s193 = smul.addr %s192, 8
          %s194 = smul.addr %s190, 64
          %s195 = sadd.s32 %s193, %s194
          %s196 = smul.addr %s195, 8
          %s197 = scalar_lea.vmem %s1, %s196
        $region28: #{msa_pair_weighted_averaging.5} parent=19 // pred_fallthru
          _
        // Predicated region
        $region29: #{msa_pair_weighted_averaging.5} parent=19 // pred_check
          %p198 = pneg %p101
        $region30: #{msa_pair_weighted_averaging.5} parent=19 // pred_check_branch
          %200 = sbr.rel (%p198) target = $region32
        $region31: #{msa_pair_weighted_averaging.5} parent=19 // pred_region
          %p201 = scmp.lt.s32.totalorder %s20, 1
          %s202 = scalar_select %p201, %s20, 1
          %p203 = scmp.lt.s32.totalorder %s21, 7
          %s204 = scalar_select %p203, %s21, 7
          %s205 = smul.addr %s204, 8
          %s206 = smul.addr %s202, 64
          %s207 = sadd.s32 %s205, %s206
          %s208 = smul.addr %s207, 8
          %s209 = scalar_lea.vmem %s2, %s208
        $region32: #{msa_pair_weighted_averaging.5} parent=19 // pred_fallthru
          _
      $region20: #{msa_pair_weighted_averaging.5} parent=5 // pred_fallthru
        _
      %p210 = scmp.le.s32.totalorder 1, %s13
      %p211 = scmp.lt.s32.totalorder %s13, 17
      %p212 = pnand %p210, %p211
      %p213 = pneg %p212
      // Predicated region
      $region33: #{msa_pair_weighted_averaging.5} parent=5 // pred_check
        _
      $region34: #{msa_pair_weighted_averaging.5} parent=5 // pred_check_branch
        %215 = sbr.rel (%p212) target = $region36
      $region35: #{msa_pair_weighted_averaging.5} parent=5 // pred_region
        %s216 = ssub.s32 %s13, 1
        %p217 = scmp.lt.s32.totalorder %s22, 1
        %s218 = scalar_select %p217, %s22, 1
        %s219 = smul.addr %s218, 32
        %s220 = smul.addr %s219, 8
        %s221 = scalar_lea.vmem %s0, %s220
        %p222 = pneg %p51
        %p223 = pneg %p48
        %p224 = scmp.lt.s32.totalorder %s22, 1
        %s225 = scalar_select %p224, %s22, 1
        %p226 = scmp.lt.s32.totalorder %s23, 7
        %s227 = scalar_select %p226, %s23, 7
        %s228 = smul.addr %s227, 8
        %s229 = smul.addr %s225, 64
        %s230 = sadd.s32 %s228, %s229
        %s231 = smul.addr %s230, 8
        %s232 = scalar_lea.vmem %s1, %s231
        %p233 = pneg %p79
        %p234 = pneg %p76
        %p235 = scmp.lt.s32.totalorder %s22, 1
        %s236 = scalar_select %p235, %s22, 1
        %p237 = scmp.lt.s32.totalorder %s23, 7
        %s238 = scalar_select %p237, %s23, 7
        %s239 = smul.addr %s238, 8
        %s240 = smul.addr %s236, 64
        %s241 = sadd.s32 %s239, %s240
        %s242 = smul.addr %s241, 8
        %s243 = scalar_lea.vmem %s2, %s242
        %p244 = pneg %p107
        %p245 = pneg %p104
        %p246 = pneg %p128
        %p247 = pneg %p125
        %p248 = pneg %p156
        %p249 = pneg %p153
        %s250 = sand.u32 %s143, 1
        %s251 = scalar_lea.sflag [#allocation3], %s250
        %s252 = sand.u32 %s143, 1
        %s253 = smul.addr %s252, 32
        %s254 = scalar_lea.vmem [#allocation2], %s253
        %p255 = scmp.lt.s32.totalorder %s22, 1
        %s256 = scalar_select %p255, %s22, 1
        %s257 = smul.addr %s256, 32
        %s258 = smul.addr %s257, 8
        %s259 = scalar_lea.vmem %s0, %s258
        %p260 = scmp.lt.s32.totalorder %s22, 1
        %s261 = scalar_select %p260, %s22, 1
        %p262 = scmp.lt.s32.totalorder %s23, 7
        %s263 = scalar_select %p262, %s23, 7
        %s264 = smul.addr %s263, 8
        %s265 = smul.addr %s261, 64
        %s266 = sadd.s32 %s264, %s265
        %s267 = smul.addr %s266, 8
        %s268 = scalar_lea.vmem %s1, %s267
        %p269 = scmp.lt.s32.totalorder %s22, 1
        %s270 = scalar_select %p269, %s22, 1
        %p271 = scmp.lt.s32.totalorder %s23, 7
        %s272 = scalar_select %p271, %s23, 7
        %s273 = smul.addr %s272, 8
        %s274 = smul.addr %s270, 64
        %s275 = sadd.s32 %s273, %s274
        %s276 = smul.addr %s275, 8
        %s277 = scalar_lea.vmem %s2, %s276
        %v278 = vld [vmem:[%s268] sm:$0xff]
        %v279 = vld [vmem:[%s268 + $0x8] sm:$0xff]
        %v280 = vld [vmem:[%s268 + $0x10] sm:$0xff]
        %v281 = vld [vmem:[%s268 + $0x18] sm:$0xff]
        %v282 = vld [vmem:[%s268 + $0x20] sm:$0xff]
        %v283 = vld [vmem:[%s268 + $0x28] sm:$0xff]
        %v284 = vld [vmem:[%s268 + $0x30] sm:$0xff]
        %v285 = vld [vmem:[%s268 + $0x38] sm:$0xff]
        %v286 = vld [vmem:[%s259] sm:$0xff]
        %v287 = vld [vmem:[%s259 + $0x8] sm:$0xff]
        %v288 = vld [vmem:[%s259 + $0x10] sm:$0xff]
        %v289 = vld [vmem:[%s259 + $0x18] sm:$0xff]
        %vm290 = vcmask 261120
        %v292 = vsel %vm290, %v286, 0
        %v295 = vsel %vm290, %v287, 0
        %v298 = vsel %vm290, %v288, 0
        %v301 = vsel %vm290, %v289, 0
        %303 = vmatpush.msra.mxu0 0.0
        %304 = vmatpush.msra.mxu0 0.0
        %305 = vmatpush.msra.mxu0 0.0
        %306 = vmatpush.msra.mxu0 0.0
        %307 = vmatpush.msra.mxu0 0.0
        %308 = vmatpush.msra.mxu0 0.0
        %309 = vmatpush.msra.mxu0 0.0
        %310 = vmatpush.msra.mxu0 0.0
        %311 = vmatpush.msra.mxu0 0.0
        %312 = vmatpush.msra.mxu0 0.0
        %313 = vmatpush.msra.mxu0 0.0
        %314 = vmatpush.msra.mxu0 0.0
        %315 = vmatpush.msra.mxu0 %v284
        %316 = vmatpush.msra.mxu0 %v282
        %317 = vmatpush.msra.mxu0 %v280
        %318 = vmatpush.msra.mxu0 %v278
        %319 = vmatmul.f32.gmra.mxu0 %v292
        %v320 = vpop.f32.mrf.mxu0
        %v321 = vadd.f32 0.0, %v320
        %322 = vmatmul.f32.gmra.mxu0 %v295
        %v323 = vpop.f32.mrf.mxu0
        %v324 = vadd.f32 0.0, %v323
        %325 = vmatmul.f32.gmra.mxu0 %v298
        %v326 = vpop.f32.mrf.mxu0
        %v327 = vadd.f32 0.0, %v326
        %328 = vmatmul.f32.gmra.mxu0 %v301
        %v329 = vpop.f32.mrf.mxu0
        %v330 = vadd.f32 0.0, %v329
        %331 = vdwg.mxu0
        %s332 = scalar_lea.vmem %s259, 32
        %v333 = vld [vmem:[%s332] sm:$0xff]
        %v334 = vld [vmem:[%s332 + $0x8] sm:$0xff]
        %v335 = vld [vmem:[%s332 + $0x10] sm:$0xff]
        %v336 = vld [vmem:[%s332 + $0x18] sm:$0xff]
        %341 = vrot.lane.b32.xlu0 %v278, 96
        %v342 = vpop.permute.xlu0 %341
        %343 = vrot.lane.b32.xlu0 %v280, 96
        %v344 = vpop.permute.xlu0 %343
        %345 = vrot.lane.b32.xlu0 %v282, 96
        %v346 = vpop.permute.xlu0 %345
        %347 = vrot.lane.b32.xlu0 %v284, 96
        %v348 = vpop.permute.xlu0 %347
        %v354 = vsel %vm290, %v333, 0
        %v357 = vsel %vm290, %v334, 0
        %v360 = vsel %vm290, %v335, 0
        %v363 = vsel %vm290, %v336, 0
        %365 = vmatpush.msra.mxu0 0.0
        %366 = vmatpush.msra.mxu0 0.0
        %367 = vmatpush.msra.mxu0 0.0
        %368 = vmatpush.msra.mxu0 0.0
        %369 = vmatpush.msra.mxu0 0.0
        %370 = vmatpush.msra.mxu0 0.0
        %371 = vmatpush.msra.mxu0 0.0
        %372 = vmatpush.msra.mxu0 0.0
        %373 = vmatpush.msra.mxu0 0.0
        %374 = vmatpush.msra.mxu0 0.0
        %375 = vmatpush.msra.mxu0 0.0
        %376 = vmatpush.msra.mxu0 0.0
        %377 = vmatpush.msra.mxu0 %v348
        %378 = vmatpush.msra.mxu0 %v346
        %379 = vmatpush.msra.mxu0 %v344
        %380 = vmatpush.msra.mxu0 %v342
        %381 = vmatmul.f32.gmra.mxu0 %v354
        %v382 = vpop.f32.mrf.mxu0
        %v383 = vadd.f32 0.0, %v382
        %384 = vmatmul.f32.gmra.mxu0 %v357
        %v385 = vpop.f32.mrf.mxu0
        %v386 = vadd.f32 0.0, %v385
        %387 = vmatmul.f32.gmra.mxu0 %v360
        %v388 = vpop.f32.mrf.mxu0
        %v389 = vadd.f32 0.0, %v388
        %390 = vmatmul.f32.gmra.mxu0 %v363
        %v391 = vpop.f32.mrf.mxu0
        %v392 = vadd.f32 0.0, %v391
        %393 = vdwg.mxu0
        %s394 = scalar_lea.vmem %s259, 64
        %v395 = vld [vmem:[%s394] sm:$0xff]
        %v396 = vld [vmem:[%s394 + $0x8] sm:$0xff]
        %v397 = vld [vmem:[%s394 + $0x10] sm:$0xff]
        %v398 = vld [vmem:[%s394 + $0x18] sm:$0xff]
        %399 = vrot.lane.b32.xlu0 %v278, 64
        %v400 = vpop.permute.xlu0 %399
        %401 = vrot.lane.b32.xlu0 %v280, 64
        %v402 = vpop.permute.xlu0 %401
        %403 = vrot.lane.b32.xlu0 %v282, 64
        %v404 = vpop.permute.xlu0 %403
        %405 = vrot.lane.b32.xlu0 %v284, 64
        %v406 = vpop.permute.xlu0 %405
        %v412 = vsel %vm290, %v395, 0
        %v415 = vsel %vm290, %v396, 0
        %v418 = vsel %vm290, %v397, 0
        %v421 = vsel %vm290, %v398, 0
        %423 = vmatpush.msra.mxu0 0.0
        %424 = vmatpush.msra.mxu0 0.0
        %425 = vmatpush.msra.mxu0 0.0
        %426 = vmatpush.msra.mxu0 0.0
        %427 = vmatpush.msra.mxu0 0.0
        %428 = vmatpush.msra.mxu0 0.0
        %429 = vmatpush.msra.mxu0 0.0
        %430 = vmatpush.msra.mxu0 0.0
        %431 = vmatpush.msra.mxu0 0.0
        %432 = vmatpush.msra.mxu0 0.0
        %433 = vmatpush.msra.mxu0 0.0
        %434 = vmatpush.msra.mxu0 0.0
        %435 = vmatpush.msra.mxu0 %v406
        %436 = vmatpush.msra.mxu0 %v404
        %437 = vmatpush.msra.mxu0 %v402
        %438 = vmatpush.msra.mxu0 %v400
        %439 = vmatmul.f32.gmra.mxu0 %v412
        %v440 = vpop.f32.mrf.mxu0
        %v441 = vadd.f32 0.0, %v440
        %442 = vmatmul.f32.gmra.mxu0 %v415
        %v443 = vpop.f32.mrf.mxu0
        %v444 = vadd.f32 0.0, %v443
        %445 = vmatmul.f32.gmra.mxu0 %v418
        %v446 = vpop.f32.mrf.mxu0
        %v447 = vadd.f32 0.0, %v446
        %448 = vmatmul.f32.gmra.mxu0 %v421
        %v449 = vpop.f32.mrf.mxu0
        %v450 = vadd.f32 0.0, %v449
        %451 = vdwg.mxu0
        %s452 = scalar_lea.vmem %s259, 96
        %v453 = vld [vmem:[%s452] sm:$0xff]
        %v454 = vld [vmem:[%s452 + $0x8] sm:$0xff]
        %v455 = vld [vmem:[%s452 + $0x10] sm:$0xff]
        %v456 = vld [vmem:[%s452 + $0x18] sm:$0xff]
        %457 = vrot.lane.b32.xlu0 %v278, 32
        %v458 = vpop.permute.xlu0 %457
        %459 = vrot.lane.b32.xlu0 %v280, 32
        %v460 = vpop.permute.xlu0 %459
        %461 = vrot.lane.b32.xlu0 %v282, 32
        %v462 = vpop.permute.xlu0 %461
        %463 = vrot.lane.b32.xlu0 %v284, 32
        %v464 = vpop.permute.xlu0 %463
        %v470 = vsel %vm290, %v453, 0
        %v473 = vsel %vm290, %v454, 0
        %v476 = vsel %vm290, %v455, 0
        %v479 = vsel %vm290, %v456, 0
        %481 = vmatpush.msra.mxu0 0.0
        %482 = vmatpush.msra.mxu0 0.0
        %483 = vmatpush.msra.mxu0 0.0
        %484 = vmatpush.msra.mxu0 0.0
        %485 = vmatpush.msra.mxu0 0.0
        %486 = vmatpush.msra.mxu0 0.0
        %487 = vmatpush.msra.mxu0 0.0
        %488 = vmatpush.msra.mxu0 0.0
        %489 = vmatpush.msra.mxu0 0.0
        %490 = vmatpush.msra.mxu0 0.0
        %491 = vmatpush.msra.mxu0 0.0
        %492 = vmatpush.msra.mxu0 0.0
        %493 = vmatpush.msra.mxu0 %v464
        %494 = vmatpush.msra.mxu0 %v462
        %495 = vmatpush.msra.mxu0 %v460
        %496 = vmatpush.msra.mxu0 %v458
        %497 = vmatmul.f32.gmra.mxu0 %v470
        %v498 = vpop.f32.mrf.mxu0
        %v499 = vadd.f32 0.0, %v498
        %500 = vmatmul.f32.gmra.mxu0 %v473
        %v501 = vpop.f32.mrf.mxu0
        %v502 = vadd.f32 0.0, %v501
        %503 = vmatmul.f32.gmra.mxu0 %v476
        %v504 = vpop.f32.mrf.mxu0
        %v505 = vadd.f32 0.0, %v504
        %506 = vmatmul.f32.gmra.mxu0 %v479
        %v507 = vpop.f32.mrf.mxu0
        %v508 = vadd.f32 0.0, %v507
        %509 = vdwg.mxu0
        %s510 = scalar_lea.vmem %s259, 128
        %v511 = vld [vmem:[%s510] sm:$0xff]
        %v512 = vld [vmem:[%s510 + $0x8] sm:$0xff]
        %v513 = vld [vmem:[%s510 + $0x10] sm:$0xff]
        %v514 = vld [vmem:[%s510 + $0x18] sm:$0xff]
        %v516 = vsel %vm290, %v511, 0
        %v519 = vsel %vm290, %v512, 0
        %v522 = vsel %vm290, %v513, 0
        %v525 = vsel %vm290, %v514, 0
        %527 = vmatpush.msra.mxu0 0.0
        %528 = vmatpush.msra.mxu0 0.0
        %529 = vmatpush.msra.mxu0 0.0
        %530 = vmatpush.msra.mxu0 0.0
        %531 = vmatpush.msra.mxu0 0.0
        %532 = vmatpush.msra.mxu0 0.0
        %533 = vmatpush.msra.mxu0 0.0
        %534 = vmatpush.msra.mxu0 0.0
        %535 = vmatpush.msra.mxu0 0.0
        %536 = vmatpush.msra.mxu0 0.0
        %537 = vmatpush.msra.mxu0 0.0
        %538 = vmatpush.msra.mxu0 0.0
        %539 = vmatpush.msra.mxu0 %v285
        %540 = vmatpush.msra.mxu0 %v283
        %541 = vmatpush.msra.mxu0 %v281
        %542 = vmatpush.msra.mxu0 %v279
        %543 = vmatmul.f32.gmra.mxu0 %v516
        %v544 = vpop.f32.mrf.mxu0
        %v545 = vadd.f32 0.0, %v544
        %546 = vmatmul.f32.gmra.mxu0 %v519
        %v547 = vpop.f32.mrf.mxu0
        %v548 = vadd.f32 0.0, %v547
        %549 = vmatmul.f32.gmra.mxu0 %v522
        %v550 = vpop.f32.mrf.mxu0
        %v551 = vadd.f32 0.0, %v550
        %552 = vmatmul.f32.gmra.mxu0 %v525
        %v553 = vpop.f32.mrf.mxu0
        %v554 = vadd.f32 0.0, %v553
        %555 = vdwg.mxu0
        %s556 = scalar_lea.vmem %s259, 160
        %v557 = vld [vmem:[%s556] sm:$0xff]
        %v558 = vld [vmem:[%s556 + $0x8] sm:$0xff]
        %v559 = vld [vmem:[%s556 + $0x10] sm:$0xff]
        %v560 = vld [vmem:[%s556 + $0x18] sm:$0xff]
        %565 = vrot.lane.b32.xlu0 %v279, 96
        %v566 = vpop.permute.xlu0 %565
        %567 = vrot.lane.b32.xlu0 %v281, 96
        %v568 = vpop.permute.xlu0 %567
        %569 = vrot.lane.b32.xlu0 %v283, 96
        %v570 = vpop.permute.xlu0 %569
        %571 = vrot.lane.b32.xlu0 %v285, 96
        %v572 = vpop.permute.xlu0 %571
        %v578 = vsel %vm290, %v557, 0
        %v581 = vsel %vm290, %v558, 0
        %v584 = vsel %vm290, %v559, 0
        %v587 = vsel %vm290, %v560, 0
        %589 = vmatpush.msra.mxu0 0.0
        %590 = vmatpush.msra.mxu0 0.0
        %591 = vmatpush.msra.mxu0 0.0
        %592 = vmatpush.msra.mxu0 0.0
        %593 = vmatpush.msra.mxu0 0.0
        %594 = vmatpush.msra.mxu0 0.0
        %595 = vmatpush.msra.mxu0 0.0
        %596 = vmatpush.msra.mxu0 0.0
        %597 = vmatpush.msra.mxu0 0.0
        %598 = vmatpush.msra.mxu0 0.0
        %599 = vmatpush.msra.mxu0 0.0
        %600 = vmatpush.msra.mxu0 0.0
        %601 = vmatpush.msra.mxu0 %v572
        %602 = vmatpush.msra.mxu0 %v570
        %603 = vmatpush.msra.mxu0 %v568
        %604 = vmatpush.msra.mxu0 %v566
        %605 = vmatmul.f32.gmra.mxu0 %v578
        %v606 = vpop.f32.mrf.mxu0
        %v607 = vadd.f32 0.0, %v606
        %608 = vmatmul.f32.gmra.mxu0 %v581
        %v609 = vpop.f32.mrf.mxu0
        %v610 = vadd.f32 0.0, %v609
        %611 = vmatmul.f32.gmra.mxu0 %v584
        %v612 = vpop.f32.mrf.mxu0
        %v613 = vadd.f32 0.0, %v612
        %614 = vmatmul.f32.gmra.mxu0 %v587
        %v615 = vpop.f32.mrf.mxu0
        %v616 = vadd.f32 0.0, %v615
        %617 = vdwg.mxu0
        %s618 = scalar_lea.vmem %s259, 192
        %v619 = vld [vmem:[%s618] sm:$0xff]
        %v620 = vld [vmem:[%s618 + $0x8] sm:$0xff]
        %v621 = vld [vmem:[%s618 + $0x10] sm:$0xff]
        %v622 = vld [vmem:[%s618 + $0x18] sm:$0xff]
        %623 = vrot.lane.b32.xlu0 %v279, 64
        %v624 = vpop.permute.xlu0 %623
        %625 = vrot.lane.b32.xlu0 %v281, 64
        %v626 = vpop.permute.xlu0 %625
        %627 = vrot.lane.b32.xlu0 %v283, 64
        %v628 = vpop.permute.xlu0 %627
        %629 = vrot.lane.b32.xlu0 %v285, 64
        %v630 = vpop.permute.xlu0 %629
        %v636 = vsel %vm290, %v619, 0
        %v639 = vsel %vm290, %v620, 0
        %v642 = vsel %vm290, %v621, 0
        %v645 = vsel %vm290, %v622, 0
        %647 = vmatpush.msra.mxu0 0.0
        %648 = vmatpush.msra.mxu0 0.0
        %649 = vmatpush.msra.mxu0 0.0
        %650 = vmatpush.msra.mxu0 0.0
        %651 = vmatpush.msra.mxu0 0.0
        %652 = vmatpush.msra.mxu0 0.0
        %653 = vmatpush.msra.mxu0 0.0
        %654 = vmatpush.msra.mxu0 0.0
        %655 = vmatpush.msra.mxu0 0.0
        %656 = vmatpush.msra.mxu0 0.0
        %657 = vmatpush.msra.mxu0 0.0
        %658 = vmatpush.msra.mxu0 0.0
        %659 = vmatpush.msra.mxu0 %v630
        %660 = vmatpush.msra.mxu0 %v628
        %661 = vmatpush.msra.mxu0 %v626
        %662 = vmatpush.msra.mxu0 %v624
        %663 = vmatmul.f32.gmra.mxu0 %v636
        %v664 = vpop.f32.mrf.mxu0
        %v665 = vadd.f32 0.0, %v664
        %666 = vmatmul.f32.gmra.mxu0 %v639
        %v667 = vpop.f32.mrf.mxu0
        %v668 = vadd.f32 0.0, %v667
        %669 = vmatmul.f32.gmra.mxu0 %v642
        %v670 = vpop.f32.mrf.mxu0
        %v671 = vadd.f32 0.0, %v670
        %672 = vmatmul.f32.gmra.mxu0 %v645
        %v673 = vpop.f32.mrf.mxu0
        %v674 = vadd.f32 0.0, %v673
        %675 = vdwg.mxu0
        %s676 = scalar_lea.vmem %s259, 224
        %v677 = vld [vmem:[%s676] sm:$0xff]
        %v678 = vld [vmem:[%s676 + $0x8] sm:$0xff]
        %v679 = vld [vmem:[%s676 + $0x10] sm:$0xff]
        %v680 = vld [vmem:[%s676 + $0x18] sm:$0xff]
        %681 = vrot.lane.b32.xlu0 %v279, 32
        %v682 = vpop.permute.xlu0 %681
        %683 = vrot.lane.b32.xlu0 %v281, 32
        %v684 = vpop.permute.xlu0 %683
        %685 = vrot.lane.b32.xlu0 %v283, 32
        %v686 = vpop.permute.xlu0 %685
        %687 = vrot.lane.b32.xlu0 %v285, 32
        %v688 = vpop.permute.xlu0 %687
        %v694 = vsel %vm290, %v677, 0
        %v697 = vsel %vm290, %v678, 0
        %v700 = vsel %vm290, %v679, 0
        %v703 = vsel %vm290, %v680, 0
        %705 = vmatpush.msra.mxu0 0.0
        %706 = vmatpush.msra.mxu0 0.0
        %707 = vmatpush.msra.mxu0 0.0
        %708 = vmatpush.msra.mxu0 0.0
        %709 = vmatpush.msra.mxu0 0.0
        %710 = vmatpush.msra.mxu0 0.0
        %711 = vmatpush.msra.mxu0 0.0
        %712 = vmatpush.msra.mxu0 0.0
        %713 = vmatpush.msra.mxu0 0.0
        %714 = vmatpush.msra.mxu0 0.0
        %715 = vmatpush.msra.mxu0 0.0
        %716 = vmatpush.msra.mxu0 0.0
        %717 = vmatpush.msra.mxu0 %v688
        %718 = vmatpush.msra.mxu0 %v686
        %719 = vmatpush.msra.mxu0 %v684
        %720 = vmatpush.msra.mxu0 %v682
        %721 = vmatmul.f32.gmra.mxu0 %v694
        %v722 = vpop.f32.mrf.mxu0
        %v723 = vadd.f32 0.0, %v722
        %724 = vmatmul.f32.gmra.mxu0 %v697
        %v725 = vpop.f32.mrf.mxu0
        %v726 = vadd.f32 0.0, %v725
        %727 = vmatmul.f32.gmra.mxu0 %v700
        %v728 = vpop.f32.mrf.mxu0
        %v729 = vadd.f32 0.0, %v728
        %730 = vmatmul.f32.gmra.mxu0 %v703
        %v731 = vpop.f32.mrf.mxu0
        %v732 = vadd.f32 0.0, %v731
        %733 = vdwg.mxu0
        %738 = vrot.lane.b32.xlu0 %v383, 32
        %v739 = vpop.permute.xlu0 %738
        %740 = vrot.lane.b32.xlu0 %v386, 32
        %v741 = vpop.permute.xlu0 %740
        %742 = vrot.lane.b32.xlu0 %v389, 32
        %v743 = vpop.permute.xlu0 %742
        %744 = vrot.lane.b32.xlu0 %v392, 32
        %v745 = vpop.permute.xlu0 %744
        %754 = vrot.lane.b32.xlu0 %v441, 64
        %v755 = vpop.permute.xlu0 %754
        %756 = vrot.lane.b32.xlu0 %v444, 64
        %v757 = vpop.permute.xlu0 %756
        %758 = vrot.lane.b32.xlu0 %v447, 64
        %v759 = vpop.permute.xlu0 %758
        %760 = vrot.lane.b32.xlu0 %v450, 64
        %v761 = vpop.permute.xlu0 %760
        %770 = vrot.lane.b32.xlu0 %v499, 96
        %v771 = vpop.permute.xlu0 %770
        %772 = vrot.lane.b32.xlu0 %v502, 96
        %v773 = vpop.permute.xlu0 %772
        %774 = vrot.lane.b32.xlu0 %v505, 96
        %v775 = vpop.permute.xlu0 %774
        %776 = vrot.lane.b32.xlu0 %v508, 96
        %v777 = vpop.permute.xlu0 %776
        %786 = vrot.lane.b32.xlu0 %v607, 32
        %v787 = vpop.permute.xlu0 %786
        %788 = vrot.lane.b32.xlu0 %v610, 32
        %v789 = vpop.permute.xlu0 %788
        %790 = vrot.lane.b32.xlu0 %v613, 32
        %v791 = vpop.permute.xlu0 %790
        %792 = vrot.lane.b32.xlu0 %v616, 32
        %v793 = vpop.permute.xlu0 %792
        %802 = vrot.lane.b32.xlu0 %v665, 64
        %v803 = vpop.permute.xlu0 %802
        %804 = vrot.lane.b32.xlu0 %v668, 64
        %v805 = vpop.permute.xlu0 %804
        %806 = vrot.lane.b32.xlu0 %v671, 64
        %v807 = vpop.permute.xlu0 %806
        %808 = vrot.lane.b32.xlu0 %v674, 64
        %v809 = vpop.permute.xlu0 %808
        %818 = vrot.lane.b32.xlu0 %v723, 96
        %v819 = vpop.permute.xlu0 %818
        %820 = vrot.lane.b32.xlu0 %v726, 96
        %v821 = vpop.permute.xlu0 %820
        %822 = vrot.lane.b32.xlu0 %v729, 96
        %v823 = vpop.permute.xlu0 %822
        %824 = vrot.lane.b32.xlu0 %v732, 96
        %v825 = vpop.permute.xlu0 %824
        %v830 = vsel %vm290, %v321, %v739
        %v831 = vsel %vm290, %v324, %v741
        %v832 = vsel %vm290, %v327, %v743
        %v833 = vsel %vm290, %v330, %v745
        %vm834 = vcmask 523264
        %v835 = vsel %vm834, %v830, %v755
        %v836 = vsel %vm834, %v831, %v757
        %v837 = vsel %vm834, %v832, %v759
        %v838 = vsel %vm834, %v833, %v761
        %vm839 = vcmask 785408
        %v840 = vsel %vm839, %v835, %v771
        %v841 = vsel %vm839, %v836, %v773
        %v842 = vsel %vm839, %v837, %v775
        %v843 = vsel %vm839, %v838, %v777
        %v844 = vsel %vm290, %v545, %v787
        %v845 = vsel %vm290, %v548, %v789
        %v846 = vsel %vm290, %v551, %v791
        %v847 = vsel %vm290, %v554, %v793
        %v848 = vsel %vm834, %v844, %v803
        %v849 = vsel %vm834, %v845, %v805
        %v850 = vsel %vm834, %v846, %v807
        %v851 = vsel %vm834, %v847, %v809
        %v852 = vsel %vm839, %v848, %v819
        %v853 = vsel %vm839, %v849, %v821
        %v854 = vsel %vm839, %v850, %v823
        %v855 = vsel %vm839, %v851, %v825
        %v856 = vld [vmem:[%s277] sm:$0xff]
        %v857 = vld [vmem:[%s277 + $0x8] sm:$0xff]
        %v858 = vld [vmem:[%s277 + $0x10] sm:$0xff]
        %v859 = vld [vmem:[%s277 + $0x18] sm:$0xff]
        %v860 = vld [vmem:[%s277 + $0x20] sm:$0xff]
        %v861 = vld [vmem:[%s277 + $0x28] sm:$0xff]
        %v862 = vld [vmem:[%s277 + $0x30] sm:$0xff]
        %v863 = vld [vmem:[%s277 + $0x38] sm:$0xff]
        %v864 = vmul.f32 %v856, %v840
        %v865 = vmul.f32 %v857, %v852
        %v866 = vmul.f32 %v858, %v841
        %v867 = vmul.f32 %v859, %v853
        %v868 = vmul.f32 %v860, %v842
        %v869 = vmul.f32 %v861, %v854
        %v870 = vmul.f32 %v862, %v843
        %v871 = vmul.f32 %v863, %v855
        %v872 = vld [vmem:[%s3] sm:$0xff]
        %v873 = vld [vmem:[%s3 + $0x8] sm:$0xff]
        %v874 = vld [vmem:[%s3 + $0x10] sm:$0xff]
        %v875 = vld [vmem:[%s3 + $0x18] sm:$0xff]
        %v876 = vld [vmem:[%s3 + $0x20] sm:$0xff]
        %v877 = vld [vmem:[%s3 + $0x28] sm:$0xff]
        %v878 = vld [vmem:[%s3 + $0x30] sm:$0xff]
        %v879 = vld [vmem:[%s3 + $0x38] sm:$0xff]
        %v880 = vld [vmem:[%s3 + $0x40] sm:$0xff]
        %v881 = vld [vmem:[%s3 + $0x48] sm:$0xff]
        %v882 = vld [vmem:[%s3 + $0x50] sm:$0xff]
        %v883 = vld [vmem:[%s3 + $0x58] sm:$0xff]
        %v884 = vld [vmem:[%s3 + $0x60] sm:$0xff]
        %v885 = vld [vmem:[%s3 + $0x68] sm:$0xff]
        %v886 = vld [vmem:[%s3 + $0x70] sm:$0xff]
        %v887 = vld [vmem:[%s3 + $0x78] sm:$0xff]
        %v888 = vld [vmem:[%s3 + $0x80] sm:$0xff]
        %v889 = vld [vmem:[%s3 + $0x88] sm:$0xff]
        %v890 = vld [vmem:[%s3 + $0x90] sm:$0xff]
        %v891 = vld [vmem:[%s3 + $0x98] sm:$0xff]
        %v892 = vld [vmem:[%s3 + $0xa0] sm:$0xff]
        %v893 = vld [vmem:[%s3 + $0xa8] sm:$0xff]
        %v894 = vld [vmem:[%s3 + $0xb0] sm:$0xff]
        %v895 = vld [vmem:[%s3 + $0xb8] sm:$0xff]
        %v896 = vld [vmem:[%s3 + $0xc0] sm:$0xff]
        %v897 = vld [vmem:[%s3 + $0xc8] sm:$0xff]
        %v898 = vld [vmem:[%s3 + $0xd0] sm:$0xff]
        %v899 = vld [vmem:[%s3 + $0xd8] sm:$0xff]
        %v900 = vld [vmem:[%s3 + $0xe0] sm:$0xff]
        %v901 = vld [vmem:[%s3 + $0xe8] sm:$0xff]
        %v902 = vld [vmem:[%s3 + $0xf0] sm:$0xff]
        %v903 = vld [vmem:[%s3 + $0xf8] sm:$0xff]
        %904 = vmatpush.msra.mxu0 %v887
        %905 = vmatpush.msra.mxu0 %v886
        %906 = vmatpush.msra.mxu0 %v885
        %907 = vmatpush.msra.mxu0 %v884
        %908 = vmatpush.msra.mxu0 %v883
        %909 = vmatpush.msra.mxu0 %v882
        %910 = vmatpush.msra.mxu0 %v881
        %911 = vmatpush.msra.mxu0 %v880
        %912 = vmatpush.msra.mxu0 %v879
        %913 = vmatpush.msra.mxu0 %v878
        %914 = vmatpush.msra.mxu0 %v877
        %915 = vmatpush.msra.mxu0 %v876
        %916 = vmatpush.msra.mxu0 %v875
        %917 = vmatpush.msra.mxu0 %v874
        %918 = vmatpush.msra.mxu0 %v873
        %919 = vmatpush.msra.mxu0 %v872
        %920 = vmatmul.f32.gmra.mxu0 %v864
        %v921 = vpop.f32.mrf.mxu0
        %v922 = vadd.f32 0.0, %v921
        %923 = vmatmul.f32.gmra.mxu0 %v866
        %v924 = vpop.f32.mrf.mxu0
        %v925 = vadd.f32 0.0, %v924
        %926 = vmatmul.f32.gmra.mxu0 %v868
        %v927 = vpop.f32.mrf.mxu0
        %v928 = vadd.f32 0.0, %v927
        %929 = vmatmul.f32.gmra.mxu0 %v870
        %v930 = vpop.f32.mrf.mxu0
        %v931 = vadd.f32 0.0, %v930
        %932 = vdwg.mxu0
        %933 = vmatpush.msra.mxu0 %v903
        %934 = vmatpush.msra.mxu0 %v902
        %935 = vmatpush.msra.mxu0 %v901
        %936 = vmatpush.msra.mxu0 %v900
        %937 = vmatpush.msra.mxu0 %v899
        %938 = vmatpush.msra.mxu0 %v898
        %939 = vmatpush.msra.mxu0 %v897
        %940 = vmatpush.msra.mxu0 %v896
        %941 = vmatpush.msra.mxu0 %v895
        %942 = vmatpush.msra.mxu0 %v894
        %943 = vmatpush.msra.mxu0 %v893
        %944 = vmatpush.msra.mxu0 %v892
        %945 = vmatpush.msra.mxu0 %v891
        %946 = vmatpush.msra.mxu0 %v890
        %947 = vmatpush.msra.mxu0 %v889
        %948 = vmatpush.msra.mxu0 %v888
        %949 = vmatmul.f32.gmra.mxu0 %v865
        %v950 = vpop.f32.mrf.mxu0
        %v951 = vadd.f32 %v922, %v950
        %952 = vmatmul.f32.gmra.mxu0 %v867
        %v953 = vpop.f32.mrf.mxu0
        %v954 = vadd.f32 %v925, %v953
        %955 = vmatmul.f32.gmra.mxu0 %v869
        %v956 = vpop.f32.mrf.mxu0
        %v957 = vadd.f32 %v928, %v956
        %958 = vmatmul.f32.gmra.mxu0 %v871
        %v959 = vpop.f32.mrf.mxu0
        %v960 = vadd.f32 %v931, %v959
        %961 = vdwg.mxu0
        %962 = vst.msk [vmem:[%s254] sm:$0xff] %vm834, %v951
        %963 = vst.msk [vmem:[%s254 + $0x8] sm:$0xff] %vm834, %v954
        %964 = vst.msk [vmem:[%s254 + $0x10] sm:$0xff] %vm834, %v957
        %965 = vst.msk [vmem:[%s254 + $0x18] sm:$0xff] %vm834, %v960
        %s966 = sand.u32 %s143, 1
        %s967 = scalar_lea.sflag [#allocation3], %s966
        %s968 = sand.u32 %s143, 1
        %s969 = smul.addr %s968, 32
        %s970 = scalar_lea.vmem [#allocation2], %s969
        // Predicated region
        $region37: #{msa_pair_weighted_averaging.5} parent=35 // pred_check
          %p971 = pneg %p153
        $region38: #{msa_pair_weighted_averaging.5} parent=35 // pred_check_branch
          %973 = sbr.rel (%p971) target = $region40
        $region39: #{msa_pair_weighted_averaging.5} parent=35 // pred_region
          %975 = vsyncadd %s967, 0
          %s976 = smul.addr %s23, 4
          %s977 = smul.addr %s22, 32
          %s978 = sadd.s32 %s976, %s977
          %s979 = smul.addr %s978, 8
          %s980 = scalar_lea.hbm %s4, %s979
          %s981 = sshll.u32 %s970, 4
          %s982 = int_to_ptr.vmem [resolvable:$true] %s981
          %s983 = sshll.u32 %s980, 4
          %s984 = int_to_ptr.hbm [resolvable:$true] %s983
          %989 = dma.vmem_to_hbm [thread:$0]  %s982, 512, %s984, %s967, 128, 128, 8
        $region40: #{msa_pair_weighted_averaging.5} parent=35 // pred_fallthru
          _
      $region36: #{msa_pair_weighted_averaging.5} parent=5 // pred_fallthru
        _
      %p990 = scmp.le.s32.totalorder 2, %s13
      // Predicated region
      $region41: #{msa_pair_weighted_averaging.5} parent=5 // pred_check
        %p991 = pneg %p990
      $region42: #{msa_pair_weighted_averaging.5} parent=5 // pred_check_branch
        %993 = sbr.rel (%p991) target = $region44
      $region43: #{msa_pair_weighted_averaging.5} parent=5 // pred_region
        %s994 = ssub.s32 %s13, 2
        // Predicated region
        $region45: #{msa_pair_weighted_averaging.5} parent=43 // pred_check
          %p995 = pneg %p159
        $region46: #{msa_pair_weighted_averaging.5} parent=43 // pred_check_branch
          %997 = sbr.rel (%p995) target = $region48
        $region47: #{msa_pair_weighted_averaging.5} parent=43 // pred_region
          %s998 = sand.u32 %s144, 1
          %s999 = scalar_lea.sflag [#allocation3], %s998
          %s1000 = sand.u32 %s144, 1
          %s1001 = smul.addr %s1000, 32
          %s1002 = scalar_lea.vmem [#allocation2], %s1001
          %1004 = dma.done %s999, 512
        $region48: #{msa_pair_weighted_averaging.5} parent=43 // pred_fallthru
          _
      $region44: #{msa_pair_weighted_averaging.5} parent=5 // pred_fallthru
        _
    $region6: #{msa_pair_weighted_averaging.5} parent=1 // loop_footer
      %s17 = sadd.s32 1, %s13
    $region7: #{msa_pair_weighted_averaging.5} parent=1 // loop_footer_branch
      %12 = sbr.rel target = $region3
    $region8: #{msa_pair_weighted_averaging.5} parent=1 // loop_exit
      _
    %1005 = vsyncpa [#allocation3], 1
    %s1006 = scalar_lea.sflag [#allocation3], 1
    %1007 = vsyncpa %s1006, 1

// kernel: msa_pair_weighted_averaging.3
$region0: #{msa_pair_weighted_averaging.3}
  #allocation0 [shape = 'u32[]', space=smem, size = 0x4, offset = 0x4, fixed_abs, tag = 'smem constant byte address 0x4 - core index']
  #allocation1 [shape = 'u32[72,128]{1,0:T(1,128)}', space=vmem, size = 0x9000, scoped, tag = 'internal scratch']
  %s0 = inlined_call_operand.vmem [shape: f32[512,64], index: 0, kind: input, shape index: {}]
  %s1 = inlined_call_operand.vmem [shape: f32[1,64], index: 1, kind: input, shape index: {}]
  %s2 = inlined_call_operand.vmem [shape: f32[1,64], index: 2, kind: input, shape index: {}]
  %s3 = inlined_call_operand.vmem [shape: f32[64,512], index: 3, kind: input, shape index: {}]
  %s4 = inlined_call_operand.vmem [shape: f32[512,256], index: 4, kind: output, shape index: {0}]
  %s5 = inlined_call_operand.vmem [shape: f32[512,256], index: 5, kind: output, shape index: {1}]
  %6 = xla_tuple %s4, %s5
  %s7 = sld [smem:[#allocation0]]
  $region57: #{msa_pair_weighted_averaging.3} parent=0
    _
  %s9 = ssub.s32 1, %s7
  %s10 = scalar_select 0, %s9, %s7
  loop: start=0, step=1, limit=4
  $region2: #{msa_pair_weighted_averaging.3} parent=0 // loop_pre_header
    _
  $region3: #{msa_pair_weighted_averaging.3} parent=0 // loop_header
    %s12 = sphi 0, %s16
    %p13 = scmp.ge.s32.totalorder %s12, 4
    %s22 = sphi 0, %s24
    %s25 = sphi 0, %s22
    %s26 = sphi 0, %s25
    %s42 = sphi 0, %s26
    %s46 = sphi 0, %s46
    %s48 = sphi 0, %s46
    %s49 = sphi 0, %s48
    %s63 = sphi 0, %s49
    %s67 = sphi 0, %s67
    %s69 = sphi 0, %s67
    %s70 = sphi 0, %s69
    %s84 = sphi 0, %s70
    %s88 = sphi 0, %s88
    %s90 = sphi 0, %s88
    %s91 = sphi 0, %s90
    %s105 = sphi 0, %s91
    %s111 = sphi 0, %s113
    %s114 = sphi 0, %s111
    %s115 = sphi 0, %s114
    %s131 = sphi 0, %s115
    %s137 = sphi 0, %s139
    %s140 = sphi 0, %s137
    %s141 = sphi 0, %s140
    %s157 = sphi 0, %s141
  $region4: #{msa_pair_weighted_averaging.3} parent=0 // loop_header_branch
    %15 = sbr.rel (%p13) target = $region8
  $region5: #{msa_pair_weighted_averaging.3} parent=0 // loop_body
    %s17 = ssub.s32 %s12, 1
    %s18 = ssub.s32 %s12, 2
    %s19 = sadd.s32 %s12, 1
    %s20 = ssub.s32 %s12, %s19
    %p21 = scmp.eq.s32.totalorder %s20, 0
    %s23 = sadd.s32 %s22, 1
    %s24 = scalar_select %p21, %s22, %s23
    %p27 = pneg %p21
    %p28 = scmp.eq.s32.totalorder %s12, 1
    %p29 = por %p27, %p28
    %p30 = scmp.ne.s32.totalorder %s22, %s25
    %p31 = scmp.eq.s32.totalorder %s12, 0
    %p32 = por %p30, %p31
    %p33 = scmp.ne.s32.totalorder %s22, %s25
    %p34 = scmp.eq.s32.totalorder %s17, 1
    %p35 = por %p33, %p34
    %p36 = scmp.ne.s32.totalorder %s25, %s26
    %p37 = scmp.eq.s32.totalorder %s17, 0
    %p38 = por %p36, %p37
    %p39 = scmp.ne.s32.totalorder %s25, %s26
    %p40 = scmp.eq.s32.totalorder %s18, 1
    %p41 = por %p39, %p40
    %p43 = scmp.ne.s32.totalorder %s26, %s42
    %p44 = scmp.eq.s32.totalorder %s18, 0
    %p45 = por %p43, %p44
    %s47 = sadd.s32 %s46, 1
    %p50 = scmp.eq.s32.totalorder %s12, 1
    %p51 = scmp.ne.s32.totalorder %s46, %s48
    %p52 = scmp.eq.s32.totalorder %s12, 0
    %p53 = por %p51, %p52
    %p54 = scmp.ne.s32.totalorder %s46, %s48
    %p55 = scmp.eq.s32.totalorder %s17, 1
    %p56 = por %p54, %p55
    %p57 = scmp.ne.s32.totalorder %s48, %s49
    %p58 = scmp.eq.s32.totalorder %s17, 0
    %p59 = por %p57, %p58
    %p60 = scmp.ne.s32.totalorder %s48, %s49
    %p61 = scmp.eq.s32.totalorder %s18, 1
    %p62 = por %p60, %p61
    %p64 = scmp.ne.s32.totalorder %s49, %s63
    %p65 = scmp.eq.s32.totalorder %s18, 0
    %p66 = por %p64, %p65
    %s68 = sadd.s32 %s67, 1
    %p71 = scmp.eq.s32.totalorder %s12, 1
    %p72 = scmp.ne.s32.totalorder %s67, %s69
    %p73 = scmp.eq.s32.totalorder %s12, 0
    %p74 = por %p72, %p73
    %p75 = scmp.ne.s32.totalorder %s67, %s69
    %p76 = scmp.eq.s32.totalorder %s17, 1
    %p77 = por %p75, %p76
    %p78 = scmp.ne.s32.totalorder %s69, %s70
    %p79 = scmp.eq.s32.totalorder %s17, 0
    %p80 = por %p78, %p79
    %p81 = scmp.ne.s32.totalorder %s69, %s70
    %p82 = scmp.eq.s32.totalorder %s18, 1
    %p83 = por %p81, %p82
    %p85 = scmp.ne.s32.totalorder %s70, %s84
    %p86 = scmp.eq.s32.totalorder %s18, 0
    %p87 = por %p85, %p86
    %s89 = sadd.s32 %s88, 1
    %p92 = scmp.eq.s32.totalorder %s12, 1
    %p93 = scmp.ne.s32.totalorder %s88, %s90
    %p94 = scmp.eq.s32.totalorder %s12, 0
    %p95 = por %p93, %p94
    %p96 = scmp.ne.s32.totalorder %s88, %s90
    %p97 = scmp.eq.s32.totalorder %s17, 1
    %p98 = por %p96, %p97
    %p99 = scmp.ne.s32.totalorder %s90, %s91
    %p100 = scmp.eq.s32.totalorder %s17, 0
    %p101 = por %p99, %p100
    %p102 = scmp.ne.s32.totalorder %s90, %s91
    %p103 = scmp.eq.s32.totalorder %s18, 1
    %p104 = por %p102, %p103
    %p106 = scmp.ne.s32.totalorder %s91, %s105
    %p107 = scmp.eq.s32.totalorder %s18, 0
    %p108 = por %p106, %p107
    %s109 = ssub.s32 %s12, %s19
    %p110 = scmp.eq.s32.totalorder %s109, 0
    %s112 = sadd.s32 %s111, 1
    %s113 = scalar_select %p110, %s111, %s112
    %p116 = pneg %p110
    %p117 = scmp.eq.s32.totalorder %s12, 1
    %p118 = por %p116, %p117
    %p119 = scmp.ne.s32.totalorder %s111, %s114
    %p120 = scmp.eq.s32.totalorder %s12, 0
    %p121 = por %p119, %p120
    %p122 = scmp.ne.s32.totalorder %s111, %s114
    %p123 = scmp.eq.s32.totalorder %s17, 1
    %p124 = por %p122, %p123
    %p125 = scmp.ne.s32.totalorder %s114, %s115
    %p126 = scmp.eq.s32.totalorder %s17, 0
    %p127 = por %p125, %p126
    %p128 = scmp.ne.s32.totalorder %s114, %s115
    %p129 = scmp.eq.s32.totalorder %s18, 1
    %p130 = por %p128, %p129
    %p132 = scmp.ne.s32.totalorder %s115, %s131
    %p133 = scmp.eq.s32.totalorder %s18, 0
    %p134 = por %p132, %p133
    %s135 = ssub.s32 %s12, %s19
    %p136 = scmp.eq.s32.totalorder %s135, 0
    %s138 = sadd.s32 %s137, 1
    %s139 = scalar_select %p136, %s137, %s138
    %p142 = pneg %p136
    %p143 = scmp.eq.s32.totalorder %s12, 1
    %p144 = por %p142, %p143
    %p145 = scmp.ne.s32.totalorder %s137, %s140
    %p146 = scmp.eq.s32.totalorder %s12, 0
    %p147 = por %p145, %p146
    %p148 = scmp.ne.s32.totalorder %s137, %s140
    %p149 = scmp.eq.s32.totalorder %s17, 1
    %p150 = por %p148, %p149
    %p151 = scmp.ne.s32.totalorder %s140, %s141
    %p152 = scmp.eq.s32.totalorder %s17, 0
    %p153 = por %p151, %p152
    %p154 = scmp.ne.s32.totalorder %s140, %s141
    %p155 = scmp.eq.s32.totalorder %s18, 1
    %p156 = por %p154, %p155
    %p158 = scmp.ne.s32.totalorder %s141, %s157
    %p159 = scmp.eq.s32.totalorder %s18, 0
    %p160 = por %p158, %p159
    %p161 = scmp.le.s32.totalorder 1, %s12
    %p162 = scmp.lt.s32.totalorder %s12, 3
    %p163 = pnand %p161, %p162
    %p164 = pneg %p163
    // Predicated region
    $region9: #{msa_pair_weighted_averaging.3} parent=5 // pred_check
      _
    $region10: #{msa_pair_weighted_averaging.3} parent=5 // pred_check_branch
      %166 = sbr.rel (%p163) target = $region12
    $region11: #{msa_pair_weighted_averaging.3} parent=5 // pred_region
      %s167 = ssub.s32 %s12, 1
      // Predicated region
      $region13: #{msa_pair_weighted_averaging.3} parent=11 // pred_check
        %p168 = pneg %p59
      $region14: #{msa_pair_weighted_averaging.3} parent=11 // pred_check_branch
        %170 = sbr.rel (%p168) target = $region16
      $region15: #{msa_pair_weighted_averaging.3} parent=11 // pred_region
        _
      $region16: #{msa_pair_weighted_averaging.3} parent=11 // pred_fallthru
        _
      // Predicated region
      $region17: #{msa_pair_weighted_averaging.3} parent=11 // pred_check
        %p171 = pneg %p80
      $region18: #{msa_pair_weighted_averaging.3} parent=11 // pred_check_branch
        %173 = sbr.rel (%p171) target = $region20
      $region19: #{msa_pair_weighted_averaging.3} parent=11 // pred_region
        _
      $region20: #{msa_pair_weighted_averaging.3} parent=11 // pred_fallthru
        _
      // Predicated region
      $region21: #{msa_pair_weighted_averaging.3} parent=11 // pred_check
        %p174 = pneg %p101
      $region22: #{msa_pair_weighted_averaging.3} parent=11 // pred_check_branch
        %176 = sbr.rel (%p174) target = $region24
      $region23: #{msa_pair_weighted_averaging.3} parent=11 // pred_region
        _
      $region24: #{msa_pair_weighted_averaging.3} parent=11 // pred_fallthru
        _
    $region12: #{msa_pair_weighted_averaging.3} parent=5 // pred_fallthru
      _
    %p177 = scmp.lt.s32.totalorder %s12, 2
    // Predicated region
    $region25: #{msa_pair_weighted_averaging.3} parent=5 // pred_check
      %p178 = pneg %p177
    $region26: #{msa_pair_weighted_averaging.3} parent=5 // pred_check_branch
      %180 = sbr.rel (%p178) target = $region28
    $region27: #{msa_pair_weighted_averaging.3} parent=5 // pred_region
      // Predicated region
      $region29: #{msa_pair_weighted_averaging.3} parent=27 // pred_check
        %p181 = pneg %p32
      $region30: #{msa_pair_weighted_averaging.3} parent=27 // pred_check_branch
        %183 = sbr.rel (%p181) target = $region32
      $region31: #{msa_pair_weighted_averaging.3} parent=27 // pred_region
        %s184 = smul.u32 32, %s12
        %p185 = scmp.lt.s32.totalorder %s184, 63
        %s186 = scalar_select %p185, %s184, 63
        %s187 = smul.addr %s186, 8
        %s188 = scalar_lea.vmem %s0, %s187
        %s189 = smul.u32 32, %s12
      $region32: #{msa_pair_weighted_averaging.3} parent=27 // pred_fallthru
        _
    $region28: #{msa_pair_weighted_averaging.3} parent=5 // pred_fallthru
      _
    %p190 = scmp.le.s32.totalorder 1, %s12
    %p191 = scmp.lt.s32.totalorder %s12, 3
    %p192 = pnand %p190, %p191
    %p193 = pneg %p192
    // Predicated region
    $region33: #{msa_pair_weighted_averaging.3} parent=5 // pred_check
      _
    $region34: #{msa_pair_weighted_averaging.3} parent=5 // pred_check_branch
      %195 = sbr.rel (%p192) target = $region36
    $region35: #{msa_pair_weighted_averaging.3} parent=5 // pred_region
      %s196 = ssub.s32 %s12, 1
      %s197 = smul.u32 32, %s17
      %p198 = scmp.lt.s32.totalorder %s197, 63
      %s199 = scalar_select %p198, %s197, 63
      %s200 = smul.addr %s199, 8
      %s201 = scalar_lea.vmem %s0, %s200
      %p202 = pneg %p38
      %p203 = pneg %p35
      %p204 = pneg %p59
      %p205 = pneg %p56
      %p206 = pneg %p80
      %p207 = pneg %p77
      %p208 = pneg %p101
      %p209 = pneg %p98
      %p210 = pneg %p127
      %p211 = pneg %p124
      %s212 = smul.u32 32, %s17
      %p213 = scmp.lt.s32.totalorder %s212, 63
      %s214 = scalar_select %p213, %s212, 63
      %s215 = smul.addr %s214, 2
      %s216 = smul.addr %s215, 8
      %s217 = scalar_lea.vmem %s4, %s216
      %p218 = pneg %p153
      %p219 = pneg %p150
      %s220 = smul.u32 32, %s17
      %p221 = scmp.lt.s32.totalorder %s220, 63
      %s222 = scalar_select %p221, %s220, 63
      %s223 = smul.addr %s222, 2
      %s224 = smul.addr %s223, 8
      %s225 = scalar_lea.vmem %s5, %s224
      %s226 = smul.u32 32, %s17
      %p227 = scmp.lt.s32.totalorder %s226, 63
      %s228 = scalar_select %p227, %s226, 63
      %s229 = smul.addr %s228, 8
      %s230 = scalar_lea.vmem %s0, %s229
      %s231 = smul.u32 32, %s17
      %s232 = smul.u32 32, %s17
      %p233 = scmp.lt.s32.totalorder %s232, 63
      %s234 = scalar_select %p233, %s232, 63
      %s235 = smul.addr %s234, 2
      %s236 = smul.addr %s235, 8
      %s237 = scalar_lea.vmem %s4, %s236
      %s238 = smul.u32 32, %s17
      %s239 = smul.u32 32, %s17
      %p240 = scmp.lt.s32.totalorder %s239, 63
      %s241 = scalar_select %p240, %s239, 63
      %s242 = smul.addr %s241, 2
      %s243 = smul.addr %s242, 8
      %s244 = scalar_lea.vmem %s5, %s243
      %s245 = smul.u32 32, %s17
      %v246 = vld [vmem:[%s230] sm:$0xff]
      %v247 = vld [vmem:[%s230 + $0x8] sm:$0xff]
      %v248 = vld [vmem:[%s230 + $0x10] sm:$0xff]
      %v249 = vld [vmem:[%s230 + $0x18] sm:$0xff]
      %v250 = vld [vmem:[%s230 + $0x20] sm:$0xff]
      %v251 = vld [vmem:[%s230 + $0x28] sm:$0xff]
      %v252 = vld [vmem:[%s230 + $0x30] sm:$0xff]
      %v253 = vld [vmem:[%s230 + $0x38] sm:$0xff]
      %v254 = vld [vmem:[%s230 + $0x40] sm:$0xff]
      %v255 = vld [vmem:[%s230 + $0x48] sm:$0xff]
      %v256 = vld [vmem:[%s230 + $0x50] sm:$0xff]
      %v257 = vld [vmem:[%s230 + $0x58] sm:$0xff]
      %v258 = vld [vmem:[%s230 + $0x60] sm:$0xff]
      %v259 = vld [vmem:[%s230 + $0x68] sm:$0xff]
      %v260 = vld [vmem:[%s230 + $0x70] sm:$0xff]
      %v261 = vld [vmem:[%s230 + $0x78] sm:$0xff]
      %v262 = vld [vmem:[%s230 + $0x80] sm:$0xff]
      %v263 = vld [vmem:[%s230 + $0x88] sm:$0xff]
      %v264 = vld [vmem:[%s230 + $0x90] sm:$0xff]
      %v265 = vld [vmem:[%s230 + $0x98] sm:$0xff]
      %v266 = vld [vmem:[%s230 + $0xa0] sm:$0xff]
      %v267 = vld [vmem:[%s230 + $0xa8] sm:$0xff]
      %v268 = vld [vmem:[%s230 + $0xb0] sm:$0xff]
      %v269 = vld [vmem:[%s230 + $0xb8] sm:$0xff]
      %v270 = vld [vmem:[%s230 + $0xc0] sm:$0xff]
      %v271 = vld [vmem:[%s230 + $0xc8] sm:$0xff]
      %v272 = vld [vmem:[%s230 + $0xd0] sm:$0xff]
      %v273 = vld [vmem:[%s230 + $0xd8] sm:$0xff]
      %v274 = vld [vmem:[%s230 + $0xe0] sm:$0xff]
      %v275 = vld [vmem:[%s230 + $0xe8] sm:$0xff]
      %v276 = vld [vmem:[%s230 + $0xf0] sm:$0xff]
      %v277 = vld [vmem:[%s230 + $0xf8] sm:$0xff]
      %vm278 = vcmask 523264
      %v279 = vsel %vm278, %v246, 0.0
      %280 = vadd.xlane.f32.xlu0 %v279
      %v281 = vpop.xlane.xlu0 %280
      %v282 = vsel %vm278, %v247, 0.0
      %283 = vadd.xlane.f32.xlu0 %v282
      %v284 = vpop.xlane.xlu0 %283
      %v285 = vsel %vm278, %v248, 0.0
      %286 = vadd.xlane.f32.xlu0 %v285
      %v287 = vpop.xlane.xlu0 %286
      %v288 = vsel %vm278, %v249, 0.0
      %289 = vadd.xlane.f32.xlu0 %v288
      %v290 = vpop.xlane.xlu0 %289
      %v291 = vsel %vm278, %v250, 0.0
      %292 = vadd.xlane.f32.xlu0 %v291
      %v293 = vpop.xlane.xlu0 %292
      %v294 = vsel %vm278, %v251, 0.0
      %295 = vadd.xlane.f32.xlu0 %v294
      %v296 = vpop.xlane.xlu0 %295
      %v297 = vsel %vm278, %v252, 0.0
      %298 = vadd.xlane.f32.xlu0 %v297
      %v299 = vpop.xlane.xlu0 %298
      %v300 = vsel %vm278, %v253, 0.0
      %301 = vadd.xlane.f32.xlu0 %v300
      %v302 = vpop.xlane.xlu0 %301
      %v303 = vsel %vm278, %v254, 0.0
      %304 = vadd.xlane.f32.xlu0 %v303
      %v305 = vpop.xlane.xlu0 %304
      %v306 = vsel %vm278, %v255, 0.0
      %307 = vadd.xlane.f32.xlu0 %v306
      %v308 = vpop.xlane.xlu0 %307
      %v309 = vsel %vm278, %v256, 0.0
      %310 = vadd.xlane.f32.xlu0 %v309
      %v311 = vpop.xlane.xlu0 %310
      %v312 = vsel %vm278, %v257, 0.0
      %313 = vadd.xlane.f32.xlu0 %v312
      %v314 = vpop.xlane.xlu0 %313
      %v315 = vsel %vm278, %v258, 0.0
      %316 = vadd.xlane.f32.xlu0 %v315
      %v317 = vpop.xlane.xlu0 %316
      %v318 = vsel %vm278, %v259, 0.0
      %319 = vadd.xlane.f32.xlu0 %v318
      %v320 = vpop.xlane.xlu0 %319
      %v321 = vsel %vm278, %v260, 0.0
      %322 = vadd.xlane.f32.xlu0 %v321
      %v323 = vpop.xlane.xlu0 %322
      %v324 = vsel %vm278, %v261, 0.0
      %325 = vadd.xlane.f32.xlu0 %v324
      %v326 = vpop.xlane.xlu0 %325
      %v327 = vsel %vm278, %v262, 0.0
      %328 = vadd.xlane.f32.xlu0 %v327
      %v329 = vpop.xlane.xlu0 %328
      %v330 = vsel %vm278, %v263, 0.0
      %331 = vadd.xlane.f32.xlu0 %v330
      %v332 = vpop.xlane.xlu0 %331
      %v333 = vsel %vm278, %v264, 0.0
      %334 = vadd.xlane.f32.xlu0 %v333
      %v335 = vpop.xlane.xlu0 %334
      %v336 = vsel %vm278, %v265, 0.0
      %337 = vadd.xlane.f32.xlu0 %v336
      %v338 = vpop.xlane.xlu0 %337
      %v339 = vsel %vm278, %v266, 0.0
      %340 = vadd.xlane.f32.xlu0 %v339
      %v341 = vpop.xlane.xlu0 %340
      %v342 = vsel %vm278, %v267, 0.0
      %343 = vadd.xlane.f32.xlu0 %v342
      %v344 = vpop.xlane.xlu0 %343
      %v345 = vsel %vm278, %v268, 0.0
      %346 = vadd.xlane.f32.xlu0 %v345
      %v347 = vpop.xlane.xlu0 %346
      %v348 = vsel %vm278, %v269, 0.0
      %349 = vadd.xlane.f32.xlu0 %v348
      %v350 = vpop.xlane.xlu0 %349
      %v351 = vsel %vm278, %v270, 0.0
      %352 = vadd.xlane.f32.xlu0 %v351
      %v353 = vpop.xlane.xlu0 %352
      %v354 = vsel %vm278, %v271, 0.0
      %355 = vadd.xlane.f32.xlu0 %v354
      %v356 = vpop.xlane.xlu0 %355
      %v357 = vsel %vm278, %v272, 0.0
      %358 = vadd.xlane.f32.xlu0 %v357
      %v359 = vpop.xlane.xlu0 %358
      %v360 = vsel %vm278, %v273, 0.0
      %361 = vadd.xlane.f32.xlu0 %v360
      %v362 = vpop.xlane.xlu0 %361
      %v363 = vsel %vm278, %v274, 0.0
      %364 = vadd.xlane.f32.xlu0 %v363
      %v365 = vpop.xlane.xlu0 %364
      %v366 = vsel %vm278, %v275, 0.0
      %367 = vadd.xlane.f32.xlu0 %v366
      %v368 = vpop.xlane.xlu0 %367
      %v369 = vsel %vm278, %v276, 0.0
      %370 = vadd.xlane.f32.xlu0 %v369
      %v371 = vpop.xlane.xlu0 %370
      %v372 = vsel %vm278, %v277, 0.0
      %373 = vadd.xlane.f32.xlu0 %v372
      %v374 = vpop.xlane.xlu0 %373
      %v375 = vrcp.pop 64.0
      %v376 = vmul.f32 64.0, %v375
      %v377 = vsub.f32 1.0, %v376
      %v378 = vmul.f32 %v375, %v377
      %v379 = vadd.f32 %v375, %v378
      %vm380 = vweird.f32 %v375
      %v381 = vsel %vm380, %v375, %v379
      %v382 = vmul.f32 %v281, %v381
      %v383 = vmul.f32 %v284, %v381
      %v384 = vmul.f32 %v287, %v381
      %v385 = vmul.f32 %v290, %v381
      %v386 = vmul.f32 %v293, %v381
      %v387 = vmul.f32 %v296, %v381
      %v388 = vmul.f32 %v299, %v381
      %v389 = vmul.f32 %v302, %v381
      %v390 = vmul.f32 %v305, %v381
      %v391 = vmul.f32 %v308, %v381
      %v392 = vmul.f32 %v311, %v381
      %v393 = vmul.f32 %v314, %v381
      %v394 = vmul.f32 %v317, %v381
      %v395 = vmul.f32 %v320, %v381
      %v396 = vmul.f32 %v323, %v381
      %v397 = vmul.f32 %v326, %v381
      %v398 = vmul.f32 %v329, %v381
      %v399 = vmul.f32 %v332, %v381
      %v400 = vmul.f32 %v335, %v381
      %v401 = vmul.f32 %v338, %v381
      %v402 = vmul.f32 %v341, %v381
      %v403 = vmul.f32 %v344, %v381
      %v404 = vmul.f32 %v347, %v381
      %v405 = vmul.f32 %v350, %v381
      %v406 = vmul.f32 %v353, %v381
      %v407 = vmul.f32 %v356, %v381
      %v408 = vmul.f32 %v359, %v381
      %v409 = vmul.f32 %v362, %v381
      %v410 = vmul.f32 %v365, %v381
      %v411 = vmul.f32 %v368, %v381
      %v412 = vmul.f32 %v371, %v381
      %v413 = vmul.f32 %v374, %v381
      %v414 = vsub.f32 %v246, %v382
      %v415 = vsub.f32 %v247, %v383
      %v416 = vsub.f32 %v248, %v384
      %v417 = vsub.f32 %v249, %v385
      %v418 = vsub.f32 %v250, %v386
      %v419 = vsub.f32 %v251, %v387
      %v420 = vsub.f32 %v252, %v388
      %v421 = vsub.f32 %v253, %v389
      %v422 = vsub.f32 %v254, %v390
      %v423 = vsub.f32 %v255, %v391
      %v424 = vsub.f32 %v256, %v392
      %v425 = vsub.f32 %v257, %v393
      %v426 = vsub.f32 %v258, %v394
      %v427 = vsub.f32 %v259, %v395
      %v428 = vsub.f32 %v260, %v396
      %v429 = vsub.f32 %v261, %v397
      %v430 = vsub.f32 %v262, %v398
      %v431 = vsub.f32 %v263, %v399
      %v432 = vsub.f32 %v264, %v400
      %v433 = vsub.f32 %v265, %v401
      %v434 = vsub.f32 %v266, %v402
      %v435 = vsub.f32 %v267, %v403
      %v436 = vsub.f32 %v268, %v404
      %v437 = vsub.f32 %v269, %v405
      %v438 = vsub.f32 %v270, %v406
      %v439 = vsub.f32 %v271, %v407
      %v440 = vsub.f32 %v272, %v408
      %v441 = vsub.f32 %v273, %v409
      %v442 = vsub.f32 %v274, %v410
      %v443 = vsub.f32 %v275, %v411
      %v444 = vsub.f32 %v276, %v412
      %v445 = vsub.f32 %v277, %v413
      %v446 = vmul.f32 %v414, %v414
      %v447 = vmul.f32 %v415, %v415
      %v448 = vmul.f32 %v416, %v416
      %v449 = vmul.f32 %v417, %v417
      %v450 = vmul.f32 %v418, %v418
      %v451 = vmul.f32 %v419, %v419
      %v452 = vmul.f32 %v420, %v420
      %v453 = vmul.f32 %v421, %v421
      %v454 = vmul.f32 %v422, %v422
      %v455 = vmul.f32 %v423, %v423
      %v456 = vmul.f32 %v424, %v424
      %v457 = vmul.f32 %v425, %v425
      %v458 = vmul.f32 %v426, %v426
      %v459 = vmul.f32 %v427, %v427
      %v460 = vmul.f32 %v428, %v428
      %v461 = vmul.f32 %v429, %v429
      %v462 = vmul.f32 %v430, %v430
      %v463 = vmul.f32 %v431, %v431
      %v464 = vmul.f32 %v432, %v432
      %v465 = vmul.f32 %v433, %v433
      %v466 = vmul.f32 %v434, %v434
      %v467 = vmul.f32 %v435, %v435
      %v468 = vmul.f32 %v436, %v436
      %v469 = vmul.f32 %v437, %v437
      %v470 = vmul.f32 %v438, %v438
      %v471 = vmul.f32 %v439, %v439
      %v472 = vmul.f32 %v440, %v440
      %v473 = vmul.f32 %v441, %v441
      %v474 = vmul.f32 %v442, %v442
      %v475 = vmul.f32 %v443, %v443
      %v476 = vmul.f32 %v444, %v444
      %v477 = vmul.f32 %v445, %v445
      %v478 = vsel %vm278, %v446, 0.0
      %479 = vadd.xlane.f32.xlu0 %v478
      %v480 = vpop.xlane.xlu0 %479
      %v481 = vsel %vm278, %v447, 0.0
      %482 = vadd.xlane.f32.xlu0 %v481
      %v483 = vpop.xlane.xlu0 %482
      %v484 = vsel %vm278, %v448, 0.0
      %485 = vadd.xlane.f32.xlu0 %v484
      %v486 = vpop.xlane.xlu0 %485
      %v487 = vsel %vm278, %v449, 0.0
      %488 = vadd.xlane.f32.xlu0 %v487
      %v489 = vpop.xlane.xlu0 %488
      %v490 = vsel %vm278, %v450, 0.0
      %491 = vadd.xlane.f32.xlu0 %v490
      %v492 = vpop.xlane.xlu0 %491
      %v493 = vsel %vm278, %v451, 0.0
      %494 = vadd.xlane.f32.xlu0 %v493
      %v495 = vpop.xlane.xlu0 %494
      %v496 = vsel %vm278, %v452, 0.0
      %497 = vadd.xlane.f32.xlu0 %v496
      %v498 = vpop.xlane.xlu0 %497
      %v499 = vsel %vm278, %v453, 0.0
      %500 = vadd.xlane.f32.xlu0 %v499
      %v501 = vpop.xlane.xlu0 %500
      %v502 = vsel %vm278, %v454, 0.0
      %503 = vadd.xlane.f32.xlu0 %v502
      %v504 = vpop.xlane.xlu0 %503
      %v505 = vsel %vm278, %v455, 0.0
      %506 = vadd.xlane.f32.xlu0 %v505
      %v507 = vpop.xlane.xlu0 %506
      %v508 = vsel %vm278, %v456, 0.0
      %509 = vadd.xlane.f32.xlu0 %v508
      %v510 = vpop.xlane.xlu0 %509
      %v511 = vsel %vm278, %v457, 0.0
      %512 = vadd.xlane.f32.xlu0 %v511
      %v513 = vpop.xlane.xlu0 %512
      %v514 = vsel %vm278, %v458, 0.0
      %515 = vadd.xlane.f32.xlu0 %v514
      %v516 = vpop.xlane.xlu0 %515
      %v517 = vsel %vm278, %v459, 0.0
      %518 = vadd.xlane.f32.xlu0 %v517
      %v519 = vpop.xlane.xlu0 %518
      %v520 = vsel %vm278, %v460, 0.0
      %521 = vadd.xlane.f32.xlu0 %v520
      %v522 = vpop.xlane.xlu0 %521
      %v523 = vsel %vm278, %v461, 0.0
      %524 = vadd.xlane.f32.xlu0 %v523
      %v525 = vpop.xlane.xlu0 %524
      %v526 = vsel %vm278, %v462, 0.0
      %527 = vadd.xlane.f32.xlu0 %v526
      %v528 = vpop.xlane.xlu0 %527
      %v529 = vsel %vm278, %v463, 0.0
      %530 = vadd.xlane.f32.xlu0 %v529
      %v531 = vpop.xlane.xlu0 %530
      %v532 = vsel %vm278, %v464, 0.0
      %533 = vadd.xlane.f32.xlu0 %v532
      %v534 = vpop.xlane.xlu0 %533
      %v535 = vsel %vm278, %v465, 0.0
      %536 = vadd.xlane.f32.xlu0 %v535
      %v537 = vpop.xlane.xlu0 %536
      %v538 = vsel %vm278, %v466, 0.0
      %539 = vadd.xlane.f32.xlu0 %v538
      %v540 = vpop.xlane.xlu0 %539
      %v541 = vsel %vm278, %v467, 0.0
      %542 = vadd.xlane.f32.xlu0 %v541
      %v543 = vpop.xlane.xlu0 %542
      %v544 = vsel %vm278, %v468, 0.0
      %545 = vadd.xlane.f32.xlu0 %v544
      %v546 = vpop.xlane.xlu0 %545
      %v547 = vsel %vm278, %v469, 0.0
      %548 = vadd.xlane.f32.xlu0 %v547
      %v549 = vpop.xlane.xlu0 %548
      %v550 = vsel %vm278, %v470, 0.0
      %551 = vadd.xlane.f32.xlu0 %v550
      %v552 = vpop.xlane.xlu0 %551
      %v553 = vsel %vm278, %v471, 0.0
      %554 = vadd.xlane.f32.xlu0 %v553
      %v555 = vpop.xlane.xlu0 %554
      %v556 = vsel %vm278, %v472, 0.0
      %557 = vadd.xlane.f32.xlu0 %v556
      %v558 = vpop.xlane.xlu0 %557
      %v559 = vsel %vm278, %v473, 0.0
      %560 = vadd.xlane.f32.xlu0 %v559
      %v561 = vpop.xlane.xlu0 %560
      %v562 = vsel %vm278, %v474, 0.0
      %563 = vadd.xlane.f32.xlu0 %v562
      %v564 = vpop.xlane.xlu0 %563
      %v565 = vsel %vm278, %v475, 0.0
      %566 = vadd.xlane.f32.xlu0 %v565
      %v567 = vpop.xlane.xlu0 %566
      %v568 = vsel %vm278, %v476, 0.0
      %569 = vadd.xlane.f32.xlu0 %v568
      %v570 = vpop.xlane.xlu0 %569
      %v571 = vsel %vm278, %v477, 0.0
      %572 = vadd.xlane.f32.xlu0 %v571
      %v573 = vpop.xlane.xlu0 %572
      %v574 = vmul.f32 %v480, %v381
      %v575 = vmul.f32 %v483, %v381
      %v576 = vmul.f32 %v486, %v381
      %v577 = vmul.f32 %v489, %v381
      %v578 = vmul.f32 %v492, %v381
      %v579 = vmul.f32 %v495, %v381
      %v580 = vmul.f32 %v498, %v381
      %v581 = vmul.f32 %v501, %v381
      %v582 = vmul.f32 %v504, %v381
      %v583 = vmul.f32 %v507, %v381
      %v584 = vmul.f32 %v510, %v381
      %v585 = vmul.f32 %v513, %v381
      %v586 = vmul.f32 %v516, %v381
      %v587 = vmul.f32 %v519, %v381
      %v588 = vmul.f32 %v522, %v381
      %v589 = vmul.f32 %v525, %v381
      %v590 = vmul.f32 %v528, %v381
      %v591 = vmul.f32 %v531, %v381
      %v592 = vmul.f32 %v534, %v381
      %v593 = vmul.f32 %v537, %v381
      %v594 = vmul.f32 %v540, %v381
      %v595 = vmul.f32 %v543, %v381
      %v596 = vmul.f32 %v546, %v381
      %v597 = vmul.f32 %v549, %v381
      %v598 = vmul.f32 %v552, %v381
      %v599 = vmul.f32 %v555, %v381
      %v600 = vmul.f32 %v558, %v381
      %v601 = vmul.f32 %v561, %v381
      %v602 = vmul.f32 %v564, %v381
      %v603 = vmul.f32 %v567, %v381
      %v604 = vmul.f32 %v570, %v381
      %v605 = vmul.f32 %v573, %v381
      %v606 = vadd.f32 %v574, 1e-05
      %v607 = vadd.f32 %v575, 1e-05
      %v608 = vadd.f32 %v576, 1e-05
      %v609 = vadd.f32 %v577, 1e-05
      %v610 = vadd.f32 %v578, 1e-05
      %v611 = vadd.f32 %v579, 1e-05
      %v612 = vadd.f32 %v580, 1e-05
      %v613 = vadd.f32 %v581, 1e-05
      %v614 = vadd.f32 %v582, 1e-05
      %v615 = vadd.f32 %v583, 1e-05
      %v616 = vadd.f32 %v584, 1e-05
      %v617 = vadd.f32 %v585, 1e-05
      %v618 = vadd.f32 %v586, 1e-05
      %v619 = vadd.f32 %v587, 1e-05
      %v620 = vadd.f32 %v588, 1e-05
      %v621 = vadd.f32 %v589, 1e-05
      %v622 = vadd.f32 %v590, 1e-05
      %v623 = vadd.f32 %v591, 1e-05
      %v624 = vadd.f32 %v592, 1e-05
      %v625 = vadd.f32 %v593, 1e-05
      %v626 = vadd.f32 %v594, 1e-05
      %v627 = vadd.f32 %v595, 1e-05
      %v628 = vadd.f32 %v596, 1e-05
      %v629 = vadd.f32 %v597, 1e-05
      %v630 = vadd.f32 %v598, 1e-05
      %v631 = vadd.f32 %v599, 1e-05
      %v632 = vadd.f32 %v600, 1e-05
      %v633 = vadd.f32 %v601, 1e-05
      %v634 = vadd.f32 %v602, 1e-05
      %v635 = vadd.f32 %v603, 1e-05
      %v636 = vadd.f32 %v604, 1e-05
      %v637 = vadd.f32 %v605, 1e-05
      %v638 = vrsqrt.pop %v606
      %v639 = vmul.f32 %v638, %v606
      %v640 = vmul.f32 %v639, %v638
      %v641 = vmul.f32 0.5, %v640
      %v642 = vsub.f32 1.5, %v641
      %v643 = vmul.f32 %v638, %v642
      %vm644 = vweird.f32 %v606
      %vm645 = vweird.f32 %v638
      %vm646 = vmor %vm644, %vm645
      %v647 = vsel %vm646, %v638, %v643
      %v648 = vrsqrt.pop %v607
      %v649 = vmul.f32 %v648, %v607
      %v650 = vmul.f32 %v649, %v648
      %v651 = vmul.f32 0.5, %v650
      %v652 = vsub.f32 1.5, %v651
      %v653 = vmul.f32 %v648, %v652
      %vm654 = vweird.f32 %v607
      %vm655 = vweird.f32 %v648
      %vm656 = vmor %vm654, %vm655
      %v657 = vsel %vm656, %v648, %v653
      %v658 = vrsqrt.pop %v608
      %v659 = vmul.f32 %v658, %v608
      %v660 = vmul.f32 %v659, %v658
      %v661 = vmul.f32 0.5, %v660
      %v662 = vsub.f32 1.5, %v661
      %v663 = vmul.f32 %v658, %v662
      %vm664 = vweird.f32 %v608
      %vm665 = vweird.f32 %v658
      %vm666 = vmor %vm664, %vm665
      %v667 = vsel %vm666, %v658, %v663
      %v668 = vrsqrt.pop %v609
      %v669 = vmul.f32 %v668, %v609
      %v670 = vmul.f32 %v669, %v668
      %v671 = vmul.f32 0.5, %v670
      %v672 = vsub.f32 1.5, %v671
      %v673 = vmul.f32 %v668, %v672
      %vm674 = vweird.f32 %v609
      %vm675 = vweird.f32 %v668
      %vm676 = vmor %vm674, %vm675
      %v677 = vsel %vm676, %v668, %v673
      %v678 = vrsqrt.pop %v610
      %v679 = vmul.f32 %v678, %v610
      %v680 = vmul.f32 %v679, %v678
      %v681 = vmul.f32 0.5, %v680
      %v682 = vsub.f32 1.5, %v681
      %v683 = vmul.f32 %v678, %v682
      %vm684 = vweird.f32 %v610
      %vm685 = vweird.f32 %v678
      %vm686 = vmor %vm684, %vm685
      %v687 = vsel %vm686, %v678, %v683
      %v688 = vrsqrt.pop %v611
      %v689 = vmul.f32 %v688, %v611
      %v690 = vmul.f32 %v689, %v688
      %v691 = vmul.f32 0.5, %v690
      %v692 = vsub.f32 1.5, %v691
      %v693 = vmul.f32 %v688, %v692
      %vm694 = vweird.f32 %v611
      %vm695 = vweird.f32 %v688
      %vm696 = vmor %vm694, %vm695
      %v697 = vsel %vm696, %v688, %v693
      %v698 = vrsqrt.pop %v612
      %v699 = vmul.f32 %v698, %v612
      %v700 = vmul.f32 %v699, %v698
      %v701 = vmul.f32 0.5, %v700
      %v702 = vsub.f32 1.5, %v701
      %v703 = vmul.f32 %v698, %v702
      %vm704 = vweird.f32 %v612
      %vm705 = vweird.f32 %v698
      %vm706 = vmor %vm704, %vm705
      %v707 = vsel %vm706, %v698, %v703
      %v708 = vrsqrt.pop %v613
      %v709 = vmul.f32 %v708, %v613
      %v710 = vmul.f32 %v709, %v708
      %v711 = vmul.f32 0.5, %v710
      %v712 = vsub.f32 1.5, %v711
      %v713 = vmul.f32 %v708, %v712
      %vm714 = vweird.f32 %v613
      %vm715 = vweird.f32 %v708
      %vm716 = vmor %vm714, %vm715
      %v717 = vsel %vm716, %v708, %v713
      %v718 = vrsqrt.pop %v614
      %v719 = vmul.f32 %v718, %v614
      %v720 = vmul.f32 %v719, %v718
      %v721 = vmul.f32 0.5, %v720
      %v722 = vsub.f32 1.5, %v721
      %v723 = vmul.f32 %v718, %v722
      %vm724 = vweird.f32 %v614
      %vm725 = vweird.f32 %v718
      %vm726 = vmor %vm724, %vm725
      %v727 = vsel %vm726, %v718, %v723
      %v728 = vrsqrt.pop %v615
      %v729 = vmul.f32 %v728, %v615
      %v730 = vmul.f32 %v729, %v728
      %v731 = vmul.f32 0.5, %v730
      %v732 = vsub.f32 1.5, %v731
      %v733 = vmul.f32 %v728, %v732
      %vm734 = vweird.f32 %v615
      %vm735 = vweird.f32 %v728
      %vm736 = vmor %vm734, %vm735
      %v737 = vsel %vm736, %v728, %v733
      %v738 = vrsqrt.pop %v616
      %v739 = vmul.f32 %v738, %v616
      %v740 = vmul.f32 %v739, %v738
      %v741 = vmul.f32 0.5, %v740
      %v742 = vsub.f32 1.5, %v741
      %v743 = vmul.f32 %v738, %v742
      %vm744 = vweird.f32 %v616
      %vm745 = vweird.f32 %v738
      %vm746 = vmor %vm744, %vm745
      %v747 = vsel %vm746, %v738, %v743
      %v748 = vrsqrt.pop %v617
      %v749 = vmul.f32 %v748, %v617
      %v750 = vmul.f32 %v749, %v748
      %v751 = vmul.f32 0.5, %v750
      %v752 = vsub.f32 1.5, %v751
      %v753 = vmul.f32 %v748, %v752
      %vm754 = vweird.f32 %v617
      %vm755 = vweird.f32 %v748
      %vm756 = vmor %vm754, %vm755
      %v757 = vsel %vm756, %v748, %v753
      %v758 = vrsqrt.pop %v618
      %v759 = vmul.f32 %v758, %v618
      %v760 = vmul.f32 %v759, %v758
      %v761 = vmul.f32 0.5, %v760
      %v762 = vsub.f32 1.5, %v761
      %v763 = vmul.f32 %v758, %v762
      %vm764 = vweird.f32 %v618
      %vm765 = vweird.f32 %v758
      %vm766 = vmor %vm764, %vm765
      %v767 = vsel %vm766, %v758, %v763
      %v768 = vrsqrt.pop %v619
      %v769 = vmul.f32 %v768, %v619
      %v770 = vmul.f32 %v769, %v768
      %v771 = vmul.f32 0.5, %v770
      %v772 = vsub.f32 1.5, %v771
      %v773 = vmul.f32 %v768, %v772
      %vm774 = vweird.f32 %v619
      %vm775 = vweird.f32 %v768
      %vm776 = vmor %vm774, %vm775
      %v777 = vsel %vm776, %v768, %v773
      %v778 = vrsqrt.pop %v620
      %v779 = vmul.f32 %v778, %v620
      %v780 = vmul.f32 %v779, %v778
      %v781 = vmul.f32 0.5, %v780
      %v782 = vsub.f32 1.5, %v781
      %v783 = vmul.f32 %v778, %v782
      %vm784 = vweird.f32 %v620
      %vm785 = vweird.f32 %v778
      %vm786 = vmor %vm784, %vm785
      %v787 = vsel %vm786, %v778, %v783
      %v788 = vrsqrt.pop %v621
      %v789 = vmul.f32 %v788, %v621
      %v790 = vmul.f32 %v789, %v788
      %v791 = vmul.f32 0.5, %v790
      %v792 = vsub.f32 1.5, %v791
      %v793 = vmul.f32 %v788, %v792
      %vm794 = vweird.f32 %v621
      %vm795 = vweird.f32 %v788
      %vm796 = vmor %vm794, %vm795
      %v797 = vsel %vm796, %v788, %v793
      %v798 = vrsqrt.pop %v622
      %v799 = vmul.f32 %v798, %v622
      %v800 = vmul.f32 %v799, %v798
      %v801 = vmul.f32 0.5, %v800
      %v802 = vsub.f32 1.5, %v801
      %v803 = vmul.f32 %v798, %v802
      %vm804 = vweird.f32 %v622
      %vm805 = vweird.f32 %v798
      %vm806 = vmor %vm804, %vm805
      %v807 = vsel %vm806, %v798, %v803
      %v808 = vrsqrt.pop %v623
      %v809 = vmul.f32 %v808, %v623
      %v810 = vmul.f32 %v809, %v808
      %v811 = vmul.f32 0.5, %v810
      %v812 = vsub.f32 1.5, %v811
      %v813 = vmul.f32 %v808, %v812
      %vm814 = vweird.f32 %v623
      %vm815 = vweird.f32 %v808
      %vm816 = vmor %vm814, %vm815
      %v817 = vsel %vm816, %v808, %v813
      %v818 = vrsqrt.pop %v624
      %v819 = vmul.f32 %v818, %v624
      %v820 = vmul.f32 %v819, %v818
      %v821 = vmul.f32 0.5, %v820
      %v822 = vsub.f32 1.5, %v821
      %v823 = vmul.f32 %v818, %v822
      %vm824 = vweird.f32 %v624
      %vm825 = vweird.f32 %v818
      %vm826 = vmor %vm824, %vm825
      %v827 = vsel %vm826, %v818, %v823
      %v828 = vrsqrt.pop %v625
      %v829 = vmul.f32 %v828, %v625
      %v830 = vmul.f32 %v829, %v828
      %v831 = vmul.f32 0.5, %v830
      %v832 = vsub.f32 1.5, %v831
      %v833 = vmul.f32 %v828, %v832
      %vm834 = vweird.f32 %v625
      %vm835 = vweird.f32 %v828
      %vm836 = vmor %vm834, %vm835
      %v837 = vsel %vm836, %v828, %v833
      %v838 = vrsqrt.pop %v626
      %v839 = vmul.f32 %v838, %v626
      %v840 = vmul.f32 %v839, %v838
      %v841 = vmul.f32 0.5, %v840
      %v842 = vsub.f32 1.5, %v841
      %v843 = vmul.f32 %v838, %v842
      %vm844 = vweird.f32 %v626
      %vm845 = vweird.f32 %v838
      %vm846 = vmor %vm844, %vm845
      %v847 = vsel %vm846, %v838, %v843
      %v848 = vrsqrt.pop %v627
      %v849 = vmul.f32 %v848, %v627
      %v850 = vmul.f32 %v849, %v848
      %v851 = vmul.f32 0.5, %v850
      %v852 = vsub.f32 1.5, %v851
      %v853 = vmul.f32 %v848, %v852
      %vm854 = vweird.f32 %v627
      %vm855 = vweird.f32 %v848
      %vm856 = vmor %vm854, %vm855
      %v857 = vsel %vm856, %v848, %v853
      %v858 = vrsqrt.pop %v628
      %v859 = vmul.f32 %v858, %v628
      %v860 = vmul.f32 %v859, %v858
      %v861 = vmul.f32 0.5, %v860
      %v862 = vsub.f32 1.5, %v861
      %v863 = vmul.f32 %v858, %v862
      %vm864 = vweird.f32 %v628
      %vm865 = vweird.f32 %v858
      %vm866 = vmor %vm864, %vm865
      %v867 = vsel %vm866, %v858, %v863
      %v868 = vrsqrt.pop %v629
      %v869 = vmul.f32 %v868, %v629
      %v870 = vmul.f32 %v869, %v868
      %v871 = vmul.f32 0.5, %v870
      %v872 = vsub.f32 1.5, %v871
      %v873 = vmul.f32 %v868, %v872
      %vm874 = vweird.f32 %v629
      %vm875 = vweird.f32 %v868
      %vm876 = vmor %vm874, %vm875
      %v877 = vsel %vm876, %v868, %v873
      %v878 = vrsqrt.pop %v630
      %v879 = vmul.f32 %v878, %v630
      %v880 = vmul.f32 %v879, %v878
      %v881 = vmul.f32 0.5, %v880
      %v882 = vsub.f32 1.5, %v881
      %v883 = vmul.f32 %v878, %v882
      %vm884 = vweird.f32 %v630
      %vm885 = vweird.f32 %v878
      %vm886 = vmor %vm884, %vm885
      %v887 = vsel %vm886, %v878, %v883
      %v888 = vrsqrt.pop %v631
      %v889 = vmul.f32 %v888, %v631
      %v890 = vmul.f32 %v889, %v888
      %v891 = vmul.f32 0.5, %v890
      %v892 = vsub.f32 1.5, %v891
      %v893 = vmul.f32 %v888, %v892
      %vm894 = vweird.f32 %v631
      %vm895 = vweird.f32 %v888
      %vm896 = vmor %vm894, %vm895
      %v897 = vsel %vm896, %v888, %v893
      %v898 = vrsqrt.pop %v632
      %v899 = vmul.f32 %v898, %v632
      %v900 = vmul.f32 %v899, %v898
      %v901 = vmul.f32 0.5, %v900
      %v902 = vsub.f32 1.5, %v901
      %v903 = vmul.f32 %v898, %v902
      %vm904 = vweird.f32 %v632
      %vm905 = vweird.f32 %v898
      %vm906 = vmor %vm904, %vm905
      %v907 = vsel %vm906, %v898, %v903
      %v908 = vrsqrt.pop %v633
      %v909 = vmul.f32 %v908, %v633
      %v910 = vmul.f32 %v909, %v908
      %v911 = vmul.f32 0.5, %v910
      %v912 = vsub.f32 1.5, %v911
      %v913 = vmul.f32 %v908, %v912
      %vm914 = vweird.f32 %v633
      %vm915 = vweird.f32 %v908
      %vm916 = vmor %vm914, %vm915
      %v917 = vsel %vm916, %v908, %v913
      %v918 = vrsqrt.pop %v634
      %v919 = vmul.f32 %v918, %v634
      %v920 = vmul.f32 %v919, %v918
      %v921 = vmul.f32 0.5, %v920
      %v922 = vsub.f32 1.5, %v921
      %v923 = vmul.f32 %v918, %v922
      %vm924 = vweird.f32 %v634
      %vm925 = vweird.f32 %v918
      %vm926 = vmor %vm924, %vm925
      %v927 = vsel %vm926, %v918, %v923
      %v928 = vrsqrt.pop %v635
      %v929 = vmul.f32 %v928, %v635
      %v930 = vmul.f32 %v929, %v928
      %v931 = vmul.f32 0.5, %v930
      %v932 = vsub.f32 1.5, %v931
      %v933 = vmul.f32 %v928, %v932
      %vm934 = vweird.f32 %v635
      %vm935 = vweird.f32 %v928
      %vm936 = vmor %vm934, %vm935
      %v937 = vsel %vm936, %v928, %v933
      %v938 = vrsqrt.pop %v636
      %v939 = vmul.f32 %v938, %v636
      %v940 = vmul.f32 %v939, %v938
      %v941 = vmul.f32 0.5, %v940
      %v942 = vsub.f32 1.5, %v941
      %v943 = vmul.f32 %v938, %v942
      %vm944 = vweird.f32 %v636
      %vm945 = vweird.f32 %v938
      %vm946 = vmor %vm944, %vm945
      %v947 = vsel %vm946, %v938, %v943
      %v948 = vrsqrt.pop %v637
      %v949 = vmul.f32 %v948, %v637
      %v950 = vmul.f32 %v949, %v948
      %v951 = vmul.f32 0.5, %v950
      %v952 = vsub.f32 1.5, %v951
      %v953 = vmul.f32 %v948, %v952
      %vm954 = vweird.f32 %v637
      %vm955 = vweird.f32 %v948
      %vm956 = vmor %vm954, %vm955
      %v957 = vsel %vm956, %v948, %v953
      %v958 = vmul.f32 %v414, %v647
      %v959 = vmul.f32 %v415, %v657
      %v960 = vmul.f32 %v416, %v667
      %v961 = vmul.f32 %v417, %v677
      %v962 = vmul.f32 %v418, %v687
      %v963 = vmul.f32 %v419, %v697
      %v964 = vmul.f32 %v420, %v707
      %v965 = vmul.f32 %v421, %v717
      %v966 = vmul.f32 %v422, %v727
      %v967 = vmul.f32 %v423, %v737
      %v968 = vmul.f32 %v424, %v747
      %v969 = vmul.f32 %v425, %v757
      %v970 = vmul.f32 %v426, %v767
      %v971 = vmul.f32 %v427, %v777
      %v972 = vmul.f32 %v428, %v787
      %v973 = vmul.f32 %v429, %v797
      %v974 = vmul.f32 %v430, %v807
      %v975 = vmul.f32 %v431, %v817
      %v976 = vmul.f32 %v432, %v827
      %v977 = vmul.f32 %v433, %v837
      %v978 = vmul.f32 %v434, %v847
      %v979 = vmul.f32 %v435, %v857
      %v980 = vmul.f32 %v436, %v867
      %v981 = vmul.f32 %v437, %v877
      %v982 = vmul.f32 %v438, %v887
      %v983 = vmul.f32 %v439, %v897
      %v984 = vmul.f32 %v440, %v907
      %v985 = vmul.f32 %v441, %v917
      %v986 = vmul.f32 %v442, %v927
      %v987 = vmul.f32 %v443, %v937
      %v988 = vmul.f32 %v444, %v947
      %v989 = vmul.f32 %v445, %v957
      %v990 = vld [vmem:[%s1] sm:$0x1]
      %v992 = vperm.slane %v990, 0
      %v994 = vmul.f32 %v958, %v992
      %v995 = vmul.f32 %v959, %v992
      %v996 = vmul.f32 %v960, %v992
      %v997 = vmul.f32 %v961, %v992
      %v998 = vmul.f32 %v962, %v992
      %v999 = vmul.f32 %v963, %v992
      %v1000 = vmul.f32 %v964, %v992
      %v1001 = vmul.f32 %v965, %v992
      %v1002 = vmul.f32 %v966, %v992
      %v1003 = vmul.f32 %v967, %v992
      %v1004 = vmul.f32 %v968, %v992
      %v1005 = vmul.f32 %v969, %v992
      %v1006 = vmul.f32 %v970, %v992
      %v1007 = vmul.f32 %v971, %v992
      %v1008 = vmul.f32 %v972, %v992
      %v1009 = vmul.f32 %v973, %v992
      %v1010 = vmul.f32 %v974, %v992
      %v1011 = vmul.f32 %v975, %v992
      %v1012 = vmul.f32 %v976, %v992
      %v1013 = vmul.f32 %v977, %v992
      %v1014 = vmul.f32 %v978, %v992
      %v1015 = vmul.f32 %v979, %v992
      %v1016 = vmul.f32 %v980, %v992
      %v1017 = vmul.f32 %v981, %v992
      %v1018 = vmul.f32 %v982, %v992
      %v1019 = vmul.f32 %v983, %v992
      %v1020 = vmul.f32 %v984, %v992
      %v1021 = vmul.f32 %v985, %v992
      %v1022 = vmul.f32 %v986, %v992
      %v1023 = vmul.f32 %v987, %v992
      %v1024 = vmul.f32 %v988, %v992
      %v1025 = vmul.f32 %v989, %v992
      %v1026 = vld [vmem:[%s2] sm:$0x1]
      %v1028 = vperm.slane %v1026, 0
      %v1030 = vadd.f32 %v994, %v1028
      %v1031 = vadd.f32 %v995, %v1028
      %v1032 = vadd.f32 %v996, %v1028
      %v1033 = vadd.f32 %v997, %v1028
      %v1034 = vadd.f32 %v998, %v1028
      %v1035 = vadd.f32 %v999, %v1028
      %v1036 = vadd.f32 %v1000, %v1028
      %v1037 = vadd.f32 %v1001, %v1028
      %v1038 = vadd.f32 %v1002, %v1028
      %v1039 = vadd.f32 %v1003, %v1028
      %v1040 = vadd.f32 %v1004, %v1028
      %v1041 = vadd.f32 %v1005, %v1028
      %v1042 = vadd.f32 %v1006, %v1028
      %v1043 = vadd.f32 %v1007, %v1028
      %v1044 = vadd.f32 %v1008, %v1028
      %v1045 = vadd.f32 %v1009, %v1028
      %v1046 = vadd.f32 %v1010, %v1028
      %v1047 = vadd.f32 %v1011, %v1028
      %v1048 = vadd.f32 %v1012, %v1028
      %v1049 = vadd.f32 %v1013, %v1028
      %v1050 = vadd.f32 %v1014, %v1028
      %v1051 = vadd.f32 %v1015, %v1028
      %v1052 = vadd.f32 %v1016, %v1028
      %v1053 = vadd.f32 %v1017, %v1028
      %v1054 = vadd.f32 %v1018, %v1028
      %v1055 = vadd.f32 %v1019, %v1028
      %v1056 = vadd.f32 %v1020, %v1028
      %v1057 = vadd.f32 %v1021, %v1028
      %v1058 = vadd.f32 %v1022, %v1028
      %v1059 = vadd.f32 %v1023, %v1028
      %v1060 = vadd.f32 %v1024, %v1028
      %v1061 = vadd.f32 %v1025, %v1028
      %v1062 = vld [vmem:[%s3] sm:$0xff]
      %v1063 = vld [vmem:[%s3 + $0x8] sm:$0xff]
      %v1064 = vld [vmem:[%s3 + $0x10] sm:$0xff]
      %v1065 = vld [vmem:[%s3 + $0x18] sm:$0xff]
      %v1066 = vld [vmem:[%s3 + $0x20] sm:$0xff]
      %v1067 = vld [vmem:[%s3 + $0x28] sm:$0xff]
      %v1068 = vld [vmem:[%s3 + $0x30] sm:$0xff]
      %v1069 = vld [vmem:[%s3 + $0x38] sm:$0xff]
      %v1070 = vld [vmem:[%s3 + $0x40] sm:$0xff]
      %v1071 = vld [vmem:[%s3 + $0x48] sm:$0xff]
      %v1072 = vld [vmem:[%s3 + $0x50] sm:$0xff]
      %v1073 = vld [vmem:[%s3 + $0x58] sm:$0xff]
      %v1074 = vld [vmem:[%s3 + $0x60] sm:$0xff]
      %v1075 = vld [vmem:[%s3 + $0x68] sm:$0xff]
      %v1076 = vld [vmem:[%s3 + $0x70] sm:$0xff]
      %v1077 = vld [vmem:[%s3 + $0x78] sm:$0xff]
      %v1078 = vld [vmem:[%s3 + $0x80] sm:$0xff]
      %v1079 = vld [vmem:[%s3 + $0x88] sm:$0xff]
      %v1080 = vld [vmem:[%s3 + $0x90] sm:$0xff]
      %v1081 = vld [vmem:[%s3 + $0x98] sm:$0xff]
      %v1082 = vld [vmem:[%s3 + $0xa0] sm:$0xff]
      %v1083 = vld [vmem:[%s3 + $0xa8] sm:$0xff]
      %v1084 = vld [vmem:[%s3 + $0xb0] sm:$0xff]
      %v1085 = vld [vmem:[%s3 + $0xb8] sm:$0xff]
      %v1086 = vld [vmem:[%s3 + $0xc0] sm:$0xff]
      %v1087 = vld [vmem:[%s3 + $0xc8] sm:$0xff]
      %v1088 = vld [vmem:[%s3 + $0xd0] sm:$0xff]
      %v1089 = vld [vmem:[%s3 + $0xd8] sm:$0xff]
      %v1090 = vld [vmem:[%s3 + $0xe0] sm:$0xff]
      %v1091 = vld [vmem:[%s3 + $0xe8] sm:$0xff]
      %v1092 = vld [vmem:[%s3 + $0xf0] sm:$0xff]
      %v1093 = vld [vmem:[%s3 + $0xf8] sm:$0xff]
      %v1095 = vsel %vm278, %v1030, 0
      %v1098 = vsel %vm278, %v1031, 0
      %v1101 = vsel %vm278, %v1032, 0
      %v1104 = vsel %vm278, %v1033, 0
      %v1107 = vsel %vm278, %v1034, 0
      %v1110 = vsel %vm278, %v1035, 0
      %v1113 = vsel %vm278, %v1036, 0
      %v1116 = vsel %vm278, %v1037, 0
      %v1119 = vsel %vm278, %v1038, 0
      %v1122 = vsel %vm278, %v1039, 0
      %v1125 = vsel %vm278, %v1040, 0
      %v1128 = vsel %vm278, %v1041, 0
      %v1131 = vsel %vm278, %v1042, 0
      %v1134 = vsel %vm278, %v1043, 0
      %v1137 = vsel %vm278, %v1044, 0
      %v1140 = vsel %vm278, %v1045, 0
      %v1143 = vsel %vm278, %v1046, 0
      %v1146 = vsel %vm278, %v1047, 0
      %v1149 = vsel %vm278, %v1048, 0
      %v1152 = vsel %vm278, %v1049, 0
      %v1155 = vsel %vm278, %v1050, 0
      %v1158 = vsel %vm278, %v1051, 0
      %v1161 = vsel %vm278, %v1052, 0
      %v1164 = vsel %vm278, %v1053, 0
      %v1167 = vsel %vm278, %v1054, 0
      %v1170 = vsel %vm278, %v1055, 0
      %v1173 = vsel %vm278, %v1056, 0
      %v1176 = vsel %vm278, %v1057, 0
      %v1179 = vsel %vm278, %v1058, 0
      %v1182 = vsel %vm278, %v1059, 0
      %v1185 = vsel %vm278, %v1060, 0
      %v1188 = vsel %vm278, %v1061, 0
      %1190 = vmatpush.msra.mxu0 0.0
      %1191 = vmatpush.msra.mxu0 0.0
      %1192 = vmatpush.msra.mxu0 0.0
      %1193 = vmatpush.msra.mxu0 0.0
      %1194 = vmatpush.msra.mxu0 0.0
      %1195 = vmatpush.msra.mxu0 0.0
      %1196 = vmatpush.msra.mxu0 0.0
      %1197 = vmatpush.msra.mxu0 0.0
      %1198 = vmatpush.msra.mxu0 %v1090
      %1199 = vmatpush.msra.mxu0 %v1086
      %1200 = vmatpush.msra.mxu0 %v1082
      %1201 = vmatpush.msra.mxu0 %v1078
      %1202 = vmatpush.msra.mxu0 %v1074
      %1203 = vmatpush.msra.mxu0 %v1070
      %1204 = vmatpush.msra.mxu0 %v1066
      %1205 = vmatpush.msra.mxu0 %v1062
      %1206 = vmatmul.f32.gmra.mxu0 %v1095
      %v1207 = vpop.f32.mrf.mxu0
      %v1208 = vadd.f32 0.0, %v1207
      %1209 = vmatmul.f32.gmra.mxu0 %v1098
      %v1210 = vpop.f32.mrf.mxu0
      %v1211 = vadd.f32 0.0, %v1210
      %1212 = vmatmul.f32.gmra.mxu0 %v1101
      %v1213 = vpop.f32.mrf.mxu0
      %v1214 = vadd.f32 0.0, %v1213
      %1215 = vmatmul.f32.gmra.mxu0 %v1104
      %v1216 = vpop.f32.mrf.mxu0
      %v1217 = vadd.f32 0.0, %v1216
      %1218 = vmatmul.f32.gmra.mxu0 %v1107
      %v1219 = vpop.f32.mrf.mxu0
      %v1220 = vadd.f32 0.0, %v1219
      %1221 = vmatmul.f32.gmra.mxu0 %v1110
      %v1222 = vpop.f32.mrf.mxu0
      %v1223 = vadd.f32 0.0, %v1222
      %1224 = vmatmul.f32.gmra.mxu0 %v1113
      %v1225 = vpop.f32.mrf.mxu0
      %v1226 = vadd.f32 0.0, %v1225
      %1227 = vmatmul.f32.gmra.mxu0 %v1116
      %v1228 = vpop.f32.mrf.mxu0
      %v1229 = vadd.f32 0.0, %v1228
      %1230 = vmatmul.f32.gmra.mxu0 %v1119
      %v1231 = vpop.f32.mrf.mxu0
      %v1232 = vadd.f32 0.0, %v1231
      %1233 = vmatmul.f32.gmra.mxu0 %v1122
      %v1234 = vpop.f32.mrf.mxu0
      %v1235 = vadd.f32 0.0, %v1234
      %1236 = vmatmul.f32.gmra.mxu0 %v1125
      %v1237 = vpop.f32.mrf.mxu0
      %v1238 = vadd.f32 0.0, %v1237
      %1239 = vmatmul.f32.gmra.mxu0 %v1128
      %v1240 = vpop.f32.mrf.mxu0
      %v1241 = vadd.f32 0.0, %v1240
      %1242 = vmatmul.f32.gmra.mxu0 %v1131
      %v1243 = vpop.f32.mrf.mxu0
      %v1244 = vadd.f32 0.0, %v1243
      %1245 = vmatmul.f32.gmra.mxu0 %v1134
      %v1246 = vpop.f32.mrf.mxu0
      %v1247 = vadd.f32 0.0, %v1246
      %1248 = vmatmul.f32.gmra.mxu0 %v1137
      %v1249 = vpop.f32.mrf.mxu0
      %v1250 = vadd.f32 0.0, %v1249
      %1251 = vmatmul.f32.gmra.mxu0 %v1140
      %v1252 = vpop.f32.mrf.mxu0
      %v1253 = vadd.f32 0.0, %v1252
      %1254 = vmatmul.f32.gmra.mxu0 %v1143
      %v1255 = vpop.f32.mrf.mxu0
      %v1256 = vadd.f32 0.0, %v1255
      %1257 = vmatmul.f32.gmra.mxu0 %v1146
      %v1258 = vpop.f32.mrf.mxu0
      %v1259 = vadd.f32 0.0, %v1258
      %1260 = vmatmul.f32.gmra.mxu0 %v1149
      %v1261 = vpop.f32.mrf.mxu0
      %v1262 = vadd.f32 0.0, %v1261
      %1263 = vmatmul.f32.gmra.mxu0 %v1152
      %v1264 = vpop.f32.mrf.mxu0
      %v1265 = vadd.f32 0.0, %v1264
      %1266 = vmatmul.f32.gmra.mxu0 %v1155
      %v1267 = vpop.f32.mrf.mxu0
      %v1268 = vadd.f32 0.0, %v1267
      %1269 = vmatmul.f32.gmra.mxu0 %v1158
      %v1270 = vpop.f32.mrf.mxu0
      %v1271 = vadd.f32 0.0, %v1270
      %1272 = vmatmul.f32.gmra.mxu0 %v1161
      %v1273 = vpop.f32.mrf.mxu0
      %v1274 = vadd.f32 0.0, %v1273
      %1275 = vmatmul.f32.gmra.mxu0 %v1164
      %v1276 = vpop.f32.mrf.mxu0
      %v1277 = vadd.f32 0.0, %v1276
      %1278 = vmatmul.f32.gmra.mxu0 %v1167
      %v1279 = vpop.f32.mrf.mxu0
      %v1280 = vadd.f32 0.0, %v1279
      %1281 = vmatmul.f32.gmra.mxu0 %v1170
      %v1282 = vpop.f32.mrf.mxu0
      %v1283 = vadd.f32 0.0, %v1282
      %1284 = vmatmul.f32.gmra.mxu0 %v1173
      %v1285 = vpop.f32.mrf.mxu0
      %v1286 = vadd.f32 0.0, %v1285
      %1287 = vmatmul.f32.gmra.mxu0 %v1176
      %v1288 = vpop.f32.mrf.mxu0
      %v1289 = vadd.f32 0.0, %v1288
      %1290 = vmatmul.f32.gmra.mxu0 %v1179
      %v1291 = vpop.f32.mrf.mxu0
      %v1292 = vadd.f32 0.0, %v1291
      %1293 = vmatmul.f32.gmra.mxu0 %v1182
      %v1294 = vpop.f32.mrf.mxu0
      %v1295 = vadd.f32 0.0, %v1294
      %1296 = vmatmul.f32.gmra.mxu0 %v1185
      %v1297 = vpop.f32.mrf.mxu0
      %v1298 = vadd.f32 0.0, %v1297
      %1299 = vmatmul.f32.gmra.mxu0 %v1188
      %v1300 = vpop.f32.mrf.mxu0
      %v1301 = vadd.f32 0.0, %v1300
      %1302 = vdwg.mxu0
      %1303 = vmatpush.msra.mxu0 0.0
      %1304 = vmatpush.msra.mxu0 0.0
      %1305 = vmatpush.msra.mxu0 0.0
      %1306 = vmatpush.msra.mxu0 0.0
      %1307 = vmatpush.msra.mxu0 0.0
      %1308 = vmatpush.msra.mxu0 0.0
      %1309 = vmatpush.msra.mxu0 0.0
      %1310 = vmatpush.msra.mxu0 0.0
      %1311 = vmatpush.msra.mxu0 %v1091
      %1312 = vmatpush.msra.mxu0 %v1087
      %1313 = vmatpush.msra.mxu0 %v1083
      %1314 = vmatpush.msra.mxu0 %v1079
      %1315 = vmatpush.msra.mxu0 %v1075
      %1316 = vmatpush.msra.mxu0 %v1071
      %1317 = vmatpush.msra.mxu0 %v1067
      %1318 = vmatpush.msra.mxu0 %v1063
      %1319 = vmatmul.f32.gmra.mxu0 %v1095
      %v1320 = vpop.f32.mrf.mxu0
      %v1321 = vadd.f32 0.0, %v1320
      %1322 = vmatmul.f32.gmra.mxu0 %v1098
      %v1323 = vpop.f32.mrf.mxu0
      %v1324 = vadd.f32 0.0, %v1323
      %1325 = vmatmul.f32.gmra.mxu0 %v1101
      %v1326 = vpop.f32.mrf.mxu0
      %v1327 = vadd.f32 0.0, %v1326
      %1328 = vmatmul.f32.gmra.mxu0 %v1104
      %v1329 = vpop.f32.mrf.mxu0
      %v1330 = vadd.f32 0.0, %v1329
      %1331 = vmatmul.f32.gmra.mxu0 %v1107
      %v1332 = vpop.f32.mrf.mxu0
      %v1333 = vadd.f32 0.0, %v1332
      %1334 = vmatmul.f32.gmra.mxu0 %v1110
      %v1335 = vpop.f32.mrf.mxu0
      %v1336 = vadd.f32 0.0, %v1335
      %1337 = vmatmul.f32.gmra.mxu0 %v1113
      %v1338 = vpop.f32.mrf.mxu0
      %v1339 = vadd.f32 0.0, %v1338
      %1340 = vmatmul.f32.gmra.mxu0 %v1116
      %v1341 = vpop.f32.mrf.mxu0
      %v1342 = vadd.f32 0.0, %v1341
      %1343 = vmatmul.f32.gmra.mxu0 %v1119
      %v1344 = vpop.f32.mrf.mxu0
      %v1345 = vadd.f32 0.0, %v1344
      %1346 = vmatmul.f32.gmra.mxu0 %v1122
      %v1347 = vpop.f32.mrf.mxu0
      %v1348 = vadd.f32 0.0, %v1347
      %1349 = vmatmul.f32.gmra.mxu0 %v1125
      %v1350 = vpop.f32.mrf.mxu0
      %v1351 = vadd.f32 0.0, %v1350
      %1352 = vmatmul.f32.gmra.mxu0 %v1128
      %v1353 = vpop.f32.mrf.mxu0
      %v1354 = vadd.f32 0.0, %v1353
      %1355 = vmatmul.f32.gmra.mxu0 %v1131
      %v1356 = vpop.f32.mrf.mxu0
      %v1357 = vadd.f32 0.0, %v1356
      %1358 = vmatmul.f32.gmra.mxu0 %v1134
      %v1359 = vpop.f32.mrf.mxu0
      %v1360 = vadd.f32 0.0, %v1359
      %1361 = vmatmul.f32.gmra.mxu0 %v1137
      %v1362 = vpop.f32.mrf.mxu0
      %v1363 = vadd.f32 0.0, %v1362
      %1364 = vmatmul.f32.gmra.mxu0 %v1140
      %v1365 = vpop.f32.mrf.mxu0
      %v1366 = vadd.f32 0.0, %v1365
      %1367 = vmatmul.f32.gmra.mxu0 %v1143
      %v1368 = vpop.f32.mrf.mxu0
      %v1369 = vadd.f32 0.0, %v1368
      %1370 = vmatmul.f32.gmra.mxu0 %v1146
      %v1371 = vpop.f32.mrf.mxu0
      %v1372 = vadd.f32 0.0, %v1371
      %1373 = vmatmul.f32.gmra.mxu0 %v1149
      %v1374 = vpop.f32.mrf.mxu0
      %v1375 = vadd.f32 0.0, %v1374
      %1376 = vmatmul.f32.gmra.mxu0 %v1152
      %v1377 = vpop.f32.mrf.mxu0
      %v1378 = vadd.f32 0.0, %v1377
      %1379 = vmatmul.f32.gmra.mxu0 %v1155
      %v1380 = vpop.f32.mrf.mxu0
      %v1381 = vadd.f32 0.0, %v1380
      %1382 = vmatmul.f32.gmra.mxu0 %v1158
      %v1383 = vpop.f32.mrf.mxu0
      %v1384 = vadd.f32 0.0, %v1383
      %1385 = vmatmul.f32.gmra.mxu0 %v1161
      %v1386 = vpop.f32.mrf.mxu0
      %v1387 = vadd.f32 0.0, %v1386
      %1388 = vmatmul.f32.gmra.mxu0 %v1164
      %v1389 = vpop.f32.mrf.mxu0
      %v1390 = vadd.f32 0.0, %v1389
      %1391 = vmatmul.f32.gmra.mxu0 %v1167
      %v1392 = vpop.f32.mrf.mxu0
      %v1393 = vadd.f32 0.0, %v1392
      %1394 = vmatmul.f32.gmra.mxu0 %v1170
      %v1395 = vpop.f32.mrf.mxu0
      %v1396 = vadd.f32 0.0, %v1395
      %1397 = vmatmul.f32.gmra.mxu0 %v1173
      %v1398 = vpop.f32.mrf.mxu0
      %v1399 = vadd.f32 0.0, %v1398
      %1400 = vmatmul.f32.gmra.mxu0 %v1176
      %v1401 = vpop.f32.mrf.mxu0
      %v1402 = vadd.f32 0.0, %v1401
      %1403 = vmatmul.f32.gmra.mxu0 %v1179
      %v1404 = vpop.f32.mrf.mxu0
      %v1405 = vadd.f32 0.0, %v1404
      %1406 = vmatmul.f32.gmra.mxu0 %v1182
      %v1407 = vpop.f32.mrf.mxu0
      %v1408 = vadd.f32 0.0, %v1407
      %1409 = vmatmul.f32.gmra.mxu0 %v1185
      %v1410 = vpop.f32.mrf.mxu0
      %v1411 = vadd.f32 0.0, %v1410
      %1412 = vmatmul.f32.gmra.mxu0 %v1188
      %v1413 = vpop.f32.mrf.mxu0
      %v1414 = vadd.f32 0.0, %v1413
      %1415 = vdwg.mxu0
      %1416 = vmatpush.msra.mxu0 0.0
      %1417 = vmatpush.msra.mxu0 0.0
      %1418 = vmatpush.msra.mxu0 0.0
      %1419 = vmatpush.msra.mxu0 0.0
      %1420 = vmatpush.msra.mxu0 0.0
      %1421 = vmatpush.msra.mxu0 0.0
      %1422 = vmatpush.msra.mxu0 0.0
      %1423 = vmatpush.msra.mxu0 0.0
      %1424 = vmatpush.msra.mxu0 %v1092
      %1425 = vmatpush.msra.mxu0 %v1088
      %1426 = vmatpush.msra.mxu0 %v1084
      %1427 = vmatpush.msra.mxu0 %v1080
      %1428 = vmatpush.msra.mxu0 %v1076
      %1429 = vmatpush.msra.mxu0 %v1072
      %1430 = vmatpush.msra.mxu0 %v1068
      %1431 = vmatpush.msra.mxu0 %v1064
      %1432 = vmatmul.f32.gmra.mxu0 %v1095
      %v1433 = vpop.f32.mrf.mxu0
      %v1434 = vadd.f32 0.0, %v1433
      %1435 = vmatmul.f32.gmra.mxu0 %v1098
      %v1436 = vpop.f32.mrf.mxu0
      %v1437 = vadd.f32 0.0, %v1436
      %1438 = vmatmul.f32.gmra.mxu0 %v1101
      %v1439 = vpop.f32.mrf.mxu0
      %v1440 = vadd.f32 0.0, %v1439
      %1441 = vmatmul.f32.gmra.mxu0 %v1104
      %v1442 = vpop.f32.mrf.mxu0
      %v1443 = vadd.f32 0.0, %v1442
      %1444 = vmatmul.f32.gmra.mxu0 %v1107
      %v1445 = vpop.f32.mrf.mxu0
      %v1446 = vadd.f32 0.0, %v1445
      %1447 = vmatmul.f32.gmra.mxu0 %v1110
      %v1448 = vpop.f32.mrf.mxu0
      %v1449 = vadd.f32 0.0, %v1448
      %1450 = vmatmul.f32.gmra.mxu0 %v1113
      %v1451 = vpop.f32.mrf.mxu0
      %v1452 = vadd.f32 0.0, %v1451
      %1453 = vmatmul.f32.gmra.mxu0 %v1116
      %v1454 = vpop.f32.mrf.mxu0
      %v1455 = vadd.f32 0.0, %v1454
      %1456 = vmatmul.f32.gmra.mxu0 %v1119
      %v1457 = vpop.f32.mrf.mxu0
      %v1458 = vadd.f32 0.0, %v1457
      %1459 = vmatmul.f32.gmra.mxu0 %v1122
      %v1460 = vpop.f32.mrf.mxu0
      %v1461 = vadd.f32 0.0, %v1460
      %1462 = vmatmul.f32.gmra.mxu0 %v1125
      %v1463 = vpop.f32.mrf.mxu0
      %v1464 = vadd.f32 0.0, %v1463
      %1465 = vmatmul.f32.gmra.mxu0 %v1128
      %v1466 = vpop.f32.mrf.mxu0
      %v1467 = vadd.f32 0.0, %v1466
      %1468 = vmatmul.f32.gmra.mxu0 %v1131
      %v1469 = vpop.f32.mrf.mxu0
      %v1470 = vadd.f32 0.0, %v1469
      %1471 = vmatmul.f32.gmra.mxu0 %v1134
      %v1472 = vpop.f32.mrf.mxu0
      %v1473 = vadd.f32 0.0, %v1472
      %1474 = vmatmul.f32.gmra.mxu0 %v1137
      %v1475 = vpop.f32.mrf.mxu0
      %v1476 = vadd.f32 0.0, %v1475
      %1477 = vmatmul.f32.gmra.mxu0 %v1140
      %v1478 = vpop.f32.mrf.mxu0
      %v1479 = vadd.f32 0.0, %v1478
      %1480 = vmatmul.f32.gmra.mxu0 %v1143
      %v1481 = vpop.f32.mrf.mxu0
      %v1482 = vadd.f32 0.0, %v1481
      %1483 = vmatmul.f32.gmra.mxu0 %v1146
      %v1484 = vpop.f32.mrf.mxu0
      %v1485 = vadd.f32 0.0, %v1484
      %1486 = vmatmul.f32.gmra.mxu0 %v1149
      %v1487 = vpop.f32.mrf.mxu0
      %v1488 = vadd.f32 0.0, %v1487
      %1489 = vmatmul.f32.gmra.mxu0 %v1152
      %v1490 = vpop.f32.mrf.mxu0
      %v1491 = vadd.f32 0.0, %v1490
      %1492 = vmatmul.f32.gmra.mxu0 %v1155
      %v1493 = vpop.f32.mrf.mxu0
      %v1494 = vadd.f32 0.0, %v1493
      %1495 = vmatmul.f32.gmra.mxu0 %v1158
      %v1496 = vpop.f32.mrf.mxu0
      %v1497 = vadd.f32 0.0, %v1496
      %1498 = vmatmul.f32.gmra.mxu0 %v1161
      %v1499 = vpop.f32.mrf.mxu0
      %v1500 = vadd.f32 0.0, %v1499
      %1501 = vmatmul.f32.gmra.mxu0 %v1164
      %v1502 = vpop.f32.mrf.mxu0
      %v1503 = vadd.f32 0.0, %v1502
      %1504 = vmatmul.f32.gmra.mxu0 %v1167
      %v1505 = vpop.f32.mrf.mxu0
      %v1506 = vadd.f32 0.0, %v1505
      %1507 = vmatmul.f32.gmra.mxu0 %v1170
      %v1508 = vpop.f32.mrf.mxu0
      %v1509 = vadd.f32 0.0, %v1508
      %1510 = vmatmul.f32.gmra.mxu0 %v1173
      %v1511 = vpop.f32.mrf.mxu0
      %v1512 = vadd.f32 0.0, %v1511
      %1513 = vmatmul.f32.gmra.mxu0 %v1176
      %v1514 = vpop.f32.mrf.mxu0
      %v1515 = vadd.f32 0.0, %v1514
      %1516 = vmatmul.f32.gmra.mxu0 %v1179
      %v1517 = vpop.f32.mrf.mxu0
      %v1518 = vadd.f32 0.0, %v1517
      %1519 = vmatmul.f32.gmra.mxu0 %v1182
      %v1520 = vpop.f32.mrf.mxu0
      %v1521 = vadd.f32 0.0, %v1520
      %1522 = vmatmul.f32.gmra.mxu0 %v1185
      %v1523 = vpop.f32.mrf.mxu0
      %v1524 = vadd.f32 0.0, %v1523
      %1525 = vmatmul.f32.gmra.mxu0 %v1188
      %v1526 = vpop.f32.mrf.mxu0
      %v1527 = vadd.f32 0.0, %v1526
      %1528 = vdwg.mxu0
      %1529 = vmatpush.msra.mxu0 0.0
      %1530 = vmatpush.msra.mxu0 0.0
      %1531 = vmatpush.msra.mxu0 0.0
      %1532 = vmatpush.msra.mxu0 0.0
      %1533 = vmatpush.msra.mxu0 0.0
      %1534 = vmatpush.msra.mxu0 0.0
      %1535 = vmatpush.msra.mxu0 0.0
      %1536 = vmatpush.msra.mxu0 0.0
      %1537 = vmatpush.msra.mxu0 %v1093
      %1538 = vmatpush.msra.mxu0 %v1089
      %1539 = vmatpush.msra.mxu0 %v1085
      %1540 = vmatpush.msra.mxu0 %v1081
      %1541 = vmatpush.msra.mxu0 %v1077
      %1542 = vmatpush.msra.mxu0 %v1073
      %1543 = vmatpush.msra.mxu0 %v1069
      %1544 = vmatpush.msra.mxu0 %v1065
      %1545 = vmatmul.f32.gmra.mxu0 %v1095
      %v1546 = vpop.f32.mrf.mxu0
      %v1547 = vadd.f32 0.0, %v1546
      %1548 = vmatmul.f32.gmra.mxu0 %v1098
      %v1549 = vpop.f32.mrf.mxu0
      %v1550 = vadd.f32 0.0, %v1549
      %1551 = vmatmul.f32.gmra.mxu0 %v1101
      %v1552 = vpop.f32.mrf.mxu0
      %v1553 = vadd.f32 0.0, %v1552
      %1554 = vmatmul.f32.gmra.mxu0 %v1104
      %v1555 = vpop.f32.mrf.mxu0
      %v1556 = vadd.f32 0.0, %v1555
      %1557 = vmatmul.f32.gmra.mxu0 %v1107
      %v1558 = vpop.f32.mrf.mxu0
      %v1559 = vadd.f32 0.0, %v1558
      %1560 = vmatmul.f32.gmra.mxu0 %v1110
      %v1561 = vpop.f32.mrf.mxu0
      %v1562 = vadd.f32 0.0, %v1561
      %1563 = vmatmul.f32.gmra.mxu0 %v1113
      %v1564 = vpop.f32.mrf.mxu0
      %v1565 = vadd.f32 0.0, %v1564
      %1566 = vmatmul.f32.gmra.mxu0 %v1116
      %v1567 = vpop.f32.mrf.mxu0
      %v1568 = vadd.f32 0.0, %v1567
      %1569 = vmatmul.f32.gmra.mxu0 %v1119
      %v1570 = vpop.f32.mrf.mxu0
      %v1571 = vadd.f32 0.0, %v1570
      %1572 = vmatmul.f32.gmra.mxu0 %v1122
      %v1573 = vpop.f32.mrf.mxu0
      %v1574 = vadd.f32 0.0, %v1573
      %1575 = vmatmul.f32.gmra.mxu0 %v1125
      %v1576 = vpop.f32.mrf.mxu0
      %v1577 = vadd.f32 0.0, %v1576
      %1578 = vmatmul.f32.gmra.mxu0 %v1128
      %v1579 = vpop.f32.mrf.mxu0
      %v1580 = vadd.f32 0.0, %v1579
      %1581 = vmatmul.f32.gmra.mxu0 %v1131
      %v1582 = vpop.f32.mrf.mxu0
      %v1583 = vadd.f32 0.0, %v1582
      %1584 = vmatmul.f32.gmra.mxu0 %v1134
      %v1585 = vpop.f32.mrf.mxu0
      %v1586 = vadd.f32 0.0, %v1585
      %1587 = vmatmul.f32.gmra.mxu0 %v1137
      %v1588 = vpop.f32.mrf.mxu0
      %v1589 = vadd.f32 0.0, %v1588
      %1590 = vmatmul.f32.gmra.mxu0 %v1140
      %v1591 = vpop.f32.mrf.mxu0
      %v1592 = vadd.f32 0.0, %v1591
      %1593 = vmatmul.f32.gmra.mxu0 %v1143
      %v1594 = vpop.f32.mrf.mxu0
      %v1595 = vadd.f32 0.0, %v1594
      %1596 = vmatmul.f32.gmra.mxu0 %v1146
      %v1597 = vpop.f32.mrf.mxu0
      %v1598 = vadd.f32 0.0, %v1597
      %1599 = vmatmul.f32.gmra.mxu0 %v1149
      %v1600 = vpop.f32.mrf.mxu0
      %v1601 = vadd.f32 0.0, %v1600
      %1602 = vmatmul.f32.gmra.mxu0 %v1152
      %v1603 = vpop.f32.mrf.mxu0
      %v1604 = vadd.f32 0.0, %v1603
      %1605 = vmatmul.f32.gmra.mxu0 %v1155
      %v1606 = vpop.f32.mrf.mxu0
      %v1607 = vadd.f32 0.0, %v1606
      %1608 = vmatmul.f32.gmra.mxu0 %v1158
      %v1609 = vpop.f32.mrf.mxu0
      %v1610 = vadd.f32 0.0, %v1609
      %1611 = vmatmul.f32.gmra.mxu0 %v1161
      %v1612 = vpop.f32.mrf.mxu0
      %v1613 = vadd.f32 0.0, %v1612
      %1614 = vmatmul.f32.gmra.mxu0 %v1164
      %v1615 = vpop.f32.mrf.mxu0
      %v1616 = vadd.f32 0.0, %v1615
      %1617 = vmatmul.f32.gmra.mxu0 %v1167
      %v1618 = vpop.f32.mrf.mxu0
      %v1619 = vadd.f32 0.0, %v1618
      %1620 = vmatmul.f32.gmra.mxu0 %v1170
      %v1621 = vpop.f32.mrf.mxu0
      %v1622 = vadd.f32 0.0, %v1621
      %1623 = vmatmul.f32.gmra.mxu0 %v1173
      %v1624 = vpop.f32.mrf.mxu0
      %v1625 = vadd.f32 0.0, %v1624
      %1626 = vmatmul.f32.gmra.mxu0 %v1176
      %v1627 = vpop.f32.mrf.mxu0
      %v1628 = vadd.f32 0.0, %v1627
      %1629 = vmatmul.f32.gmra.mxu0 %v1179
      %v1630 = vpop.f32.mrf.mxu0
      %v1631 = vadd.f32 0.0, %v1630
      %1632 = vmatmul.f32.gmra.mxu0 %v1182
      %v1633 = vpop.f32.mrf.mxu0
      %v1634 = vadd.f32 0.0, %v1633
      %1635 = vmatmul.f32.gmra.mxu0 %v1185
      %v1636 = vpop.f32.mrf.mxu0
      %v1637 = vadd.f32 0.0, %v1636
      %1638 = vmatmul.f32.gmra.mxu0 %v1188
      %v1639 = vpop.f32.mrf.mxu0
      %v1640 = vadd.f32 0.0, %v1639
      %1641 = vdwg.mxu0
      %1642 = vst [vmem:[%s237] sm:$0xff] %v1208
      %1643 = vst [vmem:[%s237 + $0x8] sm:$0xff] %v1321
      %1644 = vst [vmem:[%s237 + $0x10] sm:$0xff] %v1211
      %1645 = vst [vmem:[%s237 + $0x18] sm:$0xff] %v1324
      %1646 = vst [vmem:[%s237 + $0x20] sm:$0xff] %v1214
      %1647 = vst [vmem:[%s237 + $0x28] sm:$0xff] %v1327
      %1648 = vst [vmem:[%s237 + $0x30] sm:$0xff] %v1217
      %1649 = vst [vmem:[%s237 + $0x38] sm:$0xff] %v1330
      %1650 = vst [vmem:[%s237 + $0x40] sm:$0xff] %v1220
      %1651 = vst [vmem:[%s237 + $0x48] sm:$0xff] %v1333
      %1652 = vst [vmem:[%s237 + $0x50] sm:$0xff] %v1223
      %1653 = vst [vmem:[%s237 + $0x58] sm:$0xff] %v1336
      %1654 = vst [vmem:[%s237 + $0x60] sm:$0xff] %v1226
      %1655 = vst [vmem:[%s237 + $0x68] sm:$0xff] %v1339
      %1656 = vst [vmem:[%s237 + $0x70] sm:$0xff] %v1229
      %1657 = vst [vmem:[%s237 + $0x78] sm:$0xff] %v1342
      %1658 = vst [vmem:[%s237 + $0x80] sm:$0xff] %v1232
      %1659 = vst [vmem:[%s237 + $0x88] sm:$0xff] %v1345
      %1660 = vst [vmem:[%s237 + $0x90] sm:$0xff] %v1235
      %1661 = vst [vmem:[%s237 + $0x98] sm:$0xff] %v1348
      %1662 = vst [vmem:[%s237 + $0xa0] sm:$0xff] %v1238
      %1663 = vst [vmem:[%s237 + $0xa8] sm:$0xff] %v1351
      %1664 = vst [vmem:[%s237 + $0xb0] sm:$0xff] %v1241
      %1665 = vst [vmem:[%s237 + $0xb8] sm:$0xff] %v1354
      %1666 = vst [vmem:[%s237 + $0xc0] sm:$0xff] %v1244
      %1667 = vst [vmem:[%s237 + $0xc8] sm:$0xff] %v1357
      %1668 = vst [vmem:[%s237 + $0xd0] sm:$0xff] %v1247
      %1669 = vst [vmem:[%s237 + $0xd8] sm:$0xff] %v1360
      %1670 = vst [vmem:[%s237 + $0xe0] sm:$0xff] %v1250
      %1671 = vst [vmem:[%s237 + $0xe8] sm:$0xff] %v1363
      %1672 = vst [vmem:[%s237 + $0xf0] sm:$0xff] %v1253
      %1673 = vst [vmem:[%s237 + $0xf8] sm:$0xff] %v1366
      %1674 = vst [vmem:[%s237 + $0x100] sm:$0xff] %v1256
      %1675 = vst [vmem:[%s237 + $0x108] sm:$0xff] %v1369
      %1676 = vst [vmem:[%s237 + $0x110] sm:$0xff] %v1259
      %1677 = vst [vmem:[%s237 + $0x118] sm:$0xff] %v1372
      %1678 = vst [vmem:[%s237 + $0x120] sm:$0xff] %v1262
      %1679 = vst [vmem:[%s237 + $0x128] sm:$0xff] %v1375
      %1680 = vst [vmem:[%s237 + $0x130] sm:$0xff] %v1265
      %1681 = vst [vmem:[%s237 + $0x138] sm:$0xff] %v1378
      %1682 = vst [vmem:[%s237 + $0x140] sm:$0xff] %v1268
      %1683 = vst [vmem:[%s237 + $0x148] sm:$0xff] %v1381
      %1684 = vst [vmem:[%s237 + $0x150] sm:$0xff] %v1271
      %1685 = vst [vmem:[%s237 + $0x158] sm:$0xff] %v1384
      %1686 = vst [vmem:[%s237 + $0x160] sm:$0xff] %v1274
      %1687 = vst [vmem:[%s237 + $0x168] sm:$0xff] %v1387
      %1688 = vst [vmem:[%s237 + $0x170] sm:$0xff] %v1277
      %1689 = vst [vmem:[%s237 + $0x178] sm:$0xff] %v1390
      %1690 = vst [vmem:[%s237 + $0x180] sm:$0xff] %v1280
      %1691 = vst [vmem:[%s237 + $0x188] sm:$0xff] %v1393
      %1692 = vst [vmem:[%s237 + $0x190] sm:$0xff] %v1283
      %1693 = vst [vmem:[%s237 + $0x198] sm:$0xff] %v1396
      %1694 = vst [vmem:[%s237 + $0x1a0] sm:$0xff] %v1286
      %1695 = vst [vmem:[%s237 + $0x1a8] sm:$0xff] %v1399
      %1696 = vst [vmem:[%s237 + $0x1b0] sm:$0xff] %v1289
      %1697 = vst [vmem:[%s237 + $0x1b8] sm:$0xff] %v1402
      %1698 = vst [vmem:[%s237 + $0x1c0] sm:$0xff] %v1292
      %1699 = vst [vmem:[%s237 + $0x1c8] sm:$0xff] %v1405
      %1700 = vst [vmem:[%s237 + $0x1d0] sm:$0xff] %v1295
      %1701 = vst [vmem:[%s237 + $0x1d8] sm:$0xff] %v1408
      %1702 = vst [vmem:[%s237 + $0x1e0] sm:$0xff] %v1298
      %1703 = vst [vmem:[%s237 + $0x1e8] sm:$0xff] %v1411
      %1704 = vst [vmem:[%s237 + $0x1f0] sm:$0xff] %v1301
      %1705 = vst [vmem:[%s237 + $0x1f8] sm:$0xff] %v1414
      %v1706 = vxor.u32 %v1434, 2147483648
      %v1707 = vxor.u32 %v1547, 2147483648
      %v1708 = vxor.u32 %v1437, 2147483648
      %v1709 = vxor.u32 %v1550, 2147483648
      %v1710 = vxor.u32 %v1440, 2147483648
      %v1711 = vxor.u32 %v1553, 2147483648
      %v1712 = vxor.u32 %v1443, 2147483648
      %v1713 = vxor.u32 %v1556, 2147483648
      %v1714 = vxor.u32 %v1446, 2147483648
      %v1715 = vxor.u32 %v1559, 2147483648
      %v1716 = vxor.u32 %v1449, 2147483648
      %v1717 = vxor.u32 %v1562, 2147483648
      %v1718 = vxor.u32 %v1452, 2147483648
      %v1719 = vxor.u32 %v1565, 2147483648
      %v1720 = vxor.u32 %v1455, 2147483648
      %v1721 = vxor.u32 %v1568, 2147483648
      %v1722 = vxor.u32 %v1458, 2147483648
      %v1723 = vxor.u32 %v1571, 2147483648
      %v1724 = vxor.u32 %v1461, 2147483648
      %v1725 = vxor.u32 %v1574, 2147483648
      %v1726 = vxor.u32 %v1464, 2147483648
      %v1727 = vxor.u32 %v1577, 2147483648
      %v1728 = vxor.u32 %v1467, 2147483648
      %v1729 = vxor.u32 %v1580, 2147483648
      %v1730 = vxor.u32 %v1470, 2147483648
      %v1731 = vxor.u32 %v1583, 2147483648
      %v1732 = vxor.u32 %v1473, 2147483648
      %v1733 = vxor.u32 %v1586, 2147483648
      %v1734 = vxor.u32 %v1476, 2147483648
      %v1735 = vxor.u32 %v1589, 2147483648
      %v1736 = vxor.u32 %v1479, 2147483648
      %v1737 = vxor.u32 %v1592, 2147483648
      %v1738 = vxor.u32 %v1482, 2147483648
      %v1739 = vxor.u32 %v1595, 2147483648
      %v1740 = vxor.u32 %v1485, 2147483648
      %v1741 = vxor.u32 %v1598, 2147483648
      %v1742 = vxor.u32 %v1488, 2147483648
      %v1743 = vxor.u32 %v1601, 2147483648
      %v1744 = vxor.u32 %v1491, 2147483648
      %v1745 = vxor.u32 %v1604, 2147483648
      %v1746 = vxor.u32 %v1494, 2147483648
      %v1747 = vxor.u32 %v1607, 2147483648
      %v1748 = vxor.u32 %v1497, 2147483648
      %v1749 = vxor.u32 %v1610, 2147483648
      %v1750 = vxor.u32 %v1500, 2147483648
      %v1751 = vxor.u32 %v1613, 2147483648
      %v1752 = vxor.u32 %v1503, 2147483648
      %v1753 = vxor.u32 %v1616, 2147483648
      %v1754 = vxor.u32 %v1506, 2147483648
      %v1755 = vxor.u32 %v1619, 2147483648
      %v1756 = vxor.u32 %v1509, 2147483648
      %v1757 = vxor.u32 %v1622, 2147483648
      %v1758 = vxor.u32 %v1512, 2147483648
      %v1759 = vxor.u32 %v1625, 2147483648
      %v1760 = vxor.u32 %v1515, 2147483648
      %v1761 = vxor.u32 %v1628, 2147483648
      %v1762 = vxor.u32 %v1518, 2147483648
      %v1763 = vxor.u32 %v1631, 2147483648
      %v1764 = vxor.u32 %v1521, 2147483648
      %v1765 = vxor.u32 %v1634, 2147483648
      %v1766 = vxor.u32 %v1524, 2147483648
      %v1767 = vxor.u32 %v1637, 2147483648
      %v1768 = vxor.u32 %v1527, 2147483648
      %v1769 = vxor.u32 %v1640, 2147483648
      %v1770 = vmul.f32 %v1706, 1.442695
      %v1771 = vpow.pop %v1770
      %v1772 = vmul.f32 %v1707, 1.442695
      %v1773 = vpow.pop %v1772
      %v1774 = vmul.f32 %v1708, 1.442695
      %v1775 = vpow.pop %v1774
      %v1776 = vmul.f32 %v1709, 1.442695
      %v1777 = vpow.pop %v1776
      %v1778 = vmul.f32 %v1710, 1.442695
      %v1779 = vpow.pop %v1778
      %v1780 = vmul.f32 %v1711, 1.442695
      %v1781 = vpow.pop %v1780
      %v1782 = vmul.f32 %v1712, 1.442695
      %v1783 = vpow.pop %v1782
      %v1784 = vmul.f32 %v1713, 1.442695
      %v1785 = vpow.pop %v1784
      %v1786 = vmul.f32 %v1714, 1.442695
      %v1787 = vpow.pop %v1786
      %v1788 = vmul.f32 %v1715, 1.442695
      %v1789 = vpow.pop %v1788
      %v1790 = vmul.f32 %v1716, 1.442695
      %v1791 = vpow.pop %v1790
      %v1792 = vmul.f32 %v1717, 1.442695
      %v1793 = vpow.pop %v1792
      %v1794 = vmul.f32 %v1718, 1.442695
      %v1795 = vpow.pop %v1794
      %v1796 = vmul.f32 %v1719, 1.442695
      %v1797 = vpow.pop %v1796
      %v1798 = vmul.f32 %v1720, 1.442695
      %v1799 = vpow.pop %v1798
      %v1800 = vmul.f32 %v1721, 1.442695
      %v1801 = vpow.pop %v1800
      %v1802 = vmul.f32 %v1722, 1.442695
      %v1803 = vpow.pop %v1802
      %v1804 = vmul.f32 %v1723, 1.442695
      %v1805 = vpow.pop %v1804
      %v1806 = vmul.f32 %v1724, 1.442695
      %v1807 = vpow.pop %v1806
      %v1808 = vmul.f32 %v1725, 1.442695
      %v1809 = vpow.pop %v1808
      %v1810 = vmul.f32 %v1726, 1.442695
      %v1811 = vpow.pop %v1810
      %v1812 = vmul.f32 %v1727, 1.442695
      %v1813 = vpow.pop %v1812
      %v1814 = vmul.f32 %v1728, 1.442695
      %v1815 = vpow.pop %v1814
      %v1816 = vmul.f32 %v1729, 1.442695
      %v1817 = vpow.pop %v1816
      %v1818 = vmul.f32 %v1730, 1.442695
      %v1819 = vpow.pop %v1818
      %v1820 = vmul.f32 %v1731, 1.442695
      %v1821 = vpow.pop %v1820
      %v1822 = vmul.f32 %v1732, 1.442695
      %v1823 = vpow.pop %v1822
      %v1824 = vmul.f32 %v1733, 1.442695
      %v1825 = vpow.pop %v1824
      %v1826 = vmul.f32 %v1734, 1.442695
      %v1827 = vpow.pop %v1826
      %v1828 = vmul.f32 %v1735, 1.442695
      %v1829 = vpow.pop %v1828
      %v1830 = vmul.f32 %v1736, 1.442695
      %v1831 = vpow.pop %v1830
      %v1832 = vmul.f32 %v1737, 1.442695
      %v1833 = vpow.pop %v1832
      %v1834 = vmul.f32 %v1738, 1.442695
      %v1835 = vpow.pop %v1834
      %v1836 = vmul.f32 %v1739, 1.442695
      %v1837 = vpow.pop %v1836
      %v1838 = vmul.f32 %v1740, 1.442695
      %v1839 = vpow.pop %v1838
      %v1840 = vmul.f32 %v1741, 1.442695
      %v1841 = vpow.pop %v1840
      %v1842 = vmul.f32 %v1742, 1.442695
      %v1843 = vpow.pop %v1842
      %v1844 = vmul.f32 %v1743, 1.442695
      %v1845 = vpow.pop %v1844
      %v1846 = vmul.f32 %v1744, 1.442695
      %v1847 = vpow.pop %v1846
      %v1848 = vmul.f32 %v1745, 1.442695
      %v1849 = vpow.pop %v1848
      %v1850 = vmul.f32 %v1746, 1.442695
      %v1851 = vpow.pop %v1850
      %v1852 = vmul.f32 %v1747, 1.442695
      %v1853 = vpow.pop %v1852
      %v1854 = vmul.f32 %v1748, 1.442695
      %v1855 = vpow.pop %v1854
      %v1856 = vmul.f32 %v1749, 1.442695
      %v1857 = vpow.pop %v1856
      %v1858 = vmul.f32 %v1750, 1.442695
      %v1859 = vpow.pop %v1858
      %v1860 = vmul.f32 %v1751, 1.442695
      %v1861 = vpow.pop %v1860
      %v1862 = vmul.f32 %v1752, 1.442695
      %v1863 = vpow.pop %v1862
      %v1864 = vmul.f32 %v1753, 1.442695
      %v1865 = vpow.pop %v1864
      %v1866 = vmul.f32 %v1754, 1.442695
      %v1867 = vpow.pop %v1866
      %v1868 = vmul.f32 %v1755, 1.442695
      %v1869 = vpow.pop %v1868
      %v1870 = vmul.f32 %v1756, 1.442695
      %v1871 = vpow.pop %v1870
      %v1872 = vmul.f32 %v1757, 1.442695
      %v1873 = vpow.pop %v1872
      %v1874 = vmul.f32 %v1758, 1.442695
      %v1875 = vpow.pop %v1874
      %v1876 = vmul.f32 %v1759, 1.442695
      %v1877 = vpow.pop %v1876
      %v1878 = vmul.f32 %v1760, 1.442695
      %v1879 = vpow.pop %v1878
      %v1880 = vmul.f32 %v1761, 1.442695
      %v1881 = vpow.pop %v1880
      %v1882 = vmul.f32 %v1762, 1.442695
      %v1883 = vpow.pop %v1882
      %v1884 = vmul.f32 %v1763, 1.442695
      %v1885 = vpow.pop %v1884
      %v1886 = vmul.f32 %v1764, 1.442695
      %v1887 = vpow.pop %v1886
      %v1888 = vmul.f32 %v1765, 1.442695
      %v1889 = vpow.pop %v1888
      %v1890 = vmul.f32 %v1766, 1.442695
      %v1891 = vpow.pop %v1890
      %v1892 = vmul.f32 %v1767, 1.442695
      %v1893 = vpow.pop %v1892
      %v1894 = vmul.f32 %v1768, 1.442695
      %v1895 = vpow.pop %v1894
      %v1896 = vmul.f32 %v1769, 1.442695
      %v1897 = vpow.pop %v1896
      %v1898 = vadd.f32 %v1771, 1.0
      %v1899 = vadd.f32 %v1773, 1.0
      %v1900 = vadd.f32 %v1775, 1.0
      %v1901 = vadd.f32 %v1777, 1.0
      %v1902 = vadd.f32 %v1779, 1.0
      %v1903 = vadd.f32 %v1781, 1.0
      %v1904 = vadd.f32 %v1783, 1.0
      %v1905 = vadd.f32 %v1785, 1.0
      %v1906 = vadd.f32 %v1787, 1.0
      %v1907 = vadd.f32 %v1789, 1.0
      %v1908 = vadd.f32 %v1791, 1.0
      %v1909 = vadd.f32 %v1793, 1.0
      %v1910 = vadd.f32 %v1795, 1.0
      %v1911 = vadd.f32 %v1797, 1.0
      %v1912 = vadd.f32 %v1799, 1.0
      %v1913 = vadd.f32 %v1801, 1.0
      %v1914 = vadd.f32 %v1803, 1.0
      %v1915 = vadd.f32 %v1805, 1.0
      %v1916 = vadd.f32 %v1807, 1.0
      %v1917 = vadd.f32 %v1809, 1.0
      %v1918 = vadd.f32 %v1811, 1.0
      %v1919 = vadd.f32 %v1813, 1.0
      %v1920 = vadd.f32 %v1815, 1.0
      %v1921 = vadd.f32 %v1817, 1.0
      %v1922 = vadd.f32 %v1819, 1.0
      %v1923 = vadd.f32 %v1821, 1.0
      %v1924 = vadd.f32 %v1823, 1.0
      %v1925 = vadd.f32 %v1825, 1.0
      %v1926 = vadd.f32 %v1827, 1.0
      %v1927 = vadd.f32 %v1829, 1.0
      %v1928 = vadd.f32 %v1831, 1.0
      %v1929 = vadd.f32 %v1833, 1.0
      %v1930 = vadd.f32 %v1835, 1.0
      %v1931 = vadd.f32 %v1837, 1.0
      %v1932 = vadd.f32 %v1839, 1.0
      %v1933 = vadd.f32 %v1841, 1.0
      %v1934 = vadd.f32 %v1843, 1.0
      %v1935 = vadd.f32 %v1845, 1.0
      %v1936 = vadd.f32 %v1847, 1.0
      %v1937 = vadd.f32 %v1849, 1.0
      %v1938 = vadd.f32 %v1851, 1.0
      %v1939 = vadd.f32 %v1853, 1.0
      %v1940 = vadd.f32 %v1855, 1.0
      %v1941 = vadd.f32 %v1857, 1.0
      %v1942 = vadd.f32 %v1859, 1.0
      %v1943 = vadd.f32 %v1861, 1.0
      %v1944 = vadd.f32 %v1863, 1.0
      %v1945 = vadd.f32 %v1865, 1.0
      %v1946 = vadd.f32 %v1867, 1.0
      %v1947 = vadd.f32 %v1869, 1.0
      %v1948 = vadd.f32 %v1871, 1.0
      %v1949 = vadd.f32 %v1873, 1.0
      %v1950 = vadd.f32 %v1875, 1.0
      %v1951 = vadd.f32 %v1877, 1.0
      %v1952 = vadd.f32 %v1879, 1.0
      %v1953 = vadd.f32 %v1881, 1.0
      %v1954 = vadd.f32 %v1883, 1.0
      %v1955 = vadd.f32 %v1885, 1.0
      %v1956 = vadd.f32 %v1887, 1.0
      %v1957 = vadd.f32 %v1889, 1.0
      %v1958 = vadd.f32 %v1891, 1.0
      %v1959 = vadd.f32 %v1893, 1.0
      %v1960 = vadd.f32 %v1895, 1.0
      %v1961 = vadd.f32 %v1897, 1.0
      %v1962 = vrcp.pop %v1898
      %v1963 = vmul.f32 %v1898, %v1962
      %v1964 = vsub.f32 1.0, %v1963
      %v1965 = vmul.f32 %v1962, %v1964
      %v1966 = vadd.f32 %v1962, %v1965
      %vm1967 = vweird.f32 %v1898
      %vm1968 = vweird.f32 %v1962
      %vm1969 = vmor %vm1967, %vm1968
      %v1970 = vsel %vm1969, %v1962, %v1966
      %v1971 = vand.u32 2147483647, %v1898
      %vm1972 = vcmp.eq.f32.partialorder %v1971, 8.507059e+37
      %v1973 = vand.u32 %v1898, 2147483648
      %v1974 = vor.u32 1.1754944e-38, %v1973
      %v1975 = vsel %vm1972, %v1974, %v1970
      %v1976 = vmul.f32 1.0, %v1975
      %v1977 = vrcp.pop %v1899
      %v1978 = vmul.f32 %v1899, %v1977
      %v1979 = vsub.f32 1.0, %v1978
      %v1980 = vmul.f32 %v1977, %v1979
      %v1981 = vadd.f32 %v1977, %v1980
      %vm1982 = vweird.f32 %v1899
      %vm1983 = vweird.f32 %v1977
      %vm1984 = vmor %vm1982, %vm1983
      %v1985 = vsel %vm1984, %v1977, %v1981
      %v1986 = vand.u32 2147483647, %v1899
      %vm1987 = vcmp.eq.f32.partialorder %v1986, 8.507059e+37
      %v1988 = vand.u32 %v1899, 2147483648
      %v1989 = vor.u32 1.1754944e-38, %v1988
      %v1990 = vsel %vm1987, %v1989, %v1985
      %v1991 = vmul.f32 1.0, %v1990
      %v1992 = vrcp.pop %v1900
      %v1993 = vmul.f32 %v1900, %v1992
      %v1994 = vsub.f32 1.0, %v1993
      %v1995 = vmul.f32 %v1992, %v1994
      %v1996 = vadd.f32 %v1992, %v1995
      %vm1997 = vweird.f32 %v1900
      %vm1998 = vweird.f32 %v1992
      %vm1999 = vmor %vm1997, %vm1998
      %v2000 = vsel %vm1999, %v1992, %v1996
      %v2001 = vand.u32 2147483647, %v1900
      %vm2002 = vcmp.eq.f32.partialorder %v2001, 8.507059e+37
      %v2003 = vand.u32 %v1900, 2147483648
      %v2004 = vor.u32 1.1754944e-38, %v2003
      %v2005 = vsel %vm2002, %v2004, %v2000
      %v2006 = vmul.f32 1.0, %v2005
      %v2007 = vrcp.pop %v1901
      %v2008 = vmul.f32 %v1901, %v2007
      %v2009 = vsub.f32 1.0, %v2008
      %v2010 = vmul.f32 %v2007, %v2009
      %v2011 = vadd.f32 %v2007, %v2010
      %vm2012 = vweird.f32 %v1901
      %vm2013 = vweird.f32 %v2007
      %vm2014 = vmor %vm2012, %vm2013
      %v2015 = vsel %vm2014, %v2007, %v2011
      %v2016 = vand.u32 2147483647, %v1901
      %vm2017 = vcmp.eq.f32.partialorder %v2016, 8.507059e+37
      %v2018 = vand.u32 %v1901, 2147483648
      %v2019 = vor.u32 1.1754944e-38, %v2018
      %v2020 = vsel %vm2017, %v2019, %v2015
      %v2021 = vmul.f32 1.0, %v2020
      %v2022 = vrcp.pop %v1902
      %v2023 = vmul.f32 %v1902, %v2022
      %v2024 = vsub.f32 1.0, %v2023
      %v2025 = vmul.f32 %v2022, %v2024
      %v2026 = vadd.f32 %v2022, %v2025
      %vm2027 = vweird.f32 %v1902
      %vm2028 = vweird.f32 %v2022
      %vm2029 = vmor %vm2027, %vm2028
      %v2030 = vsel %vm2029, %v2022, %v2026
      %v2031 = vand.u32 2147483647, %v1902
      %vm2032 = vcmp.eq.f32.partialorder %v2031, 8.507059e+37
      %v2033 = vand.u32 %v1902, 2147483648
      %v2034 = vor.u32 1.1754944e-38, %v2033
      %v2035 = vsel %vm2032, %v2034, %v2030
      %v2036 = vmul.f32 1.0, %v2035
      %v2037 = vrcp.pop %v1903
      %v2038 = vmul.f32 %v1903, %v2037
      %v2039 = vsub.f32 1.0, %v2038
      %v2040 = vmul.f32 %v2037, %v2039
      %v2041 = vadd.f32 %v2037, %v2040
      %vm2042 = vweird.f32 %v1903
      %vm2043 = vweird.f32 %v2037
      %vm2044 = vmor %vm2042, %vm2043
      %v2045 = vsel %vm2044, %v2037, %v2041
      %v2046 = vand.u32 2147483647, %v1903
      %vm2047 = vcmp.eq.f32.partialorder %v2046, 8.507059e+37
      %v2048 = vand.u32 %v1903, 2147483648
      %v2049 = vor.u32 1.1754944e-38, %v2048
      %v2050 = vsel %vm2047, %v2049, %v2045
      %v2051 = vmul.f32 1.0, %v2050
      %v2052 = vrcp.pop %v1904
      %v2053 = vmul.f32 %v1904, %v2052
      %v2054 = vsub.f32 1.0, %v2053
      %v2055 = vmul.f32 %v2052, %v2054
      %v2056 = vadd.f32 %v2052, %v2055
      %vm2057 = vweird.f32 %v1904
      %vm2058 = vweird.f32 %v2052
      %vm2059 = vmor %vm2057, %vm2058
      %v2060 = vsel %vm2059, %v2052, %v2056
      %v2061 = vand.u32 2147483647, %v1904
      %vm2062 = vcmp.eq.f32.partialorder %v2061, 8.507059e+37
      %v2063 = vand.u32 %v1904, 2147483648
      %v2064 = vor.u32 1.1754944e-38, %v2063
      %v2065 = vsel %vm2062, %v2064, %v2060
      %v2066 = vmul.f32 1.0, %v2065
      %v2067 = vrcp.pop %v1905
      %v2068 = vmul.f32 %v1905, %v2067
      %v2069 = vsub.f32 1.0, %v2068
      %v2070 = vmul.f32 %v2067, %v2069
      %v2071 = vadd.f32 %v2067, %v2070
      %vm2072 = vweird.f32 %v1905
      %vm2073 = vweird.f32 %v2067
      %vm2074 = vmor %vm2072, %vm2073
      %v2075 = vsel %vm2074, %v2067, %v2071
      %v2076 = vand.u32 2147483647, %v1905
      %vm2077 = vcmp.eq.f32.partialorder %v2076, 8.507059e+37
      %v2078 = vand.u32 %v1905, 2147483648
      %v2079 = vor.u32 1.1754944e-38, %v2078
      %v2080 = vsel %vm2077, %v2079, %v2075
      %v2081 = vmul.f32 1.0, %v2080
      %v2082 = vrcp.pop %v1906
      %v2083 = vmul.f32 %v1906, %v2082
      %v2084 = vsub.f32 1.0, %v2083
      %v2085 = vmul.f32 %v2082, %v2084
      %v2086 = vadd.f32 %v2082, %v2085
      %vm2087 = vweird.f32 %v1906
      %vm2088 = vweird.f32 %v2082
      %vm2089 = vmor %vm2087, %vm2088
      %v2090 = vsel %vm2089, %v2082, %v2086
      %v2091 = vand.u32 2147483647, %v1906
      %vm2092 = vcmp.eq.f32.partialorder %v2091, 8.507059e+37
      %v2093 = vand.u32 %v1906, 2147483648
      %v2094 = vor.u32 1.1754944e-38, %v2093
      %v2095 = vsel %vm2092, %v2094, %v2090
      %v2096 = vmul.f32 1.0, %v2095
      %v2097 = vrcp.pop %v1907
      %v2098 = vmul.f32 %v1907, %v2097
      %v2099 = vsub.f32 1.0, %v2098
      %v2100 = vmul.f32 %v2097, %v2099
      %v2101 = vadd.f32 %v2097, %v2100
      %vm2102 = vweird.f32 %v1907
      %vm2103 = vweird.f32 %v2097
      %vm2104 = vmor %vm2102, %vm2103
      %v2105 = vsel %vm2104, %v2097, %v2101
      %v2106 = vand.u32 2147483647, %v1907
      %vm2107 = vcmp.eq.f32.partialorder %v2106, 8.507059e+37
      %v2108 = vand.u32 %v1907, 2147483648
      %v2109 = vor.u32 1.1754944e-38, %v2108
      %v2110 = vsel %vm2107, %v2109, %v2105
      %v2111 = vmul.f32 1.0, %v2110
      %v2112 = vrcp.pop %v1908
      %v2113 = vmul.f32 %v1908, %v2112
      %v2114 = vsub.f32 1.0, %v2113
      %v2115 = vmul.f32 %v2112, %v2114
      %v2116 = vadd.f32 %v2112, %v2115
      %vm2117 = vweird.f32 %v1908
      %vm2118 = vweird.f32 %v2112
      %vm2119 = vmor %vm2117, %vm2118
      %v2120 = vsel %vm2119, %v2112, %v2116
      %v2121 = vand.u32 2147483647, %v1908
      %vm2122 = vcmp.eq.f32.partialorder %v2121, 8.507059e+37
      %v2123 = vand.u32 %v1908, 2147483648
      %v2124 = vor.u32 1.1754944e-38, %v2123
      %v2125 = vsel %vm2122, %v2124, %v2120
      %v2126 = vmul.f32 1.0, %v2125
      %v2127 = vrcp.pop %v1909
      %v2128 = vmul.f32 %v1909, %v2127
      %v2129 = vsub.f32 1.0, %v2128
      %v2130 = vmul.f32 %v2127, %v2129
      %v2131 = vadd.f32 %v2127, %v2130
      %vm2132 = vweird.f32 %v1909
      %vm2133 = vweird.f32 %v2127
      %vm2134 = vmor %vm2132, %vm2133
      %v2135 = vsel %vm2134, %v2127, %v2131
      %v2136 = vand.u32 2147483647, %v1909
      %vm2137 = vcmp.eq.f32.partialorder %v2136, 8.507059e+37
      %v2138 = vand.u32 %v1909, 2147483648
      %v2139 = vor.u32 1.1754944e-38, %v2138
      %v2140 = vsel %vm2137, %v2139, %v2135
      %v2141 = vmul.f32 1.0, %v2140
      %v2142 = vrcp.pop %v1910
      %v2143 = vmul.f32 %v1910, %v2142
      %v2144 = vsub.f32 1.0, %v2143
      %v2145 = vmul.f32 %v2142, %v2144
      %v2146 = vadd.f32 %v2142, %v2145
      %vm2147 = vweird.f32 %v1910
      %vm2148 = vweird.f32 %v2142
      %vm2149 = vmor %vm2147, %vm2148
      %v2150 = vsel %vm2149, %v2142, %v2146
      %v2151 = vand.u32 2147483647, %v1910
      %vm2152 = vcmp.eq.f32.partialorder %v2151, 8.507059e+37
      %v2153 = vand.u32 %v1910, 2147483648
      %v2154 = vor.u32 1.1754944e-38, %v2153
      %v2155 = vsel %vm2152, %v2154, %v2150
      %v2156 = vmul.f32 1.0, %v2155
      %v2157 = vrcp.pop %v1911
      %v2158 = vmul.f32 %v1911, %v2157
      %v2159 = vsub.f32 1.0, %v2158
      %v2160 = vmul.f32 %v2157, %v2159
      %v2161 = vadd.f32 %v2157, %v2160
      %vm2162 = vweird.f32 %v1911
      %vm2163 = vweird.f32 %v2157
      %vm2164 = vmor %vm2162, %vm2163
      %v2165 = vsel %vm2164, %v2157, %v2161
      %v2166 = vand.u32 2147483647, %v1911
      %vm2167 = vcmp.eq.f32.partialorder %v2166, 8.507059e+37
      %v2168 = vand.u32 %v1911, 2147483648
      %v2169 = vor.u32 1.1754944e-38, %v2168
      %v2170 = vsel %vm2167, %v2169, %v2165
      %v2171 = vmul.f32 1.0, %v2170
      %v2172 = vrcp.pop %v1912
      %v2173 = vmul.f32 %v1912, %v2172
      %v2174 = vsub.f32 1.0, %v2173
      %v2175 = vmul.f32 %v2172, %v2174
      %v2176 = vadd.f32 %v2172, %v2175
      %vm2177 = vweird.f32 %v1912
      %vm2178 = vweird.f32 %v2172
      %vm2179 = vmor %vm2177, %vm2178
      %v2180 = vsel %vm2179, %v2172, %v2176
      %v2181 = vand.u32 2147483647, %v1912
      %vm2182 = vcmp.eq.f32.partialorder %v2181, 8.507059e+37
      %v2183 = vand.u32 %v1912, 2147483648
      %v2184 = vor.u32 1.1754944e-38, %v2183
      %v2185 = vsel %vm2182, %v2184, %v2180
      %v2186 = vmul.f32 1.0, %v2185
      %v2187 = vrcp.pop %v1913
      %v2188 = vmul.f32 %v1913, %v2187
      %v2189 = vsub.f32 1.0, %v2188
      %v2190 = vmul.f32 %v2187, %v2189
      %v2191 = vadd.f32 %v2187, %v2190
      %vm2192 = vweird.f32 %v1913
      %vm2193 = vweird.f32 %v2187
      %vm2194 = vmor %vm2192, %vm2193
      %v2195 = vsel %vm2194, %v2187, %v2191
      %v2196 = vand.u32 2147483647, %v1913
      %vm2197 = vcmp.eq.f32.partialorder %v2196, 8.507059e+37
      %v2198 = vand.u32 %v1913, 2147483648
      %v2199 = vor.u32 1.1754944e-38, %v2198
      %v2200 = vsel %vm2197, %v2199, %v2195
      %v2201 = vmul.f32 1.0, %v2200
      %v2202 = vrcp.pop %v1914
      %v2203 = vmul.f32 %v1914, %v2202
      %v2204 = vsub.f32 1.0, %v2203
      %v2205 = vmul.f32 %v2202, %v2204
      %v2206 = vadd.f32 %v2202, %v2205
      %vm2207 = vweird.f32 %v1914
      %vm2208 = vweird.f32 %v2202
      %vm2209 = vmor %vm2207, %vm2208
      %v2210 = vsel %vm2209, %v2202, %v2206
      %v2211 = vand.u32 2147483647, %v1914
      %vm2212 = vcmp.eq.f32.partialorder %v2211, 8.507059e+37
      %v2213 = vand.u32 %v1914, 2147483648
      %v2214 = vor.u32 1.1754944e-38, %v2213
      %v2215 = vsel %vm2212, %v2214, %v2210
      %v2216 = vmul.f32 1.0, %v2215
      %v2217 = vrcp.pop %v1915
      %v2218 = vmul.f32 %v1915, %v2217
      %v2219 = vsub.f32 1.0, %v2218
      %v2220 = vmul.f32 %v2217, %v2219
      %v2221 = vadd.f32 %v2217, %v2220
      %vm2222 = vweird.f32 %v1915
      %vm2223 = vweird.f32 %v2217
      %vm2224 = vmor %vm2222, %vm2223
      %v2225 = vsel %vm2224, %v2217, %v2221
      %v2226 = vand.u32 2147483647, %v1915
      %vm2227 = vcmp.eq.f32.partialorder %v2226, 8.507059e+37
      %v2228 = vand.u32 %v1915, 2147483648
      %v2229 = vor.u32 1.1754944e-38, %v2228
      %v2230 = vsel %vm2227, %v2229, %v2225
      %v2231 = vmul.f32 1.0, %v2230
      %v2232 = vrcp.pop %v1916
      %v2233 = vmul.f32 %v1916, %v2232
      %v2234 = vsub.f32 1.0, %v2233
      %v2235 = vmul.f32 %v2232, %v2234
      %v2236 = vadd.f32 %v2232, %v2235
      %vm2237 = vweird.f32 %v1916
      %vm2238 = vweird.f32 %v2232
      %vm2239 = vmor %vm2237, %vm2238
      %v2240 = vsel %vm2239, %v2232, %v2236
      %v2241 = vand.u32 2147483647, %v1916
      %vm2242 = vcmp.eq.f32.partialorder %v2241, 8.507059e+37
      %v2243 = vand.u32 %v1916, 2147483648
      %v2244 = vor.u32 1.1754944e-38, %v2243
      %v2245 = vsel %vm2242, %v2244, %v2240
      %v2246 = vmul.f32 1.0, %v2245
      %v2247 = vrcp.pop %v1917
      %v2248 = vmul.f32 %v1917, %v2247
      %v2249 = vsub.f32 1.0, %v2248
      %v2250 = vmul.f32 %v2247, %v2249
      %v2251 = vadd.f32 %v2247, %v2250
      %vm2252 = vweird.f32 %v1917
      %vm2253 = vweird.f32 %v2247
      %vm2254 = vmor %vm2252, %vm2253
      %v2255 = vsel %vm2254, %v2247, %v2251
      %v2256 = vand.u32 2147483647, %v1917
      %vm2257 = vcmp.eq.f32.partialorder %v2256, 8.507059e+37
      %v2258 = vand.u32 %v1917, 2147483648
      %v2259 = vor.u32 1.1754944e-38, %v2258
      %v2260 = vsel %vm2257, %v2259, %v2255
      %v2261 = vmul.f32 1.0, %v2260
      %v2262 = vrcp.pop %v1918
      %v2263 = vmul.f32 %v1918, %v2262
      %v2264 = vsub.f32 1.0, %v2263
      %v2265 = vmul.f32 %v2262, %v2264
      %v2266 = vadd.f32 %v2262, %v2265
      %vm2267 = vweird.f32 %v1918
      %vm2268 = vweird.f32 %v2262
      %vm2269 = vmor %vm2267, %vm2268
      %v2270 = vsel %vm2269, %v2262, %v2266
      %v2271 = vand.u32 2147483647, %v1918
      %vm2272 = vcmp.eq.f32.partialorder %v2271, 8.507059e+37
      %v2273 = vand.u32 %v1918, 2147483648
      %v2274 = vor.u32 1.1754944e-38, %v2273
      %v2275 = vsel %vm2272, %v2274, %v2270
      %v2276 = vmul.f32 1.0, %v2275
      %v2277 = vrcp.pop %v1919
      %v2278 = vmul.f32 %v1919, %v2277
      %v2279 = vsub.f32 1.0, %v2278
      %v2280 = vmul.f32 %v2277, %v2279
      %v2281 = vadd.f32 %v2277, %v2280
      %vm2282 = vweird.f32 %v1919
      %vm2283 = vweird.f32 %v2277
      %vm2284 = vmor %vm2282, %vm2283
      %v2285 = vsel %vm2284, %v2277, %v2281
      %v2286 = vand.u32 2147483647, %v1919
      %vm2287 = vcmp.eq.f32.partialorder %v2286, 8.507059e+37
      %v2288 = vand.u32 %v1919, 2147483648
      %v2289 = vor.u32 1.1754944e-38, %v2288
      %v2290 = vsel %vm2287, %v2289, %v2285
      %v2291 = vmul.f32 1.0, %v2290
      %v2292 = vrcp.pop %v1920
      %v2293 = vmul.f32 %v1920, %v2292
      %v2294 = vsub.f32 1.0, %v2293
      %v2295 = vmul.f32 %v2292, %v2294
      %v2296 = vadd.f32 %v2292, %v2295
      %vm2297 = vweird.f32 %v1920
      %vm2298 = vweird.f32 %v2292
      %vm2299 = vmor %vm2297, %vm2298
      %v2300 = vsel %vm2299, %v2292, %v2296
      %v2301 = vand.u32 2147483647, %v1920
      %vm2302 = vcmp.eq.f32.partialorder %v2301, 8.507059e+37
      %v2303 = vand.u32 %v1920, 2147483648
      %v2304 = vor.u32 1.1754944e-38, %v2303
      %v2305 = vsel %vm2302, %v2304, %v2300
      %v2306 = vmul.f32 1.0, %v2305
      %v2307 = vrcp.pop %v1921
      %v2308 = vmul.f32 %v1921, %v2307
      %v2309 = vsub.f32 1.0, %v2308
      %v2310 = vmul.f32 %v2307, %v2309
      %v2311 = vadd.f32 %v2307, %v2310
      %vm2312 = vweird.f32 %v1921
      %vm2313 = vweird.f32 %v2307
      %vm2314 = vmor %vm2312, %vm2313
      %v2315 = vsel %vm2314, %v2307, %v2311
      %v2316 = vand.u32 2147483647, %v1921
      %vm2317 = vcmp.eq.f32.partialorder %v2316, 8.507059e+37
      %v2318 = vand.u32 %v1921, 2147483648
      %v2319 = vor.u32 1.1754944e-38, %v2318
      %v2320 = vsel %vm2317, %v2319, %v2315
      %v2321 = vmul.f32 1.0, %v2320
      %v2322 = vrcp.pop %v1922
      %v2323 = vmul.f32 %v1922, %v2322
      %v2324 = vsub.f32 1.0, %v2323
      %v2325 = vmul.f32 %v2322, %v2324
      %v2326 = vadd.f32 %v2322, %v2325
      %vm2327 = vweird.f32 %v1922
      %vm2328 = vweird.f32 %v2322
      %vm2329 = vmor %vm2327, %vm2328
      %v2330 = vsel %vm2329, %v2322, %v2326
      %v2331 = vand.u32 2147483647, %v1922
      %vm2332 = vcmp.eq.f32.partialorder %v2331, 8.507059e+37
      %v2333 = vand.u32 %v1922, 2147483648
      %v2334 = vor.u32 1.1754944e-38, %v2333
      %v2335 = vsel %vm2332, %v2334, %v2330
      %v2336 = vmul.f32 1.0, %v2335
      %v2337 = vrcp.pop %v1923
      %v2338 = vmul.f32 %v1923, %v2337
      %v2339 = vsub.f32 1.0, %v2338
      %v2340 = vmul.f32 %v2337, %v2339
      %v2341 = vadd.f32 %v2337, %v2340
      %vm2342 = vweird.f32 %v1923
      %vm2343 = vweird.f32 %v2337
      %vm2344 = vmor %vm2342, %vm2343
      %v2345 = vsel %vm2344, %v2337, %v2341
      %v2346 = vand.u32 2147483647, %v1923
      %vm2347 = vcmp.eq.f32.partialorder %v2346, 8.507059e+37
      %v2348 = vand.u32 %v1923, 2147483648
      %v2349 = vor.u32 1.1754944e-38, %v2348
      %v2350 = vsel %vm2347, %v2349, %v2345
      %v2351 = vmul.f32 1.0, %v2350
      %v2352 = vrcp.pop %v1924
      %v2353 = vmul.f32 %v1924, %v2352
      %v2354 = vsub.f32 1.0, %v2353
      %v2355 = vmul.f32 %v2352, %v2354
      %v2356 = vadd.f32 %v2352, %v2355
      %vm2357 = vweird.f32 %v1924
      %vm2358 = vweird.f32 %v2352
      %vm2359 = vmor %vm2357, %vm2358
      %v2360 = vsel %vm2359, %v2352, %v2356
      %v2361 = vand.u32 2147483647, %v1924
      %vm2362 = vcmp.eq.f32.partialorder %v2361, 8.507059e+37
      %v2363 = vand.u32 %v1924, 2147483648
      %v2364 = vor.u32 1.1754944e-38, %v2363
      %v2365 = vsel %vm2362, %v2364, %v2360
      %v2366 = vmul.f32 1.0, %v2365
      %v2367 = vrcp.pop %v1925
      %v2368 = vmul.f32 %v1925, %v2367
      %v2369 = vsub.f32 1.0, %v2368
      %v2370 = vmul.f32 %v2367, %v2369
      %v2371 = vadd.f32 %v2367, %v2370
      %vm2372 = vweird.f32 %v1925
      %vm2373 = vweird.f32 %v2367
      %vm2374 = vmor %vm2372, %vm2373
      %v2375 = vsel %vm2374, %v2367, %v2371
      %v2376 = vand.u32 2147483647, %v1925
      %vm2377 = vcmp.eq.f32.partialorder %v2376, 8.507059e+37
      %v2378 = vand.u32 %v1925, 2147483648
      %v2379 = vor.u32 1.1754944e-38, %v2378
      %v2380 = vsel %vm2377, %v2379, %v2375
      %v2381 = vmul.f32 1.0, %v2380
      %v2382 = vrcp.pop %v1926
      %v2383 = vmul.f32 %v1926, %v2382
      %v2384 = vsub.f32 1.0, %v2383
      %v2385 = vmul.f32 %v2382, %v2384
      %v2386 = vadd.f32 %v2382, %v2385
      %vm2387 = vweird.f32 %v1926
      %vm2388 = vweird.f32 %v2382
      %vm2389 = vmor %vm2387, %vm2388
      %v2390 = vsel %vm2389, %v2382, %v2386
      %v2391 = vand.u32 2147483647, %v1926
      %vm2392 = vcmp.eq.f32.partialorder %v2391, 8.507059e+37
      %v2393 = vand.u32 %v1926, 2147483648
      %v2394 = vor.u32 1.1754944e-38, %v2393
      %v2395 = vsel %vm2392, %v2394, %v2390
      %v2396 = vmul.f32 1.0, %v2395
      %v2397 = vrcp.pop %v1927
      %v2398 = vmul.f32 %v1927, %v2397
      %v2399 = vsub.f32 1.0, %v2398
      %v2400 = vmul.f32 %v2397, %v2399
      %v2401 = vadd.f32 %v2397, %v2400
      %vm2402 = vweird.f32 %v1927
      %vm2403 = vweird.f32 %v2397
      %vm2404 = vmor %vm2402, %vm2403
      %v2405 = vsel %vm2404, %v2397, %v2401
      %v2406 = vand.u32 2147483647, %v1927
      %vm2407 = vcmp.eq.f32.partialorder %v2406, 8.507059e+37
      %v2408 = vand.u32 %v1927, 2147483648
      %v2409 = vor.u32 1.1754944e-38, %v2408
      %v2410 = vsel %vm2407, %v2409, %v2405
      %v2411 = vmul.f32 1.0, %v2410
      %v2412 = vrcp.pop %v1928
      %v2413 = vmul.f32 %v1928, %v2412
      %v2414 = vsub.f32 1.0, %v2413
      %v2415 = vmul.f32 %v2412, %v2414
      %v2416 = vadd.f32 %v2412, %v2415
      %vm2417 = vweird.f32 %v1928
      %vm2418 = vweird.f32 %v2412
      %vm2419 = vmor %vm2417, %vm2418
      %v2420 = vsel %vm2419, %v2412, %v2416
      %v2421 = vand.u32 2147483647, %v1928
      %vm2422 = vcmp.eq.f32.partialorder %v2421, 8.507059e+37
      %v2423 = vand.u32 %v1928, 2147483648
      %v2424 = vor.u32 1.1754944e-38, %v2423
      %v2425 = vsel %vm2422, %v2424, %v2420
      %v2426 = vmul.f32 1.0, %v2425
      %v2427 = vrcp.pop %v1929
      %v2428 = vmul.f32 %v1929, %v2427
      %v2429 = vsub.f32 1.0, %v2428
      %v2430 = vmul.f32 %v2427, %v2429
      %v2431 = vadd.f32 %v2427, %v2430
      %vm2432 = vweird.f32 %v1929
      %vm2433 = vweird.f32 %v2427
      %vm2434 = vmor %vm2432, %vm2433
      %v2435 = vsel %vm2434, %v2427, %v2431
      %v2436 = vand.u32 2147483647, %v1929
      %vm2437 = vcmp.eq.f32.partialorder %v2436, 8.507059e+37
      %v2438 = vand.u32 %v1929, 2147483648
      %v2439 = vor.u32 1.1754944e-38, %v2438
      %v2440 = vsel %vm2437, %v2439, %v2435
      %v2441 = vmul.f32 1.0, %v2440
      %v2442 = vrcp.pop %v1930
      %v2443 = vmul.f32 %v1930, %v2442
      %v2444 = vsub.f32 1.0, %v2443
      %v2445 = vmul.f32 %v2442, %v2444
      %v2446 = vadd.f32 %v2442, %v2445
      %vm2447 = vweird.f32 %v1930
      %vm2448 = vweird.f32 %v2442
      %vm2449 = vmor %vm2447, %vm2448
      %v2450 = vsel %vm2449, %v2442, %v2446
      %v2451 = vand.u32 2147483647, %v1930
      %vm2452 = vcmp.eq.f32.partialorder %v2451, 8.507059e+37
      %v2453 = vand.u32 %v1930, 2147483648
      %v2454 = vor.u32 1.1754944e-38, %v2453
      %v2455 = vsel %vm2452, %v2454, %v2450
      %v2456 = vmul.f32 1.0, %v2455
      %v2457 = vrcp.pop %v1931
      %v2458 = vmul.f32 %v1931, %v2457
      %v2459 = vsub.f32 1.0, %v2458
      %v2460 = vmul.f32 %v2457, %v2459
      %v2461 = vadd.f32 %v2457, %v2460
      %vm2462 = vweird.f32 %v1931
      %vm2463 = vweird.f32 %v2457
      %vm2464 = vmor %vm2462, %vm2463
      %v2465 = vsel %vm2464, %v2457, %v2461
      %v2466 = vand.u32 2147483647, %v1931
      %vm2467 = vcmp.eq.f32.partialorder %v2466, 8.507059e+37
      %v2468 = vand.u32 %v1931, 2147483648
      %v2469 = vor.u32 1.1754944e-38, %v2468
      %v2470 = vsel %vm2467, %v2469, %v2465
      %v2471 = vmul.f32 1.0, %v2470
      %v2472 = vrcp.pop %v1932
      %v2473 = vmul.f32 %v1932, %v2472
      %v2474 = vsub.f32 1.0, %v2473
      %v2475 = vmul.f32 %v2472, %v2474
      %v2476 = vadd.f32 %v2472, %v2475
      %vm2477 = vweird.f32 %v1932
      %vm2478 = vweird.f32 %v2472
      %vm2479 = vmor %vm2477, %vm2478
      %v2480 = vsel %vm2479, %v2472, %v2476
      %v2481 = vand.u32 2147483647, %v1932
      %vm2482 = vcmp.eq.f32.partialorder %v2481, 8.507059e+37
      %v2483 = vand.u32 %v1932, 2147483648
      %v2484 = vor.u32 1.1754944e-38, %v2483
      %v2485 = vsel %vm2482, %v2484, %v2480
      %v2486 = vmul.f32 1.0, %v2485
      %v2487 = vrcp.pop %v1933
      %v2488 = vmul.f32 %v1933, %v2487
      %v2489 = vsub.f32 1.0, %v2488
      %v2490 = vmul.f32 %v2487, %v2489
      %v2491 = vadd.f32 %v2487, %v2490
      %vm2492 = vweird.f32 %v1933
      %vm2493 = vweird.f32 %v2487
      %vm2494 = vmor %vm2492, %vm2493
      %v2495 = vsel %vm2494, %v2487, %v2491
      %v2496 = vand.u32 2147483647, %v1933
      %vm2497 = vcmp.eq.f32.partialorder %v2496, 8.507059e+37
      %v2498 = vand.u32 %v1933, 2147483648
      %v2499 = vor.u32 1.1754944e-38, %v2498
      %v2500 = vsel %vm2497, %v2499, %v2495
      %v2501 = vmul.f32 1.0, %v2500
      %v2502 = vrcp.pop %v1934
      %v2503 = vmul.f32 %v1934, %v2502
      %v2504 = vsub.f32 1.0, %v2503
      %v2505 = vmul.f32 %v2502, %v2504
      %v2506 = vadd.f32 %v2502, %v2505
      %vm2507 = vweird.f32 %v1934
      %vm2508 = vweird.f32 %v2502
      %vm2509 = vmor %vm2507, %vm2508
      %v2510 = vsel %vm2509, %v2502, %v2506
      %v2511 = vand.u32 2147483647, %v1934
      %vm2512 = vcmp.eq.f32.partialorder %v2511, 8.507059e+37
      %v2513 = vand.u32 %v1934, 2147483648
      %v2514 = vor.u32 1.1754944e-38, %v2513
      %v2515 = vsel %vm2512, %v2514, %v2510
      %v2516 = vmul.f32 1.0, %v2515
      %v2517 = vrcp.pop %v1935
      %v2518 = vmul.f32 %v1935, %v2517
      %v2519 = vsub.f32 1.0, %v2518
      %v2520 = vmul.f32 %v2517, %v2519
      %v2521 = vadd.f32 %v2517, %v2520
      %vm2522 = vweird.f32 %v1935
      %vm2523 = vweird.f32 %v2517
      %vm2524 = vmor %vm2522, %vm2523
      %v2525 = vsel %vm2524, %v2517, %v2521
      %v2526 = vand.u32 2147483647, %v1935
      %vm2527 = vcmp.eq.f32.partialorder %v2526, 8.507059e+37
      %v2528 = vand.u32 %v1935, 2147483648
      %v2529 = vor.u32 1.1754944e-38, %v2528
      %v2530 = vsel %vm2527, %v2529, %v2525
      %v2531 = vmul.f32 1.0, %v2530
      %v2532 = vrcp.pop %v1936
      %v2533 = vmul.f32 %v1936, %v2532
      %v2534 = vsub.f32 1.0, %v2533
      %v2535 = vmul.f32 %v2532, %v2534
      %v2536 = vadd.f32 %v2532, %v2535
      %vm2537 = vweird.f32 %v1936
      %vm2538 = vweird.f32 %v2532
      %vm2539 = vmor %vm2537, %vm2538
      %v2540 = vsel %vm2539, %v2532, %v2536
      %v2541 = vand.u32 2147483647, %v1936
      %vm2542 = vcmp.eq.f32.partialorder %v2541, 8.507059e+37
      %v2543 = vand.u32 %v1936, 2147483648
      %v2544 = vor.u32 1.1754944e-38, %v2543
      %v2545 = vsel %vm2542, %v2544, %v2540
      %v2546 = vmul.f32 1.0, %v2545
      %v2547 = vrcp.pop %v1937
      %v2548 = vmul.f32 %v1937, %v2547
      %v2549 = vsub.f32 1.0, %v2548
      %v2550 = vmul.f32 %v2547, %v2549
      %v2551 = vadd.f32 %v2547, %v2550
      %vm2552 = vweird.f32 %v1937
      %vm2553 = vweird.f32 %v2547
      %vm2554 = vmor %vm2552, %vm2553
      %v2555 = vsel %vm2554, %v2547, %v2551
      %v2556 = vand.u32 2147483647, %v1937
      %vm2557 = vcmp.eq.f32.partialorder %v2556, 8.507059e+37
      %v2558 = vand.u32 %v1937, 2147483648
      %v2559 = vor.u32 1.1754944e-38, %v2558
      %v2560 = vsel %vm2557, %v2559, %v2555
      %v2561 = vmul.f32 1.0, %v2560
      %v2562 = vrcp.pop %v1938
      %v2563 = vmul.f32 %v1938, %v2562
      %v2564 = vsub.f32 1.0, %v2563
      %v2565 = vmul.f32 %v2562, %v2564
      %v2566 = vadd.f32 %v2562, %v2565
      %vm2567 = vweird.f32 %v1938
      %vm2568 = vweird.f32 %v2562
      %vm2569 = vmor %vm2567, %vm2568
      %v2570 = vsel %vm2569, %v2562, %v2566
      %v2571 = vand.u32 2147483647, %v1938
      %vm2572 = vcmp.eq.f32.partialorder %v2571, 8.507059e+37
      %v2573 = vand.u32 %v1938, 2147483648
      %v2574 = vor.u32 1.1754944e-38, %v2573
      %v2575 = vsel %vm2572, %v2574, %v2570
      %v2576 = vmul.f32 1.0, %v2575
      %v2577 = vrcp.pop %v1939
      %v2578 = vmul.f32 %v1939, %v2577
      %v2579 = vsub.f32 1.0, %v2578
      %v2580 = vmul.f32 %v2577, %v2579
      %v2581 = vadd.f32 %v2577, %v2580
      %vm2582 = vweird.f32 %v1939
      %vm2583 = vweird.f32 %v2577
      %vm2584 = vmor %vm2582, %vm2583
      %v2585 = vsel %vm2584, %v2577, %v2581
      %v2586 = vand.u32 2147483647, %v1939
      %vm2587 = vcmp.eq.f32.partialorder %v2586, 8.507059e+37
      %v2588 = vand.u32 %v1939, 2147483648
      %v2589 = vor.u32 1.1754944e-38, %v2588
      %v2590 = vsel %vm2587, %v2589, %v2585
      %v2591 = vmul.f32 1.0, %v2590
      %v2592 = vrcp.pop %v1940
      %v2593 = vmul.f32 %v1940, %v2592
      %v2594 = vsub.f32 1.0, %v2593
      %v2595 = vmul.f32 %v2592, %v2594
      %v2596 = vadd.f32 %v2592, %v2595
      %vm2597 = vweird.f32 %v1940
      %vm2598 = vweird.f32 %v2592
      %vm2599 = vmor %vm2597, %vm2598
      %v2600 = vsel %vm2599, %v2592, %v2596
      %v2601 = vand.u32 2147483647, %v1940
      %vm2602 = vcmp.eq.f32.partialorder %v2601, 8.507059e+37
      %v2603 = vand.u32 %v1940, 2147483648
      %v2604 = vor.u32 1.1754944e-38, %v2603
      %v2605 = vsel %vm2602, %v2604, %v2600
      %v2606 = vmul.f32 1.0, %v2605
      %v2607 = vrcp.pop %v1941
      %v2608 = vmul.f32 %v1941, %v2607
      %v2609 = vsub.f32 1.0, %v2608
      %v2610 = vmul.f32 %v2607, %v2609
      %v2611 = vadd.f32 %v2607, %v2610
      %vm2612 = vweird.f32 %v1941
      %vm2613 = vweird.f32 %v2607
      %vm2614 = vmor %vm2612, %vm2613
      %v2615 = vsel %vm2614, %v2607, %v2611
      %v2616 = vand.u32 2147483647, %v1941
      %vm2617 = vcmp.eq.f32.partialorder %v2616, 8.507059e+37
      %v2618 = vand.u32 %v1941, 2147483648
      %v2619 = vor.u32 1.1754944e-38, %v2618
      %v2620 = vsel %vm2617, %v2619, %v2615
      %v2621 = vmul.f32 1.0, %v2620
      %v2622 = vrcp.pop %v1942
      %v2623 = vmul.f32 %v1942, %v2622
      %v2624 = vsub.f32 1.0, %v2623
      %v2625 = vmul.f32 %v2622, %v2624
      %v2626 = vadd.f32 %v2622, %v2625
      %vm2627 = vweird.f32 %v1942
      %vm2628 = vweird.f32 %v2622
      %vm2629 = vmor %vm2627, %vm2628
      %v2630 = vsel %vm2629, %v2622, %v2626
      %v2631 = vand.u32 2147483647, %v1942
      %vm2632 = vcmp.eq.f32.partialorder %v2631, 8.507059e+37
      %v2633 = vand.u32 %v1942, 2147483648
      %v2634 = vor.u32 1.1754944e-38, %v2633
      %v2635 = vsel %vm2632, %v2634, %v2630
      %v2636 = vmul.f32 1.0, %v2635
      %v2637 = vrcp.pop %v1943
      %v2638 = vmul.f32 %v1943, %v2637
      %v2639 = vsub.f32 1.0, %v2638
      %v2640 = vmul.f32 %v2637, %v2639
      %v2641 = vadd.f32 %v2637, %v2640
      %vm2642 = vweird.f32 %v1943
      %vm2643 = vweird.f32 %v2637
      %vm2644 = vmor %vm2642, %vm2643
      %v2645 = vsel %vm2644, %v2637, %v2641
      %v2646 = vand.u32 2147483647, %v1943
      %vm2647 = vcmp.eq.f32.partialorder %v2646, 8.507059e+37
      %v2648 = vand.u32 %v1943, 2147483648
      %v2649 = vor.u32 1.1754944e-38, %v2648
      %v2650 = vsel %vm2647, %v2649, %v2645
      %v2651 = vmul.f32 1.0, %v2650
      %v2652 = vrcp.pop %v1944
      %v2653 = vmul.f32 %v1944, %v2652
      %v2654 = vsub.f32 1.0, %v2653
      %v2655 = vmul.f32 %v2652, %v2654
      %v2656 = vadd.f32 %v2652, %v2655
      %vm2657 = vweird.f32 %v1944
      %vm2658 = vweird.f32 %v2652
      %vm2659 = vmor %vm2657, %vm2658
      %v2660 = vsel %vm2659, %v2652, %v2656
      %v2661 = vand.u32 2147483647, %v1944
      %vm2662 = vcmp.eq.f32.partialorder %v2661, 8.507059e+37
      %v2663 = vand.u32 %v1944, 2147483648
      %v2664 = vor.u32 1.1754944e-38, %v2663
      %v2665 = vsel %vm2662, %v2664, %v2660
      %v2666 = vmul.f32 1.0, %v2665
      %v2667 = vrcp.pop %v1945
      %v2668 = vmul.f32 %v1945, %v2667
      %v2669 = vsub.f32 1.0, %v2668
      %v2670 = vmul.f32 %v2667, %v2669
      %v2671 = vadd.f32 %v2667, %v2670
      %vm2672 = vweird.f32 %v1945
      %vm2673 = vweird.f32 %v2667
      %vm2674 = vmor %vm2672, %vm2673
      %v2675 = vsel %vm2674, %v2667, %v2671
      %v2676 = vand.u32 2147483647, %v1945
      %vm2677 = vcmp.eq.f32.partialorder %v2676, 8.507059e+37
      %v2678 = vand.u32 %v1945, 2147483648
      %v2679 = vor.u32 1.1754944e-38, %v2678
      %v2680 = vsel %vm2677, %v2679, %v2675
      %v2681 = vmul.f32 1.0, %v2680
      %v2682 = vrcp.pop %v1946
      %v2683 = vmul.f32 %v1946, %v2682
      %v2684 = vsub.f32 1.0, %v2683
      %v2685 = vmul.f32 %v2682, %v2684
      %v2686 = vadd.f32 %v2682, %v2685
      %vm2687 = vweird.f32 %v1946
      %vm2688 = vweird.f32 %v2682
      %vm2689 = vmor %vm2687, %vm2688
      %v2690 = vsel %vm2689, %v2682, %v2686
      %v2691 = vand.u32 2147483647, %v1946
      %vm2692 = vcmp.eq.f32.partialorder %v2691, 8.507059e+37
      %v2693 = vand.u32 %v1946, 2147483648
      %v2694 = vor.u32 1.1754944e-38, %v2693
      %v2695 = vsel %vm2692, %v2694, %v2690
      %v2696 = vmul.f32 1.0, %v2695
      %v2697 = vrcp.pop %v1947
      %v2698 = vmul.f32 %v1947, %v2697
      %v2699 = vsub.f32 1.0, %v2698
      %v2700 = vmul.f32 %v2697, %v2699
      %v2701 = vadd.f32 %v2697, %v2700
      %vm2702 = vweird.f32 %v1947
      %vm2703 = vweird.f32 %v2697
      %vm2704 = vmor %vm2702, %vm2703
      %v2705 = vsel %vm2704, %v2697, %v2701
      %v2706 = vand.u32 2147483647, %v1947
      %vm2707 = vcmp.eq.f32.partialorder %v2706, 8.507059e+37
      %v2708 = vand.u32 %v1947, 2147483648
      %v2709 = vor.u32 1.1754944e-38, %v2708
      %v2710 = vsel %vm2707, %v2709, %v2705
      %v2711 = vmul.f32 1.0, %v2710
      %v2712 = vrcp.pop %v1948
      %v2713 = vmul.f32 %v1948, %v2712
      %v2714 = vsub.f32 1.0, %v2713
      %v2715 = vmul.f32 %v2712, %v2714
      %v2716 = vadd.f32 %v2712, %v2715
      %vm2717 = vweird.f32 %v1948
      %vm2718 = vweird.f32 %v2712
      %vm2719 = vmor %vm2717, %vm2718
      %v2720 = vsel %vm2719, %v2712, %v2716
      %v2721 = vand.u32 2147483647, %v1948
      %vm2722 = vcmp.eq.f32.partialorder %v2721, 8.507059e+37
      %v2723 = vand.u32 %v1948, 2147483648
      %v2724 = vor.u32 1.1754944e-38, %v2723
      %v2725 = vsel %vm2722, %v2724, %v2720
      %v2726 = vmul.f32 1.0, %v2725
      %v2727 = vrcp.pop %v1949
      %v2728 = vmul.f32 %v1949, %v2727
      %v2729 = vsub.f32 1.0, %v2728
      %v2730 = vmul.f32 %v2727, %v2729
      %v2731 = vadd.f32 %v2727, %v2730
      %vm2732 = vweird.f32 %v1949
      %vm2733 = vweird.f32 %v2727
      %vm2734 = vmor %vm2732, %vm2733
      %v2735 = vsel %vm2734, %v2727, %v2731
      %v2736 = vand.u32 2147483647, %v1949
      %vm2737 = vcmp.eq.f32.partialorder %v2736, 8.507059e+37
      %v2738 = vand.u32 %v1949, 2147483648
      %v2739 = vor.u32 1.1754944e-38, %v2738
      %v2740 = vsel %vm2737, %v2739, %v2735
      %v2741 = vmul.f32 1.0, %v2740
      %v2742 = vrcp.pop %v1950
      %v2743 = vmul.f32 %v1950, %v2742
      %v2744 = vsub.f32 1.0, %v2743
      %v2745 = vmul.f32 %v2742, %v2744
      %v2746 = vadd.f32 %v2742, %v2745
      %vm2747 = vweird.f32 %v1950
      %vm2748 = vweird.f32 %v2742
      %vm2749 = vmor %vm2747, %vm2748
      %v2750 = vsel %vm2749, %v2742, %v2746
      %v2751 = vand.u32 2147483647, %v1950
      %vm2752 = vcmp.eq.f32.partialorder %v2751, 8.507059e+37
      %v2753 = vand.u32 %v1950, 2147483648
      %v2754 = vor.u32 1.1754944e-38, %v2753
      %v2755 = vsel %vm2752, %v2754, %v2750
      %v2756 = vmul.f32 1.0, %v2755
      %v2757 = vrcp.pop %v1951
      %v2758 = vmul.f32 %v1951, %v2757
      %v2759 = vsub.f32 1.0, %v2758
      %v2760 = vmul.f32 %v2757, %v2759
      %v2761 = vadd.f32 %v2757, %v2760
      %vm2762 = vweird.f32 %v1951
      %vm2763 = vweird.f32 %v2757
      %vm2764 = vmor %vm2762, %vm2763
      %v2765 = vsel %vm2764, %v2757, %v2761
      %v2766 = vand.u32 2147483647, %v1951
      %vm2767 = vcmp.eq.f32.partialorder %v2766, 8.507059e+37
      %v2768 = vand.u32 %v1951, 2147483648
      %v2769 = vor.u32 1.1754944e-38, %v2768
      %v2770 = vsel %vm2767, %v2769, %v2765
      %v2771 = vmul.f32 1.0, %v2770
      %v2772 = vrcp.pop %v1952
      %v2773 = vmul.f32 %v1952, %v2772
      %v2774 = vsub.f32 1.0, %v2773
      %v2775 = vmul.f32 %v2772, %v2774
      %v2776 = vadd.f32 %v2772, %v2775
      %vm2777 = vweird.f32 %v1952
      %vm2778 = vweird.f32 %v2772
      %vm2779 = vmor %vm2777, %vm2778
      %v2780 = vsel %vm2779, %v2772, %v2776
      %v2781 = vand.u32 2147483647, %v1952
      %vm2782 = vcmp.eq.f32.partialorder %v2781, 8.507059e+37
      %v2783 = vand.u32 %v1952, 2147483648
      %v2784 = vor.u32 1.1754944e-38, %v2783
      %v2785 = vsel %vm2782, %v2784, %v2780
      %v2786 = vmul.f32 1.0, %v2785
      %v2787 = vrcp.pop %v1953
      %v2788 = vmul.f32 %v1953, %v2787
      %v2789 = vsub.f32 1.0, %v2788
      %v2790 = vmul.f32 %v2787, %v2789
      %v2791 = vadd.f32 %v2787, %v2790
      %vm2792 = vweird.f32 %v1953
      %vm2793 = vweird.f32 %v2787
      %vm2794 = vmor %vm2792, %vm2793
      %v2795 = vsel %vm2794, %v2787, %v2791
      %v2796 = vand.u32 2147483647, %v1953
      %vm2797 = vcmp.eq.f32.partialorder %v2796, 8.507059e+37
      %v2798 = vand.u32 %v1953, 2147483648
      %v2799 = vor.u32 1.1754944e-38, %v2798
      %v2800 = vsel %vm2797, %v2799, %v2795
      %v2801 = vmul.f32 1.0, %v2800
      %v2802 = vrcp.pop %v1954
      %v2803 = vmul.f32 %v1954, %v2802
      %v2804 = vsub.f32 1.0, %v2803
      %v2805 = vmul.f32 %v2802, %v2804
      %v2806 = vadd.f32 %v2802, %v2805
      %vm2807 = vweird.f32 %v1954
      %vm2808 = vweird.f32 %v2802
      %vm2809 = vmor %vm2807, %vm2808
      %v2810 = vsel %vm2809, %v2802, %v2806
      %v2811 = vand.u32 2147483647, %v1954
      %vm2812 = vcmp.eq.f32.partialorder %v2811, 8.507059e+37
      %v2813 = vand.u32 %v1954, 2147483648
      %v2814 = vor.u32 1.1754944e-38, %v2813
      %v2815 = vsel %vm2812, %v2814, %v2810
      %v2816 = vmul.f32 1.0, %v2815
      %v2817 = vrcp.pop %v1955
      %v2818 = vmul.f32 %v1955, %v2817
      %v2819 = vsub.f32 1.0, %v2818
      %v2820 = vmul.f32 %v2817, %v2819
      %v2821 = vadd.f32 %v2817, %v2820
      %vm2822 = vweird.f32 %v1955
      %vm2823 = vweird.f32 %v2817
      %vm2824 = vmor %vm2822, %vm2823
      %v2825 = vsel %vm2824, %v2817, %v2821
      %v2826 = vand.u32 2147483647, %v1955
      %vm2827 = vcmp.eq.f32.partialorder %v2826, 8.507059e+37
      %v2828 = vand.u32 %v1955, 2147483648
      %v2829 = vor.u32 1.1754944e-38, %v2828
      %v2830 = vsel %vm2827, %v2829, %v2825
      %v2831 = vmul.f32 1.0, %v2830
      %v2832 = vrcp.pop %v1956
      %v2833 = vmul.f32 %v1956, %v2832
      %v2834 = vsub.f32 1.0, %v2833
      %v2835 = vmul.f32 %v2832, %v2834
      %v2836 = vadd.f32 %v2832, %v2835
      %vm2837 = vweird.f32 %v1956
      %vm2838 = vweird.f32 %v2832
      %vm2839 = vmor %vm2837, %vm2838
      %v2840 = vsel %vm2839, %v2832, %v2836
      %v2841 = vand.u32 2147483647, %v1956
      %vm2842 = vcmp.eq.f32.partialorder %v2841, 8.507059e+37
      %v2843 = vand.u32 %v1956, 2147483648
      %v2844 = vor.u32 1.1754944e-38, %v2843
      %v2845 = vsel %vm2842, %v2844, %v2840
      %v2846 = vmul.f32 1.0, %v2845
      %v2847 = vrcp.pop %v1957
      %v2848 = vmul.f32 %v1957, %v2847
      %v2849 = vsub.f32 1.0, %v2848
      %v2850 = vmul.f32 %v2847, %v2849
      %v2851 = vadd.f32 %v2847, %v2850
      %vm2852 = vweird.f32 %v1957
      %vm2853 = vweird.f32 %v2847
      %vm2854 = vmor %vm2852, %vm2853
      %v2855 = vsel %vm2854, %v2847, %v2851
      %v2856 = vand.u32 2147483647, %v1957
      %vm2857 = vcmp.eq.f32.partialorder %v2856, 8.507059e+37
      %v2858 = vand.u32 %v1957, 2147483648
      %v2859 = vor.u32 1.1754944e-38, %v2858
      %v2860 = vsel %vm2857, %v2859, %v2855
      %v2861 = vmul.f32 1.0, %v2860
      %v2862 = vrcp.pop %v1958
      %v2863 = vmul.f32 %v1958, %v2862
      %v2864 = vsub.f32 1.0, %v2863
      %v2865 = vmul.f32 %v2862, %v2864
      %v2866 = vadd.f32 %v2862, %v2865
      %vm2867 = vweird.f32 %v1958
      %vm2868 = vweird.f32 %v2862
      %vm2869 = vmor %vm2867, %vm2868
      %v2870 = vsel %vm2869, %v2862, %v2866
      %v2871 = vand.u32 2147483647, %v1958
      %vm2872 = vcmp.eq.f32.partialorder %v2871, 8.507059e+37
      %v2873 = vand.u32 %v1958, 2147483648
      %v2874 = vor.u32 1.1754944e-38, %v2873
      %v2875 = vsel %vm2872, %v2874, %v2870
      %v2876 = vmul.f32 1.0, %v2875
      %v2877 = vrcp.pop %v1959
      %v2878 = vmul.f32 %v1959, %v2877
      %v2879 = vsub.f32 1.0, %v2878
      %v2880 = vmul.f32 %v2877, %v2879
      %v2881 = vadd.f32 %v2877, %v2880
      %vm2882 = vweird.f32 %v1959
      %vm2883 = vweird.f32 %v2877
      %vm2884 = vmor %vm2882, %vm2883
      %v2885 = vsel %vm2884, %v2877, %v2881
      %v2886 = vand.u32 2147483647, %v1959
      %vm2887 = vcmp.eq.f32.partialorder %v2886, 8.507059e+37
      %v2888 = vand.u32 %v1959, 2147483648
      %v2889 = vor.u32 1.1754944e-38, %v2888
      %v2890 = vsel %vm2887, %v2889, %v2885
      %v2891 = vmul.f32 1.0, %v2890
      %v2892 = vrcp.pop %v1960
      %v2893 = vmul.f32 %v1960, %v2892
      %v2894 = vsub.f32 1.0, %v2893
      %v2895 = vmul.f32 %v2892, %v2894
      %v2896 = vadd.f32 %v2892, %v2895
      %vm2897 = vweird.f32 %v1960
      %vm2898 = vweird.f32 %v2892
      %vm2899 = vmor %vm2897, %vm2898
      %v2900 = vsel %vm2899, %v2892, %v2896
      %v2901 = vand.u32 2147483647, %v1960
      %vm2902 = vcmp.eq.f32.partialorder %v2901, 8.507059e+37
      %v2903 = vand.u32 %v1960, 2147483648
      %v2904 = vor.u32 1.1754944e-38, %v2903
      %v2905 = vsel %vm2902, %v2904, %v2900
      %v2906 = vmul.f32 1.0, %v2905
      %v2907 = vrcp.pop %v1961
      %v2908 = vmul.f32 %v1961, %v2907
      %v2909 = vsub.f32 1.0, %v2908
      %v2910 = vmul.f32 %v2907, %v2909
      %v2911 = vadd.f32 %v2907, %v2910
      %vm2912 = vweird.f32 %v1961
      %vm2913 = vweird.f32 %v2907
      %vm2914 = vmor %vm2912, %vm2913
      %v2915 = vsel %vm2914, %v2907, %v2911
      %v2916 = vand.u32 2147483647, %v1961
      %vm2917 = vcmp.eq.f32.partialorder %v2916, 8.507059e+37
      %v2918 = vand.u32 %v1961, 2147483648
      %v2919 = vor.u32 1.1754944e-38, %v2918
      %v2920 = vsel %vm2917, %v2919, %v2915
      %v2921 = vmul.f32 1.0, %v2920
      %2922 = vst [vmem:[%s244] sm:$0xff] %v1976
      %2923 = vst [vmem:[%s244 + $0x8] sm:$0xff] %v1991
      %2924 = vst [vmem:[%s244 + $0x10] sm:$0xff] %v2006
      %2925 = vst [vmem:[%s244 + $0x18] sm:$0xff] %v2021
      %2926 = vst [vmem:[%s244 + $0x20] sm:$0xff] %v2036
      %2927 = vst [vmem:[%s244 + $0x28] sm:$0xff] %v2051
      %2928 = vst [vmem:[%s244 + $0x30] sm:$0xff] %v2066
      %2929 = vst [vmem:[%s244 + $0x38] sm:$0xff] %v2081
      %2930 = vst [vmem:[%s244 + $0x40] sm:$0xff] %v2096
      %2931 = vst [vmem:[%s244 + $0x48] sm:$0xff] %v2111
      %2932 = vst [vmem:[%s244 + $0x50] sm:$0xff] %v2126
      %2933 = vst [vmem:[%s244 + $0x58] sm:$0xff] %v2141
      %2934 = vst [vmem:[%s244 + $0x60] sm:$0xff] %v2156
      %2935 = vst [vmem:[%s244 + $0x68] sm:$0xff] %v2171
      %2936 = vst [vmem:[%s244 + $0x70] sm:$0xff] %v2186
      %2937 = vst [vmem:[%s244 + $0x78] sm:$0xff] %v2201
      %2938 = vst [vmem:[%s244 + $0x80] sm:$0xff] %v2216
      %2939 = vst [vmem:[%s244 + $0x88] sm:$0xff] %v2231
      %2940 = vst [vmem:[%s244 + $0x90] sm:$0xff] %v2246
      %2941 = vst [vmem:[%s244 + $0x98] sm:$0xff] %v2261
      %2942 = vst [vmem:[%s244 + $0xa0] sm:$0xff] %v2276
      %2943 = vst [vmem:[%s244 + $0xa8] sm:$0xff] %v2291
      %2944 = vst [vmem:[%s244 + $0xb0] sm:$0xff] %v2306
      %2945 = vst [vmem:[%s244 + $0xb8] sm:$0xff] %v2321
      %2946 = vst [vmem:[%s244 + $0xc0] sm:$0xff] %v2336
      %2947 = vst [vmem:[%s244 + $0xc8] sm:$0xff] %v2351
      %2948 = vst [vmem:[%s244 + $0xd0] sm:$0xff] %v2366
      %2949 = vst [vmem:[%s244 + $0xd8] sm:$0xff] %v2381
      %2950 = vst [vmem:[%s244 + $0xe0] sm:$0xff] %v2396
      %2951 = vst [vmem:[%s244 + $0xe8] sm:$0xff] %v2411
      %2952 = vst [vmem:[%s244 + $0xf0] sm:$0xff] %v2426
      %2953 = vst [vmem:[%s244 + $0xf8] sm:$0xff] %v2441
      %2954 = vst [vmem:[%s244 + $0x100] sm:$0xff] %v2456
      %2955 = vst [vmem:[%s244 + $0x108] sm:$0xff] %v2471
      %2956 = vst [vmem:[%s244 + $0x110] sm:$0xff] %v2486
      %2957 = vst [vmem:[%s244 + $0x118] sm:$0xff] %v2501
      %2958 = vst [vmem:[%s244 + $0x120] sm:$0xff] %v2516
      %2959 = vst [vmem:[%s244 + $0x128] sm:$0xff] %v2531
      %2960 = vst [vmem:[%s244 + $0x130] sm:$0xff] %v2546
      %2961 = vst [vmem:[%s244 + $0x138] sm:$0xff] %v2561
      %2962 = vst [vmem:[%s244 + $0x140] sm:$0xff] %v2576
      %2963 = vst [vmem:[%s244 + $0x148] sm:$0xff] %v2591
      %2964 = vst [vmem:[%s244 + $0x150] sm:$0xff] %v2606
      %2965 = vst [vmem:[%s244 + $0x158] sm:$0xff] %v2621
      %2966 = vst [vmem:[%s244 + $0x160] sm:$0xff] %v2636
      %2967 = vst [vmem:[%s244 + $0x168] sm:$0xff] %v2651
      %2968 = vst [vmem:[%s244 + $0x170] sm:$0xff] %v2666
      %2969 = vst [vmem:[%s244 + $0x178] sm:$0xff] %v2681
      %2970 = vst [vmem:[%s244 + $0x180] sm:$0xff] %v2696
      %2971 = vst [vmem:[%s244 + $0x188] sm:$0xff] %v2711
      %2972 = vst [vmem:[%s244 + $0x190] sm:$0xff] %v2726
      %2973 = vst [vmem:[%s244 + $0x198] sm:$0xff] %v2741
      %2974 = vst [vmem:[%s244 + $0x1a0] sm:$0xff] %v2756
      %2975 = vst [vmem:[%s244 + $0x1a8] sm:$0xff] %v2771
      %2976 = vst [vmem:[%s244 + $0x1b0] sm:$0xff] %v2786
      %2977 = vst [vmem:[%s244 + $0x1b8] sm:$0xff] %v2801
      %2978 = vst [vmem:[%s244 + $0x1c0] sm:$0xff] %v2816
      %2979 = vst [vmem:[%s244 + $0x1c8] sm:$0xff] %v2831
      %2980 = vst [vmem:[%s244 + $0x1d0] sm:$0xff] %v2846
      %2981 = vst [vmem:[%s244 + $0x1d8] sm:$0xff] %v2861
      %2982 = vst [vmem:[%s244 + $0x1e0] sm:$0xff] %v2876
      %2983 = vst [vmem:[%s244 + $0x1e8] sm:$0xff] %v2891
      %2984 = vst [vmem:[%s244 + $0x1f0] sm:$0xff] %v2906
      %2985 = vst [vmem:[%s244 + $0x1f8] sm:$0xff] %v2921
      %s2986 = smul.u32 32, %s17
      %p2987 = scmp.lt.s32.totalorder %s2986, 63
      %s2988 = scalar_select %p2987, %s2986, 63
      %s2989 = smul.addr %s2988, 2
      %s2990 = smul.addr %s2989, 8
      %s2991 = scalar_lea.vmem %s4, %s2990
      %s2992 = smul.u32 32, %s17
      %p2993 = scmp.lt.s32.totalorder %s2992, 63
      %s2994 = scalar_select %p2993, %s2992, 63
      %s2995 = smul.addr %s2994, 2
      %s2996 = smul.addr %s2995, 8
      %s2997 = scalar_lea.vmem %s5, %s2996
      // Predicated region
      $region37: #{msa_pair_weighted_averaging.3} parent=35 // pred_check
        %p2998 = pneg %p124
      $region38: #{msa_pair_weighted_averaging.3} parent=35 // pred_check_branch
        %3000 = sbr.rel (%p2998) target = $region40
      $region39: #{msa_pair_weighted_averaging.3} parent=35 // pred_region
        %s3001 = smul.u32 32, %s17
      $region40: #{msa_pair_weighted_averaging.3} parent=35 // pred_fallthru
        _
      // Predicated region
      $region41: #{msa_pair_weighted_averaging.3} parent=35 // pred_check
        %p3002 = pneg %p150
      $region42: #{msa_pair_weighted_averaging.3} parent=35 // pred_check_branch
        %3004 = sbr.rel (%p3002) target = $region44
      $region43: #{msa_pair_weighted_averaging.3} parent=35 // pred_region
        %s3005 = smul.u32 32, %s17
      $region44: #{msa_pair_weighted_averaging.3} parent=35 // pred_fallthru
        _
    $region36: #{msa_pair_weighted_averaging.3} parent=5 // pred_fallthru
      _
    %p3006 = scmp.le.s32.totalorder 2, %s12
    // Predicated region
    $region45: #{msa_pair_weighted_averaging.3} parent=5 // pred_check
      %p3007 = pneg %p3006
    $region46: #{msa_pair_weighted_averaging.3} parent=5 // pred_check_branch
      %3009 = sbr.rel (%p3007) target = $region48
    $region47: #{msa_pair_weighted_averaging.3} parent=5 // pred_region
      %s3010 = ssub.s32 %s12, 2
      // Predicated region
      $region49: #{msa_pair_weighted_averaging.3} parent=47 // pred_check
        %p3011 = pneg %p130
      $region50: #{msa_pair_weighted_averaging.3} parent=47 // pred_check_branch
        %3013 = sbr.rel (%p3011) target = $region52
      $region51: #{msa_pair_weighted_averaging.3} parent=47 // pred_region
        %s3014 = smul.u32 32, %s18
        %p3015 = scmp.lt.s32.totalorder %s3014, 63
        %s3016 = scalar_select %p3015, %s3014, 63
        %s3017 = smul.addr %s3016, 2
        %s3018 = smul.addr %s3017, 8
        %s3019 = scalar_lea.vmem %s4, %s3018
      $region52: #{msa_pair_weighted_averaging.3} parent=47 // pred_fallthru
        _
      // Predicated region
      $region53: #{msa_pair_weighted_averaging.3} parent=47 // pred_check
        %p3020 = pneg %p156
      $region54: #{msa_pair_weighted_averaging.3} parent=47 // pred_check_branch
        %3022 = sbr.rel (%p3020) target = $region56
      $region55: #{msa_pair_weighted_averaging.3} parent=47 // pred_region
        %s3023 = smul.u32 32, %s18
        %p3024 = scmp.lt.s32.totalorder %s3023, 63
        %s3025 = scalar_select %p3024, %s3023, 63
        %s3026 = smul.addr %s3025, 2
        %s3027 = smul.addr %s3026, 8
        %s3028 = scalar_lea.vmem %s5, %s3027
      $region56: #{msa_pair_weighted_averaging.3} parent=47 // pred_fallthru
        _
    $region48: #{msa_pair_weighted_averaging.3} parent=5 // pred_fallthru
      _
  $region6: #{msa_pair_weighted_averaging.3} parent=0 // loop_footer
    %s16 = sadd.s32 1, %s12
  $region7: #{msa_pair_weighted_averaging.3} parent=0 // loop_footer_branch
    %11 = sbr.rel target = $region3
  $region8: #{msa_pair_weighted_averaging.3} parent=0 // loop_exit
    _

// kernel: msa_pair_weighted_averaging.4
$region0: #{msa_pair_weighted_averaging.4}
  #allocation0 [shape = 'u32[]', space=smem, size = 0x4, offset = 0x4, fixed_abs, tag = 'smem constant byte address 0x4 - core index']
  #allocation1 [shape = 'u32[72,128]{1,0:T(1,128)}', space=vmem, size = 0x9000, scoped, tag = 'internal scratch']
  #allocation5 [shape = 's32[]', space=sflag, size = 0x4, offset = 0, fixed_abs, tag = 'sflag constant byte address 0x0 - dummy sync flag']
  %s0 = inlined_call_operand.hbm [shape: f32[2,32,32,32], index: 0, kind: input, shape index: {}]
  %s1 = inlined_call_operand.vmem [shape: f32[1,32], index: 1, kind: input, shape index: {}]
  %s2 = inlined_call_operand.vmem [shape: f32[1,32], index: 2, kind: input, shape index: {}]
  %s3 = inlined_call_operand.vmem [shape: f32[32,8], index: 3, kind: input, shape index: {}]
  %s4 = inlined_call_operand.vmem [shape: f32[2,32,32,8], index: 4, kind: output, shape index: {}]
  %s5 = sld [smem:[#allocation0]]
  $region87: #{msa_pair_weighted_averaging.4} parent=0
    _
  %s7 = ssub.s32 1, %s5
  %s8 = scalar_select 0, %s7, %s5
  $region1: #{msa_pair_weighted_averaging.4} parent=0
    #allocation2 [shape = 'u8[524288]{0}', space=vmem, size = 0x80000, scoped, tag = 'input window, operand 0']
    #allocation3 [shape = 's32[2]{0}', space=sflag, size = 0x8, scoped, tag = 'scoped memory for msa_pair_weighted_averaging.4']
    #allocation4 [shape = 'u8[524288]{0}', space=vmem, size = 0x80000, scoped, tag = 'output window, operand 0']
    %9 = vsyncpa [#allocation3], 0
    %s10 = scalar_lea.sflag [#allocation3], 1
    %11 = vsyncpa %s10, 0
    loop: start=0, step=1, limit=6
    $region2: #{msa_pair_weighted_averaging.4} parent=1 // loop_pre_header
      _
    $region3: #{msa_pair_weighted_averaging.4} parent=1 // loop_header
      %s13 = sphi 0, %s17
      %p14 = scmp.ge.s32.totalorder %s13, 6
      %s20 = sphi 0, %s32
      %s21 = sphi 0, %s28
      %s22 = sphi 0, %s20
      %s23 = sphi 0, %s21
      %s24 = sphi 0, %s22
      %s25 = sphi 0, %s23
      %s37 = sphi 0, %s39
      %s40 = sphi 0, %s37
      %s41 = sphi 0, %s40
      %s57 = sphi 0, %s41
      %s61 = sphi 0, %s61
      %s63 = sphi 0, %s61
      %s64 = sphi 0, %s63
      %s78 = sphi 0, %s64
      %s82 = sphi 0, %s82
      %s84 = sphi 0, %s82
      %s85 = sphi 0, %s84
      %s99 = sphi 0, %s85
      %s103 = sphi 0, %s103
      %s105 = sphi 0, %s103
      %s106 = sphi 0, %s105
      %s120 = sphi 0, %s106
      %s128 = sphi 0, %s130
      %s131 = sphi 0, %s128
      %s132 = sphi 0, %s131
      %s148 = sphi 0, %s132
    $region4: #{msa_pair_weighted_averaging.4} parent=1 // loop_header_branch
      %16 = sbr.rel (%p14) target = $region8
    $region5: #{msa_pair_weighted_averaging.4} parent=1 // loop_body
      %s18 = ssub.s32 %s13, 1
      %s19 = ssub.s32 %s13, 2
      %s26 = sadd.s32 1, %s21
      %p27 = scmp.ge.s32.totalorder %s26, 2
      %s28 = scalar_select %p27, 0, %s26
      %s29 = sadd.s32 1, %s20
      %s30 = scalar_select %p27, %s29, %s20
      %p31 = scmp.ge.s32.totalorder %s30, 2
      %s32 = scalar_select %p31, 0, %s30
      %s33 = ssub.s32 %s20, %s32
      %s34 = ssub.s32 %s21, %s28
      %s35 = sor.u32 %s33, %s34
      %p36 = scmp.eq.s32.totalorder %s35, 0
      %s38 = sadd.s32 %s37, 1
      %s39 = scalar_select %p36, %s37, %s38
      %p42 = pneg %p36
      %p43 = scmp.eq.s32.totalorder %s13, 3
      %p44 = por %p42, %p43
      %p45 = scmp.ne.s32.totalorder %s37, %s40
      %p46 = scmp.eq.s32.totalorder %s13, 0
      %p47 = por %p45, %p46
      %p48 = scmp.ne.s32.totalorder %s37, %s40
      %p49 = scmp.eq.s32.totalorder %s18, 3
      %p50 = por %p48, %p49
      %p51 = scmp.ne.s32.totalorder %s40, %s41
      %p52 = scmp.eq.s32.totalorder %s18, 0
      %p53 = por %p51, %p52
      %p54 = scmp.ne.s32.totalorder %s40, %s41
      %p55 = scmp.eq.s32.totalorder %s19, 3
      %p56 = por %p54, %p55
      %p58 = scmp.ne.s32.totalorder %s41, %s57
      %p59 = scmp.eq.s32.totalorder %s19, 0
      %p60 = por %p58, %p59
      %s62 = sadd.s32 %s61, 1
      %p65 = scmp.eq.s32.totalorder %s13, 3
      %p66 = scmp.ne.s32.totalorder %s61, %s63
      %p67 = scmp.eq.s32.totalorder %s13, 0
      %p68 = por %p66, %p67
      %p69 = scmp.ne.s32.totalorder %s61, %s63
      %p70 = scmp.eq.s32.totalorder %s18, 3
      %p71 = por %p69, %p70
      %p72 = scmp.ne.s32.totalorder %s63, %s64
      %p73 = scmp.eq.s32.totalorder %s18, 0
      %p74 = por %p72, %p73
      %p75 = scmp.ne.s32.totalorder %s63, %s64
      %p76 = scmp.eq.s32.totalorder %s19, 3
      %p77 = por %p75, %p76
      %p79 = scmp.ne.s32.totalorder %s64, %s78
      %p80 = scmp.eq.s32.totalorder %s19, 0
      %p81 = por %p79, %p80
      %s83 = sadd.s32 %s82, 1
      %p86 = scmp.eq.s32.totalorder %s13, 3
      %p87 = scmp.ne.s32.totalorder %s82, %s84
      %p88 = scmp.eq.s32.totalorder %s13, 0
      %p89 = por %p87, %p88
      %p90 = scmp.ne.s32.totalorder %s82, %s84
      %p91 = scmp.eq.s32.totalorder %s18, 3
      %p92 = por %p90, %p91
      %p93 = scmp.ne.s32.totalorder %s84, %s85
      %p94 = scmp.eq.s32.totalorder %s18, 0
      %p95 = por %p93, %p94
      %p96 = scmp.ne.s32.totalorder %s84, %s85
      %p97 = scmp.eq.s32.totalorder %s19, 3
      %p98 = por %p96, %p97
      %p100 = scmp.ne.s32.totalorder %s85, %s99
      %p101 = scmp.eq.s32.totalorder %s19, 0
      %p102 = por %p100, %p101
      %s104 = sadd.s32 %s103, 1
      %p107 = scmp.eq.s32.totalorder %s13, 3
      %p108 = scmp.ne.s32.totalorder %s103, %s105
      %p109 = scmp.eq.s32.totalorder %s13, 0
      %p110 = por %p108, %p109
      %p111 = scmp.ne.s32.totalorder %s103, %s105
      %p112 = scmp.eq.s32.totalorder %s18, 3
      %p113 = por %p111, %p112
      %p114 = scmp.ne.s32.totalorder %s105, %s106
      %p115 = scmp.eq.s32.totalorder %s18, 0
      %p116 = por %p114, %p115
      %p117 = scmp.ne.s32.totalorder %s105, %s106
      %p118 = scmp.eq.s32.totalorder %s19, 3
      %p119 = por %p117, %p118
      %p121 = scmp.ne.s32.totalorder %s106, %s120
      %p122 = scmp.eq.s32.totalorder %s19, 0
      %p123 = por %p121, %p122
      %s124 = ssub.s32 %s20, %s32
      %s125 = ssub.s32 %s21, %s28
      %s126 = sor.u32 %s124, %s125
      %p127 = scmp.eq.s32.totalorder %s126, 0
      %s129 = sadd.s32 %s128, 1
      %s130 = scalar_select %p127, %s128, %s129
      %p133 = pneg %p127
      %p134 = scmp.eq.s32.totalorder %s13, 3
      %p135 = por %p133, %p134
      %p136 = scmp.ne.s32.totalorder %s128, %s131
      %p137 = scmp.eq.s32.totalorder %s13, 0
      %p138 = por %p136, %p137
      %p139 = scmp.ne.s32.totalorder %s128, %s131
      %p140 = scmp.eq.s32.totalorder %s18, 3
      %p141 = por %p139, %p140
      %p142 = scmp.ne.s32.totalorder %s131, %s132
      %p143 = scmp.eq.s32.totalorder %s18, 0
      %p144 = por %p142, %p143
      %p145 = scmp.ne.s32.totalorder %s131, %s132
      %p146 = scmp.eq.s32.totalorder %s19, 3
      %p147 = por %p145, %p146
      %p149 = scmp.ne.s32.totalorder %s132, %s148
      %p150 = scmp.eq.s32.totalorder %s19, 0
      %p151 = por %p149, %p150
      %p152 = scmp.le.s32.totalorder 1, %s13
      %p153 = scmp.lt.s32.totalorder %s13, 5
      %p154 = pnand %p152, %p153
      %p155 = pneg %p154
      // Predicated region
      $region9: #{msa_pair_weighted_averaging.4} parent=5 // pred_check
        _
      $region10: #{msa_pair_weighted_averaging.4} parent=5 // pred_check_branch
        %157 = sbr.rel (%p154) target = $region12
      $region11: #{msa_pair_weighted_averaging.4} parent=5 // pred_region
        %s158 = ssub.s32 %s13, 1
        // Predicated region
        $region13: #{msa_pair_weighted_averaging.4} parent=11 // pred_check
          %p159 = pneg %p74
        $region14: #{msa_pair_weighted_averaging.4} parent=11 // pred_check_branch
          %161 = sbr.rel (%p159) target = $region16
        $region15: #{msa_pair_weighted_averaging.4} parent=11 // pred_region
          _
        $region16: #{msa_pair_weighted_averaging.4} parent=11 // pred_fallthru
          _
        // Predicated region
        $region17: #{msa_pair_weighted_averaging.4} parent=11 // pred_check
          %p162 = pneg %p95
        $region18: #{msa_pair_weighted_averaging.4} parent=11 // pred_check_branch
          %164 = sbr.rel (%p162) target = $region20
        $region19: #{msa_pair_weighted_averaging.4} parent=11 // pred_region
          _
        $region20: #{msa_pair_weighted_averaging.4} parent=11 // pred_fallthru
          _
        // Predicated region
        $region21: #{msa_pair_weighted_averaging.4} parent=11 // pred_check
          %p165 = pneg %p116
        $region22: #{msa_pair_weighted_averaging.4} parent=11 // pred_check_branch
          %167 = sbr.rel (%p165) target = $region24
        $region23: #{msa_pair_weighted_averaging.4} parent=11 // pred_region
          _
        $region24: #{msa_pair_weighted_averaging.4} parent=11 // pred_fallthru
          _
      $region12: #{msa_pair_weighted_averaging.4} parent=5 // pred_fallthru
        _
      %p168 = scmp.lt.s32.totalorder %s13, 4
      // Predicated region
      $region25: #{msa_pair_weighted_averaging.4} parent=5 // pred_check
        %p169 = pneg %p168
      $region26: #{msa_pair_weighted_averaging.4} parent=5 // pred_check_branch
        %171 = sbr.rel (%p169) target = $region28
      $region27: #{msa_pair_weighted_averaging.4} parent=5 // pred_region
        // Predicated region
        $region29: #{msa_pair_weighted_averaging.4} parent=27 // pred_check
          %p172 = pneg %p47
        $region30: #{msa_pair_weighted_averaging.4} parent=27 // pred_check_branch
          %174 = sbr.rel (%p172) target = $region32
        $region31: #{msa_pair_weighted_averaging.4} parent=27 // pred_region
          #allocation6 [shape = 'u32[6]{0}', space=smem, size = 0x18, scoped, tag = 'DMA stride descriptor']
          %s175 = sand.u32 %s37, 1
          %s176 = scalar_lea.sflag [#allocation3], %s175
          %s177 = sand.u32 %s37, 1
          %s178 = smul.addr %s177, 512
          %s179 = scalar_lea.vmem [#allocation2], %s178
          %s180 = smul.u32 2, %s21
          %182 = vsyncadd %s176, 0
          %s183 = smul.addr %s20, 128
          %s184 = sadd.s32 %s180, %s183
          %s185 = smul.addr %s184, 8
          %s186 = scalar_lea.hbm %s0, %s185
          %s188 = sshll.u32 1, 14
          %s189 = sxor.u32 4294967295, %s188
          %s191 = sld [smem:[#allocation0]]
          %s192 = sadd.s32 2, %s191
          %s194 = sshll.u32 7, 26
          %s195 = sxor.u32 4294967295, %s194
          %s196 = sand.u32 0, %s195
          %s197 = sshll.u32 %s192, 26
          %s198 = sor.u32 %s196, %s197
          %s199 = sshll.u32 %s186, 4
          %s200 = int_to_ptr.hbm [resolvable:$true] %s199
          %s201 = sshll.u32 %s179, 4
          %s202 = int_to_ptr.vmem [resolvable:$true] %s201
          %208 = sst [smem:[#allocation6]] 512
          %s209 = scalar_lea.smem [#allocation6], 1
          %210 = sst [smem:[%s209]] 256
          %s211 = scalar_lea.smem [#allocation6], 2
          %212 = sst [smem:[%s211]] 2
          %s213 = scalar_lea.smem [#allocation6], 3
          %214 = sst [smem:[%s213]] 128
          %s215 = scalar_lea.smem [#allocation6], 4
          %216 = sst [smem:[%s215]] 128
          %s217 = scalar_lea.smem [#allocation6], 5
          %218 = sst [smem:[%s217]] 8
          %220 = dma.general %s200, 8192, %s202, %s176, [#allocation5], [#allocation6], %s198, 0
        $region32: #{msa_pair_weighted_averaging.4} parent=27 // pred_fallthru
          _
      $region28: #{msa_pair_weighted_averaging.4} parent=5 // pred_fallthru
        _
      %p221 = scmp.le.s32.totalorder 1, %s13
      %p222 = scmp.lt.s32.totalorder %s13, 5
      %p223 = pnand %p221, %p222
      %p224 = pneg %p223
      // Predicated region
      $region33: #{msa_pair_weighted_averaging.4} parent=5 // pred_check
        _
      $region34: #{msa_pair_weighted_averaging.4} parent=5 // pred_check_branch
        %226 = sbr.rel (%p223) target = $region36
      $region35: #{msa_pair_weighted_averaging.4} parent=5 // pred_region
        %s227 = ssub.s32 %s13, 1
        %s228 = sand.u32 %s40, 1
        %s229 = scalar_lea.sflag [#allocation3], %s228
        %s230 = sand.u32 %s40, 1
        %s231 = smul.addr %s230, 512
        %s232 = scalar_lea.vmem [#allocation2], %s231
        // Predicated region
        $region37: #{msa_pair_weighted_averaging.4} parent=35 // pred_check
          %p233 = pneg %p53
        $region38: #{msa_pair_weighted_averaging.4} parent=35 // pred_check_branch
          %235 = sbr.rel (%p233) target = $region40
        $region39: #{msa_pair_weighted_averaging.4} parent=35 // pred_region
          %237 = dma.done %s229, 8192
        $region40: #{msa_pair_weighted_averaging.4} parent=35 // pred_fallthru
          _
        %s238 = sand.u32 %s40, 1
        %s239 = scalar_lea.sflag [#allocation3], %s238
        %s240 = sand.u32 %s40, 1
        %s241 = smul.addr %s240, 512
        %s242 = scalar_lea.vmem [#allocation2], %s241
        %p243 = pneg %p53
        %p244 = pneg %p50
        %p245 = pneg %p74
        %p246 = pneg %p71
        %p247 = pneg %p95
        %p248 = pneg %p92
        %p249 = pneg %p116
        %p250 = pneg %p113
        %p251 = pneg %p144
        %p252 = pneg %p141
        %s253 = sand.u32 %s131, 1
        %s254 = sand.u32 %s131, 1
        %s255 = smul.addr %s254, 512
        %s256 = scalar_lea.vmem [#allocation4], %s255
        %s257 = smul.u32 2, %s23
        %s258 = smul.u32 2, %s23
        %v259 = vld [vmem:[%s232] sm:$0xff]
        %v260 = vld [vmem:[%s232 + $0x8] sm:$0xff]
        %v261 = vld [vmem:[%s232 + $0x10] sm:$0xff]
        %v262 = vld [vmem:[%s232 + $0x18] sm:$0xff]
        %v263 = vld [vmem:[%s232 + $0x20] sm:$0xff]
        %v264 = vld [vmem:[%s232 + $0x28] sm:$0xff]
        %v265 = vld [vmem:[%s232 + $0x30] sm:$0xff]
        %v266 = vld [vmem:[%s232 + $0x38] sm:$0xff]
        %v267 = vld [vmem:[%s232 + $0x40] sm:$0xff]
        %v268 = vld [vmem:[%s232 + $0x48] sm:$0xff]
        %v269 = vld [vmem:[%s232 + $0x50] sm:$0xff]
        %v270 = vld [vmem:[%s232 + $0x58] sm:$0xff]
        %v271 = vld [vmem:[%s232 + $0x60] sm:$0xff]
        %v272 = vld [vmem:[%s232 + $0x68] sm:$0xff]
        %v273 = vld [vmem:[%s232 + $0x70] sm:$0xff]
        %v274 = vld [vmem:[%s232 + $0x78] sm:$0xff]
        %v275 = vld [vmem:[%s232 + $0x80] sm:$0xff]
        %v276 = vld [vmem:[%s232 + $0x88] sm:$0xff]
        %v277 = vld [vmem:[%s232 + $0x90] sm:$0xff]
        %v278 = vld [vmem:[%s232 + $0x98] sm:$0xff]
        %v279 = vld [vmem:[%s232 + $0xa0] sm:$0xff]
        %v280 = vld [vmem:[%s232 + $0xa8] sm:$0xff]
        %v281 = vld [vmem:[%s232 + $0xb0] sm:$0xff]
        %v282 = vld [vmem:[%s232 + $0xb8] sm:$0xff]
        %v283 = vld [vmem:[%s232 + $0xc0] sm:$0xff]
        %v284 = vld [vmem:[%s232 + $0xc8] sm:$0xff]
        %v285 = vld [vmem:[%s232 + $0xd0] sm:$0xff]
        %v286 = vld [vmem:[%s232 + $0xd8] sm:$0xff]
        %v287 = vld [vmem:[%s232 + $0xe0] sm:$0xff]
        %v288 = vld [vmem:[%s232 + $0xe8] sm:$0xff]
        %v289 = vld [vmem:[%s232 + $0xf0] sm:$0xff]
        %v290 = vld [vmem:[%s232 + $0xf8] sm:$0xff]
        %v291 = vld [vmem:[%s232 + $0x100] sm:$0xff]
        %v292 = vld [vmem:[%s232 + $0x108] sm:$0xff]
        %v293 = vld [vmem:[%s232 + $0x110] sm:$0xff]
        %v294 = vld [vmem:[%s232 + $0x118] sm:$0xff]
        %v295 = vld [vmem:[%s232 + $0x120] sm:$0xff]
        %v296 = vld [vmem:[%s232 + $0x128] sm:$0xff]
        %v297 = vld [vmem:[%s232 + $0x130] sm:$0xff]
        %v298 = vld [vmem:[%s232 + $0x138] sm:$0xff]
        %v299 = vld [vmem:[%s232 + $0x140] sm:$0xff]
        %v300 = vld [vmem:[%s232 + $0x148] sm:$0xff]
        %v301 = vld [vmem:[%s232 + $0x150] sm:$0xff]
        %v302 = vld [vmem:[%s232 + $0x158] sm:$0xff]
        %v303 = vld [vmem:[%s232 + $0x160] sm:$0xff]
        %v304 = vld [vmem:[%s232 + $0x168] sm:$0xff]
        %v305 = vld [vmem:[%s232 + $0x170] sm:$0xff]
        %v306 = vld [vmem:[%s232 + $0x178] sm:$0xff]
        %v307 = vld [vmem:[%s232 + $0x180] sm:$0xff]
        %v308 = vld [vmem:[%s232 + $0x188] sm:$0xff]
        %v309 = vld [vmem:[%s232 + $0x190] sm:$0xff]
        %v310 = vld [vmem:[%s232 + $0x198] sm:$0xff]
        %v311 = vld [vmem:[%s232 + $0x1a0] sm:$0xff]
        %v312 = vld [vmem:[%s232 + $0x1a8] sm:$0xff]
        %v313 = vld [vmem:[%s232 + $0x1b0] sm:$0xff]
        %v314 = vld [vmem:[%s232 + $0x1b8] sm:$0xff]
        %v315 = vld [vmem:[%s232 + $0x1c0] sm:$0xff]
        %v316 = vld [vmem:[%s232 + $0x1c8] sm:$0xff]
        %v317 = vld [vmem:[%s232 + $0x1d0] sm:$0xff]
        %v318 = vld [vmem:[%s232 + $0x1d8] sm:$0xff]
        %v319 = vld [vmem:[%s232 + $0x1e0] sm:$0xff]
        %v320 = vld [vmem:[%s232 + $0x1e8] sm:$0xff]
        %v321 = vld [vmem:[%s232 + $0x1f0] sm:$0xff]
        %v322 = vld [vmem:[%s232 + $0x1f8] sm:$0xff]
        %vm323 = vcmask 261120
        %v324 = vsel %vm323, %v259, 0.0
        %325 = vadd.xlane.f32.xlu0 %v324
        %v326 = vpop.xlane.xlu0 %325
        %v327 = vsel %vm323, %v260, 0.0
        %328 = vadd.xlane.f32.xlu0 %v327
        %v329 = vpop.xlane.xlu0 %328
        %v330 = vsel %vm323, %v261, 0.0
        %331 = vadd.xlane.f32.xlu0 %v330
        %v332 = vpop.xlane.xlu0 %331
        %v333 = vsel %vm323, %v262, 0.0
        %334 = vadd.xlane.f32.xlu0 %v333
        %v335 = vpop.xlane.xlu0 %334
        %v336 = vsel %vm323, %v263, 0.0
        %337 = vadd.xlane.f32.xlu0 %v336
        %v338 = vpop.xlane.xlu0 %337
        %v339 = vsel %vm323, %v264, 0.0
        %340 = vadd.xlane.f32.xlu0 %v339
        %v341 = vpop.xlane.xlu0 %340
        %v342 = vsel %vm323, %v265, 0.0
        %343 = vadd.xlane.f32.xlu0 %v342
        %v344 = vpop.xlane.xlu0 %343
        %v345 = vsel %vm323, %v266, 0.0
        %346 = vadd.xlane.f32.xlu0 %v345
        %v347 = vpop.xlane.xlu0 %346
        %v348 = vsel %vm323, %v267, 0.0
        %349 = vadd.xlane.f32.xlu0 %v348
        %v350 = vpop.xlane.xlu0 %349
        %v351 = vsel %vm323, %v268, 0.0
        %352 = vadd.xlane.f32.xlu0 %v351
        %v353 = vpop.xlane.xlu0 %352
        %v354 = vsel %vm323, %v269, 0.0
        %355 = vadd.xlane.f32.xlu0 %v354
        %v356 = vpop.xlane.xlu0 %355
        %v357 = vsel %vm323, %v270, 0.0
        %358 = vadd.xlane.f32.xlu0 %v357
        %v359 = vpop.xlane.xlu0 %358
        %v360 = vsel %vm323, %v271, 0.0
        %361 = vadd.xlane.f32.xlu0 %v360
        %v362 = vpop.xlane.xlu0 %361
        %v363 = vsel %vm323, %v272, 0.0
        %364 = vadd.xlane.f32.xlu0 %v363
        %v365 = vpop.xlane.xlu0 %364
        %v366 = vsel %vm323, %v273, 0.0
        %367 = vadd.xlane.f32.xlu0 %v366
        %v368 = vpop.xlane.xlu0 %367
        %v369 = vsel %vm323, %v274, 0.0
        %370 = vadd.xlane.f32.xlu0 %v369
        %v371 = vpop.xlane.xlu0 %370
        %v372 = vsel %vm323, %v275, 0.0
        %373 = vadd.xlane.f32.xlu0 %v372
        %v374 = vpop.xlane.xlu0 %373
        %v375 = vsel %vm323, %v276, 0.0
        %376 = vadd.xlane.f32.xlu0 %v375
        %v377 = vpop.xlane.xlu0 %376
        %v378 = vsel %vm323, %v277, 0.0
        %379 = vadd.xlane.f32.xlu0 %v378
        %v380 = vpop.xlane.xlu0 %379
        %v381 = vsel %vm323, %v278, 0.0
        %382 = vadd.xlane.f32.xlu0 %v381
        %v383 = vpop.xlane.xlu0 %382
        %v384 = vsel %vm323, %v279, 0.0
        %385 = vadd.xlane.f32.xlu0 %v384
        %v386 = vpop.xlane.xlu0 %385
        %v387 = vsel %vm323, %v280, 0.0
        %388 = vadd.xlane.f32.xlu0 %v387
        %v389 = vpop.xlane.xlu0 %388
        %v390 = vsel %vm323, %v281, 0.0
        %391 = vadd.xlane.f32.xlu0 %v390
        %v392 = vpop.xlane.xlu0 %391
        %v393 = vsel %vm323, %v282, 0.0
        %394 = vadd.xlane.f32.xlu0 %v393
        %v395 = vpop.xlane.xlu0 %394
        %v396 = vsel %vm323, %v283, 0.0
        %397 = vadd.xlane.f32.xlu0 %v396
        %v398 = vpop.xlane.xlu0 %397
        %v399 = vsel %vm323, %v284, 0.0
        %400 = vadd.xlane.f32.xlu0 %v399
        %v401 = vpop.xlane.xlu0 %400
        %v402 = vsel %vm323, %v285, 0.0
        %403 = vadd.xlane.f32.xlu0 %v402
        %v404 = vpop.xlane.xlu0 %403
        %v405 = vsel %vm323, %v286, 0.0
        %406 = vadd.xlane.f32.xlu0 %v405
        %v407 = vpop.xlane.xlu0 %406
        %v408 = vsel %vm323, %v287, 0.0
        %409 = vadd.xlane.f32.xlu0 %v408
        %v410 = vpop.xlane.xlu0 %409
        %v411 = vsel %vm323, %v288, 0.0
        %412 = vadd.xlane.f32.xlu0 %v411
        %v413 = vpop.xlane.xlu0 %412
        %v414 = vsel %vm323, %v289, 0.0
        %415 = vadd.xlane.f32.xlu0 %v414
        %v416 = vpop.xlane.xlu0 %415
        %v417 = vsel %vm323, %v290, 0.0
        %418 = vadd.xlane.f32.xlu0 %v417
        %v419 = vpop.xlane.xlu0 %418
        %v420 = vsel %vm323, %v291, 0.0
        %421 = vadd.xlane.f32.xlu0 %v420
        %v422 = vpop.xlane.xlu0 %421
        %v423 = vsel %vm323, %v292, 0.0
        %424 = vadd.xlane.f32.xlu0 %v423
        %v425 = vpop.xlane.xlu0 %424
        %v426 = vsel %vm323, %v293, 0.0
        %427 = vadd.xlane.f32.xlu0 %v426
        %v428 = vpop.xlane.xlu0 %427
        %v429 = vsel %vm323, %v294, 0.0
        %430 = vadd.xlane.f32.xlu0 %v429
        %v431 = vpop.xlane.xlu0 %430
        %v432 = vsel %vm323, %v295, 0.0
        %433 = vadd.xlane.f32.xlu0 %v432
        %v434 = vpop.xlane.xlu0 %433
        %v435 = vsel %vm323, %v296, 0.0
        %436 = vadd.xlane.f32.xlu0 %v435
        %v437 = vpop.xlane.xlu0 %436
        %v438 = vsel %vm323, %v297, 0.0
        %439 = vadd.xlane.f32.xlu0 %v438
        %v440 = vpop.xlane.xlu0 %439
        %v441 = vsel %vm323, %v298, 0.0
        %442 = vadd.xlane.f32.xlu0 %v441
        %v443 = vpop.xlane.xlu0 %442
        %v444 = vsel %vm323, %v299, 0.0
        %445 = vadd.xlane.f32.xlu0 %v444
        %v446 = vpop.xlane.xlu0 %445
        %v447 = vsel %vm323, %v300, 0.0
        %448 = vadd.xlane.f32.xlu0 %v447
        %v449 = vpop.xlane.xlu0 %448
        %v450 = vsel %vm323, %v301, 0.0
        %451 = vadd.xlane.f32.xlu0 %v450
        %v452 = vpop.xlane.xlu0 %451
        %v453 = vsel %vm323, %v302, 0.0
        %454 = vadd.xlane.f32.xlu0 %v453
        %v455 = vpop.xlane.xlu0 %454
        %v456 = vsel %vm323, %v303, 0.0
        %457 = vadd.xlane.f32.xlu0 %v456
        %v458 = vpop.xlane.xlu0 %457
        %v459 = vsel %vm323, %v304, 0.0
        %460 = vadd.xlane.f32.xlu0 %v459
        %v461 = vpop.xlane.xlu0 %460
        %v462 = vsel %vm323, %v305, 0.0
        %463 = vadd.xlane.f32.xlu0 %v462
        %v464 = vpop.xlane.xlu0 %463
        %v465 = vsel %vm323, %v306, 0.0
        %466 = vadd.xlane.f32.xlu0 %v465
        %v467 = vpop.xlane.xlu0 %466
        %v468 = vsel %vm323, %v307, 0.0
        %469 = vadd.xlane.f32.xlu0 %v468
        %v470 = vpop.xlane.xlu0 %469
        %v471 = vsel %vm323, %v308, 0.0
        %472 = vadd.xlane.f32.xlu0 %v471
        %v473 = vpop.xlane.xlu0 %472
        %v474 = vsel %vm323, %v309, 0.0
        %475 = vadd.xlane.f32.xlu0 %v474
        %v476 = vpop.xlane.xlu0 %475
        %v477 = vsel %vm323, %v310, 0.0
        %478 = vadd.xlane.f32.xlu0 %v477
        %v479 = vpop.xlane.xlu0 %478
        %v480 = vsel %vm323, %v311, 0.0
        %481 = vadd.xlane.f32.xlu0 %v480
        %v482 = vpop.xlane.xlu0 %481
        %v483 = vsel %vm323, %v312, 0.0
        %484 = vadd.xlane.f32.xlu0 %v483
        %v485 = vpop.xlane.xlu0 %484
        %v486 = vsel %vm323, %v313, 0.0
        %487 = vadd.xlane.f32.xlu0 %v486
        %v488 = vpop.xlane.xlu0 %487
        %v489 = vsel %vm323, %v314, 0.0
        %490 = vadd.xlane.f32.xlu0 %v489
        %v491 = vpop.xlane.xlu0 %490
        %v492 = vsel %vm323, %v315, 0.0
        %493 = vadd.xlane.f32.xlu0 %v492
        %v494 = vpop.xlane.xlu0 %493
        %v495 = vsel %vm323, %v316, 0.0
        %496 = vadd.xlane.f32.xlu0 %v495
        %v497 = vpop.xlane.xlu0 %496
        %v498 = vsel %vm323, %v317, 0.0
        %499 = vadd.xlane.f32.xlu0 %v498
        %v500 = vpop.xlane.xlu0 %499
        %v501 = vsel %vm323, %v318, 0.0
        %502 = vadd.xlane.f32.xlu0 %v501
        %v503 = vpop.xlane.xlu0 %502
        %v504 = vsel %vm323, %v319, 0.0
        %505 = vadd.xlane.f32.xlu0 %v504
        %v506 = vpop.xlane.xlu0 %505
        %v507 = vsel %vm323, %v320, 0.0
        %508 = vadd.xlane.f32.xlu0 %v507
        %v509 = vpop.xlane.xlu0 %508
        %v510 = vsel %vm323, %v321, 0.0
        %511 = vadd.xlane.f32.xlu0 %v510
        %v512 = vpop.xlane.xlu0 %511
        %v513 = vsel %vm323, %v322, 0.0
        %514 = vadd.xlane.f32.xlu0 %v513
        %v515 = vpop.xlane.xlu0 %514
        %v516 = vrcp.pop 32.0
        %v517 = vmul.f32 32.0, %v516
        %v518 = vsub.f32 1.0, %v517
        %v519 = vmul.f32 %v516, %v518
        %v520 = vadd.f32 %v516, %v519
        %vm521 = vweird.f32 %v516
        %v522 = vsel %vm521, %v516, %v520
        %v523 = vmul.f32 %v326, %v522
        %v524 = vmul.f32 %v329, %v522
        %v525 = vmul.f32 %v332, %v522
        %v526 = vmul.f32 %v335, %v522
        %v527 = vmul.f32 %v338, %v522
        %v528 = vmul.f32 %v341, %v522
        %v529 = vmul.f32 %v344, %v522
        %v530 = vmul.f32 %v347, %v522
        %v531 = vmul.f32 %v350, %v522
        %v532 = vmul.f32 %v353, %v522
        %v533 = vmul.f32 %v356, %v522
        %v534 = vmul.f32 %v359, %v522
        %v535 = vmul.f32 %v362, %v522
        %v536 = vmul.f32 %v365, %v522
        %v537 = vmul.f32 %v368, %v522
        %v538 = vmul.f32 %v371, %v522
        %v539 = vmul.f32 %v374, %v522
        %v540 = vmul.f32 %v377, %v522
        %v541 = vmul.f32 %v380, %v522
        %v542 = vmul.f32 %v383, %v522
        %v543 = vmul.f32 %v386, %v522
        %v544 = vmul.f32 %v389, %v522
        %v545 = vmul.f32 %v392, %v522
        %v546 = vmul.f32 %v395, %v522
        %v547 = vmul.f32 %v398, %v522
        %v548 = vmul.f32 %v401, %v522
        %v549 = vmul.f32 %v404, %v522
        %v550 = vmul.f32 %v407, %v522
        %v551 = vmul.f32 %v410, %v522
        %v552 = vmul.f32 %v413, %v522
        %v553 = vmul.f32 %v416, %v522
        %v554 = vmul.f32 %v419, %v522
        %v555 = vmul.f32 %v422, %v522
        %v556 = vmul.f32 %v425, %v522
        %v557 = vmul.f32 %v428, %v522
        %v558 = vmul.f32 %v431, %v522
        %v559 = vmul.f32 %v434, %v522
        %v560 = vmul.f32 %v437, %v522
        %v561 = vmul.f32 %v440, %v522
        %v562 = vmul.f32 %v443, %v522
        %v563 = vmul.f32 %v446, %v522
        %v564 = vmul.f32 %v449, %v522
        %v565 = vmul.f32 %v452, %v522
        %v566 = vmul.f32 %v455, %v522
        %v567 = vmul.f32 %v458, %v522
        %v568 = vmul.f32 %v461, %v522
        %v569 = vmul.f32 %v464, %v522
        %v570 = vmul.f32 %v467, %v522
        %v571 = vmul.f32 %v470, %v522
        %v572 = vmul.f32 %v473, %v522
        %v573 = vmul.f32 %v476, %v522
        %v574 = vmul.f32 %v479, %v522
        %v575 = vmul.f32 %v482, %v522
        %v576 = vmul.f32 %v485, %v522
        %v577 = vmul.f32 %v488, %v522
        %v578 = vmul.f32 %v491, %v522
        %v579 = vmul.f32 %v494, %v522
        %v580 = vmul.f32 %v497, %v522
        %v581 = vmul.f32 %v500, %v522
        %v582 = vmul.f32 %v503, %v522
        %v583 = vmul.f32 %v506, %v522
        %v584 = vmul.f32 %v509, %v522
        %v585 = vmul.f32 %v512, %v522
        %v586 = vmul.f32 %v515, %v522
        %v587 = vsub.f32 %v259, %v523
        %v588 = vsub.f32 %v260, %v524
        %v589 = vsub.f32 %v261, %v525
        %v590 = vsub.f32 %v262, %v526
        %v591 = vsub.f32 %v263, %v527
        %v592 = vsub.f32 %v264, %v528
        %v593 = vsub.f32 %v265, %v529
        %v594 = vsub.f32 %v266, %v530
        %v595 = vsub.f32 %v267, %v531
        %v596 = vsub.f32 %v268, %v532
        %v597 = vsub.f32 %v269, %v533
        %v598 = vsub.f32 %v270, %v534
        %v599 = vsub.f32 %v271, %v535
        %v600 = vsub.f32 %v272, %v536
        %v601 = vsub.f32 %v273, %v537
        %v602 = vsub.f32 %v274, %v538
        %v603 = vsub.f32 %v275, %v539
        %v604 = vsub.f32 %v276, %v540
        %v605 = vsub.f32 %v277, %v541
        %v606 = vsub.f32 %v278, %v542
        %v607 = vsub.f32 %v279, %v543
        %v608 = vsub.f32 %v280, %v544
        %v609 = vsub.f32 %v281, %v545
        %v610 = vsub.f32 %v282, %v546
        %v611 = vsub.f32 %v283, %v547
        %v612 = vsub.f32 %v284, %v548
        %v613 = vsub.f32 %v285, %v549
        %v614 = vsub.f32 %v286, %v550
        %v615 = vsub.f32 %v287, %v551
        %v616 = vsub.f32 %v288, %v552
        %v617 = vsub.f32 %v289, %v553
        %v618 = vsub.f32 %v290, %v554
        %v619 = vsub.f32 %v291, %v555
        %v620 = vsub.f32 %v292, %v556
        %v621 = vsub.f32 %v293, %v557
        %v622 = vsub.f32 %v294, %v558
        %v623 = vsub.f32 %v295, %v559
        %v624 = vsub.f32 %v296, %v560
        %v625 = vsub.f32 %v297, %v561
        %v626 = vsub.f32 %v298, %v562
        %v627 = vsub.f32 %v299, %v563
        %v628 = vsub.f32 %v300, %v564
        %v629 = vsub.f32 %v301, %v565
        %v630 = vsub.f32 %v302, %v566
        %v631 = vsub.f32 %v303, %v567
        %v632 = vsub.f32 %v304, %v568
        %v633 = vsub.f32 %v305, %v569
        %v634 = vsub.f32 %v306, %v570
        %v635 = vsub.f32 %v307, %v571
        %v636 = vsub.f32 %v308, %v572
        %v637 = vsub.f32 %v309, %v573
        %v638 = vsub.f32 %v310, %v574
        %v639 = vsub.f32 %v311, %v575
        %v640 = vsub.f32 %v312, %v576
        %v641 = vsub.f32 %v313, %v577
        %v642 = vsub.f32 %v314, %v578
        %v643 = vsub.f32 %v315, %v579
        %v644 = vsub.f32 %v316, %v580
        %v645 = vsub.f32 %v317, %v581
        %v646 = vsub.f32 %v318, %v582
        %v647 = vsub.f32 %v319, %v583
        %v648 = vsub.f32 %v320, %v584
        %v649 = vsub.f32 %v321, %v585
        %v650 = vsub.f32 %v322, %v586
        %v651 = vmul.f32 %v587, %v587
        %v652 = vmul.f32 %v588, %v588
        %v653 = vmul.f32 %v589, %v589
        %v654 = vmul.f32 %v590, %v590
        %v655 = vmul.f32 %v591, %v591
        %v656 = vmul.f32 %v592, %v592
        %v657 = vmul.f32 %v593, %v593
        %v658 = vmul.f32 %v594, %v594
        %v659 = vmul.f32 %v595, %v595
        %v660 = vmul.f32 %v596, %v596
        %v661 = vmul.f32 %v597, %v597
        %v662 = vmul.f32 %v598, %v598
        %v663 = vmul.f32 %v599, %v599
        %v664 = vmul.f32 %v600, %v600
        %v665 = vmul.f32 %v601, %v601
        %v666 = vmul.f32 %v602, %v602
        %v667 = vmul.f32 %v603, %v603
        %v668 = vmul.f32 %v604, %v604
        %v669 = vmul.f32 %v605, %v605
        %v670 = vmul.f32 %v606, %v606
        %v671 = vmul.f32 %v607, %v607
        %v672 = vmul.f32 %v608, %v608
        %v673 = vmul.f32 %v609, %v609
        %v674 = vmul.f32 %v610, %v610
        %v675 = vmul.f32 %v611, %v611
        %v676 = vmul.f32 %v612, %v612
        %v677 = vmul.f32 %v613, %v613
        %v678 = vmul.f32 %v614, %v614
        %v679 = vmul.f32 %v615, %v615
        %v680 = vmul.f32 %v616, %v616
        %v681 = vmul.f32 %v617, %v617
        %v682 = vmul.f32 %v618, %v618
        %v683 = vmul.f32 %v619, %v619
        %v684 = vmul.f32 %v620, %v620
        %v685 = vmul.f32 %v621, %v621
        %v686 = vmul.f32 %v622, %v622
        %v687 = vmul.f32 %v623, %v623
        %v688 = vmul.f32 %v624, %v624
        %v689 = vmul.f32 %v625, %v625
        %v690 = vmul.f32 %v626, %v626
        %v691 = vmul.f32 %v627, %v627
        %v692 = vmul.f32 %v628, %v628
        %v693 = vmul.f32 %v629, %v629
        %v694 = vmul.f32 %v630, %v630
        %v695 = vmul.f32 %v631, %v631
        %v696 = vmul.f32 %v632, %v632
        %v697 = vmul.f32 %v633, %v633
        %v698 = vmul.f32 %v634, %v634
        %v699 = vmul.f32 %v635, %v635
        %v700 = vmul.f32 %v636, %v636
        %v701 = vmul.f32 %v637, %v637
        %v702 = vmul.f32 %v638, %v638
        %v703 = vmul.f32 %v639, %v639
        %v704 = vmul.f32 %v640, %v640
        %v705 = vmul.f32 %v641, %v641
        %v706 = vmul.f32 %v642, %v642
        %v707 = vmul.f32 %v643, %v643
        %v708 = vmul.f32 %v644, %v644
        %v709 = vmul.f32 %v645, %v645
        %v710 = vmul.f32 %v646, %v646
        %v711 = vmul.f32 %v647, %v647
        %v712 = vmul.f32 %v648, %v648
        %v713 = vmul.f32 %v649, %v649
        %v714 = vmul.f32 %v650, %v650
        %v715 = vsel %vm323, %v651, 0.0
        %716 = vadd.xlane.f32.xlu0 %v715
        %v717 = vpop.xlane.xlu0 %716
        %v718 = vsel %vm323, %v652, 0.0
        %719 = vadd.xlane.f32.xlu0 %v718
        %v720 = vpop.xlane.xlu0 %719
        %v721 = vsel %vm323, %v653, 0.0
        %722 = vadd.xlane.f32.xlu0 %v721
        %v723 = vpop.xlane.xlu0 %722
        %v724 = vsel %vm323, %v654, 0.0
        %725 = vadd.xlane.f32.xlu0 %v724
        %v726 = vpop.xlane.xlu0 %725
        %v727 = vsel %vm323, %v655, 0.0
        %728 = vadd.xlane.f32.xlu0 %v727
        %v729 = vpop.xlane.xlu0 %728
        %v730 = vsel %vm323, %v656, 0.0
        %731 = vadd.xlane.f32.xlu0 %v730
        %v732 = vpop.xlane.xlu0 %731
        %v733 = vsel %vm323, %v657, 0.0
        %734 = vadd.xlane.f32.xlu0 %v733
        %v735 = vpop.xlane.xlu0 %734
        %v736 = vsel %vm323, %v658, 0.0
        %737 = vadd.xlane.f32.xlu0 %v736
        %v738 = vpop.xlane.xlu0 %737
        %v739 = vsel %vm323, %v659, 0.0
        %740 = vadd.xlane.f32.xlu0 %v739
        %v741 = vpop.xlane.xlu0 %740
        %v742 = vsel %vm323, %v660, 0.0
        %743 = vadd.xlane.f32.xlu0 %v742
        %v744 = vpop.xlane.xlu0 %743
        %v745 = vsel %vm323, %v661, 0.0
        %746 = vadd.xlane.f32.xlu0 %v745
        %v747 = vpop.xlane.xlu0 %746
        %v748 = vsel %vm323, %v662, 0.0
        %749 = vadd.xlane.f32.xlu0 %v748
        %v750 = vpop.xlane.xlu0 %749
        %v751 = vsel %vm323, %v663, 0.0
        %752 = vadd.xlane.f32.xlu0 %v751
        %v753 = vpop.xlane.xlu0 %752
        %v754 = vsel %vm323, %v664, 0.0
        %755 = vadd.xlane.f32.xlu0 %v754
        %v756 = vpop.xlane.xlu0 %755
        %v757 = vsel %vm323, %v665, 0.0
        %758 = vadd.xlane.f32.xlu0 %v757
        %v759 = vpop.xlane.xlu0 %758
        %v760 = vsel %vm323, %v666, 0.0
        %761 = vadd.xlane.f32.xlu0 %v760
        %v762 = vpop.xlane.xlu0 %761
        %v763 = vsel %vm323, %v667, 0.0
        %764 = vadd.xlane.f32.xlu0 %v763
        %v765 = vpop.xlane.xlu0 %764
        %v766 = vsel %vm323, %v668, 0.0
        %767 = vadd.xlane.f32.xlu0 %v766
        %v768 = vpop.xlane.xlu0 %767
        %v769 = vsel %vm323, %v669, 0.0
        %770 = vadd.xlane.f32.xlu0 %v769
        %v771 = vpop.xlane.xlu0 %770
        %v772 = vsel %vm323, %v670, 0.0
        %773 = vadd.xlane.f32.xlu0 %v772
        %v774 = vpop.xlane.xlu0 %773
        %v775 = vsel %vm323, %v671, 0.0
        %776 = vadd.xlane.f32.xlu0 %v775
        %v777 = vpop.xlane.xlu0 %776
        %v778 = vsel %vm323, %v672, 0.0
        %779 = vadd.xlane.f32.xlu0 %v778
        %v780 = vpop.xlane.xlu0 %779
        %v781 = vsel %vm323, %v673, 0.0
        %782 = vadd.xlane.f32.xlu0 %v781
        %v783 = vpop.xlane.xlu0 %782
        %v784 = vsel %vm323, %v674, 0.0
        %785 = vadd.xlane.f32.xlu0 %v784
        %v786 = vpop.xlane.xlu0 %785
        %v787 = vsel %vm323, %v675, 0.0
        %788 = vadd.xlane.f32.xlu0 %v787
        %v789 = vpop.xlane.xlu0 %788
        %v790 = vsel %vm323, %v676, 0.0
        %791 = vadd.xlane.f32.xlu0 %v790
        %v792 = vpop.xlane.xlu0 %791
        %v793 = vsel %vm323, %v677, 0.0
        %794 = vadd.xlane.f32.xlu0 %v793
        %v795 = vpop.xlane.xlu0 %794
        %v796 = vsel %vm323, %v678, 0.0
        %797 = vadd.xlane.f32.xlu0 %v796
        %v798 = vpop.xlane.xlu0 %797
        %v799 = vsel %vm323, %v679, 0.0
        %800 = vadd.xlane.f32.xlu0 %v799
        %v801 = vpop.xlane.xlu0 %800
        %v802 = vsel %vm323, %v680, 0.0
        %803 = vadd.xlane.f32.xlu0 %v802
        %v804 = vpop.xlane.xlu0 %803
        %v805 = vsel %vm323, %v681, 0.0
        %806 = vadd.xlane.f32.xlu0 %v805
        %v807 = vpop.xlane.xlu0 %806
        %v808 = vsel %vm323, %v682, 0.0
        %809 = vadd.xlane.f32.xlu0 %v808
        %v810 = vpop.xlane.xlu0 %809
        %v811 = vsel %vm323, %v683, 0.0
        %812 = vadd.xlane.f32.xlu0 %v811
        %v813 = vpop.xlane.xlu0 %812
        %v814 = vsel %vm323, %v684, 0.0
        %815 = vadd.xlane.f32.xlu0 %v814
        %v816 = vpop.xlane.xlu0 %815
        %v817 = vsel %vm323, %v685, 0.0
        %818 = vadd.xlane.f32.xlu0 %v817
        %v819 = vpop.xlane.xlu0 %818
        %v820 = vsel %vm323, %v686, 0.0
        %821 = vadd.xlane.f32.xlu0 %v820
        %v822 = vpop.xlane.xlu0 %821
        %v823 = vsel %vm323, %v687, 0.0
        %824 = vadd.xlane.f32.xlu0 %v823
        %v825 = vpop.xlane.xlu0 %824
        %v826 = vsel %vm323, %v688, 0.0
        %827 = vadd.xlane.f32.xlu0 %v826
        %v828 = vpop.xlane.xlu0 %827
        %v829 = vsel %vm323, %v689, 0.0
        %830 = vadd.xlane.f32.xlu0 %v829
        %v831 = vpop.xlane.xlu0 %830
        %v832 = vsel %vm323, %v690, 0.0
        %833 = vadd.xlane.f32.xlu0 %v832
        %v834 = vpop.xlane.xlu0 %833
        %v835 = vsel %vm323, %v691, 0.0
        %836 = vadd.xlane.f32.xlu0 %v835
        %v837 = vpop.xlane.xlu0 %836
        %v838 = vsel %vm323, %v692, 0.0
        %839 = vadd.xlane.f32.xlu0 %v838
        %v840 = vpop.xlane.xlu0 %839
        %v841 = vsel %vm323, %v693, 0.0
        %842 = vadd.xlane.f32.xlu0 %v841
        %v843 = vpop.xlane.xlu0 %842
        %v844 = vsel %vm323, %v694, 0.0
        %845 = vadd.xlane.f32.xlu0 %v844
        %v846 = vpop.xlane.xlu0 %845
        %v847 = vsel %vm323, %v695, 0.0
        %848 = vadd.xlane.f32.xlu0 %v847
        %v849 = vpop.xlane.xlu0 %848
        %v850 = vsel %vm323, %v696, 0.0
        %851 = vadd.xlane.f32.xlu0 %v850
        %v852 = vpop.xlane.xlu0 %851
        %v853 = vsel %vm323, %v697, 0.0
        %854 = vadd.xlane.f32.xlu0 %v853
        %v855 = vpop.xlane.xlu0 %854
        %v856 = vsel %vm323, %v698, 0.0
        %857 = vadd.xlane.f32.xlu0 %v856
        %v858 = vpop.xlane.xlu0 %857
        %v859 = vsel %vm323, %v699, 0.0
        %860 = vadd.xlane.f32.xlu0 %v859
        %v861 = vpop.xlane.xlu0 %860
        %v862 = vsel %vm323, %v700, 0.0
        %863 = vadd.xlane.f32.xlu0 %v862
        %v864 = vpop.xlane.xlu0 %863
        %v865 = vsel %vm323, %v701, 0.0
        %866 = vadd.xlane.f32.xlu0 %v865
        %v867 = vpop.xlane.xlu0 %866
        %v868 = vsel %vm323, %v702, 0.0
        %869 = vadd.xlane.f32.xlu0 %v868
        %v870 = vpop.xlane.xlu0 %869
        %v871 = vsel %vm323, %v703, 0.0
        %872 = vadd.xlane.f32.xlu0 %v871
        %v873 = vpop.xlane.xlu0 %872
        %v874 = vsel %vm323, %v704, 0.0
        %875 = vadd.xlane.f32.xlu0 %v874
        %v876 = vpop.xlane.xlu0 %875
        %v877 = vsel %vm323, %v705, 0.0
        %878 = vadd.xlane.f32.xlu0 %v877
        %v879 = vpop.xlane.xlu0 %878
        %v880 = vsel %vm323, %v706, 0.0
        %881 = vadd.xlane.f32.xlu0 %v880
        %v882 = vpop.xlane.xlu0 %881
        %v883 = vsel %vm323, %v707, 0.0
        %884 = vadd.xlane.f32.xlu0 %v883
        %v885 = vpop.xlane.xlu0 %884
        %v886 = vsel %vm323, %v708, 0.0
        %887 = vadd.xlane.f32.xlu0 %v886
        %v888 = vpop.xlane.xlu0 %887
        %v889 = vsel %vm323, %v709, 0.0
        %890 = vadd.xlane.f32.xlu0 %v889
        %v891 = vpop.xlane.xlu0 %890
        %v892 = vsel %vm323, %v710, 0.0
        %893 = vadd.xlane.f32.xlu0 %v892
        %v894 = vpop.xlane.xlu0 %893
        %v895 = vsel %vm323, %v711, 0.0
        %896 = vadd.xlane.f32.xlu0 %v895
        %v897 = vpop.xlane.xlu0 %896
        %v898 = vsel %vm323, %v712, 0.0
        %899 = vadd.xlane.f32.xlu0 %v898
        %v900 = vpop.xlane.xlu0 %899
        %v901 = vsel %vm323, %v713, 0.0
        %902 = vadd.xlane.f32.xlu0 %v901
        %v903 = vpop.xlane.xlu0 %902
        %v904 = vsel %vm323, %v714, 0.0
        %905 = vadd.xlane.f32.xlu0 %v904
        %v906 = vpop.xlane.xlu0 %905
        %v907 = vmul.f32 %v717, %v522
        %v908 = vmul.f32 %v720, %v522
        %v909 = vmul.f32 %v723, %v522
        %v910 = vmul.f32 %v726, %v522
        %v911 = vmul.f32 %v729, %v522
        %v912 = vmul.f32 %v732, %v522
        %v913 = vmul.f32 %v735, %v522
        %v914 = vmul.f32 %v738, %v522
        %v915 = vmul.f32 %v741, %v522
        %v916 = vmul.f32 %v744, %v522
        %v917 = vmul.f32 %v747, %v522
        %v918 = vmul.f32 %v750, %v522
        %v919 = vmul.f32 %v753, %v522
        %v920 = vmul.f32 %v756, %v522
        %v921 = vmul.f32 %v759, %v522
        %v922 = vmul.f32 %v762, %v522
        %v923 = vmul.f32 %v765, %v522
        %v924 = vmul.f32 %v768, %v522
        %v925 = vmul.f32 %v771, %v522
        %v926 = vmul.f32 %v774, %v522
        %v927 = vmul.f32 %v777, %v522
        %v928 = vmul.f32 %v780, %v522
        %v929 = vmul.f32 %v783, %v522
        %v930 = vmul.f32 %v786, %v522
        %v931 = vmul.f32 %v789, %v522
        %v932 = vmul.f32 %v792, %v522
        %v933 = vmul.f32 %v795, %v522
        %v934 = vmul.f32 %v798, %v522
        %v935 = vmul.f32 %v801, %v522
        %v936 = vmul.f32 %v804, %v522
        %v937 = vmul.f32 %v807, %v522
        %v938 = vmul.f32 %v810, %v522
        %v939 = vmul.f32 %v813, %v522
        %v940 = vmul.f32 %v816, %v522
        %v941 = vmul.f32 %v819, %v522
        %v942 = vmul.f32 %v822, %v522
        %v943 = vmul.f32 %v825, %v522
        %v944 = vmul.f32 %v828, %v522
        %v945 = vmul.f32 %v831, %v522
        %v946 = vmul.f32 %v834, %v522
        %v947 = vmul.f32 %v837, %v522
        %v948 = vmul.f32 %v840, %v522
        %v949 = vmul.f32 %v843, %v522
        %v950 = vmul.f32 %v846, %v522
        %v951 = vmul.f32 %v849, %v522
        %v952 = vmul.f32 %v852, %v522
        %v953 = vmul.f32 %v855, %v522
        %v954 = vmul.f32 %v858, %v522
        %v955 = vmul.f32 %v861, %v522
        %v956 = vmul.f32 %v864, %v522
        %v957 = vmul.f32 %v867, %v522
        %v958 = vmul.f32 %v870, %v522
        %v959 = vmul.f32 %v873, %v522
        %v960 = vmul.f32 %v876, %v522
        %v961 = vmul.f32 %v879, %v522
        %v962 = vmul.f32 %v882, %v522
        %v963 = vmul.f32 %v885, %v522
        %v964 = vmul.f32 %v888, %v522
        %v965 = vmul.f32 %v891, %v522
        %v966 = vmul.f32 %v894, %v522
        %v967 = vmul.f32 %v897, %v522
        %v968 = vmul.f32 %v900, %v522
        %v969 = vmul.f32 %v903, %v522
        %v970 = vmul.f32 %v906, %v522
        %v971 = vadd.f32 %v907, 1e-05
        %v972 = vadd.f32 %v908, 1e-05
        %v973 = vadd.f32 %v909, 1e-05
        %v974 = vadd.f32 %v910, 1e-05
        %v975 = vadd.f32 %v911, 1e-05
        %v976 = vadd.f32 %v912, 1e-05
        %v977 = vadd.f32 %v913, 1e-05
        %v978 = vadd.f32 %v914, 1e-05
        %v979 = vadd.f32 %v915, 1e-05
        %v980 = vadd.f32 %v916, 1e-05
        %v981 = vadd.f32 %v917, 1e-05
        %v982 = vadd.f32 %v918, 1e-05
        %v983 = vadd.f32 %v919, 1e-05
        %v984 = vadd.f32 %v920, 1e-05
        %v985 = vadd.f32 %v921, 1e-05
        %v986 = vadd.f32 %v922, 1e-05
        %v987 = vadd.f32 %v923, 1e-05
        %v988 = vadd.f32 %v924, 1e-05
        %v989 = vadd.f32 %v925, 1e-05
        %v990 = vadd.f32 %v926, 1e-05
        %v991 = vadd.f32 %v927, 1e-05
        %v992 = vadd.f32 %v928, 1e-05
        %v993 = vadd.f32 %v929, 1e-05
        %v994 = vadd.f32 %v930, 1e-05
        %v995 = vadd.f32 %v931, 1e-05
        %v996 = vadd.f32 %v932, 1e-05
        %v997 = vadd.f32 %v933, 1e-05
        %v998 = vadd.f32 %v934, 1e-05
        %v999 = vadd.f32 %v935, 1e-05
        %v1000 = vadd.f32 %v936, 1e-05
        %v1001 = vadd.f32 %v937, 1e-05
        %v1002 = vadd.f32 %v938, 1e-05
        %v1003 = vadd.f32 %v939, 1e-05
        %v1004 = vadd.f32 %v940, 1e-05
        %v1005 = vadd.f32 %v941, 1e-05
        %v1006 = vadd.f32 %v942, 1e-05
        %v1007 = vadd.f32 %v943, 1e-05
        %v1008 = vadd.f32 %v944, 1e-05
        %v1009 = vadd.f32 %v945, 1e-05
        %v1010 = vadd.f32 %v946, 1e-05
        %v1011 = vadd.f32 %v947, 1e-05
        %v1012 = vadd.f32 %v948, 1e-05
        %v1013 = vadd.f32 %v949, 1e-05
        %v1014 = vadd.f32 %v950, 1e-05
        %v1015 = vadd.f32 %v951, 1e-05
        %v1016 = vadd.f32 %v952, 1e-05
        %v1017 = vadd.f32 %v953, 1e-05
        %v1018 = vadd.f32 %v954, 1e-05
        %v1019 = vadd.f32 %v955, 1e-05
        %v1020 = vadd.f32 %v956, 1e-05
        %v1021 = vadd.f32 %v957, 1e-05
        %v1022 = vadd.f32 %v958, 1e-05
        %v1023 = vadd.f32 %v959, 1e-05
        %v1024 = vadd.f32 %v960, 1e-05
        %v1025 = vadd.f32 %v961, 1e-05
        %v1026 = vadd.f32 %v962, 1e-05
        %v1027 = vadd.f32 %v963, 1e-05
        %v1028 = vadd.f32 %v964, 1e-05
        %v1029 = vadd.f32 %v965, 1e-05
        %v1030 = vadd.f32 %v966, 1e-05
        %v1031 = vadd.f32 %v967, 1e-05
        %v1032 = vadd.f32 %v968, 1e-05
        %v1033 = vadd.f32 %v969, 1e-05
        %v1034 = vadd.f32 %v970, 1e-05
        %v1035 = vrsqrt.pop %v971
        %v1036 = vmul.f32 %v1035, %v971
        %v1037 = vmul.f32 %v1036, %v1035
        %v1038 = vmul.f32 0.5, %v1037
        %v1039 = vsub.f32 1.5, %v1038
        %v1040 = vmul.f32 %v1035, %v1039
        %vm1041 = vweird.f32 %v971
        %vm1042 = vweird.f32 %v1035
        %vm1043 = vmor %vm1041, %vm1042
        %v1044 = vsel %vm1043, %v1035, %v1040
        %v1045 = vrsqrt.pop %v972
        %v1046 = vmul.f32 %v1045, %v972
        %v1047 = vmul.f32 %v1046, %v1045
        %v1048 = vmul.f32 0.5, %v1047
        %v1049 = vsub.f32 1.5, %v1048
        %v1050 = vmul.f32 %v1045, %v1049
        %vm1051 = vweird.f32 %v972
        %vm1052 = vweird.f32 %v1045
        %vm1053 = vmor %vm1051, %vm1052
        %v1054 = vsel %vm1053, %v1045, %v1050
        %v1055 = vrsqrt.pop %v973
        %v1056 = vmul.f32 %v1055, %v973
        %v1057 = vmul.f32 %v1056, %v1055
        %v1058 = vmul.f32 0.5, %v1057
        %v1059 = vsub.f32 1.5, %v1058
        %v1060 = vmul.f32 %v1055, %v1059
        %vm1061 = vweird.f32 %v973
        %vm1062 = vweird.f32 %v1055
        %vm1063 = vmor %vm1061, %vm1062
        %v1064 = vsel %vm1063, %v1055, %v1060
        %v1065 = vrsqrt.pop %v974
        %v1066 = vmul.f32 %v1065, %v974
        %v1067 = vmul.f32 %v1066, %v1065
        %v1068 = vmul.f32 0.5, %v1067
        %v1069 = vsub.f32 1.5, %v1068
        %v1070 = vmul.f32 %v1065, %v1069
        %vm1071 = vweird.f32 %v974
        %vm1072 = vweird.f32 %v1065
        %vm1073 = vmor %vm1071, %vm1072
        %v1074 = vsel %vm1073, %v1065, %v1070
        %v1075 = vrsqrt.pop %v975
        %v1076 = vmul.f32 %v1075, %v975
        %v1077 = vmul.f32 %v1076, %v1075
        %v1078 = vmul.f32 0.5, %v1077
        %v1079 = vsub.f32 1.5, %v1078
        %v1080 = vmul.f32 %v1075, %v1079
        %vm1081 = vweird.f32 %v975
        %vm1082 = vweird.f32 %v1075
        %vm1083 = vmor %vm1081, %vm1082
        %v1084 = vsel %vm1083, %v1075, %v1080
        %v1085 = vrsqrt.pop %v976
        %v1086 = vmul.f32 %v1085, %v976
        %v1087 = vmul.f32 %v1086, %v1085
        %v1088 = vmul.f32 0.5, %v1087
        %v1089 = vsub.f32 1.5, %v1088
        %v1090 = vmul.f32 %v1085, %v1089
        %vm1091 = vweird.f32 %v976
        %vm1092 = vweird.f32 %v1085
        %vm1093 = vmor %vm1091, %vm1092
        %v1094 = vsel %vm1093, %v1085, %v1090
        %v1095 = vrsqrt.pop %v977
        %v1096 = vmul.f32 %v1095, %v977
        %v1097 = vmul.f32 %v1096, %v1095
        %v1098 = vmul.f32 0.5, %v1097
        %v1099 = vsub.f32 1.5, %v1098
        %v1100 = vmul.f32 %v1095, %v1099
        %vm1101 = vweird.f32 %v977
        %vm1102 = vweird.f32 %v1095
        %vm1103 = vmor %vm1101, %vm1102
        %v1104 = vsel %vm1103, %v1095, %v1100
        %v1105 = vrsqrt.pop %v978
        %v1106 = vmul.f32 %v1105, %v978
        %v1107 = vmul.f32 %v1106, %v1105
        %v1108 = vmul.f32 0.5, %v1107
        %v1109 = vsub.f32 1.5, %v1108
        %v1110 = vmul.f32 %v1105, %v1109
        %vm1111 = vweird.f32 %v978
        %vm1112 = vweird.f32 %v1105
        %vm1113 = vmor %vm1111, %vm1112
        %v1114 = vsel %vm1113, %v1105, %v1110
        %v1115 = vrsqrt.pop %v979
        %v1116 = vmul.f32 %v1115, %v979
        %v1117 = vmul.f32 %v1116, %v1115
        %v1118 = vmul.f32 0.5, %v1117
        %v1119 = vsub.f32 1.5, %v1118
        %v1120 = vmul.f32 %v1115, %v1119
        %vm1121 = vweird.f32 %v979
        %vm1122 = vweird.f32 %v1115
        %vm1123 = vmor %vm1121, %vm1122
        %v1124 = vsel %vm1123, %v1115, %v1120
        %v1125 = vrsqrt.pop %v980
        %v1126 = vmul.f32 %v1125, %v980
        %v1127 = vmul.f32 %v1126, %v1125
        %v1128 = vmul.f32 0.5, %v1127
        %v1129 = vsub.f32 1.5, %v1128
        %v1130 = vmul.f32 %v1125, %v1129
        %vm1131 = vweird.f32 %v980
        %vm1132 = vweird.f32 %v1125
        %vm1133 = vmor %vm1131, %vm1132
        %v1134 = vsel %vm1133, %v1125, %v1130
        %v1135 = vrsqrt.pop %v981
        %v1136 = vmul.f32 %v1135, %v981
        %v1137 = vmul.f32 %v1136, %v1135
        %v1138 = vmul.f32 0.5, %v1137
        %v1139 = vsub.f32 1.5, %v1138
        %v1140 = vmul.f32 %v1135, %v1139
        %vm1141 = vweird.f32 %v981
        %vm1142 = vweird.f32 %v1135
        %vm1143 = vmor %vm1141, %vm1142
        %v1144 = vsel %vm1143, %v1135, %v1140
        %v1145 = vrsqrt.pop %v982
        %v1146 = vmul.f32 %v1145, %v982
        %v1147 = vmul.f32 %v1146, %v1145
        %v1148 = vmul.f32 0.5, %v1147
        %v1149 = vsub.f32 1.5, %v1148
        %v1150 = vmul.f32 %v1145, %v1149
        %vm1151 = vweird.f32 %v982
        %vm1152 = vweird.f32 %v1145
        %vm1153 = vmor %vm1151, %vm1152
        %v1154 = vsel %vm1153, %v1145, %v1150
        %v1155 = vrsqrt.pop %v983
        %v1156 = vmul.f32 %v1155, %v983
        %v1157 = vmul.f32 %v1156, %v1155
        %v1158 = vmul.f32 0.5, %v1157
        %v1159 = vsub.f32 1.5, %v1158
        %v1160 = vmul.f32 %v1155, %v1159
        %vm1161 = vweird.f32 %v983
        %vm1162 = vweird.f32 %v1155
        %vm1163 = vmor %vm1161, %vm1162
        %v1164 = vsel %vm1163, %v1155, %v1160
        %v1165 = vrsqrt.pop %v984
        %v1166 = vmul.f32 %v1165, %v984
        %v1167 = vmul.f32 %v1166, %v1165
        %v1168 = vmul.f32 0.5, %v1167
        %v1169 = vsub.f32 1.5, %v1168
        %v1170 = vmul.f32 %v1165, %v1169
        %vm1171 = vweird.f32 %v984
        %vm1172 = vweird.f32 %v1165
        %vm1173 = vmor %vm1171, %vm1172
        %v1174 = vsel %vm1173, %v1165, %v1170
        %v1175 = vrsqrt.pop %v985
        %v1176 = vmul.f32 %v1175, %v985
        %v1177 = vmul.f32 %v1176, %v1175
        %v1178 = vmul.f32 0.5, %v1177
        %v1179 = vsub.f32 1.5, %v1178
        %v1180 = vmul.f32 %v1175, %v1179
        %vm1181 = vweird.f32 %v985
        %vm1182 = vweird.f32 %v1175
        %vm1183 = vmor %vm1181, %vm1182
        %v1184 = vsel %vm1183, %v1175, %v1180
        %v1185 = vrsqrt.pop %v986
        %v1186 = vmul.f32 %v1185, %v986
        %v1187 = vmul.f32 %v1186, %v1185
        %v1188 = vmul.f32 0.5, %v1187
        %v1189 = vsub.f32 1.5, %v1188
        %v1190 = vmul.f32 %v1185, %v1189
        %vm1191 = vweird.f32 %v986
        %vm1192 = vweird.f32 %v1185
        %vm1193 = vmor %vm1191, %vm1192
        %v1194 = vsel %vm1193, %v1185, %v1190
        %v1195 = vrsqrt.pop %v987
        %v1196 = vmul.f32 %v1195, %v987
        %v1197 = vmul.f32 %v1196, %v1195
        %v1198 = vmul.f32 0.5, %v1197
        %v1199 = vsub.f32 1.5, %v1198
        %v1200 = vmul.f32 %v1195, %v1199
        %vm1201 = vweird.f32 %v987
        %vm1202 = vweird.f32 %v1195
        %vm1203 = vmor %vm1201, %vm1202
        %v1204 = vsel %vm1203, %v1195, %v1200
        %v1205 = vrsqrt.pop %v988
        %v1206 = vmul.f32 %v1205, %v988
        %v1207 = vmul.f32 %v1206, %v1205
        %v1208 = vmul.f32 0.5, %v1207
        %v1209 = vsub.f32 1.5, %v1208
        %v1210 = vmul.f32 %v1205, %v1209
        %vm1211 = vweird.f32 %v988
        %vm1212 = vweird.f32 %v1205
        %vm1213 = vmor %vm1211, %vm1212
        %v1214 = vsel %vm1213, %v1205, %v1210
        %v1215 = vrsqrt.pop %v989
        %v1216 = vmul.f32 %v1215, %v989
        %v1217 = vmul.f32 %v1216, %v1215
        %v1218 = vmul.f32 0.5, %v1217
        %v1219 = vsub.f32 1.5, %v1218
        %v1220 = vmul.f32 %v1215, %v1219
        %vm1221 = vweird.f32 %v989
        %vm1222 = vweird.f32 %v1215
        %vm1223 = vmor %vm1221, %vm1222
        %v1224 = vsel %vm1223, %v1215, %v1220
        %v1225 = vrsqrt.pop %v990
        %v1226 = vmul.f32 %v1225, %v990
        %v1227 = vmul.f32 %v1226, %v1225
        %v1228 = vmul.f32 0.5, %v1227
        %v1229 = vsub.f32 1.5, %v1228
        %v1230 = vmul.f32 %v1225, %v1229
        %vm1231 = vweird.f32 %v990
        %vm1232 = vweird.f32 %v1225
        %vm1233 = vmor %vm1231, %vm1232
        %v1234 = vsel %vm1233, %v1225, %v1230
        %v1235 = vrsqrt.pop %v991
        %v1236 = vmul.f32 %v1235, %v991
        %v1237 = vmul.f32 %v1236, %v1235
        %v1238 = vmul.f32 0.5, %v1237
        %v1239 = vsub.f32 1.5, %v1238
        %v1240 = vmul.f32 %v1235, %v1239
        %vm1241 = vweird.f32 %v991
        %vm1242 = vweird.f32 %v1235
        %vm1243 = vmor %vm1241, %vm1242
        %v1244 = vsel %vm1243, %v1235, %v1240
        %v1245 = vrsqrt.pop %v992
        %v1246 = vmul.f32 %v1245, %v992
        %v1247 = vmul.f32 %v1246, %v1245
        %v1248 = vmul.f32 0.5, %v1247
        %v1249 = vsub.f32 1.5, %v1248
        %v1250 = vmul.f32 %v1245, %v1249
        %vm1251 = vweird.f32 %v992
        %vm1252 = vweird.f32 %v1245
        %vm1253 = vmor %vm1251, %vm1252
        %v1254 = vsel %vm1253, %v1245, %v1250
        %v1255 = vrsqrt.pop %v993
        %v1256 = vmul.f32 %v1255, %v993
        %v1257 = vmul.f32 %v1256, %v1255
        %v1258 = vmul.f32 0.5, %v1257
        %v1259 = vsub.f32 1.5, %v1258
        %v1260 = vmul.f32 %v1255, %v1259
        %vm1261 = vweird.f32 %v993
        %vm1262 = vweird.f32 %v1255
        %vm1263 = vmor %vm1261, %vm1262
        %v1264 = vsel %vm1263, %v1255, %v1260
        %v1265 = vrsqrt.pop %v994
        %v1266 = vmul.f32 %v1265, %v994
        %v1267 = vmul.f32 %v1266, %v1265
        %v1268 = vmul.f32 0.5, %v1267
        %v1269 = vsub.f32 1.5, %v1268
        %v1270 = vmul.f32 %v1265, %v1269
        %vm1271 = vweird.f32 %v994
        %vm1272 = vweird.f32 %v1265
        %vm1273 = vmor %vm1271, %vm1272
        %v1274 = vsel %vm1273, %v1265, %v1270
        %v1275 = vrsqrt.pop %v995
        %v1276 = vmul.f32 %v1275, %v995
        %v1277 = vmul.f32 %v1276, %v1275
        %v1278 = vmul.f32 0.5, %v1277
        %v1279 = vsub.f32 1.5, %v1278
        %v1280 = vmul.f32 %v1275, %v1279
        %vm1281 = vweird.f32 %v995
        %vm1282 = vweird.f32 %v1275
        %vm1283 = vmor %vm1281, %vm1282
        %v1284 = vsel %vm1283, %v1275, %v1280
        %v1285 = vrsqrt.pop %v996
        %v1286 = vmul.f32 %v1285, %v996
        %v1287 = vmul.f32 %v1286, %v1285
        %v1288 = vmul.f32 0.5, %v1287
        %v1289 = vsub.f32 1.5, %v1288
        %v1290 = vmul.f32 %v1285, %v1289
        %vm1291 = vweird.f32 %v996
        %vm1292 = vweird.f32 %v1285
        %vm1293 = vmor %vm1291, %vm1292
        %v1294 = vsel %vm1293, %v1285, %v1290
        %v1295 = vrsqrt.pop %v997
        %v1296 = vmul.f32 %v1295, %v997
        %v1297 = vmul.f32 %v1296, %v1295
        %v1298 = vmul.f32 0.5, %v1297
        %v1299 = vsub.f32 1.5, %v1298
        %v1300 = vmul.f32 %v1295, %v1299
        %vm1301 = vweird.f32 %v997
        %vm1302 = vweird.f32 %v1295
        %vm1303 = vmor %vm1301, %vm1302
        %v1304 = vsel %vm1303, %v1295, %v1300
        %v1305 = vrsqrt.pop %v998
        %v1306 = vmul.f32 %v1305, %v998
        %v1307 = vmul.f32 %v1306, %v1305
        %v1308 = vmul.f32 0.5, %v1307
        %v1309 = vsub.f32 1.5, %v1308
        %v1310 = vmul.f32 %v1305, %v1309
        %vm1311 = vweird.f32 %v998
        %vm1312 = vweird.f32 %v1305
        %vm1313 = vmor %vm1311, %vm1312
        %v1314 = vsel %vm1313, %v1305, %v1310
        %v1315 = vrsqrt.pop %v999
        %v1316 = vmul.f32 %v1315, %v999
        %v1317 = vmul.f32 %v1316, %v1315
        %v1318 = vmul.f32 0.5, %v1317
        %v1319 = vsub.f32 1.5, %v1318
        %v1320 = vmul.f32 %v1315, %v1319
        %vm1321 = vweird.f32 %v999
        %vm1322 = vweird.f32 %v1315
        %vm1323 = vmor %vm1321, %vm1322
        %v1324 = vsel %vm1323, %v1315, %v1320
        %v1325 = vrsqrt.pop %v1000
        %v1326 = vmul.f32 %v1325, %v1000
        %v1327 = vmul.f32 %v1326, %v1325
        %v1328 = vmul.f32 0.5, %v1327
        %v1329 = vsub.f32 1.5, %v1328
        %v1330 = vmul.f32 %v1325, %v1329
        %vm1331 = vweird.f32 %v1000
        %vm1332 = vweird.f32 %v1325
        %vm1333 = vmor %vm1331, %vm1332
        %v1334 = vsel %vm1333, %v1325, %v1330
        %v1335 = vrsqrt.pop %v1001
        %v1336 = vmul.f32 %v1335, %v1001
        %v1337 = vmul.f32 %v1336, %v1335
        %v1338 = vmul.f32 0.5, %v1337
        %v1339 = vsub.f32 1.5, %v1338
        %v1340 = vmul.f32 %v1335, %v1339
        %vm1341 = vweird.f32 %v1001
        %vm1342 = vweird.f32 %v1335
        %vm1343 = vmor %vm1341, %vm1342
        %v1344 = vsel %vm1343, %v1335, %v1340
        %v1345 = vrsqrt.pop %v1002
        %v1346 = vmul.f32 %v1345, %v1002
        %v1347 = vmul.f32 %v1346, %v1345
        %v1348 = vmul.f32 0.5, %v1347
        %v1349 = vsub.f32 1.5, %v1348
        %v1350 = vmul.f32 %v1345, %v1349
        %vm1351 = vweird.f32 %v1002
        %vm1352 = vweird.f32 %v1345
        %vm1353 = vmor %vm1351, %vm1352
        %v1354 = vsel %vm1353, %v1345, %v1350
        %v1355 = vrsqrt.pop %v1003
        %v1356 = vmul.f32 %v1355, %v1003
        %v1357 = vmul.f32 %v1356, %v1355
        %v1358 = vmul.f32 0.5, %v1357
        %v1359 = vsub.f32 1.5, %v1358
        %v1360 = vmul.f32 %v1355, %v1359
        %vm1361 = vweird.f32 %v1003
        %vm1362 = vweird.f32 %v1355
        %vm1363 = vmor %vm1361, %vm1362
        %v1364 = vsel %vm1363, %v1355, %v1360
        %v1365 = vrsqrt.pop %v1004
        %v1366 = vmul.f32 %v1365, %v1004
        %v1367 = vmul.f32 %v1366, %v1365
        %v1368 = vmul.f32 0.5, %v1367
        %v1369 = vsub.f32 1.5, %v1368
        %v1370 = vmul.f32 %v1365, %v1369
        %vm1371 = vweird.f32 %v1004
        %vm1372 = vweird.f32 %v1365
        %vm1373 = vmor %vm1371, %vm1372
        %v1374 = vsel %vm1373, %v1365, %v1370
        %v1375 = vrsqrt.pop %v1005
        %v1376 = vmul.f32 %v1375, %v1005
        %v1377 = vmul.f32 %v1376, %v1375
        %v1378 = vmul.f32 0.5, %v1377
        %v1379 = vsub.f32 1.5, %v1378
        %v1380 = vmul.f32 %v1375, %v1379
        %vm1381 = vweird.f32 %v1005
        %vm1382 = vweird.f32 %v1375
        %vm1383 = vmor %vm1381, %vm1382
        %v1384 = vsel %vm1383, %v1375, %v1380
        %v1385 = vrsqrt.pop %v1006
        %v1386 = vmul.f32 %v1385, %v1006
        %v1387 = vmul.f32 %v1386, %v1385
        %v1388 = vmul.f32 0.5, %v1387
        %v1389 = vsub.f32 1.5, %v1388
        %v1390 = vmul.f32 %v1385, %v1389
        %vm1391 = vweird.f32 %v1006
        %vm1392 = vweird.f32 %v1385
        %vm1393 = vmor %vm1391, %vm1392
        %v1394 = vsel %vm1393, %v1385, %v1390
        %v1395 = vrsqrt.pop %v1007
        %v1396 = vmul.f32 %v1395, %v1007
        %v1397 = vmul.f32 %v1396, %v1395
        %v1398 = vmul.f32 0.5, %v1397
        %v1399 = vsub.f32 1.5, %v1398
        %v1400 = vmul.f32 %v1395, %v1399
        %vm1401 = vweird.f32 %v1007
        %vm1402 = vweird.f32 %v1395
        %vm1403 = vmor %vm1401, %vm1402
        %v1404 = vsel %vm1403, %v1395, %v1400
        %v1405 = vrsqrt.pop %v1008
        %v1406 = vmul.f32 %v1405, %v1008
        %v1407 = vmul.f32 %v1406, %v1405
        %v1408 = vmul.f32 0.5, %v1407
        %v1409 = vsub.f32 1.5, %v1408
        %v1410 = vmul.f32 %v1405, %v1409
        %vm1411 = vweird.f32 %v1008
        %vm1412 = vweird.f32 %v1405
        %vm1413 = vmor %vm1411, %vm1412
        %v1414 = vsel %vm1413, %v1405, %v1410
        %v1415 = vrsqrt.pop %v1009
        %v1416 = vmul.f32 %v1415, %v1009
        %v1417 = vmul.f32 %v1416, %v1415
        %v1418 = vmul.f32 0.5, %v1417
        %v1419 = vsub.f32 1.5, %v1418
        %v1420 = vmul.f32 %v1415, %v1419
        %vm1421 = vweird.f32 %v1009
        %vm1422 = vweird.f32 %v1415
        %vm1423 = vmor %vm1421, %vm1422
        %v1424 = vsel %vm1423, %v1415, %v1420
        %v1425 = vrsqrt.pop %v1010
        %v1426 = vmul.f32 %v1425, %v1010
        %v1427 = vmul.f32 %v1426, %v1425
        %v1428 = vmul.f32 0.5, %v1427
        %v1429 = vsub.f32 1.5, %v1428
        %v1430 = vmul.f32 %v1425, %v1429
        %vm1431 = vweird.f32 %v1010
        %vm1432 = vweird.f32 %v1425
        %vm1433 = vmor %vm1431, %vm1432
        %v1434 = vsel %vm1433, %v1425, %v1430
        %v1435 = vrsqrt.pop %v1011
        %v1436 = vmul.f32 %v1435, %v1011
        %v1437 = vmul.f32 %v1436, %v1435
        %v1438 = vmul.f32 0.5, %v1437
        %v1439 = vsub.f32 1.5, %v1438
        %v1440 = vmul.f32 %v1435, %v1439
        %vm1441 = vweird.f32 %v1011
        %vm1442 = vweird.f32 %v1435
        %vm1443 = vmor %vm1441, %vm1442
        %v1444 = vsel %vm1443, %v1435, %v1440
        %v1445 = vrsqrt.pop %v1012
        %v1446 = vmul.f32 %v1445, %v1012
        %v1447 = vmul.f32 %v1446, %v1445
        %v1448 = vmul.f32 0.5, %v1447
        %v1449 = vsub.f32 1.5, %v1448
        %v1450 = vmul.f32 %v1445, %v1449
        %vm1451 = vweird.f32 %v1012
        %vm1452 = vweird.f32 %v1445
        %vm1453 = vmor %vm1451, %vm1452
        %v1454 = vsel %vm1453, %v1445, %v1450
        %v1455 = vrsqrt.pop %v1013
        %v1456 = vmul.f32 %v1455, %v1013
        %v1457 = vmul.f32 %v1456, %v1455
        %v1458 = vmul.f32 0.5, %v1457
        %v1459 = vsub.f32 1.5, %v1458
        %v1460 = vmul.f32 %v1455, %v1459
        %vm1461 = vweird.f32 %v1013
        %vm1462 = vweird.f32 %v1455
        %vm1463 = vmor %vm1461, %vm1462
        %v1464 = vsel %vm1463, %v1455, %v1460
        %v1465 = vrsqrt.pop %v1014
        %v1466 = vmul.f32 %v1465, %v1014
        %v1467 = vmul.f32 %v1466, %v1465
        %v1468 = vmul.f32 0.5, %v1467
        %v1469 = vsub.f32 1.5, %v1468
        %v1470 = vmul.f32 %v1465, %v1469
        %vm1471 = vweird.f32 %v1014
        %vm1472 = vweird.f32 %v1465
        %vm1473 = vmor %vm1471, %vm1472
        %v1474 = vsel %vm1473, %v1465, %v1470
        %v1475 = vrsqrt.pop %v1015
        %v1476 = vmul.f32 %v1475, %v1015
        %v1477 = vmul.f32 %v1476, %v1475
        %v1478 = vmul.f32 0.5, %v1477
        %v1479 = vsub.f32 1.5, %v1478
        %v1480 = vmul.f32 %v1475, %v1479
        %vm1481 = vweird.f32 %v1015
        %vm1482 = vweird.f32 %v1475
        %vm1483 = vmor %vm1481, %vm1482
        %v1484 = vsel %vm1483, %v1475, %v1480
        %v1485 = vrsqrt.pop %v1016
        %v1486 = vmul.f32 %v1485, %v1016
        %v1487 = vmul.f32 %v1486, %v1485
        %v1488 = vmul.f32 0.5, %v1487
        %v1489 = vsub.f32 1.5, %v1488
        %v1490 = vmul.f32 %v1485, %v1489
        %vm1491 = vweird.f32 %v1016
        %vm1492 = vweird.f32 %v1485
        %vm1493 = vmor %vm1491, %vm1492
        %v1494 = vsel %vm1493, %v1485, %v1490
        %v1495 = vrsqrt.pop %v1017
        %v1496 = vmul.f32 %v1495, %v1017
        %v1497 = vmul.f32 %v1496, %v1495
        %v1498 = vmul.f32 0.5, %v1497
        %v1499 = vsub.f32 1.5, %v1498
        %v1500 = vmul.f32 %v1495, %v1499
        %vm1501 = vweird.f32 %v1017
        %vm1502 = vweird.f32 %v1495
        %vm1503 = vmor %vm1501, %vm1502
        %v1504 = vsel %vm1503, %v1495, %v1500
        %v1505 = vrsqrt.pop %v1018
        %v1506 = vmul.f32 %v1505, %v1018
        %v1507 = vmul.f32 %v1506, %v1505
        %v1508 = vmul.f32 0.5, %v1507
        %v1509 = vsub.f32 1.5, %v1508
        %v1510 = vmul.f32 %v1505, %v1509
        %vm1511 = vweird.f32 %v1018
        %vm1512 = vweird.f32 %v1505
        %vm1513 = vmor %vm1511, %vm1512
        %v1514 = vsel %vm1513, %v1505, %v1510
        %v1515 = vrsqrt.pop %v1019
        %v1516 = vmul.f32 %v1515, %v1019
        %v1517 = vmul.f32 %v1516, %v1515
        %v1518 = vmul.f32 0.5, %v1517
        %v1519 = vsub.f32 1.5, %v1518
        %v1520 = vmul.f32 %v1515, %v1519
        %vm1521 = vweird.f32 %v1019
        %vm1522 = vweird.f32 %v1515
        %vm1523 = vmor %vm1521, %vm1522
        %v1524 = vsel %vm1523, %v1515, %v1520
        %v1525 = vrsqrt.pop %v1020
        %v1526 = vmul.f32 %v1525, %v1020
        %v1527 = vmul.f32 %v1526, %v1525
        %v1528 = vmul.f32 0.5, %v1527
        %v1529 = vsub.f32 1.5, %v1528
        %v1530 = vmul.f32 %v1525, %v1529
        %vm1531 = vweird.f32 %v1020
        %vm1532 = vweird.f32 %v1525
        %vm1533 = vmor %vm1531, %vm1532
        %v1534 = vsel %vm1533, %v1525, %v1530
        %v1535 = vrsqrt.pop %v1021
        %v1536 = vmul.f32 %v1535, %v1021
        %v1537 = vmul.f32 %v1536, %v1535
        %v1538 = vmul.f32 0.5, %v1537
        %v1539 = vsub.f32 1.5, %v1538
        %v1540 = vmul.f32 %v1535, %v1539
        %vm1541 = vweird.f32 %v1021
        %vm1542 = vweird.f32 %v1535
        %vm1543 = vmor %vm1541, %vm1542
        %v1544 = vsel %vm1543, %v1535, %v1540
        %v1545 = vrsqrt.pop %v1022
        %v1546 = vmul.f32 %v1545, %v1022
        %v1547 = vmul.f32 %v1546, %v1545
        %v1548 = vmul.f32 0.5, %v1547
        %v1549 = vsub.f32 1.5, %v1548
        %v1550 = vmul.f32 %v1545, %v1549
        %vm1551 = vweird.f32 %v1022
        %vm1552 = vweird.f32 %v1545
        %vm1553 = vmor %vm1551, %vm1552
        %v1554 = vsel %vm1553, %v1545, %v1550
        %v1555 = vrsqrt.pop %v1023
        %v1556 = vmul.f32 %v1555, %v1023
        %v1557 = vmul.f32 %v1556, %v1555
        %v1558 = vmul.f32 0.5, %v1557
        %v1559 = vsub.f32 1.5, %v1558
        %v1560 = vmul.f32 %v1555, %v1559
        %vm1561 = vweird.f32 %v1023
        %vm1562 = vweird.f32 %v1555
        %vm1563 = vmor %vm1561, %vm1562
        %v1564 = vsel %vm1563, %v1555, %v1560
        %v1565 = vrsqrt.pop %v1024
        %v1566 = vmul.f32 %v1565, %v1024
        %v1567 = vmul.f32 %v1566, %v1565
        %v1568 = vmul.f32 0.5, %v1567
        %v1569 = vsub.f32 1.5, %v1568
        %v1570 = vmul.f32 %v1565, %v1569
        %vm1571 = vweird.f32 %v1024
        %vm1572 = vweird.f32 %v1565
        %vm1573 = vmor %vm1571, %vm1572
        %v1574 = vsel %vm1573, %v1565, %v1570
        %v1575 = vrsqrt.pop %v1025
        %v1576 = vmul.f32 %v1575, %v1025
        %v1577 = vmul.f32 %v1576, %v1575
        %v1578 = vmul.f32 0.5, %v1577
        %v1579 = vsub.f32 1.5, %v1578
        %v1580 = vmul.f32 %v1575, %v1579
        %vm1581 = vweird.f32 %v1025
        %vm1582 = vweird.f32 %v1575
        %vm1583 = vmor %vm1581, %vm1582
        %v1584 = vsel %vm1583, %v1575, %v1580
        %v1585 = vrsqrt.pop %v1026
        %v1586 = vmul.f32 %v1585, %v1026
        %v1587 = vmul.f32 %v1586, %v1585
        %v1588 = vmul.f32 0.5, %v1587
        %v1589 = vsub.f32 1.5, %v1588
        %v1590 = vmul.f32 %v1585, %v1589
        %vm1591 = vweird.f32 %v1026
        %vm1592 = vweird.f32 %v1585
        %vm1593 = vmor %vm1591, %vm1592
        %v1594 = vsel %vm1593, %v1585, %v1590
        %v1595 = vrsqrt.pop %v1027
        %v1596 = vmul.f32 %v1595, %v1027
        %v1597 = vmul.f32 %v1596, %v1595
        %v1598 = vmul.f32 0.5, %v1597
        %v1599 = vsub.f32 1.5, %v1598
        %v1600 = vmul.f32 %v1595, %v1599
        %vm1601 = vweird.f32 %v1027
        %vm1602 = vweird.f32 %v1595
        %vm1603 = vmor %vm1601, %vm1602
        %v1604 = vsel %vm1603, %v1595, %v1600
        %v1605 = vrsqrt.pop %v1028
        %v1606 = vmul.f32 %v1605, %v1028
        %v1607 = vmul.f32 %v1606, %v1605
        %v1608 = vmul.f32 0.5, %v1607
        %v1609 = vsub.f32 1.5, %v1608
        %v1610 = vmul.f32 %v1605, %v1609
        %vm1611 = vweird.f32 %v1028
        %vm1612 = vweird.f32 %v1605
        %vm1613 = vmor %vm1611, %vm1612
        %v1614 = vsel %vm1613, %v1605, %v1610
        %v1615 = vrsqrt.pop %v1029
        %v1616 = vmul.f32 %v1615, %v1029
        %v1617 = vmul.f32 %v1616, %v1615
        %v1618 = vmul.f32 0.5, %v1617
        %v1619 = vsub.f32 1.5, %v1618
        %v1620 = vmul.f32 %v1615, %v1619
        %vm1621 = vweird.f32 %v1029
        %vm1622 = vweird.f32 %v1615
        %vm1623 = vmor %vm1621, %vm1622
        %v1624 = vsel %vm1623, %v1615, %v1620
        %v1625 = vrsqrt.pop %v1030
        %v1626 = vmul.f32 %v1625, %v1030
        %v1627 = vmul.f32 %v1626, %v1625
        %v1628 = vmul.f32 0.5, %v1627
        %v1629 = vsub.f32 1.5, %v1628
        %v1630 = vmul.f32 %v1625, %v1629
        %vm1631 = vweird.f32 %v1030
        %vm1632 = vweird.f32 %v1625
        %vm1633 = vmor %vm1631, %vm1632
        %v1634 = vsel %vm1633, %v1625, %v1630
        %v1635 = vrsqrt.pop %v1031
        %v1636 = vmul.f32 %v1635, %v1031
        %v1637 = vmul.f32 %v1636, %v1635
        %v1638 = vmul.f32 0.5, %v1637
        %v1639 = vsub.f32 1.5, %v1638
        %v1640 = vmul.f32 %v1635, %v1639
        %vm1641 = vweird.f32 %v1031
        %vm1642 = vweird.f32 %v1635
        %vm1643 = vmor %vm1641, %vm1642
        %v1644 = vsel %vm1643, %v1635, %v1640
        %v1645 = vrsqrt.pop %v1032
        %v1646 = vmul.f32 %v1645, %v1032
        %v1647 = vmul.f32 %v1646, %v1645
        %v1648 = vmul.f32 0.5, %v1647
        %v1649 = vsub.f32 1.5, %v1648
        %v1650 = vmul.f32 %v1645, %v1649
        %vm1651 = vweird.f32 %v1032
        %vm1652 = vweird.f32 %v1645
        %vm1653 = vmor %vm1651, %vm1652
        %v1654 = vsel %vm1653, %v1645, %v1650
        %v1655 = vrsqrt.pop %v1033
        %v1656 = vmul.f32 %v1655, %v1033
        %v1657 = vmul.f32 %v1656, %v1655
        %v1658 = vmul.f32 0.5, %v1657
        %v1659 = vsub.f32 1.5, %v1658
        %v1660 = vmul.f32 %v1655, %v1659
        %vm1661 = vweird.f32 %v1033
        %vm1662 = vweird.f32 %v1655
        %vm1663 = vmor %vm1661, %vm1662
        %v1664 = vsel %vm1663, %v1655, %v1660
        %v1665 = vrsqrt.pop %v1034
        %v1666 = vmul.f32 %v1665, %v1034
        %v1667 = vmul.f32 %v1666, %v1665
        %v1668 = vmul.f32 0.5, %v1667
        %v1669 = vsub.f32 1.5, %v1668
        %v1670 = vmul.f32 %v1665, %v1669
        %vm1671 = vweird.f32 %v1034
        %vm1672 = vweird.f32 %v1665
        %vm1673 = vmor %vm1671, %vm1672
        %v1674 = vsel %vm1673, %v1665, %v1670
        %v1675 = vmul.f32 %v587, %v1044
        %v1676 = vmul.f32 %v588, %v1054
        %v1677 = vmul.f32 %v589, %v1064
        %v1678 = vmul.f32 %v590, %v1074
        %v1679 = vmul.f32 %v591, %v1084
        %v1680 = vmul.f32 %v592, %v1094
        %v1681 = vmul.f32 %v593, %v1104
        %v1682 = vmul.f32 %v594, %v1114
        %v1683 = vmul.f32 %v595, %v1124
        %v1684 = vmul.f32 %v596, %v1134
        %v1685 = vmul.f32 %v597, %v1144
        %v1686 = vmul.f32 %v598, %v1154
        %v1687 = vmul.f32 %v599, %v1164
        %v1688 = vmul.f32 %v600, %v1174
        %v1689 = vmul.f32 %v601, %v1184
        %v1690 = vmul.f32 %v602, %v1194
        %v1691 = vmul.f32 %v603, %v1204
        %v1692 = vmul.f32 %v604, %v1214
        %v1693 = vmul.f32 %v605, %v1224
        %v1694 = vmul.f32 %v606, %v1234
        %v1695 = vmul.f32 %v607, %v1244
        %v1696 = vmul.f32 %v608, %v1254
        %v1697 = vmul.f32 %v609, %v1264
        %v1698 = vmul.f32 %v610, %v1274
        %v1699 = vmul.f32 %v611, %v1284
        %v1700 = vmul.f32 %v612, %v1294
        %v1701 = vmul.f32 %v613, %v1304
        %v1702 = vmul.f32 %v614, %v1314
        %v1703 = vmul.f32 %v615, %v1324
        %v1704 = vmul.f32 %v616, %v1334
        %v1705 = vmul.f32 %v617, %v1344
        %v1706 = vmul.f32 %v618, %v1354
        %v1707 = vmul.f32 %v619, %v1364
        %v1708 = vmul.f32 %v620, %v1374
        %v1709 = vmul.f32 %v621, %v1384
        %v1710 = vmul.f32 %v622, %v1394
        %v1711 = vmul.f32 %v623, %v1404
        %v1712 = vmul.f32 %v624, %v1414
        %v1713 = vmul.f32 %v625, %v1424
        %v1714 = vmul.f32 %v626, %v1434
        %v1715 = vmul.f32 %v627, %v1444
        %v1716 = vmul.f32 %v628, %v1454
        %v1717 = vmul.f32 %v629, %v1464
        %v1718 = vmul.f32 %v630, %v1474
        %v1719 = vmul.f32 %v631, %v1484
        %v1720 = vmul.f32 %v632, %v1494
        %v1721 = vmul.f32 %v633, %v1504
        %v1722 = vmul.f32 %v634, %v1514
        %v1723 = vmul.f32 %v635, %v1524
        %v1724 = vmul.f32 %v636, %v1534
        %v1725 = vmul.f32 %v637, %v1544
        %v1726 = vmul.f32 %v638, %v1554
        %v1727 = vmul.f32 %v639, %v1564
        %v1728 = vmul.f32 %v640, %v1574
        %v1729 = vmul.f32 %v641, %v1584
        %v1730 = vmul.f32 %v642, %v1594
        %v1731 = vmul.f32 %v643, %v1604
        %v1732 = vmul.f32 %v644, %v1614
        %v1733 = vmul.f32 %v645, %v1624
        %v1734 = vmul.f32 %v646, %v1634
        %v1735 = vmul.f32 %v647, %v1644
        %v1736 = vmul.f32 %v648, %v1654
        %v1737 = vmul.f32 %v649, %v1664
        %v1738 = vmul.f32 %v650, %v1674
        %v1739 = vld [vmem:[%s1] sm:$0x1]
        %v1741 = vperm.slane %v1739, 0
        %v1743 = vmul.f32 %v1675, %v1741
        %v1744 = vmul.f32 %v1676, %v1741
        %v1745 = vmul.f32 %v1677, %v1741
        %v1746 = vmul.f32 %v1678, %v1741
        %v1747 = vmul.f32 %v1679, %v1741
        %v1748 = vmul.f32 %v1680, %v1741
        %v1749 = vmul.f32 %v1681, %v1741
        %v1750 = vmul.f32 %v1682, %v1741
        %v1751 = vmul.f32 %v1683, %v1741
        %v1752 = vmul.f32 %v1684, %v1741
        %v1753 = vmul.f32 %v1685, %v1741
        %v1754 = vmul.f32 %v1686, %v1741
        %v1755 = vmul.f32 %v1687, %v1741
        %v1756 = vmul.f32 %v1688, %v1741
        %v1757 = vmul.f32 %v1689, %v1741
        %v1758 = vmul.f32 %v1690, %v1741
        %v1759 = vmul.f32 %v1691, %v1741
        %v1760 = vmul.f32 %v1692, %v1741
        %v1761 = vmul.f32 %v1693, %v1741
        %v1762 = vmul.f32 %v1694, %v1741
        %v1763 = vmul.f32 %v1695, %v1741
        %v1764 = vmul.f32 %v1696, %v1741
        %v1765 = vmul.f32 %v1697, %v1741
        %v1766 = vmul.f32 %v1698, %v1741
        %v1767 = vmul.f32 %v1699, %v1741
        %v1768 = vmul.f32 %v1700, %v1741
        %v1769 = vmul.f32 %v1701, %v1741
        %v1770 = vmul.f32 %v1702, %v1741
        %v1771 = vmul.f32 %v1703, %v1741
        %v1772 = vmul.f32 %v1704, %v1741
        %v1773 = vmul.f32 %v1705, %v1741
        %v1774 = vmul.f32 %v1706, %v1741
        %v1775 = vmul.f32 %v1707, %v1741
        %v1776 = vmul.f32 %v1708, %v1741
        %v1777 = vmul.f32 %v1709, %v1741
        %v1778 = vmul.f32 %v1710, %v1741
        %v1779 = vmul.f32 %v1711, %v1741
        %v1780 = vmul.f32 %v1712, %v1741
        %v1781 = vmul.f32 %v1713, %v1741
        %v1782 = vmul.f32 %v1714, %v1741
        %v1783 = vmul.f32 %v1715, %v1741
        %v1784 = vmul.f32 %v1716, %v1741
        %v1785 = vmul.f32 %v1717, %v1741
        %v1786 = vmul.f32 %v1718, %v1741
        %v1787 = vmul.f32 %v1719, %v1741
        %v1788 = vmul.f32 %v1720, %v1741
        %v1789 = vmul.f32 %v1721, %v1741
        %v1790 = vmul.f32 %v1722, %v1741
        %v1791 = vmul.f32 %v1723, %v1741
        %v1792 = vmul.f32 %v1724, %v1741
        %v1793 = vmul.f32 %v1725, %v1741
        %v1794 = vmul.f32 %v1726, %v1741
        %v1795 = vmul.f32 %v1727, %v1741
        %v1796 = vmul.f32 %v1728, %v1741
        %v1797 = vmul.f32 %v1729, %v1741
        %v1798 = vmul.f32 %v1730, %v1741
        %v1799 = vmul.f32 %v1731, %v1741
        %v1800 = vmul.f32 %v1732, %v1741
        %v1801 = vmul.f32 %v1733, %v1741
        %v1802 = vmul.f32 %v1734, %v1741
        %v1803 = vmul.f32 %v1735, %v1741
        %v1804 = vmul.f32 %v1736, %v1741
        %v1805 = vmul.f32 %v1737, %v1741
        %v1806 = vmul.f32 %v1738, %v1741
        %v1807 = vld [vmem:[%s2] sm:$0x1]
        %v1809 = vperm.slane %v1807, 0
        %v1811 = vadd.f32 %v1743, %v1809
        %v1812 = vadd.f32 %v1744, %v1809
        %v1813 = vadd.f32 %v1745, %v1809
        %v1814 = vadd.f32 %v1746, %v1809
        %v1815 = vadd.f32 %v1747, %v1809
        %v1816 = vadd.f32 %v1748, %v1809
        %v1817 = vadd.f32 %v1749, %v1809
        %v1818 = vadd.f32 %v1750, %v1809
        %v1819 = vadd.f32 %v1751, %v1809
        %v1820 = vadd.f32 %v1752, %v1809
        %v1821 = vadd.f32 %v1753, %v1809
        %v1822 = vadd.f32 %v1754, %v1809
        %v1823 = vadd.f32 %v1755, %v1809
        %v1824 = vadd.f32 %v1756, %v1809
        %v1825 = vadd.f32 %v1757, %v1809
        %v1826 = vadd.f32 %v1758, %v1809
        %v1827 = vadd.f32 %v1759, %v1809
        %v1828 = vadd.f32 %v1760, %v1809
        %v1829 = vadd.f32 %v1761, %v1809
        %v1830 = vadd.f32 %v1762, %v1809
        %v1831 = vadd.f32 %v1763, %v1809
        %v1832 = vadd.f32 %v1764, %v1809
        %v1833 = vadd.f32 %v1765, %v1809
        %v1834 = vadd.f32 %v1766, %v1809
        %v1835 = vadd.f32 %v1767, %v1809
        %v1836 = vadd.f32 %v1768, %v1809
        %v1837 = vadd.f32 %v1769, %v1809
        %v1838 = vadd.f32 %v1770, %v1809
        %v1839 = vadd.f32 %v1771, %v1809
        %v1840 = vadd.f32 %v1772, %v1809
        %v1841 = vadd.f32 %v1773, %v1809
        %v1842 = vadd.f32 %v1774, %v1809
        %v1843 = vadd.f32 %v1775, %v1809
        %v1844 = vadd.f32 %v1776, %v1809
        %v1845 = vadd.f32 %v1777, %v1809
        %v1846 = vadd.f32 %v1778, %v1809
        %v1847 = vadd.f32 %v1779, %v1809
        %v1848 = vadd.f32 %v1780, %v1809
        %v1849 = vadd.f32 %v1781, %v1809
        %v1850 = vadd.f32 %v1782, %v1809
        %v1851 = vadd.f32 %v1783, %v1809
        %v1852 = vadd.f32 %v1784, %v1809
        %v1853 = vadd.f32 %v1785, %v1809
        %v1854 = vadd.f32 %v1786, %v1809
        %v1855 = vadd.f32 %v1787, %v1809
        %v1856 = vadd.f32 %v1788, %v1809
        %v1857 = vadd.f32 %v1789, %v1809
        %v1858 = vadd.f32 %v1790, %v1809
        %v1859 = vadd.f32 %v1791, %v1809
        %v1860 = vadd.f32 %v1792, %v1809
        %v1861 = vadd.f32 %v1793, %v1809
        %v1862 = vadd.f32 %v1794, %v1809
        %v1863 = vadd.f32 %v1795, %v1809
        %v1864 = vadd.f32 %v1796, %v1809
        %v1865 = vadd.f32 %v1797, %v1809
        %v1866 = vadd.f32 %v1798, %v1809
        %v1867 = vadd.f32 %v1799, %v1809
        %v1868 = vadd.f32 %v1800, %v1809
        %v1869 = vadd.f32 %v1801, %v1809
        %v1870 = vadd.f32 %v1802, %v1809
        %v1871 = vadd.f32 %v1803, %v1809
        %v1872 = vadd.f32 %v1804, %v1809
        %v1873 = vadd.f32 %v1805, %v1809
        %v1874 = vadd.f32 %v1806, %v1809
        %v1875 = vld [vmem:[%s3] sm:$0xff]
        %v1876 = vld [vmem:[%s3 + $0x8] sm:$0xff]
        %v1877 = vld [vmem:[%s3 + $0x10] sm:$0xff]
        %v1878 = vld [vmem:[%s3 + $0x18] sm:$0xff]
        %v1880 = vsel %vm323, %v1811, 0
        %v1883 = vsel %vm323, %v1812, 0
        %v1886 = vsel %vm323, %v1813, 0
        %v1889 = vsel %vm323, %v1814, 0
        %v1892 = vsel %vm323, %v1815, 0
        %v1895 = vsel %vm323, %v1816, 0
        %v1898 = vsel %vm323, %v1817, 0
        %v1901 = vsel %vm323, %v1818, 0
        %v1904 = vsel %vm323, %v1819, 0
        %v1907 = vsel %vm323, %v1820, 0
        %v1910 = vsel %vm323, %v1821, 0
        %v1913 = vsel %vm323, %v1822, 0
        %v1916 = vsel %vm323, %v1823, 0
        %v1919 = vsel %vm323, %v1824, 0
        %v1922 = vsel %vm323, %v1825, 0
        %v1925 = vsel %vm323, %v1826, 0
        %v1928 = vsel %vm323, %v1827, 0
        %v1931 = vsel %vm323, %v1828, 0
        %v1934 = vsel %vm323, %v1829, 0
        %v1937 = vsel %vm323, %v1830, 0
        %v1940 = vsel %vm323, %v1831, 0
        %v1943 = vsel %vm323, %v1832, 0
        %v1946 = vsel %vm323, %v1833, 0
        %v1949 = vsel %vm323, %v1834, 0
        %v1952 = vsel %vm323, %v1835, 0
        %v1955 = vsel %vm323, %v1836, 0
        %v1958 = vsel %vm323, %v1837, 0
        %v1961 = vsel %vm323, %v1838, 0
        %v1964 = vsel %vm323, %v1839, 0
        %v1967 = vsel %vm323, %v1840, 0
        %v1970 = vsel %vm323, %v1841, 0
        %v1973 = vsel %vm323, %v1842, 0
        %v1976 = vsel %vm323, %v1843, 0
        %v1979 = vsel %vm323, %v1844, 0
        %v1982 = vsel %vm323, %v1845, 0
        %v1985 = vsel %vm323, %v1846, 0
        %v1988 = vsel %vm323, %v1847, 0
        %v1991 = vsel %vm323, %v1848, 0
        %v1994 = vsel %vm323, %v1849, 0
        %v1997 = vsel %vm323, %v1850, 0
        %v2000 = vsel %vm323, %v1851, 0
        %v2003 = vsel %vm323, %v1852, 0
        %v2006 = vsel %vm323, %v1853, 0
        %v2009 = vsel %vm323, %v1854, 0
        %v2012 = vsel %vm323, %v1855, 0
        %v2015 = vsel %vm323, %v1856, 0
        %v2018 = vsel %vm323, %v1857, 0
        %v2021 = vsel %vm323, %v1858, 0
        %v2024 = vsel %vm323, %v1859, 0
        %v2027 = vsel %vm323, %v1860, 0
        %v2030 = vsel %vm323, %v1861, 0
        %v2033 = vsel %vm323, %v1862, 0
        %v2036 = vsel %vm323, %v1863, 0
        %v2039 = vsel %vm323, %v1864, 0
        %v2042 = vsel %vm323, %v1865, 0
        %v2045 = vsel %vm323, %v1866, 0
        %v2048 = vsel %vm323, %v1867, 0
        %v2051 = vsel %vm323, %v1868, 0
        %v2054 = vsel %vm323, %v1869, 0
        %v2057 = vsel %vm323, %v1870, 0
        %v2060 = vsel %vm323, %v1871, 0
        %v2063 = vsel %vm323, %v1872, 0
        %v2066 = vsel %vm323, %v1873, 0
        %v2069 = vsel %vm323, %v1874, 0
        %2071 = vmatpush.msra.mxu0 0.0
        %2072 = vmatpush.msra.mxu0 0.0
        %2073 = vmatpush.msra.mxu0 0.0
        %2074 = vmatpush.msra.mxu0 0.0
        %2075 = vmatpush.msra.mxu0 0.0
        %2076 = vmatpush.msra.mxu0 0.0
        %2077 = vmatpush.msra.mxu0 0.0
        %2078 = vmatpush.msra.mxu0 0.0
        %2079 = vmatpush.msra.mxu0 0.0
        %2080 = vmatpush.msra.mxu0 0.0
        %2081 = vmatpush.msra.mxu0 0.0
        %2082 = vmatpush.msra.mxu0 0.0
        %2083 = vmatpush.msra.mxu0 %v1878
        %2084 = vmatpush.msra.mxu0 %v1877
        %2085 = vmatpush.msra.mxu0 %v1876
        %2086 = vmatpush.msra.mxu0 %v1875
        %2087 = vmatmul.f32.gmra.mxu0 %v1880
        %v2088 = vpop.f32.mrf.mxu0
        %v2089 = vadd.f32 0.0, %v2088
        %2090 = vmatmul.f32.gmra.mxu0 %v1883
        %v2091 = vpop.f32.mrf.mxu0
        %v2092 = vadd.f32 0.0, %v2091
        %2093 = vmatmul.f32.gmra.mxu0 %v1886
        %v2094 = vpop.f32.mrf.mxu0
        %v2095 = vadd.f32 0.0, %v2094
        %2096 = vmatmul.f32.gmra.mxu0 %v1889
        %v2097 = vpop.f32.mrf.mxu0
        %v2098 = vadd.f32 0.0, %v2097
        %2099 = vmatmul.f32.gmra.mxu0 %v1892
        %v2100 = vpop.f32.mrf.mxu0
        %v2101 = vadd.f32 0.0, %v2100
        %2102 = vmatmul.f32.gmra.mxu0 %v1895
        %v2103 = vpop.f32.mrf.mxu0
        %v2104 = vadd.f32 0.0, %v2103
        %2105 = vmatmul.f32.gmra.mxu0 %v1898
        %v2106 = vpop.f32.mrf.mxu0
        %v2107 = vadd.f32 0.0, %v2106
        %2108 = vmatmul.f32.gmra.mxu0 %v1901
        %v2109 = vpop.f32.mrf.mxu0
        %v2110 = vadd.f32 0.0, %v2109
        %2111 = vmatmul.f32.gmra.mxu0 %v1904
        %v2112 = vpop.f32.mrf.mxu0
        %v2113 = vadd.f32 0.0, %v2112
        %2114 = vmatmul.f32.gmra.mxu0 %v1907
        %v2115 = vpop.f32.mrf.mxu0
        %v2116 = vadd.f32 0.0, %v2115
        %2117 = vmatmul.f32.gmra.mxu0 %v1910
        %v2118 = vpop.f32.mrf.mxu0
        %v2119 = vadd.f32 0.0, %v2118
        %2120 = vmatmul.f32.gmra.mxu0 %v1913
        %v2121 = vpop.f32.mrf.mxu0
        %v2122 = vadd.f32 0.0, %v2121
        %2123 = vmatmul.f32.gmra.mxu0 %v1916
        %v2124 = vpop.f32.mrf.mxu0
        %v2125 = vadd.f32 0.0, %v2124
        %2126 = vmatmul.f32.gmra.mxu0 %v1919
        %v2127 = vpop.f32.mrf.mxu0
        %v2128 = vadd.f32 0.0, %v2127
        %2129 = vmatmul.f32.gmra.mxu0 %v1922
        %v2130 = vpop.f32.mrf.mxu0
        %v2131 = vadd.f32 0.0, %v2130
        %2132 = vmatmul.f32.gmra.mxu0 %v1925
        %v2133 = vpop.f32.mrf.mxu0
        %v2134 = vadd.f32 0.0, %v2133
        %2135 = vmatmul.f32.gmra.mxu0 %v1928
        %v2136 = vpop.f32.mrf.mxu0
        %v2137 = vadd.f32 0.0, %v2136
        %2138 = vmatmul.f32.gmra.mxu0 %v1931
        %v2139 = vpop.f32.mrf.mxu0
        %v2140 = vadd.f32 0.0, %v2139
        %2141 = vmatmul.f32.gmra.mxu0 %v1934
        %v2142 = vpop.f32.mrf.mxu0
        %v2143 = vadd.f32 0.0, %v2142
        %2144 = vmatmul.f32.gmra.mxu0 %v1937
        %v2145 = vpop.f32.mrf.mxu0
        %v2146 = vadd.f32 0.0, %v2145
        %2147 = vmatmul.f32.gmra.mxu0 %v1940
        %v2148 = vpop.f32.mrf.mxu0
        %v2149 = vadd.f32 0.0, %v2148
        %2150 = vmatmul.f32.gmra.mxu0 %v1943
        %v2151 = vpop.f32.mrf.mxu0
        %v2152 = vadd.f32 0.0, %v2151
        %2153 = vmatmul.f32.gmra.mxu0 %v1946
        %v2154 = vpop.f32.mrf.mxu0
        %v2155 = vadd.f32 0.0, %v2154
        %2156 = vmatmul.f32.gmra.mxu0 %v1949
        %v2157 = vpop.f32.mrf.mxu0
        %v2158 = vadd.f32 0.0, %v2157
        %2159 = vmatmul.f32.gmra.mxu0 %v1952
        %v2160 = vpop.f32.mrf.mxu0
        %v2161 = vadd.f32 0.0, %v2160
        %2162 = vmatmul.f32.gmra.mxu0 %v1955
        %v2163 = vpop.f32.mrf.mxu0
        %v2164 = vadd.f32 0.0, %v2163
        %2165 = vmatmul.f32.gmra.mxu0 %v1958
        %v2166 = vpop.f32.mrf.mxu0
        %v2167 = vadd.f32 0.0, %v2166
        %2168 = vmatmul.f32.gmra.mxu0 %v1961
        %v2169 = vpop.f32.mrf.mxu0
        %v2170 = vadd.f32 0.0, %v2169
        %2171 = vmatmul.f32.gmra.mxu0 %v1964
        %v2172 = vpop.f32.mrf.mxu0
        %v2173 = vadd.f32 0.0, %v2172
        %2174 = vmatmul.f32.gmra.mxu0 %v1967
        %v2175 = vpop.f32.mrf.mxu0
        %v2176 = vadd.f32 0.0, %v2175
        %2177 = vmatmul.f32.gmra.mxu0 %v1970
        %v2178 = vpop.f32.mrf.mxu0
        %v2179 = vadd.f32 0.0, %v2178
        %2180 = vmatmul.f32.gmra.mxu0 %v1973
        %v2181 = vpop.f32.mrf.mxu0
        %v2182 = vadd.f32 0.0, %v2181
        %2183 = vmatmul.f32.gmra.mxu0 %v1976
        %v2184 = vpop.f32.mrf.mxu0
        %v2185 = vadd.f32 0.0, %v2184
        %2186 = vmatmul.f32.gmra.mxu0 %v1979
        %v2187 = vpop.f32.mrf.mxu0
        %v2188 = vadd.f32 0.0, %v2187
        %2189 = vmatmul.f32.gmra.mxu0 %v1982
        %v2190 = vpop.f32.mrf.mxu0
        %v2191 = vadd.f32 0.0, %v2190
        %2192 = vmatmul.f32.gmra.mxu0 %v1985
        %v2193 = vpop.f32.mrf.mxu0
        %v2194 = vadd.f32 0.0, %v2193
        %2195 = vmatmul.f32.gmra.mxu0 %v1988
        %v2196 = vpop.f32.mrf.mxu0
        %v2197 = vadd.f32 0.0, %v2196
        %2198 = vmatmul.f32.gmra.mxu0 %v1991
        %v2199 = vpop.f32.mrf.mxu0
        %v2200 = vadd.f32 0.0, %v2199
        %2201 = vmatmul.f32.gmra.mxu0 %v1994
        %v2202 = vpop.f32.mrf.mxu0
        %v2203 = vadd.f32 0.0, %v2202
        %2204 = vmatmul.f32.gmra.mxu0 %v1997
        %v2205 = vpop.f32.mrf.mxu0
        %v2206 = vadd.f32 0.0, %v2205
        %2207 = vmatmul.f32.gmra.mxu0 %v2000
        %v2208 = vpop.f32.mrf.mxu0
        %v2209 = vadd.f32 0.0, %v2208
        %2210 = vmatmul.f32.gmra.mxu0 %v2003
        %v2211 = vpop.f32.mrf.mxu0
        %v2212 = vadd.f32 0.0, %v2211
        %2213 = vmatmul.f32.gmra.mxu0 %v2006
        %v2214 = vpop.f32.mrf.mxu0
        %v2215 = vadd.f32 0.0, %v2214
        %2216 = vmatmul.f32.gmra.mxu0 %v2009
        %v2217 = vpop.f32.mrf.mxu0
        %v2218 = vadd.f32 0.0, %v2217
        %2219 = vmatmul.f32.gmra.mxu0 %v2012
        %v2220 = vpop.f32.mrf.mxu0
        %v2221 = vadd.f32 0.0, %v2220
        %2222 = vmatmul.f32.gmra.mxu0 %v2015
        %v2223 = vpop.f32.mrf.mxu0
        %v2224 = vadd.f32 0.0, %v2223
        %2225 = vmatmul.f32.gmra.mxu0 %v2018
        %v2226 = vpop.f32.mrf.mxu0
        %v2227 = vadd.f32 0.0, %v2226
        %2228 = vmatmul.f32.gmra.mxu0 %v2021
        %v2229 = vpop.f32.mrf.mxu0
        %v2230 = vadd.f32 0.0, %v2229
        %2231 = vmatmul.f32.gmra.mxu0 %v2024
        %v2232 = vpop.f32.mrf.mxu0
        %v2233 = vadd.f32 0.0, %v2232
        %2234 = vmatmul.f32.gmra.mxu0 %v2027
        %v2235 = vpop.f32.mrf.mxu0
        %v2236 = vadd.f32 0.0, %v2235
        %2237 = vmatmul.f32.gmra.mxu0 %v2030
        %v2238 = vpop.f32.mrf.mxu0
        %v2239 = vadd.f32 0.0, %v2238
        %2240 = vmatmul.f32.gmra.mxu0 %v2033
        %v2241 = vpop.f32.mrf.mxu0
        %v2242 = vadd.f32 0.0, %v2241
        %2243 = vmatmul.f32.gmra.mxu0 %v2036
        %v2244 = vpop.f32.mrf.mxu0
        %v2245 = vadd.f32 0.0, %v2244
        %2246 = vmatmul.f32.gmra.mxu0 %v2039
        %v2247 = vpop.f32.mrf.mxu0
        %v2248 = vadd.f32 0.0, %v2247
        %2249 = vmatmul.f32.gmra.mxu0 %v2042
        %v2250 = vpop.f32.mrf.mxu0
        %v2251 = vadd.f32 0.0, %v2250
        %2252 = vmatmul.f32.gmra.mxu0 %v2045
        %v2253 = vpop.f32.mrf.mxu0
        %v2254 = vadd.f32 0.0, %v2253
        %2255 = vmatmul.f32.gmra.mxu0 %v2048
        %v2256 = vpop.f32.mrf.mxu0
        %v2257 = vadd.f32 0.0, %v2256
        %2258 = vmatmul.f32.gmra.mxu0 %v2051
        %v2259 = vpop.f32.mrf.mxu0
        %v2260 = vadd.f32 0.0, %v2259
        %2261 = vmatmul.f32.gmra.mxu0 %v2054
        %v2262 = vpop.f32.mrf.mxu0
        %v2263 = vadd.f32 0.0, %v2262
        %2264 = vmatmul.f32.gmra.mxu0 %v2057
        %v2265 = vpop.f32.mrf.mxu0
        %v2266 = vadd.f32 0.0, %v2265
        %2267 = vmatmul.f32.gmra.mxu0 %v2060
        %v2268 = vpop.f32.mrf.mxu0
        %v2269 = vadd.f32 0.0, %v2268
        %2270 = vmatmul.f32.gmra.mxu0 %v2063
        %v2271 = vpop.f32.mrf.mxu0
        %v2272 = vadd.f32 0.0, %v2271
        %2273 = vmatmul.f32.gmra.mxu0 %v2066
        %v2274 = vpop.f32.mrf.mxu0
        %v2275 = vadd.f32 0.0, %v2274
        %2276 = vmatmul.f32.gmra.mxu0 %v2069
        %v2277 = vpop.f32.mrf.mxu0
        %v2278 = vadd.f32 0.0, %v2277
        %2279 = vdwg.mxu0
        %vm2280 = vcmask 64512
        %v2281 = vsel %vm2280, %v2089, -inf
        %v2282 = vsel %vm2280, %v2095, -inf
        %v2283 = vsel %vm2280, %v2101, -inf
        %v2284 = vmax.f32 %v2281, %v2283
        %v2285 = vsel %vm2280, %v2107, -inf
        %v2286 = vmax.f32 %v2282, %v2285
        %v2287 = vsel %vm2280, %v2113, -inf
        %v2288 = vmax.f32 %v2284, %v2287
        %v2289 = vsel %vm2280, %v2119, -inf
        %v2290 = vmax.f32 %v2286, %v2289
        %v2291 = vsel %vm2280, %v2125, -inf
        %v2292 = vmax.f32 %v2288, %v2291
        %v2293 = vsel %vm2280, %v2131, -inf
        %v2294 = vmax.f32 %v2290, %v2293
        %v2295 = vsel %vm2280, %v2137, -inf
        %v2296 = vmax.f32 %v2292, %v2295
        %v2297 = vsel %vm2280, %v2143, -inf
        %v2298 = vmax.f32 %v2294, %v2297
        %v2299 = vsel %vm2280, %v2149, -inf
        %v2300 = vmax.f32 %v2296, %v2299
        %v2301 = vsel %vm2280, %v2155, -inf
        %v2302 = vmax.f32 %v2298, %v2301
        %v2303 = vsel %vm2280, %v2161, -inf
        %v2304 = vmax.f32 %v2300, %v2303
        %v2305 = vsel %vm2280, %v2167, -inf
        %v2306 = vmax.f32 %v2302, %v2305
        %v2307 = vsel %vm2280, %v2173, -inf
        %v2308 = vmax.f32 %v2304, %v2307
        %v2309 = vsel %vm2280, %v2179, -inf
        %v2310 = vmax.f32 %v2306, %v2309
        %v2311 = vsel %vm2280, %v2185, -inf
        %v2312 = vmax.f32 %v2308, %v2311
        %v2313 = vsel %vm2280, %v2191, -inf
        %v2314 = vmax.f32 %v2310, %v2313
        %v2315 = vsel %vm2280, %v2197, -inf
        %v2316 = vmax.f32 %v2312, %v2315
        %v2317 = vsel %vm2280, %v2203, -inf
        %v2318 = vmax.f32 %v2314, %v2317
        %v2319 = vsel %vm2280, %v2209, -inf
        %v2320 = vmax.f32 %v2316, %v2319
        %v2321 = vsel %vm2280, %v2215, -inf
        %v2322 = vmax.f32 %v2318, %v2321
        %v2323 = vsel %vm2280, %v2221, -inf
        %v2324 = vmax.f32 %v2320, %v2323
        %v2325 = vsel %vm2280, %v2227, -inf
        %v2326 = vmax.f32 %v2322, %v2325
        %v2327 = vsel %vm2280, %v2233, -inf
        %v2328 = vmax.f32 %v2324, %v2327
        %v2329 = vsel %vm2280, %v2239, -inf
        %v2330 = vmax.f32 %v2326, %v2329
        %v2331 = vsel %vm2280, %v2245, -inf
        %v2332 = vmax.f32 %v2328, %v2331
        %v2333 = vsel %vm2280, %v2251, -inf
        %v2334 = vmax.f32 %v2330, %v2333
        %v2335 = vsel %vm2280, %v2257, -inf
        %v2336 = vmax.f32 %v2332, %v2335
        %v2337 = vsel %vm2280, %v2263, -inf
        %v2338 = vmax.f32 %v2334, %v2337
        %v2339 = vsel %vm2280, %v2269, -inf
        %v2340 = vmax.f32 %v2336, %v2339
        %v2341 = vsel %vm2280, %v2275, -inf
        %v2342 = vmax.f32 %v2338, %v2341
        %v2343 = vmax.f32 %v2340, %v2342
        %v2344 = vsel %vm2280, %v2092, -inf
        %v2345 = vsel %vm2280, %v2098, -inf
        %v2346 = vsel %vm2280, %v2104, -inf
        %v2347 = vmax.f32 %v2344, %v2346
        %v2348 = vsel %vm2280, %v2110, -inf
        %v2349 = vmax.f32 %v2345, %v2348
        %v2350 = vsel %vm2280, %v2116, -inf
        %v2351 = vmax.f32 %v2347, %v2350
        %v2352 = vsel %vm2280, %v2122, -inf
        %v2353 = vmax.f32 %v2349, %v2352
        %v2354 = vsel %vm2280, %v2128, -inf
        %v2355 = vmax.f32 %v2351, %v2354
        %v2356 = vsel %vm2280, %v2134, -inf
        %v2357 = vmax.f32 %v2353, %v2356
        %v2358 = vsel %vm2280, %v2140, -inf
        %v2359 = vmax.f32 %v2355, %v2358
        %v2360 = vsel %vm2280, %v2146, -inf
        %v2361 = vmax.f32 %v2357, %v2360
        %v2362 = vsel %vm2280, %v2152, -inf
        %v2363 = vmax.f32 %v2359, %v2362
        %v2364 = vsel %vm2280, %v2158, -inf
        %v2365 = vmax.f32 %v2361, %v2364
        %v2366 = vsel %vm2280, %v2164, -inf
        %v2367 = vmax.f32 %v2363, %v2366
        %v2368 = vsel %vm2280, %v2170, -inf
        %v2369 = vmax.f32 %v2365, %v2368
        %v2370 = vsel %vm2280, %v2176, -inf
        %v2371 = vmax.f32 %v2367, %v2370
        %v2372 = vsel %vm2280, %v2182, -inf
        %v2373 = vmax.f32 %v2369, %v2372
        %v2374 = vsel %vm2280, %v2188, -inf
        %v2375 = vmax.f32 %v2371, %v2374
        %v2376 = vsel %vm2280, %v2194, -inf
        %v2377 = vmax.f32 %v2373, %v2376
        %v2378 = vsel %vm2280, %v2200, -inf
        %v2379 = vmax.f32 %v2375, %v2378
        %v2380 = vsel %vm2280, %v2206, -inf
        %v2381 = vmax.f32 %v2377, %v2380
        %v2382 = vsel %vm2280, %v2212, -inf
        %v2383 = vmax.f32 %v2379, %v2382
        %v2384 = vsel %vm2280, %v2218, -inf
        %v2385 = vmax.f32 %v2381, %v2384
        %v2386 = vsel %vm2280, %v2224, -inf
        %v2387 = vmax.f32 %v2383, %v2386
        %v2388 = vsel %vm2280, %v2230, -inf
        %v2389 = vmax.f32 %v2385, %v2388
        %v2390 = vsel %vm2280, %v2236, -inf
        %v2391 = vmax.f32 %v2387, %v2390
        %v2392 = vsel %vm2280, %v2242, -inf
        %v2393 = vmax.f32 %v2389, %v2392
        %v2394 = vsel %vm2280, %v2248, -inf
        %v2395 = vmax.f32 %v2391, %v2394
        %v2396 = vsel %vm2280, %v2254, -inf
        %v2397 = vmax.f32 %v2393, %v2396
        %v2398 = vsel %vm2280, %v2260, -inf
        %v2399 = vmax.f32 %v2395, %v2398
        %v2400 = vsel %vm2280, %v2266, -inf
        %v2401 = vmax.f32 %v2397, %v2400
        %v2402 = vsel %vm2280, %v2272, -inf
        %v2403 = vmax.f32 %v2399, %v2402
        %v2404 = vsel %vm2280, %v2278, -inf
        %v2405 = vmax.f32 %v2401, %v2404
        %v2406 = vmax.f32 %v2403, %v2405
        %v2407 = vsub.f32 %v2089, %v2343
        %v2408 = vsub.f32 %v2092, %v2406
        %v2409 = vsub.f32 %v2095, %v2343
        %v2410 = vsub.f32 %v2098, %v2406
        %v2411 = vsub.f32 %v2101, %v2343
        %v2412 = vsub.f32 %v2104, %v2406
        %v2413 = vsub.f32 %v2107, %v2343
        %v2414 = vsub.f32 %v2110, %v2406
        %v2415 = vsub.f32 %v2113, %v2343
        %v2416 = vsub.f32 %v2116, %v2406
        %v2417 = vsub.f32 %v2119, %v2343
        %v2418 = vsub.f32 %v2122, %v2406
        %v2419 = vsub.f32 %v2125, %v2343
        %v2420 = vsub.f32 %v2128, %v2406
        %v2421 = vsub.f32 %v2131, %v2343
        %v2422 = vsub.f32 %v2134, %v2406
        %v2423 = vsub.f32 %v2137, %v2343
        %v2424 = vsub.f32 %v2140, %v2406
        %v2425 = vsub.f32 %v2143, %v2343
        %v2426 = vsub.f32 %v2146, %v2406
        %v2427 = vsub.f32 %v2149, %v2343
        %v2428 = vsub.f32 %v2152, %v2406
        %v2429 = vsub.f32 %v2155, %v2343
        %v2430 = vsub.f32 %v2158, %v2406
        %v2431 = vsub.f32 %v2161, %v2343
        %v2432 = vsub.f32 %v2164, %v2406
        %v2433 = vsub.f32 %v2167, %v2343
        %v2434 = vsub.f32 %v2170, %v2406
        %v2435 = vsub.f32 %v2173, %v2343
        %v2436 = vsub.f32 %v2176, %v2406
        %v2437 = vsub.f32 %v2179, %v2343
        %v2438 = vsub.f32 %v2182, %v2406
        %v2439 = vsub.f32 %v2185, %v2343
        %v2440 = vsub.f32 %v2188, %v2406
        %v2441 = vsub.f32 %v2191, %v2343
        %v2442 = vsub.f32 %v2194, %v2406
        %v2443 = vsub.f32 %v2197, %v2343
        %v2444 = vsub.f32 %v2200, %v2406
        %v2445 = vsub.f32 %v2203, %v2343
        %v2446 = vsub.f32 %v2206, %v2406
        %v2447 = vsub.f32 %v2209, %v2343
        %v2448 = vsub.f32 %v2212, %v2406
        %v2449 = vsub.f32 %v2215, %v2343
        %v2450 = vsub.f32 %v2218, %v2406
        %v2451 = vsub.f32 %v2221, %v2343
        %v2452 = vsub.f32 %v2224, %v2406
        %v2453 = vsub.f32 %v2227, %v2343
        %v2454 = vsub.f32 %v2230, %v2406
        %v2455 = vsub.f32 %v2233, %v2343
        %v2456 = vsub.f32 %v2236, %v2406
        %v2457 = vsub.f32 %v2239, %v2343
        %v2458 = vsub.f32 %v2242, %v2406
        %v2459 = vsub.f32 %v2245, %v2343
        %v2460 = vsub.f32 %v2248, %v2406
        %v2461 = vsub.f32 %v2251, %v2343
        %v2462 = vsub.f32 %v2254, %v2406
        %v2463 = vsub.f32 %v2257, %v2343
        %v2464 = vsub.f32 %v2260, %v2406
        %v2465 = vsub.f32 %v2263, %v2343
        %v2466 = vsub.f32 %v2266, %v2406
        %v2467 = vsub.f32 %v2269, %v2343
        %v2468 = vsub.f32 %v2272, %v2406
        %v2469 = vsub.f32 %v2275, %v2343
        %v2470 = vsub.f32 %v2278, %v2406
        %v2471 = vmul.f32 %v2407, 1.442695
        %v2472 = vpow.pop %v2471
        %v2473 = vmul.f32 %v2408, 1.442695
        %v2474 = vpow.pop %v2473
        %v2475 = vmul.f32 %v2409, 1.442695
        %v2476 = vpow.pop %v2475
        %v2477 = vmul.f32 %v2410, 1.442695
        %v2478 = vpow.pop %v2477
        %v2479 = vmul.f32 %v2411, 1.442695
        %v2480 = vpow.pop %v2479
        %v2481 = vmul.f32 %v2412, 1.442695
        %v2482 = vpow.pop %v2481
        %v2483 = vmul.f32 %v2413, 1.442695
        %v2484 = vpow.pop %v2483
        %v2485 = vmul.f32 %v2414, 1.442695
        %v2486 = vpow.pop %v2485
        %v2487 = vmul.f32 %v2415, 1.442695
        %v2488 = vpow.pop %v2487
        %v2489 = vmul.f32 %v2416, 1.442695
        %v2490 = vpow.pop %v2489
        %v2491 = vmul.f32 %v2417, 1.442695
        %v2492 = vpow.pop %v2491
        %v2493 = vmul.f32 %v2418, 1.442695
        %v2494 = vpow.pop %v2493
        %v2495 = vmul.f32 %v2419, 1.442695
        %v2496 = vpow.pop %v2495
        %v2497 = vmul.f32 %v2420, 1.442695
        %v2498 = vpow.pop %v2497
        %v2499 = vmul.f32 %v2421, 1.442695
        %v2500 = vpow.pop %v2499
        %v2501 = vmul.f32 %v2422, 1.442695
        %v2502 = vpow.pop %v2501
        %v2503 = vmul.f32 %v2423, 1.442695
        %v2504 = vpow.pop %v2503
        %v2505 = vmul.f32 %v2424, 1.442695
        %v2506 = vpow.pop %v2505
        %v2507 = vmul.f32 %v2425, 1.442695
        %v2508 = vpow.pop %v2507
        %v2509 = vmul.f32 %v2426, 1.442695
        %v2510 = vpow.pop %v2509
        %v2511 = vmul.f32 %v2427, 1.442695
        %v2512 = vpow.pop %v2511
        %v2513 = vmul.f32 %v2428, 1.442695
        %v2514 = vpow.pop %v2513
        %v2515 = vmul.f32 %v2429, 1.442695
        %v2516 = vpow.pop %v2515
        %v2517 = vmul.f32 %v2430, 1.442695
        %v2518 = vpow.pop %v2517
        %v2519 = vmul.f32 %v2431, 1.442695
        %v2520 = vpow.pop %v2519
        %v2521 = vmul.f32 %v2432, 1.442695
        %v2522 = vpow.pop %v2521
        %v2523 = vmul.f32 %v2433, 1.442695
        %v2524 = vpow.pop %v2523
        %v2525 = vmul.f32 %v2434, 1.442695
        %v2526 = vpow.pop %v2525
        %v2527 = vmul.f32 %v2435, 1.442695
        %v2528 = vpow.pop %v2527
        %v2529 = vmul.f32 %v2436, 1.442695
        %v2530 = vpow.pop %v2529
        %v2531 = vmul.f32 %v2437, 1.442695
        %v2532 = vpow.pop %v2531
        %v2533 = vmul.f32 %v2438, 1.442695
        %v2534 = vpow.pop %v2533
        %v2535 = vmul.f32 %v2439, 1.442695
        %v2536 = vpow.pop %v2535
        %v2537 = vmul.f32 %v2440, 1.442695
        %v2538 = vpow.pop %v2537
        %v2539 = vmul.f32 %v2441, 1.442695
        %v2540 = vpow.pop %v2539
        %v2541 = vmul.f32 %v2442, 1.442695
        %v2542 = vpow.pop %v2541
        %v2543 = vmul.f32 %v2443, 1.442695
        %v2544 = vpow.pop %v2543
        %v2545 = vmul.f32 %v2444, 1.442695
        %v2546 = vpow.pop %v2545
        %v2547 = vmul.f32 %v2445, 1.442695
        %v2548 = vpow.pop %v2547
        %v2549 = vmul.f32 %v2446, 1.442695
        %v2550 = vpow.pop %v2549
        %v2551 = vmul.f32 %v2447, 1.442695
        %v2552 = vpow.pop %v2551
        %v2553 = vmul.f32 %v2448, 1.442695
        %v2554 = vpow.pop %v2553
        %v2555 = vmul.f32 %v2449, 1.442695
        %v2556 = vpow.pop %v2555
        %v2557 = vmul.f32 %v2450, 1.442695
        %v2558 = vpow.pop %v2557
        %v2559 = vmul.f32 %v2451, 1.442695
        %v2560 = vpow.pop %v2559
        %v2561 = vmul.f32 %v2452, 1.442695
        %v2562 = vpow.pop %v2561
        %v2563 = vmul.f32 %v2453, 1.442695
        %v2564 = vpow.pop %v2563
        %v2565 = vmul.f32 %v2454, 1.442695
        %v2566 = vpow.pop %v2565
        %v2567 = vmul.f32 %v2455, 1.442695
        %v2568 = vpow.pop %v2567
        %v2569 = vmul.f32 %v2456, 1.442695
        %v2570 = vpow.pop %v2569
        %v2571 = vmul.f32 %v2457, 1.442695
        %v2572 = vpow.pop %v2571
        %v2573 = vmul.f32 %v2458, 1.442695
        %v2574 = vpow.pop %v2573
        %v2575 = vmul.f32 %v2459, 1.442695
        %v2576 = vpow.pop %v2575
        %v2577 = vmul.f32 %v2460, 1.442695
        %v2578 = vpow.pop %v2577
        %v2579 = vmul.f32 %v2461, 1.442695
        %v2580 = vpow.pop %v2579
        %v2581 = vmul.f32 %v2462, 1.442695
        %v2582 = vpow.pop %v2581
        %v2583 = vmul.f32 %v2463, 1.442695
        %v2584 = vpow.pop %v2583
        %v2585 = vmul.f32 %v2464, 1.442695
        %v2586 = vpow.pop %v2585
        %v2587 = vmul.f32 %v2465, 1.442695
        %v2588 = vpow.pop %v2587
        %v2589 = vmul.f32 %v2466, 1.442695
        %v2590 = vpow.pop %v2589
        %v2591 = vmul.f32 %v2467, 1.442695
        %v2592 = vpow.pop %v2591
        %v2593 = vmul.f32 %v2468, 1.442695
        %v2594 = vpow.pop %v2593
        %v2595 = vmul.f32 %v2469, 1.442695
        %v2596 = vpow.pop %v2595
        %v2597 = vmul.f32 %v2470, 1.442695
        %v2598 = vpow.pop %v2597
        %v2599 = vsel %vm2280, %v2472, 0.0
        %v2600 = vsel %vm2280, %v2476, 0.0
        %v2601 = vadd.f32 %v2599, %v2600
        %v2602 = vsel %vm2280, %v2480, 0.0
        %v2603 = vadd.f32 %v2601, %v2602
        %v2604 = vsel %vm2280, %v2484, 0.0
        %v2605 = vadd.f32 %v2603, %v2604
        %v2606 = vsel %vm2280, %v2488, 0.0
        %v2607 = vadd.f32 %v2605, %v2606
        %v2608 = vsel %vm2280, %v2492, 0.0
        %v2609 = vadd.f32 %v2607, %v2608
        %v2610 = vsel %vm2280, %v2496, 0.0
        %v2611 = vadd.f32 %v2609, %v2610
        %v2612 = vsel %vm2280, %v2500, 0.0
        %v2613 = vadd.f32 %v2611, %v2612
        %v2614 = vsel %vm2280, %v2504, 0.0
        %v2615 = vadd.f32 %v2613, %v2614
        %v2616 = vsel %vm2280, %v2508, 0.0
        %v2617 = vadd.f32 %v2615, %v2616
        %v2618 = vsel %vm2280, %v2512, 0.0
        %v2619 = vadd.f32 %v2617, %v2618
        %v2620 = vsel %vm2280, %v2516, 0.0
        %v2621 = vadd.f32 %v2619, %v2620
        %v2622 = vsel %vm2280, %v2520, 0.0
        %v2623 = vadd.f32 %v2621, %v2622
        %v2624 = vsel %vm2280, %v2524, 0.0
        %v2625 = vadd.f32 %v2623, %v2624
        %v2626 = vsel %vm2280, %v2528, 0.0
        %v2627 = vadd.f32 %v2625, %v2626
        %v2628 = vsel %vm2280, %v2532, 0.0
        %v2629 = vadd.f32 %v2627, %v2628
        %v2630 = vsel %vm2280, %v2536, 0.0
        %v2631 = vadd.f32 %v2629, %v2630
        %v2632 = vsel %vm2280, %v2540, 0.0
        %v2633 = vadd.f32 %v2631, %v2632
        %v2634 = vsel %vm2280, %v2544, 0.0
        %v2635 = vadd.f32 %v2633, %v2634
        %v2636 = vsel %vm2280, %v2548, 0.0
        %v2637 = vadd.f32 %v2635, %v2636
        %v2638 = vsel %vm2280, %v2552, 0.0
        %v2639 = vadd.f32 %v2637, %v2638
        %v2640 = vsel %vm2280, %v2556, 0.0
        %v2641 = vadd.f32 %v2639, %v2640
        %v2642 = vsel %vm2280, %v2560, 0.0
        %v2643 = vadd.f32 %v2641, %v2642
        %v2644 = vsel %vm2280, %v2564, 0.0
        %v2645 = vadd.f32 %v2643, %v2644
        %v2646 = vsel %vm2280, %v2568, 0.0
        %v2647 = vadd.f32 %v2645, %v2646
        %v2648 = vsel %vm2280, %v2572, 0.0
        %v2649 = vadd.f32 %v2647, %v2648
        %v2650 = vsel %vm2280, %v2576, 0.0
        %v2651 = vadd.f32 %v2649, %v2650
        %v2652 = vsel %vm2280, %v2580, 0.0
        %v2653 = vadd.f32 %v2651, %v2652
        %v2654 = vsel %vm2280, %v2584, 0.0
        %v2655 = vadd.f32 %v2653, %v2654
        %v2656 = vsel %vm2280, %v2588, 0.0
        %v2657 = vadd.f32 %v2655, %v2656
        %v2658 = vsel %vm2280, %v2592, 0.0
        %v2659 = vadd.f32 %v2657, %v2658
        %v2660 = vsel %vm2280, %v2596, 0.0
        %v2661 = vadd.f32 %v2659, %v2660
        %v2662 = vsel %vm2280, %v2474, 0.0
        %v2663 = vsel %vm2280, %v2478, 0.0
        %v2664 = vadd.f32 %v2662, %v2663
        %v2665 = vsel %vm2280, %v2482, 0.0
        %v2666 = vadd.f32 %v2664, %v2665
        %v2667 = vsel %vm2280, %v2486, 0.0
        %v2668 = vadd.f32 %v2666, %v2667
        %v2669 = vsel %vm2280, %v2490, 0.0
        %v2670 = vadd.f32 %v2668, %v2669
        %v2671 = vsel %vm2280, %v2494, 0.0
        %v2672 = vadd.f32 %v2670, %v2671
        %v2673 = vsel %vm2280, %v2498, 0.0
        %v2674 = vadd.f32 %v2672, %v2673
        %v2675 = vsel %vm2280, %v2502, 0.0
        %v2676 = vadd.f32 %v2674, %v2675
        %v2677 = vsel %vm2280, %v2506, 0.0
        %v2678 = vadd.f32 %v2676, %v2677
        %v2679 = vsel %vm2280, %v2510, 0.0
        %v2680 = vadd.f32 %v2678, %v2679
        %v2681 = vsel %vm2280, %v2514, 0.0
        %v2682 = vadd.f32 %v2680, %v2681
        %v2683 = vsel %vm2280, %v2518, 0.0
        %v2684 = vadd.f32 %v2682, %v2683
        %v2685 = vsel %vm2280, %v2522, 0.0
        %v2686 = vadd.f32 %v2684, %v2685
        %v2687 = vsel %vm2280, %v2526, 0.0
        %v2688 = vadd.f32 %v2686, %v2687
        %v2689 = vsel %vm2280, %v2530, 0.0
        %v2690 = vadd.f32 %v2688, %v2689
        %v2691 = vsel %vm2280, %v2534, 0.0
        %v2692 = vadd.f32 %v2690, %v2691
        %v2693 = vsel %vm2280, %v2538, 0.0
        %v2694 = vadd.f32 %v2692, %v2693
        %v2695 = vsel %vm2280, %v2542, 0.0
        %v2696 = vadd.f32 %v2694, %v2695
        %v2697 = vsel %vm2280, %v2546, 0.0
        %v2698 = vadd.f32 %v2696, %v2697
        %v2699 = vsel %vm2280, %v2550, 0.0
        %v2700 = vadd.f32 %v2698, %v2699
        %v2701 = vsel %vm2280, %v2554, 0.0
        %v2702 = vadd.f32 %v2700, %v2701
        %v2703 = vsel %vm2280, %v2558, 0.0
        %v2704 = vadd.f32 %v2702, %v2703
        %v2705 = vsel %vm2280, %v2562, 0.0
        %v2706 = vadd.f32 %v2704, %v2705
        %v2707 = vsel %vm2280, %v2566, 0.0
        %v2708 = vadd.f32 %v2706, %v2707
        %v2709 = vsel %vm2280, %v2570, 0.0
        %v2710 = vadd.f32 %v2708, %v2709
        %v2711 = vsel %vm2280, %v2574, 0.0
        %v2712 = vadd.f32 %v2710, %v2711
        %v2713 = vsel %vm2280, %v2578, 0.0
        %v2714 = vadd.f32 %v2712, %v2713
        %v2715 = vsel %vm2280, %v2582, 0.0
        %v2716 = vadd.f32 %v2714, %v2715
        %v2717 = vsel %vm2280, %v2586, 0.0
        %v2718 = vadd.f32 %v2716, %v2717
        %v2719 = vsel %vm2280, %v2590, 0.0
        %v2720 = vadd.f32 %v2718, %v2719
        %v2721 = vsel %vm2280, %v2594, 0.0
        %v2722 = vadd.f32 %v2720, %v2721
        %v2723 = vsel %vm2280, %v2598, 0.0
        %v2724 = vadd.f32 %v2722, %v2723
        %v2725 = vrcp.pop %v2661
        %v2726 = vrcp.pop %v2724
        %v2727 = vmul.f32 %v2472, %v2725
        %v2728 = vmul.f32 %v2474, %v2726
        %v2729 = vmul.f32 %v2476, %v2725
        %v2730 = vmul.f32 %v2478, %v2726
        %v2731 = vmul.f32 %v2480, %v2725
        %v2732 = vmul.f32 %v2482, %v2726
        %v2733 = vmul.f32 %v2484, %v2725
        %v2734 = vmul.f32 %v2486, %v2726
        %v2735 = vmul.f32 %v2488, %v2725
        %v2736 = vmul.f32 %v2490, %v2726
        %v2737 = vmul.f32 %v2492, %v2725
        %v2738 = vmul.f32 %v2494, %v2726
        %v2739 = vmul.f32 %v2496, %v2725
        %v2740 = vmul.f32 %v2498, %v2726
        %v2741 = vmul.f32 %v2500, %v2725
        %v2742 = vmul.f32 %v2502, %v2726
        %v2743 = vmul.f32 %v2504, %v2725
        %v2744 = vmul.f32 %v2506, %v2726
        %v2745 = vmul.f32 %v2508, %v2725
        %v2746 = vmul.f32 %v2510, %v2726
        %v2747 = vmul.f32 %v2512, %v2725
        %v2748 = vmul.f32 %v2514, %v2726
        %v2749 = vmul.f32 %v2516, %v2725
        %v2750 = vmul.f32 %v2518, %v2726
        %v2751 = vmul.f32 %v2520, %v2725
        %v2752 = vmul.f32 %v2522, %v2726
        %v2753 = vmul.f32 %v2524, %v2725
        %v2754 = vmul.f32 %v2526, %v2726
        %v2755 = vmul.f32 %v2528, %v2725
        %v2756 = vmul.f32 %v2530, %v2726
        %v2757 = vmul.f32 %v2532, %v2725
        %v2758 = vmul.f32 %v2534, %v2726
        %v2759 = vmul.f32 %v2536, %v2725
        %v2760 = vmul.f32 %v2538, %v2726
        %v2761 = vmul.f32 %v2540, %v2725
        %v2762 = vmul.f32 %v2542, %v2726
        %v2763 = vmul.f32 %v2544, %v2725
        %v2764 = vmul.f32 %v2546, %v2726
        %v2765 = vmul.f32 %v2548, %v2725
        %v2766 = vmul.f32 %v2550, %v2726
        %v2767 = vmul.f32 %v2552, %v2725
        %v2768 = vmul.f32 %v2554, %v2726
        %v2769 = vmul.f32 %v2556, %v2725
        %v2770 = vmul.f32 %v2558, %v2726
        %v2771 = vmul.f32 %v2560, %v2725
        %v2772 = vmul.f32 %v2562, %v2726
        %v2773 = vmul.f32 %v2564, %v2725
        %v2774 = vmul.f32 %v2566, %v2726
        %v2775 = vmul.f32 %v2568, %v2725
        %v2776 = vmul.f32 %v2570, %v2726
        %v2777 = vmul.f32 %v2572, %v2725
        %v2778 = vmul.f32 %v2574, %v2726
        %v2779 = vmul.f32 %v2576, %v2725
        %v2780 = vmul.f32 %v2578, %v2726
        %v2781 = vmul.f32 %v2580, %v2725
        %v2782 = vmul.f32 %v2582, %v2726
        %v2783 = vmul.f32 %v2584, %v2725
        %v2784 = vmul.f32 %v2586, %v2726
        %v2785 = vmul.f32 %v2588, %v2725
        %v2786 = vmul.f32 %v2590, %v2726
        %v2787 = vmul.f32 %v2592, %v2725
        %v2788 = vmul.f32 %v2594, %v2726
        %v2789 = vmul.f32 %v2596, %v2725
        %v2790 = vmul.f32 %v2598, %v2726
        %2791 = vst.msk [vmem:[%s256] sm:$0xff] %vm2280, %v2727
        %2792 = vst.msk [vmem:[%s256 + $0x8] sm:$0xff] %vm2280, %v2728
        %2793 = vst.msk [vmem:[%s256 + $0x10] sm:$0xff] %vm2280, %v2729
        %2794 = vst.msk [vmem:[%s256 + $0x18] sm:$0xff] %vm2280, %v2730
        %2795 = vst.msk [vmem:[%s256 + $0x20] sm:$0xff] %vm2280, %v2731
        %2796 = vst.msk [vmem:[%s256 + $0x28] sm:$0xff] %vm2280, %v2732
        %2797 = vst.msk [vmem:[%s256 + $0x30] sm:$0xff] %vm2280, %v2733
        %2798 = vst.msk [vmem:[%s256 + $0x38] sm:$0xff] %vm2280, %v2734
        %2799 = vst.msk [vmem:[%s256 + $0x40] sm:$0xff] %vm2280, %v2735
        %2800 = vst.msk [vmem:[%s256 + $0x48] sm:$0xff] %vm2280, %v2736
        %2801 = vst.msk [vmem:[%s256 + $0x50] sm:$0xff] %vm2280, %v2737
        %2802 = vst.msk [vmem:[%s256 + $0x58] sm:$0xff] %vm2280, %v2738
        %2803 = vst.msk [vmem:[%s256 + $0x60] sm:$0xff] %vm2280, %v2739
        %2804 = vst.msk [vmem:[%s256 + $0x68] sm:$0xff] %vm2280, %v2740
        %2805 = vst.msk [vmem:[%s256 + $0x70] sm:$0xff] %vm2280, %v2741
        %2806 = vst.msk [vmem:[%s256 + $0x78] sm:$0xff] %vm2280, %v2742
        %2807 = vst.msk [vmem:[%s256 + $0x80] sm:$0xff] %vm2280, %v2743
        %2808 = vst.msk [vmem:[%s256 + $0x88] sm:$0xff] %vm2280, %v2744
        %2809 = vst.msk [vmem:[%s256 + $0x90] sm:$0xff] %vm2280, %v2745
        %2810 = vst.msk [vmem:[%s256 + $0x98] sm:$0xff] %vm2280, %v2746
        %2811 = vst.msk [vmem:[%s256 + $0xa0] sm:$0xff] %vm2280, %v2747
        %2812 = vst.msk [vmem:[%s256 + $0xa8] sm:$0xff] %vm2280, %v2748
        %2813 = vst.msk [vmem:[%s256 + $0xb0] sm:$0xff] %vm2280, %v2749
        %2814 = vst.msk [vmem:[%s256 + $0xb8] sm:$0xff] %vm2280, %v2750
        %2815 = vst.msk [vmem:[%s256 + $0xc0] sm:$0xff] %vm2280, %v2751
        %2816 = vst.msk [vmem:[%s256 + $0xc8] sm:$0xff] %vm2280, %v2752
        %2817 = vst.msk [vmem:[%s256 + $0xd0] sm:$0xff] %vm2280, %v2753
        %2818 = vst.msk [vmem:[%s256 + $0xd8] sm:$0xff] %vm2280, %v2754
        %2819 = vst.msk [vmem:[%s256 + $0xe0] sm:$0xff] %vm2280, %v2755
        %2820 = vst.msk [vmem:[%s256 + $0xe8] sm:$0xff] %vm2280, %v2756
        %2821 = vst.msk [vmem:[%s256 + $0xf0] sm:$0xff] %vm2280, %v2757
        %2822 = vst.msk [vmem:[%s256 + $0xf8] sm:$0xff] %vm2280, %v2758
        %2823 = vst.msk [vmem:[%s256 + $0x100] sm:$0xff] %vm2280, %v2759
        %2824 = vst.msk [vmem:[%s256 + $0x108] sm:$0xff] %vm2280, %v2760
        %2825 = vst.msk [vmem:[%s256 + $0x110] sm:$0xff] %vm2280, %v2761
        %2826 = vst.msk [vmem:[%s256 + $0x118] sm:$0xff] %vm2280, %v2762
        %2827 = vst.msk [vmem:[%s256 + $0x120] sm:$0xff] %vm2280, %v2763
        %2828 = vst.msk [vmem:[%s256 + $0x128] sm:$0xff] %vm2280, %v2764
        %2829 = vst.msk [vmem:[%s256 + $0x130] sm:$0xff] %vm2280, %v2765
        %2830 = vst.msk [vmem:[%s256 + $0x138] sm:$0xff] %vm2280, %v2766
        %2831 = vst.msk [vmem:[%s256 + $0x140] sm:$0xff] %vm2280, %v2767
        %2832 = vst.msk [vmem:[%s256 + $0x148] sm:$0xff] %vm2280, %v2768
        %2833 = vst.msk [vmem:[%s256 + $0x150] sm:$0xff] %vm2280, %v2769
        %2834 = vst.msk [vmem:[%s256 + $0x158] sm:$0xff] %vm2280, %v2770
        %2835 = vst.msk [vmem:[%s256 + $0x160] sm:$0xff] %vm2280, %v2771
        %2836 = vst.msk [vmem:[%s256 + $0x168] sm:$0xff] %vm2280, %v2772
        %2837 = vst.msk [vmem:[%s256 + $0x170] sm:$0xff] %vm2280, %v2773
        %2838 = vst.msk [vmem:[%s256 + $0x178] sm:$0xff] %vm2280, %v2774
        %2839 = vst.msk [vmem:[%s256 + $0x180] sm:$0xff] %vm2280, %v2775
        %2840 = vst.msk [vmem:[%s256 + $0x188] sm:$0xff] %vm2280, %v2776
        %2841 = vst.msk [vmem:[%s256 + $0x190] sm:$0xff] %vm2280, %v2777
        %2842 = vst.msk [vmem:[%s256 + $0x198] sm:$0xff] %vm2280, %v2778
        %2843 = vst.msk [vmem:[%s256 + $0x1a0] sm:$0xff] %vm2280, %v2779
        %2844 = vst.msk [vmem:[%s256 + $0x1a8] sm:$0xff] %vm2280, %v2780
        %2845 = vst.msk [vmem:[%s256 + $0x1b0] sm:$0xff] %vm2280, %v2781
        %2846 = vst.msk [vmem:[%s256 + $0x1b8] sm:$0xff] %vm2280, %v2782
        %2847 = vst.msk [vmem:[%s256 + $0x1c0] sm:$0xff] %vm2280, %v2783
        %2848 = vst.msk [vmem:[%s256 + $0x1c8] sm:$0xff] %vm2280, %v2784
        %2849 = vst.msk [vmem:[%s256 + $0x1d0] sm:$0xff] %vm2280, %v2785
        %2850 = vst.msk [vmem:[%s256 + $0x1d8] sm:$0xff] %vm2280, %v2786
        %2851 = vst.msk [vmem:[%s256 + $0x1e0] sm:$0xff] %vm2280, %v2787
        %2852 = vst.msk [vmem:[%s256 + $0x1e8] sm:$0xff] %vm2280, %v2788
        %2853 = vst.msk [vmem:[%s256 + $0x1f0] sm:$0xff] %vm2280, %v2789
        %2854 = vst.msk [vmem:[%s256 + $0x1f8] sm:$0xff] %vm2280, %v2790
        %s2855 = sand.u32 %s131, 1
        %s2856 = sand.u32 %s131, 1
        %s2857 = smul.addr %s2856, 512
        %s2858 = scalar_lea.vmem [#allocation4], %s2857
        // Predicated region
        $region41: #{msa_pair_weighted_averaging.4} parent=35 // pred_check
          %p2859 = pneg %p141
        $region42: #{msa_pair_weighted_averaging.4} parent=35 // pred_check_branch
          %2861 = sbr.rel (%p2859) target = $region44
        $region43: #{msa_pair_weighted_averaging.4} parent=35 // pred_region
          %s2862 = smul.u32 2, %s23
          %s2863 = smul.addr %s22, 128
          %s2864 = sadd.s32 %s2862, %s2863
          %s2865 = smul.addr %s2864, 8
          %s2866 = scalar_lea.vmem %s4, %s2865
          // Predicated region
          $region45: #{msa_pair_weighted_averaging.4} parent=43 // pred_check
            _
          $region46: #{msa_pair_weighted_averaging.4} parent=43 // pred_check_branch
            %2868 = sbr.rel (0) target = $region48
          $region47: #{msa_pair_weighted_averaging.4} parent=43 // pred_region
            // Predicated region
            $region49: #{msa_pair_weighted_averaging.4} parent=47 // pred_check
              _
            $region50: #{msa_pair_weighted_averaging.4} parent=47 // pred_check_branch
              %2870 = sbr.rel (0) target = $region52
            $region51: #{msa_pair_weighted_averaging.4} parent=47 // pred_region
              // Predicated region
              $region64: #{msa_pair_weighted_averaging.4} parent=51 // pred_check
                _
              $region65: #{msa_pair_weighted_averaging.4} parent=51 // pred_check_branch
                %3012 = sbr.rel (0) target = $region67
              $region66: #{msa_pair_weighted_averaging.4} parent=51 // pred_region
                loop: start=0, step=1, limit=1
                $region68: #{msa_pair_weighted_averaging.4} parent=66 // loop_pre_header
                  _
                $region69: #{msa_pair_weighted_averaging.4} parent=66 // loop_header
                  %s3014 = sphi 0, %s3018
                  %p3015 = scmp.ge.s32.totalorder %s3014, 1
                  %s3019 = sphi %s2858, %s2858
                  %s3020 = sphi %s2866, %s2866
                $region70: #{msa_pair_weighted_averaging.4} parent=66 // loop_header_branch
                  %3017 = sbr.rel (%p3015) target = $region74
                $region71: #{msa_pair_weighted_averaging.4} parent=66 // loop_body
                  %v3021 = vld [vmem:[%s3019] sm:$0xff]
                  %3022 = vst [vmem:[%s3020] sm:$0xff] %v3021
                  %v3023 = vld [vmem:[%s3019 + $0x8] sm:$0xff]
                  %3024 = vst [vmem:[%s3020 + $0x8] sm:$0xff] %v3023
                  %v3025 = vld [vmem:[%s3019 + $0x10] sm:$0xff]
                  %3026 = vst [vmem:[%s3020 + $0x20] sm:$0xff] %v3025
                  %v3027 = vld [vmem:[%s3019 + $0x18] sm:$0xff]
                  %3028 = vst [vmem:[%s3020 + $0x28] sm:$0xff] %v3027
                  %v3029 = vld [vmem:[%s3019 + $0x20] sm:$0xff]
                  %3030 = vst [vmem:[%s3020 + $0x40] sm:$0xff] %v3029
                  %v3031 = vld [vmem:[%s3019 + $0x28] sm:$0xff]
                  %3032 = vst [vmem:[%s3020 + $0x48] sm:$0xff] %v3031
                  %v3033 = vld [vmem:[%s3019 + $0x30] sm:$0xff]
                  %3034 = vst [vmem:[%s3020 + $0x60] sm:$0xff] %v3033
                  %v3035 = vld [vmem:[%s3019 + $0x38] sm:$0xff]
                  %3036 = vst [vmem:[%s3020 + $0x68] sm:$0xff] %v3035
                  %v3037 = vld [vmem:[%s3019 + $0x40] sm:$0xff]
                  %3038 = vst [vmem:[%s3020 + $0x80] sm:$0xff] %v3037
                  %v3039 = vld [vmem:[%s3019 + $0x48] sm:$0xff]
                  %3040 = vst [vmem:[%s3020 + $0x88] sm:$0xff] %v3039
                  %v3041 = vld [vmem:[%s3019 + $0x50] sm:$0xff]
                  %3042 = vst [vmem:[%s3020 + $0xa0] sm:$0xff] %v3041
                  %v3043 = vld [vmem:[%s3019 + $0x58] sm:$0xff]
                  %3044 = vst [vmem:[%s3020 + $0xa8] sm:$0xff] %v3043
                  %v3045 = vld [vmem:[%s3019 + $0x60] sm:$0xff]
                  %3046 = vst [vmem:[%s3020 + $0xc0] sm:$0xff] %v3045
                  %v3047 = vld [vmem:[%s3019 + $0x68] sm:$0xff]
                  %3048 = vst [vmem:[%s3020 + $0xc8] sm:$0xff] %v3047
                  %v3049 = vld [vmem:[%s3019 + $0x70] sm:$0xff]
                  %3050 = vst [vmem:[%s3020 + $0xe0] sm:$0xff] %v3049
                  %v3051 = vld [vmem:[%s3019 + $0x78] sm:$0xff]
                  %3052 = vst [vmem:[%s3020 + $0xe8] sm:$0xff] %v3051
                  %v3053 = vld [vmem:[%s3019 + $0x80] sm:$0xff]
                  %3054 = vst [vmem:[%s3020 + $0x100] sm:$0xff] %v3053
                  %v3055 = vld [vmem:[%s3019 + $0x88] sm:$0xff]
                  %3056 = vst [vmem:[%s3020 + $0x108] sm:$0xff] %v3055
                  %v3057 = vld [vmem:[%s3019 + $0x90] sm:$0xff]
                  %3058 = vst [vmem:[%s3020 + $0x120] sm:$0xff] %v3057
                  %v3059 = vld [vmem:[%s3019 + $0x98] sm:$0xff]
                  %3060 = vst [vmem:[%s3020 + $0x128] sm:$0xff] %v3059
                  %v3061 = vld [vmem:[%s3019 + $0xa0] sm:$0xff]
                  %3062 = vst [vmem:[%s3020 + $0x140] sm:$0xff] %v3061
                  %v3063 = vld [vmem:[%s3019 + $0xa8] sm:$0xff]
                  %3064 = vst [vmem:[%s3020 + $0x148] sm:$0xff] %v3063
                  %v3065 = vld [vmem:[%s3019 + $0xb0] sm:$0xff]
                  %3066 = vst [vmem:[%s3020 + $0x160] sm:$0xff] %v3065
                  %v3067 = vld [vmem:[%s3019 + $0xb8] sm:$0xff]
                  %3068 = vst [vmem:[%s3020 + $0x168] sm:$0xff] %v3067
                  %v3069 = vld [vmem:[%s3019 + $0xc0] sm:$0xff]
                  %3070 = vst [vmem:[%s3020 + $0x180] sm:$0xff] %v3069
                  %v3071 = vld [vmem:[%s3019 + $0xc8] sm:$0xff]
                  %3072 = vst [vmem:[%s3020 + $0x188] sm:$0xff] %v3071
                  %v3073 = vld [vmem:[%s3019 + $0xd0] sm:$0xff]
                  %3074 = vst [vmem:[%s3020 + $0x1a0] sm:$0xff] %v3073
                  %v3075 = vld [vmem:[%s3019 + $0xd8] sm:$0xff]
                  %3076 = vst [vmem:[%s3020 + $0x1a8] sm:$0xff] %v3075
                  %v3077 = vld [vmem:[%s3019 + $0xe0] sm:$0xff]
                  %3078 = vst [vmem:[%s3020 + $0x1c0] sm:$0xff] %v3077
                  %v3079 = vld [vmem:[%s3019 + $0xe8] sm:$0xff]
                  %3080 = vst [vmem:[%s3020 + $0x1c8] sm:$0xff] %v3079
                  %v3081 = vld [vmem:[%s3019 + $0xf0] sm:$0xff]
                  %3082 = vst [vmem:[%s3020 + $0x1e0] sm:$0xff] %v3081
                  %v3083 = vld [vmem:[%s3019 + $0xf8] sm:$0xff]
                  %3084 = vst [vmem:[%s3020 + $0x1e8] sm:$0xff] %v3083
                  %v3085 = vld [vmem:[%s3019 + $0x100] sm:$0xff]
                  %3086 = vst [vmem:[%s3020 + $0x200] sm:$0xff] %v3085
                  %v3087 = vld [vmem:[%s3019 + $0x108] sm:$0xff]
                  %3088 = vst [vmem:[%s3020 + $0x208] sm:$0xff] %v3087
                  %v3089 = vld [vmem:[%s3019 + $0x110] sm:$0xff]
                  %3090 = vst [vmem:[%s3020 + $0x220] sm:$0xff] %v3089
                  %v3091 = vld [vmem:[%s3019 + $0x118] sm:$0xff]
                  %3092 = vst [vmem:[%s3020 + $0x228] sm:$0xff] %v3091
                  %v3093 = vld [vmem:[%s3019 + $0x120] sm:$0xff]
                  %3094 = vst [vmem:[%s3020 + $0x240] sm:$0xff] %v3093
                  %v3095 = vld [vmem:[%s3019 + $0x128] sm:$0xff]
                  %3096 = vst [vmem:[%s3020 + $0x248] sm:$0xff] %v3095
                  %v3097 = vld [vmem:[%s3019 + $0x130] sm:$0xff]
                  %3098 = vst [vmem:[%s3020 + $0x260] sm:$0xff] %v3097
                  %v3099 = vld [vmem:[%s3019 + $0x138] sm:$0xff]
                  %3100 = vst [vmem:[%s3020 + $0x268] sm:$0xff] %v3099
                  %v3101 = vld [vmem:[%s3019 + $0x140] sm:$0xff]
                  %3102 = vst [vmem:[%s3020 + $0x280] sm:$0xff] %v3101
                  %v3103 = vld [vmem:[%s3019 + $0x148] sm:$0xff]
                  %3104 = vst [vmem:[%s3020 + $0x288] sm:$0xff] %v3103
                  %v3105 = vld [vmem:[%s3019 + $0x150] sm:$0xff]
                  %3106 = vst [vmem:[%s3020 + $0x2a0] sm:$0xff] %v3105
                  %v3107 = vld [vmem:[%s3019 + $0x158] sm:$0xff]
                  %3108 = vst [vmem:[%s3020 + $0x2a8] sm:$0xff] %v3107
                  %v3109 = vld [vmem:[%s3019 + $0x160] sm:$0xff]
                  %3110 = vst [vmem:[%s3020 + $0x2c0] sm:$0xff] %v3109
                  %v3111 = vld [vmem:[%s3019 + $0x168] sm:$0xff]
                  %3112 = vst [vmem:[%s3020 + $0x2c8] sm:$0xff] %v3111
                  %v3113 = vld [vmem:[%s3019 + $0x170] sm:$0xff]
                  %3114 = vst [vmem:[%s3020 + $0x2e0] sm:$0xff] %v3113
                  %v3115 = vld [vmem:[%s3019 + $0x178] sm:$0xff]
                  %3116 = vst [vmem:[%s3020 + $0x2e8] sm:$0xff] %v3115
                  %v3117 = vld [vmem:[%s3019 + $0x180] sm:$0xff]
                  %3118 = vst [vmem:[%s3020 + $0x300] sm:$0xff] %v3117
                  %v3119 = vld [vmem:[%s3019 + $0x188] sm:$0xff]
                  %3120 = vst [vmem:[%s3020 + $0x308] sm:$0xff] %v3119
                  %v3121 = vld [vmem:[%s3019 + $0x190] sm:$0xff]
                  %3122 = vst [vmem:[%s3020 + $0x320] sm:$0xff] %v3121
                  %v3123 = vld [vmem:[%s3019 + $0x198] sm:$0xff]
                  %3124 = vst [vmem:[%s3020 + $0x328] sm:$0xff] %v3123
                  %v3125 = vld [vmem:[%s3019 + $0x1a0] sm:$0xff]
                  %3126 = vst [vmem:[%s3020 + $0x340] sm:$0xff] %v3125
                  %v3127 = vld [vmem:[%s3019 + $0x1a8] sm:$0xff]
                  %3128 = vst [vmem:[%s3020 + $0x348] sm:$0xff] %v3127
                  %v3129 = vld [vmem:[%s3019 + $0x1b0] sm:$0xff]
                  %3130 = vst [vmem:[%s3020 + $0x360] sm:$0xff] %v3129
                  %v3131 = vld [vmem:[%s3019 + $0x1b8] sm:$0xff]
                  %3132 = vst [vmem:[%s3020 + $0x368] sm:$0xff] %v3131
                  %v3133 = vld [vmem:[%s3019 + $0x1c0] sm:$0xff]
                  %3134 = vst [vmem:[%s3020 + $0x380] sm:$0xff] %v3133
                  %v3135 = vld [vmem:[%s3019 + $0x1c8] sm:$0xff]
                  %3136 = vst [vmem:[%s3020 + $0x388] sm:$0xff] %v3135
                  %v3137 = vld [vmem:[%s3019 + $0x1d0] sm:$0xff]
                  %3138 = vst [vmem:[%s3020 + $0x3a0] sm:$0xff] %v3137
                  %v3139 = vld [vmem:[%s3019 + $0x1d8] sm:$0xff]
                  %3140 = vst [vmem:[%s3020 + $0x3a8] sm:$0xff] %v3139
                  %v3141 = vld [vmem:[%s3019 + $0x1e0] sm:$0xff]
                  %3142 = vst [vmem:[%s3020 + $0x3c0] sm:$0xff] %v3141
                  %v3143 = vld [vmem:[%s3019 + $0x1e8] sm:$0xff]
                  %3144 = vst [vmem:[%s3020 + $0x3c8] sm:$0xff] %v3143
                  %v3145 = vld [vmem:[%s3019 + $0x1f0] sm:$0xff]
                  %3146 = vst [vmem:[%s3020 + $0x3e0] sm:$0xff] %v3145
                  %v3147 = vld [vmem:[%s3019 + $0x1f8] sm:$0xff]
                  %3148 = vst [vmem:[%s3020 + $0x3e8] sm:$0xff] %v3147
                $region72: #{msa_pair_weighted_averaging.4} parent=66 // loop_footer
                  %s3018 = sadd.s32 1, %s3014
                $region73: #{msa_pair_weighted_averaging.4} parent=66 // loop_footer_branch
                  %3013 = sbr.rel target = $region69
                $region74: #{msa_pair_weighted_averaging.4} parent=66 // loop_exit
                  _
              $region67: #{msa_pair_weighted_averaging.4} parent=51 // pred_fallthru
                _
              // Predicated region
              $region75: #{msa_pair_weighted_averaging.4} parent=51 // pred_check
                _
              $region76: #{msa_pair_weighted_averaging.4} parent=51 // pred_check_branch
                %3150 = sbr.rel target = $region78
              $region77: #{msa_pair_weighted_averaging.4} parent=51 // pred_region
                _
              $region78: #{msa_pair_weighted_averaging.4} parent=51 // pred_fallthru
                _
            $region52: #{msa_pair_weighted_averaging.4} parent=47 // pred_fallthru
              _
            // Predicated region
            $region53: #{msa_pair_weighted_averaging.4} parent=47 // pred_check
              _
            $region54: #{msa_pair_weighted_averaging.4} parent=47 // pred_check_branch
              %2872 = sbr.rel target = $region56
            $region55: #{msa_pair_weighted_averaging.4} parent=47 // pred_region
              %s2874 = ssub.s32 256, 1
              loop: start=0, step=1, limit=1
              $region57: #{msa_pair_weighted_averaging.4} parent=55 // loop_pre_header
                _
              $region58: #{msa_pair_weighted_averaging.4} parent=55 // loop_header
                %s2876 = sphi 0, %s2880
                %p2877 = scmp.ge.s32.totalorder %s2876, 1
                %s2881 = sphi %s2858, %s2858
                %s2882 = sphi %s2866, %s2866
              $region59: #{msa_pair_weighted_averaging.4} parent=55 // loop_header_branch
                %2879 = sbr.rel (%p2877) target = $region63
              $region60: #{msa_pair_weighted_averaging.4} parent=55 // loop_body
                %v2883 = vld [vmem:[%s2881] sm:%s2874]
                %2884 = vst [vmem:[%s2882] sm:%s2874] %v2883
                %v2885 = vld [vmem:[%s2881 + $0x8] sm:%s2874]
                %2886 = vst [vmem:[%s2882 + $0x8] sm:%s2874] %v2885
                %v2887 = vld [vmem:[%s2881 + $0x10] sm:%s2874]
                %2888 = vst [vmem:[%s2882 + $0x20] sm:%s2874] %v2887
                %v2889 = vld [vmem:[%s2881 + $0x18] sm:%s2874]
                %2890 = vst [vmem:[%s2882 + $0x28] sm:%s2874] %v2889
                %v2891 = vld [vmem:[%s2881 + $0x20] sm:%s2874]
                %2892 = vst [vmem:[%s2882 + $0x40] sm:%s2874] %v2891
                %v2893 = vld [vmem:[%s2881 + $0x28] sm:%s2874]
                %2894 = vst [vmem:[%s2882 + $0x48] sm:%s2874] %v2893
                %v2895 = vld [vmem:[%s2881 + $0x30] sm:%s2874]
                %2896 = vst [vmem:[%s2882 + $0x60] sm:%s2874] %v2895
                %v2897 = vld [vmem:[%s2881 + $0x38] sm:%s2874]
                %2898 = vst [vmem:[%s2882 + $0x68] sm:%s2874] %v2897
                %v2899 = vld [vmem:[%s2881 + $0x40] sm:%s2874]
                %2900 = vst [vmem:[%s2882 + $0x80] sm:%s2874] %v2899
                %v2901 = vld [vmem:[%s2881 + $0x48] sm:%s2874]
                %2902 = vst [vmem:[%s2882 + $0x88] sm:%s2874] %v2901
                %v2903 = vld [vmem:[%s2881 + $0x50] sm:%s2874]
                %2904 = vst [vmem:[%s2882 + $0xa0] sm:%s2874] %v2903
                %v2905 = vld [vmem:[%s2881 + $0x58] sm:%s2874]
                %2906 = vst [vmem:[%s2882 + $0xa8] sm:%s2874] %v2905
                %v2907 = vld [vmem:[%s2881 + $0x60] sm:%s2874]
                %2908 = vst [vmem:[%s2882 + $0xc0] sm:%s2874] %v2907
                %v2909 = vld [vmem:[%s2881 + $0x68] sm:%s2874]
                %2910 = vst [vmem:[%s2882 + $0xc8] sm:%s2874] %v2909
                %v2911 = vld [vmem:[%s2881 + $0x70] sm:%s2874]
                %2912 = vst [vmem:[%s2882 + $0xe0] sm:%s2874] %v2911
                %v2913 = vld [vmem:[%s2881 + $0x78] sm:%s2874]
                %2914 = vst [vmem:[%s2882 + $0xe8] sm:%s2874] %v2913
                %v2915 = vld [vmem:[%s2881 + $0x80] sm:%s2874]
                %2916 = vst [vmem:[%s2882 + $0x100] sm:%s2874] %v2915
                %v2917 = vld [vmem:[%s2881 + $0x88] sm:%s2874]
                %2918 = vst [vmem:[%s2882 + $0x108] sm:%s2874] %v2917
                %v2919 = vld [vmem:[%s2881 + $0x90] sm:%s2874]
                %2920 = vst [vmem:[%s2882 + $0x120] sm:%s2874] %v2919
                %v2921 = vld [vmem:[%s2881 + $0x98] sm:%s2874]
                %2922 = vst [vmem:[%s2882 + $0x128] sm:%s2874] %v2921
                %v2923 = vld [vmem:[%s2881 + $0xa0] sm:%s2874]
                %2924 = vst [vmem:[%s2882 + $0x140] sm:%s2874] %v2923
                %v2925 = vld [vmem:[%s2881 + $0xa8] sm:%s2874]
                %2926 = vst [vmem:[%s2882 + $0x148] sm:%s2874] %v2925
                %v2927 = vld [vmem:[%s2881 + $0xb0] sm:%s2874]
                %2928 = vst [vmem:[%s2882 + $0x160] sm:%s2874] %v2927
                %v2929 = vld [vmem:[%s2881 + $0xb8] sm:%s2874]
                %2930 = vst [vmem:[%s2882 + $0x168] sm:%s2874] %v2929
                %v2931 = vld [vmem:[%s2881 + $0xc0] sm:%s2874]
                %2932 = vst [vmem:[%s2882 + $0x180] sm:%s2874] %v2931
                %v2933 = vld [vmem:[%s2881 + $0xc8] sm:%s2874]
                %2934 = vst [vmem:[%s2882 + $0x188] sm:%s2874] %v2933
                %v2935 = vld [vmem:[%s2881 + $0xd0] sm:%s2874]
                %2936 = vst [vmem:[%s2882 + $0x1a0] sm:%s2874] %v2935
                %v2937 = vld [vmem:[%s2881 + $0xd8] sm:%s2874]
                %2938 = vst [vmem:[%s2882 + $0x1a8] sm:%s2874] %v2937
                %v2939 = vld [vmem:[%s2881 + $0xe0] sm:%s2874]
                %2940 = vst [vmem:[%s2882 + $0x1c0] sm:%s2874] %v2939
                %v2941 = vld [vmem:[%s2881 + $0xe8] sm:%s2874]
                %2942 = vst [vmem:[%s2882 + $0x1c8] sm:%s2874] %v2941
                %v2943 = vld [vmem:[%s2881 + $0xf0] sm:%s2874]
                %2944 = vst [vmem:[%s2882 + $0x1e0] sm:%s2874] %v2943
                %v2945 = vld [vmem:[%s2881 + $0xf8] sm:%s2874]
                %2946 = vst [vmem:[%s2882 + $0x1e8] sm:%s2874] %v2945
                %v2947 = vld [vmem:[%s2881 + $0x100] sm:%s2874]
                %2948 = vst [vmem:[%s2882 + $0x200] sm:%s2874] %v2947
                %v2949 = vld [vmem:[%s2881 + $0x108] sm:%s2874]
                %2950 = vst [vmem:[%s2882 + $0x208] sm:%s2874] %v2949
                %v2951 = vld [vmem:[%s2881 + $0x110] sm:%s2874]
                %2952 = vst [vmem:[%s2882 + $0x220] sm:%s2874] %v2951
                %v2953 = vld [vmem:[%s2881 + $0x118] sm:%s2874]
                %2954 = vst [vmem:[%s2882 + $0x228] sm:%s2874] %v2953
                %v2955 = vld [vmem:[%s2881 + $0x120] sm:%s2874]
                %2956 = vst [vmem:[%s2882 + $0x240] sm:%s2874] %v2955
                %v2957 = vld [vmem:[%s2881 + $0x128] sm:%s2874]
                %2958 = vst [vmem:[%s2882 + $0x248] sm:%s2874] %v2957
                %v2959 = vld [vmem:[%s2881 + $0x130] sm:%s2874]
                %2960 = vst [vmem:[%s2882 + $0x260] sm:%s2874] %v2959
                %v2961 = vld [vmem:[%s2881 + $0x138] sm:%s2874]
                %2962 = vst [vmem:[%s2882 + $0x268] sm:%s2874] %v2961
                %v2963 = vld [vmem:[%s2881 + $0x140] sm:%s2874]
                %2964 = vst [vmem:[%s2882 + $0x280] sm:%s2874] %v2963
                %v2965 = vld [vmem:[%s2881 + $0x148] sm:%s2874]
                %2966 = vst [vmem:[%s2882 + $0x288] sm:%s2874] %v2965
                %v2967 = vld [vmem:[%s2881 + $0x150] sm:%s2874]
                %2968 = vst [vmem:[%s2882 + $0x2a0] sm:%s2874] %v2967
                %v2969 = vld [vmem:[%s2881 + $0x158] sm:%s2874]
                %2970 = vst [vmem:[%s2882 + $0x2a8] sm:%s2874] %v2969
                %v2971 = vld [vmem:[%s2881 + $0x160] sm:%s2874]
                %2972 = vst [vmem:[%s2882 + $0x2c0] sm:%s2874] %v2971
                %v2973 = vld [vmem:[%s2881 + $0x168] sm:%s2874]
                %2974 = vst [vmem:[%s2882 + $0x2c8] sm:%s2874] %v2973
                %v2975 = vld [vmem:[%s2881 + $0x170] sm:%s2874]
                %2976 = vst [vmem:[%s2882 + $0x2e0] sm:%s2874] %v2975
                %v2977 = vld [vmem:[%s2881 + $0x178] sm:%s2874]
                %2978 = vst [vmem:[%s2882 + $0x2e8] sm:%s2874] %v2977
                %v2979 = vld [vmem:[%s2881 + $0x180] sm:%s2874]
                %2980 = vst [vmem:[%s2882 + $0x300] sm:%s2874] %v2979
                %v2981 = vld [vmem:[%s2881 + $0x188] sm:%s2874]
                %2982 = vst [vmem:[%s2882 + $0x308] sm:%s2874] %v2981
                %v2983 = vld [vmem:[%s2881 + $0x190] sm:%s2874]
                %2984 = vst [vmem:[%s2882 + $0x320] sm:%s2874] %v2983
                %v2985 = vld [vmem:[%s2881 + $0x198] sm:%s2874]
                %2986 = vst [vmem:[%s2882 + $0x328] sm:%s2874] %v2985
                %v2987 = vld [vmem:[%s2881 + $0x1a0] sm:%s2874]
                %2988 = vst [vmem:[%s2882 + $0x340] sm:%s2874] %v2987
                %v2989 = vld [vmem:[%s2881 + $0x1a8] sm:%s2874]
                %2990 = vst [vmem:[%s2882 + $0x348] sm:%s2874] %v2989
                %v2991 = vld [vmem:[%s2881 + $0x1b0] sm:%s2874]
                %2992 = vst [vmem:[%s2882 + $0x360] sm:%s2874] %v2991
                %v2993 = vld [vmem:[%s2881 + $0x1b8] sm:%s2874]
                %2994 = vst [vmem:[%s2882 + $0x368] sm:%s2874] %v2993
                %v2995 = vld [vmem:[%s2881 + $0x1c0] sm:%s2874]
                %2996 = vst [vmem:[%s2882 + $0x380] sm:%s2874] %v2995
                %v2997 = vld [vmem:[%s2881 + $0x1c8] sm:%s2874]
                %2998 = vst [vmem:[%s2882 + $0x388] sm:%s2874] %v2997
                %v2999 = vld [vmem:[%s2881 + $0x1d0] sm:%s2874]
                %3000 = vst [vmem:[%s2882 + $0x3a0] sm:%s2874] %v2999
                %v3001 = vld [vmem:[%s2881 + $0x1d8] sm:%s2874]
                %3002 = vst [vmem:[%s2882 + $0x3a8] sm:%s2874] %v3001
                %v3003 = vld [vmem:[%s2881 + $0x1e0] sm:%s2874]
                %3004 = vst [vmem:[%s2882 + $0x3c0] sm:%s2874] %v3003
                %v3005 = vld [vmem:[%s2881 + $0x1e8] sm:%s2874]
                %3006 = vst [vmem:[%s2882 + $0x3c8] sm:%s2874] %v3005
                %v3007 = vld [vmem:[%s2881 + $0x1f0] sm:%s2874]
                %3008 = vst [vmem:[%s2882 + $0x3e0] sm:%s2874] %v3007
                %v3009 = vld [vmem:[%s2881 + $0x1f8] sm:%s2874]
                %3010 = vst [vmem:[%s2882 + $0x3e8] sm:%s2874] %v3009
              $region61: #{msa_pair_weighted_averaging.4} parent=55 // loop_footer
                %s2880 = sadd.s32 1, %s2876
              $region62: #{msa_pair_weighted_averaging.4} parent=55 // loop_footer_branch
                %2875 = sbr.rel target = $region58
              $region63: #{msa_pair_weighted_averaging.4} parent=55 // loop_exit
                _
            $region56: #{msa_pair_weighted_averaging.4} parent=47 // pred_fallthru
              _
          $region48: #{msa_pair_weighted_averaging.4} parent=43 // pred_fallthru
            _
          %3151 = vnop
        $region44: #{msa_pair_weighted_averaging.4} parent=35 // pred_fallthru
          _
      $region36: #{msa_pair_weighted_averaging.4} parent=5 // pred_fallthru
        _
      %p3152 = scmp.le.s32.totalorder 2, %s13
      // Predicated region
      $region79: #{msa_pair_weighted_averaging.4} parent=5 // pred_check
        %p3153 = pneg %p3152
      $region80: #{msa_pair_weighted_averaging.4} parent=5 // pred_check_branch
        %3155 = sbr.rel (%p3153) target = $region82
      $region81: #{msa_pair_weighted_averaging.4} parent=5 // pred_region
        %s3156 = ssub.s32 %s13, 2
        // Predicated region
        $region83: #{msa_pair_weighted_averaging.4} parent=81 // pred_check
          %p3157 = pneg %p147
        $region84: #{msa_pair_weighted_averaging.4} parent=81 // pred_check_branch
          %3159 = sbr.rel (%p3157) target = $region86
        $region85: #{msa_pair_weighted_averaging.4} parent=81 // pred_region
          %s3160 = sand.u32 %s132, 1
          %s3161 = sand.u32 %s132, 1
          %s3162 = smul.addr %s3161, 512
          %s3163 = scalar_lea.vmem [#allocation4], %s3162
        $region86: #{msa_pair_weighted_averaging.4} parent=81 // pred_fallthru
          _
      $region82: #{msa_pair_weighted_averaging.4} parent=5 // pred_fallthru
        _
    $region6: #{msa_pair_weighted_averaging.4} parent=1 // loop_footer
      %s17 = sadd.s32 1, %s13
    $region7: #{msa_pair_weighted_averaging.4} parent=1 // loop_footer_branch
      %12 = sbr.rel target = $region3
    $region8: #{msa_pair_weighted_averaging.4} parent=1 // loop_exit
      _
    %3164 = vsyncpa [#allocation3], 1
    %s3165 = scalar_lea.sflag [#allocation3], 1
    %3166 = vsyncpa %s3165, 1

</llo_original>
